<compile_context>
chip_gen: v7x
topology: tpu7x:2x2x1
jax: 0.10.0
libtpu: 0.0.40
codegen_flags: <defaults>
</compile_context>

<pallas_src>
import functools

import jax
import jax.numpy as jnp
from jax import lax
from jax.experimental import pallas as pl
from jax.experimental.pallas import tpu as pltpu


# -----------------------------------------------------------------------------
# small helpers
# -----------------------------------------------------------------------------
def _round_up(x, m):
    return ((x + m - 1) // m) * m


@functools.lru_cache(maxsize=1)
def _vmem_capacity_bytes():
    try:
        return int(pltpu.get_tpu_info().vmem_capacity_bytes)
    except Exception:
        return 64 * 1024 * 1024          # conservative default: v7x per-TC VMEM


def _vmem_budget_bytes():
    # Working-set budget: 3/4 of physical VMEM (48 MiB on v7x, 96 MiB on v5e/v6e).
    return max(32 << 20, (_vmem_capacity_bytes() * 3) // 4)


def _vmem_limit_bytes(working_set):
    # Scoped-VMEM limit: working set + headroom, capped at 7/8 of physical VMEM.
    cap = _vmem_capacity_bytes()
    return int(min(max(working_set + (8 << 20), 32 << 20), (cap * 7) // 8))


def _choose_m_tiling(M, K, Ctot, in_itemsize, tile_m_max, sub):
    """Pick (M_pad, tile_m, working_set).  Prefers tile_m | M (no padding copy)."""
    budget = _vmem_budget_bytes()

    def ws(m_pad, t):
        return (3 * m_pad * Ctot * 4          # resident pre-BN slab + out buffers
                + 2 * t * K * in_itemsize     # double-buffered streamed xcol tile
                + 2 * K * Ctot * in_itemsize  # weight slab
                + 64 * Ctot * 4 + (256 << 10))

    # Preferred: tile_m divides M exactly and is a multiple of `sub`.
    if M % sub == 0:
        t = M
        while (t > tile_m_max or ws(M, t) > budget) and t % (2 * sub) == 0:
            t //= 2
        if t <= tile_m_max and M % t == 0 and ws(M, t) <= budget:
            return M, t, ws(M, t)
    # Ragged-but-small M: a single full-extent block needs no row alignment.
    if M <= tile_m_max and ws(M, M) <= budget:
        return M, M, ws(M, M)
    # Last resort: pad M up to a multiple of `sub` and tile.
    m_pad = _round_up(M, sub)
    t = max(sub, min((tile_m_max // sub) * sub, m_pad))
    while t >= sub:
        if m_pad % t == 0 and ws(m_pad, t) <= budget:
            return m_pad, t, ws(m_pad, t)
        t -= sub
    # TODO(synk): fall back to a two-pass streaming (HBM pre-BN slab) variant
    # for layers whose output slab exceeds VMEM; InnerUNet never hits this.
    raise NotImplementedError("layer too large for the fused resident-slab kernel")


# -----------------------------------------------------------------------------
# Pallas kernels
# -----------------------------------------------------------------------------
def _fused_conv_bn_act_kernel(xcol_ref, wcol_ref, gamma_ref, beta_ref,
                              gfold_ref, gexp_ref, out_ref,
                              y_acc, s_acc, q_acc, *,
                              inv_count, eps, neg_slope, t_m, n_m, n_groups):
    """One M tile: MXU matmul + BN-stat accumulation; finalize on last tile."""
    i = pl.program_id(0)

    # conv-as-matmul for this M tile (f32 accumulation on the MXU).
    y = jnp.dot(xcol_ref[...], wcol_ref[...], preferred_element_type=jnp.float32)

    @pl.when(i == 0)
    def _init():
        s_acc[...] = jnp.zeros_like(s_acc)
        q_acc[...] = jnp.zeros_like(q_acc)

    s_acc[...] += jnp.sum(y, axis=0, keepdims=True)
    q_acc[...] += jnp.sum(y * y, axis=0, keepdims=True)

    # Stash the pre-BN tile in the VMEM-resident slab (no HBM round trip).
    if n_m == 1:
        y_acc[...] = y
    else:
        row0 = pl.multiple_of(i * t_m, t_m)
        y_acc[pl.ds(row0, t_m), :] = y

    # Fold per-column stats into per-channel BN scale/bias.  Tiny; recomputed
    # every step (only the last step's value is used) so no dots sit under the
    # scf.if of the finalize.
    if n_groups == 1:
        s_c, q_c = s_acc[...], q_acc[...]
    else:
        s_c = jnp.dot(s_acc[...], gfold_ref[...], preferred_element_type=jnp.float32)
        q_c = jnp.dot(q_acc[...], gfold_ref[...], preferred_element_type=jnp.float32)
    mean = s_c * inv_count
    var = jnp.maximum(q_c * inv_count - mean * mean, 0.0)   # clamp cancellation
    scale_c = gamma_ref[...] * lax.rsqrt(var + eps)          # EUP rsqrt
    bias_c = beta_ref[...] - mean * scale_c
    if n_groups == 1:
        scale, bias = scale_c, bias_c
    else:
        scale = jnp.dot(scale_c, gexp_ref[...], preferred_element_type=jnp.float32)
        bias = jnp.dot(bias_c, gexp_ref[...], preferred_element_type=jnp.float32)

    @pl.when(i == n_m - 1)
    def _finalize():
        z = y_acc[...] * scale + bias
        out_ref[...] = jnp.where(z >= 0.0, z, neg_slope * z)


def _conv_bias_act_kernel(xcol_ref, wcol_ref, bias_ref, out_ref, *, neg_slope):
    """Bottleneck: conv-as-matmul + bias + activation (no BatchNorm)."""
    z = jnp.dot(xcol_ref[...], wcol_ref[...],
                preferred_element_type=jnp.float32) + bias_ref[...]
    out_ref[...] = jnp.where(z >= 0.0, z, neg_slope * z)


# -----------------------------------------------------------------------------
# fused pipelines (wrap the pallas_calls)
# -----------------------------------------------------------------------------
def _fused_conv_bn_act(xcol, wcol, gamma, beta, *, n_groups, negative_slope,
                       eps=1e-5, use_bf16=False, tile_m_max=1024):
    """act(BN(xcol @ wcol)) with batch statistics pooled over rows and over the
    `n_groups` column groups (for the sub-pixel ConvTranspose parities).

    xcol: (M, K), wcol: (K, n_groups*Cout), gamma/beta: (Cout,).
    Returns (M, n_groups*Cout) f32.
    """
    M, K = xcol.shape
    Ctot = wcol.shape[1]
    Cout = Ctot // n_groups
    in_dtype = jnp.bfloat16 if use_bf16 else jnp.float32
    itemsize = jnp.dtype(in_dtype).itemsize
    sub = 16 if use_bf16 else 8

    M_pad, t_m, ws = _choose_m_tiling(M, K, Ctot, itemsize, tile_m_max, sub)
    n_m = M_pad // t_m

    if M_pad != M:
        xcol = jnp.pad(xcol, ((0, M_pad - M), (0, 0)))
    xcol = xcol.astype(in_dtype)
    wcol = wcol.astype(in_dtype)
    gamma2 = gamma.astype(jnp.float32).reshape(1, Cout)
    beta2 = beta.astype(jnp.float32).reshape(1, Cout)
    eye = jnp.eye(Cout, dtype=jnp.float32)
    gfold = jnp.tile(eye, (n_groups, 1))   # (Ctot, Cout): column -> channel fold
    gexp = jnp.tile(eye, (1, n_groups))    # (Cout, Ctot): channel -> column expand

    kernel = functools.partial(
        _fused_conv_bn_act_kernel,
        inv_count=1.0 / float(n_groups * M), eps=float(eps),
        neg_slope=float(negative_slope), t_m=t_m, n_m=n_m, n_groups=n_groups)

    out = pl.pallas_call(
        kernel,
        out_shape=jax.ShapeDtypeStruct((M_pad, Ctot), jnp.float32),
        grid=(n_m,),
        in_specs=[
            pl.BlockSpec((t_m, K), lambda i: (i, 0)),      # streamed xcol tile
            pl.BlockSpec((K, Ctot), lambda i: (0, 0)),     # resident weights
            pl.BlockSpec((1, Cout), lambda i: (0, 0)),     # gamma
            pl.BlockSpec((1, Cout), lambda i: (0, 0)),     # beta
            pl.BlockSpec((Ctot, Cout), lambda i: (0, 0)),  # group-fold matrix
            pl.BlockSpec((Cout, Ctot), lambda i: (0, 0)),  # group-expand matrix
        ],
        out_specs=pl.BlockSpec((M_pad, Ctot), lambda i: (0, 0)),  # resident out
        scratch_shapes=[
            pltpu.VMEM((M_pad, Ctot), jnp.float32),   # resident pre-BN slab
            pltpu.VMEM((1, Ctot), jnp.float32),       # per-column sum
            pltpu.VMEM((1, Ctot), jnp.float32),       # per-column sum of squares
        ],
        compiler_params=pltpu.CompilerParams(
            dimension_semantics=("arbitrary",),        # sequential stat sweep
            vmem_limit_bytes=_vmem_limit_bytes(ws)),
    )(xcol, wcol, gamma2, beta2, gfold, gexp)

    return out[:M] if M_pad != M else out


def _conv_bias_act(xcol, wcol, bias_vec, *, negative_slope=0.0,
                   use_bf16=False, tile_m_max=1024):
    """act(xcol @ wcol + bias) — bottleneck (no BatchNorm)."""
    M, K = xcol.shape
    Cout = wcol.shape[1]
    in_dtype = jnp.bfloat16 if use_bf16 else jnp.float32
    itemsize = jnp.dtype(in_dtype).itemsize
    sub = 16 if use_bf16 else 8

    M_pad, t_m, ws = _choose_m_tiling(M, K, Cout, itemsize, tile_m_max, sub)
    n_m = M_pad // t_m
    if M_pad != M:
        xcol = jnp.pad(xcol, ((0, M_pad - M), (0, 0)))
    xcol = xcol.astype(in_dtype)
    wcol = wcol.astype(in_dtype)
    bias2 = bias_vec.astype(jnp.float32).reshape(1, Cout)

    out = pl.pallas_call(
        functools.partial(_conv_bias_act_kernel, neg_slope=float(negative_slope)),
        out_shape=jax.ShapeDtypeStruct((M_pad, Cout), jnp.float32),
        grid=(n_m,),
        in_specs=[
            pl.BlockSpec((t_m, K), lambda i: (i, 0)),
            pl.BlockSpec((K, Cout), lambda i: (0, 0)),
            pl.BlockSpec((1, Cout), lambda i: (0, 0)),
        ],
        out_specs=pl.BlockSpec((t_m, Cout), lambda i: (i, 0)),
        compiler_params=pltpu.CompilerParams(
            dimension_semantics=("parallel",),
            vmem_limit_bytes=_vmem_limit_bytes(ws)),
    )(xcol, wcol, bias2)
    return out[:M] if M_pad != M else out


# -----------------------------------------------------------------------------
# im2col / weight-reorder glue (pure layout plumbing, NHWC, K = (tap, ci))
# TODO(synk): a true zero-copy in-kernel tap gather (manual DMA from the NHWC
#             input) is not implemented; the (M, K) slab is materialized once.
# -----------------------------------------------------------------------------
def _im2col_down_nhwc(x, pad_mode):
    """4x4 / stride-2 / pad-1 conv input (NHWC) -> (N*Ho*Wo, 16*Cin) slab."""
    N, H, W, Cin = x.shape
    assert H % 2 == 0 and W % 2 == 0 and H >= 2 and W >= 2, (H, W)
    Ho, Wo = H // 2, W // 2
    xp = jnp.pad(x, ((0, 0), (1, 1), (1, 1), (0, 0)), mode=pad_mode)
    taps = [xp[:, kh:kh + 2 * Ho:2, kw:kw + 2 * Wo:2, :]
            for kh in range(4) for kw in range(4)]
    return jnp.concatenate(taps, axis=-1).reshape(N * Ho * Wo, 16 * Cin), Ho, Wo


def _im2col_up_nhwc(x):
    """Sub-pixel ConvTranspose2d(4,2,1): 9 taps of the 1-zero-padded input.
    Returns (N*H*W, 9*Cin); the 4 output parities share these taps."""
    N, H, W, Cin = x.shape
    xp = jnp.pad(x, ((0, 0), (1, 1), (1, 1), (0, 0)))
    taps = [xp[:, dh:dh + H, dw:dw + W, :] for dh in range(3) for dw in range(3)]
    return jnp.concatenate(taps, axis=-1).reshape(N * H * W, 9 * Cin)


def _wcol_down(weight):
    """(Cout, Cin, 4, 4) -> (16*Cin, Cout), K ordered (kh, kw, ci)."""
    cout = weight.shape[0]
    return jnp.transpose(weight, (2, 3, 1, 0)).reshape(-1, cout)


# (parity, tap-offset d) -> kernel index (or -1 if the tap is unused).
_KMAP = {(0, 0): 3, (0, 1): 1, (0, 2): -1,
         (1, 0): -1, (1, 1): 2, (1, 2): 0}


def _wcol_up(weight):
    """ConvTranspose2d weight (Cin, Cout, 4, 4) -> (9*Cin, 4*Cout) with the 4
    output-parity groups as contiguous column blocks (ph-major, pw-minor)."""
    cin, cout = weight.shape[0], weight.shape[1]
    zero = jnp.zeros((cin, cout), weight.dtype)
    cols = []
    for ph in range(2):
        for pw in range(2):
            taps = []
            for dh in range(3):
                for dw in range(3):
                    kh, kw = _KMAP[(ph, dh)], _KMAP[(pw, dw)]
                    taps.append(zero if (kh < 0 or kw < 0) else weight[:, :, kh, kw])
            cols.append(jnp.concatenate(taps, axis=0))     # (9*Cin, Cout)
    return jnp.concatenate(cols, axis=1)                   # (9*Cin, 4*Cout)


# -----------------------------------------------------------------------------
# module-level wrappers (Block / bottleneck / InnerUNet), NHWC activations
# -----------------------------------------------------------------------------
def block_forward_nhwc(x, weight, gamma, beta, *, down=True, act="relu",
                       use_bf16=False, tile_m_max=1024):
    """Block(down, act, use_dropout=False) forward on an NHWC input."""
    N, H, W, _ = x.shape
    neg = 0.0 if act == "relu" else 0.2
    if down:
        Cout = weight.shape[0]                          # (Cout, Cin, 4, 4)
        xcol, Ho, Wo = _im2col_down_nhwc(x, "reflect")  # padding_mode='reflect'
        wcol = _wcol_down(weight)
        out2d = _fused_conv_bn_act(xcol, wcol, gamma, beta, n_groups=1,
                                   negative_slope=neg, use_bf16=use_bf16,
                                   tile_m_max=tile_m_max)
        return out2d.reshape(N, Ho, Wo, Cout)
    # ConvTranspose2d via sub-pixel decomposition (4 parity column groups).
    Cout = weight.shape[1]                              # (Cin, Cout, 4, 4)
    xcol = _im2col_up_nhwc(x)
    wcol = _wcol_up(weight)
    out2d = _fused_conv_bn_act(xcol, wcol, gamma, beta, n_groups=4,
                               negative_slope=neg, use_bf16=use_bf16,
                               tile_m_max=tile_m_max)
    y = out2d.reshape(N, H, W, 2, 2, Cout)
    return jnp.transpose(y, (0, 1, 3, 2, 4, 5)).reshape(N, 2 * H, 2 * W, Cout)


def bottleneck_forward_nhwc(x, weight, bias, *, use_bf16=False, tile_m_max=1024):
    """nn.Conv2d(C, C, 4, 2, 1) + ReLU (zero padding, with bias), NHWC."""
    N, H, W, _ = x.shape
    Cout = weight.shape[0]
    xcol, Ho, Wo = _im2col_down_nhwc(x, "constant")
    wcol = _wcol_down(weight)
    out2d = _conv_bias_act(xcol, wcol, bias, negative_slope=0.0,
                           use_bf16=use_bf16, tile_m_max=tile_m_max)
    return out2d.reshape(N, Ho, Wo, Cout)


def inner_unet_forward(x_nchw, params, *, use_bf16=False, tile_m_max=1024):
    """InnerUNet forward.  NCHW in / NCHW out; NHWC internally (boundary-only
    transposes, channel-axis skip concats)."""
    x = jnp.transpose(x_nchw, (0, 2, 3, 1))

    def down(h, p):
        return block_forward_nhwc(h, p["w"], p["g"], p["b"], down=True,
                                  act="leaky", use_bf16=use_bf16,
                                  tile_m_max=tile_m_max)

    def up(h, p):
        return block_forward_nhwc(h, p["w"], p["g"], p["b"], down=False,
                                  act="relu", use_bf16=use_bf16,
                                  tile_m_max=tile_m_max)

    d1 = down(x, params["down1"])
    d2 = down(d1, params["down2"])
    d3 = down(d2, params["down3"])
    d4 = down(d3, params["down4"])
    bott = bottleneck_forward_nhwc(d4, params["bneck"]["w"], params["bneck"]["b"],
                                   use_bf16=use_bf16, tile_m_max=tile_m_max)
    u1 = up(d4, params["up1"])
    u2 = up(jnp.concatenate([u1, d3], axis=-1), params["up2"])
    u3 = up(jnp.concatenate([u2, d2], axis=-1), params["up3"])
    # TODO(synk): the reference `up4 = self.up3(torch.cat([up3, d1], 1))` feeds
    # 2*features channels into a block expecting 4*features and raises in
    # PyTorch, so there are no valid semantics to reproduce; up3 stands in.
    to_nchw = lambda t: jnp.transpose(t, (0, 3, 1, 2))
    return to_nchw(bott), to_nchw(u2), to_nchw(u3), to_nchw(d4)


# -----------------------------------------------------------------------------
# pure-JAX references (NCHW, lax.conv) for validation
# -----------------------------------------------------------------------------
def _bn_act_ref(y, gamma, beta, negative_slope, eps=1e-5):
    mean = jnp.mean(y, axis=(0, 2, 3), keepdims=True)
    var = jnp.mean((y - mean) ** 2, axis=(0, 2, 3), keepdims=True)
    yh = (y - mean) * lax.rsqrt(var + eps)
    yh = yh * gamma.reshape(1, -1, 1, 1) + beta.reshape(1, -1, 1, 1)
    return jnp.where(yh >= 0.0, yh, negative_slope * yh)


def _ref_down_block(x, p, negative_slope):
    xp = jnp.pad(x, ((0, 0), (0, 0), (1, 1), (1, 1)), mode="reflect")
    y = lax.conv_general_dilated(xp, p["w"], (2, 2), "VALID",
                                 dimension_numbers=("NCHW", "OIHW", "NCHW"))
    return _bn_act_ref(y, p["g"], p["b"], negative_slope)


def _ref_up_block(x, p, negative_slope):
    wc = jnp.transpose(jnp.flip(p["w"], axis=(2, 3)), (1, 0, 2, 3))   # OIHW
    y = lax.conv_general_dilated(x, wc, (1, 1), ((2, 2), (2, 2)),
                                 lhs_dilation=(2, 2),
                                 dimension_numbers=("NCHW", "OIHW", "NCHW"))
    return _bn_act_ref(y, p["g"], p["b"], negative_slope)


def _ref_bottleneck(x, p):
    y = lax.conv_general_dilated(x, p["w"], (2, 2), ((1, 1), (1, 1)),
                                 dimension_numbers=("NCHW", "OIHW", "NCHW"))
    y = y + p["b"].reshape(1, -1, 1, 1)
    return jnp.maximum(y, 0.0)


def _reference_inner_unet(x, params):
    d1 = _ref_down_block(x, params["down1"], 0.2)
    d2 = _ref_down_block(d1, params["down2"], 0.2)
    d3 = _ref_down_block(d2, params["down3"], 0.2)
    d4 = _ref_down_block(d3, params["down4"], 0.2)
    bott = _ref_bottleneck(d4, params["bneck"])
    u1 = _ref_up_block(d4, params["up1"], 0.0)
    u2 = _ref_up_block(jnp.concatenate([u1, d3], axis=1), params["up2"], 0.0)
    u3 = _ref_up_block(jnp.concatenate([u2, d2], axis=1), params["up3"], 0.0)
    return bott, u2, u3, d4


# -----------------------------------------------------------------------------
# demo / self-test
# -----------------------------------------------------------------------------
def _down_params(key, cin, cout):
    k1, k2, k3 = jax.random.split(key, 3)
    return {"w": 0.05 * jax.random.normal(k1, (cout, cin, 4, 4), jnp.float32),
            "g": 1.0 + 0.1 * jax.random.normal(k2, (cout,), jnp.float32),
            "b": 0.1 * jax.random.normal(k3, (cout,), jnp.float32)}


def _up_params(key, cin, cout):
    k1, k2, k3 = jax.random.split(key, 3)
    return {"w": 0.05 * jax.random.normal(k1, (cin, cout, 4, 4), jnp.float32),
            "g": 1.0 + 0.1 * jax.random.normal(k2, (cout,), jnp.float32),
            "b": 0.1 * jax.random.normal(k3, (cout,), jnp.float32)}


if __name__ == "__main__":
    # Small shapes consistent with the module: batch=2, in_channels=4,
    # features=8, spatial 32 (smallest even size surviving all 5 stride-2
    # downsamplings including the bottleneck).
    N, IN_CH, FEAT, H, W = 2, 4, 8, 32, 32

    keys = jax.random.split(jax.random.PRNGKey(0), 11)
    x = jax.random.normal(keys[0], (N, IN_CH, H, W), dtype=jnp.float32)

    params = {
        "down1": _down_params(keys[1], IN_CH, FEAT),
        "down2": _down_params(keys[2], FEAT, FEAT * 2),
        "down3": _down_params(keys[3], FEAT * 2, FEAT * 4),
        "down4": _down_params(keys[4], FEAT * 4, FEAT * 8),
        "bneck": {
            "w": 0.05 * jax.random.normal(keys[5], (FEAT * 8, FEAT * 8, 4, 4),
                                          jnp.float32),
            "b": 0.1 * jax.random.normal(keys[6], (FEAT * 8,), jnp.float32),
        },
        "up1": _up_params(keys[7], FEAT * 8, FEAT * 4),
        "up2": _up_params(keys[8], FEAT * 8, FEAT * 2),   # cat(up1, d3) = 8F in
        "up3": _up_params(keys[9], FEAT * 4, FEAT),       # cat(up2, d2) = 4F in
    }

    # Full network (f32 MXU streaming).
    unet = jax.jit(inner_unet_forward)
    outs = jax.block_until_ready(unet(x, params))
    refs = jax.block_until_ready(_reference_inner_unet(x, params))

    expected_shapes = {
        "bottleneck": (N, FEAT * 8, 1, 1),
        "up2": (N, FEAT * 2, 8, 8),
        "up3": (N, FEAT, 16, 16),
        "d4": (N, FEAT * 8, 2, 2),
    }
    for name, o, r in zip(("bottleneck", "up2", "up3", "d4"), outs, refs):
        assert o.shape == expected_shapes[name], (name, o.shape)
        err = float(jnp.max(jnp.abs(o - r)))
        assert jnp.allclose(o, r, atol=2e-3, rtol=2e-3), (name, err)

    # Multi-tile BN statistics path: force 8 grid steps on down1 (M=512).
    p1 = params["down1"]
    x_nhwc = jnp.transpose(x, (0, 2, 3, 1))
    d1_ref = jnp.transpose(_ref_down_block(x, p1, 0.2), (0, 2, 3, 1))
    tiled_block = jax.jit(functools.partial(
        block_forward_nhwc, down=True, act="leaky", tile_m_max=64))
    d1_tiled = jax.block_until_ready(tiled_block(x_nhwc, p1["w"], p1["g"], p1["b"]))
    err = float(jnp.max(jnp.abs(d1_tiled - d1_ref)))
    assert jnp.allclose(d1_tiled, d1_ref, atol=2e-3, rtol=2e-3), ("tiled_d1", err)

    # Standalone sub-pixel ConvTranspose block check.
    pu = params["up3"]
    up_in = jax.random.normal(keys[10], (N, FEAT * 4, 8, 8), dtype=jnp.float32)
    up_ref = jnp.transpose(_ref_up_block(up_in, pu, 0.0), (0, 2, 3, 1))
    up_blk = jax.jit(functools.partial(block_forward_nhwc, down=False, act="relu"))
    up_out = jax.block_until_ready(
        up_blk(jnp.transpose(up_in, (0, 2, 3, 1)), pu["w"], pu["g"], pu["b"]))
    err = float(jnp.max(jnp.abs(up_out - up_ref)))
    assert up_out.shape == up_ref.shape, up_out.shape
    assert jnp.allclose(up_out, up_ref, atol=2e-3, rtol=2e-3), ("up_block", err)

    # bf16 MXU-input streaming (recommended on v5e/v6e/v7x) — loose tolerance:
    # bf16 inputs also perturb the batch statistics themselves.
    bf16_block = jax.jit(functools.partial(
        block_forward_nhwc, down=True, act="leaky", use_bf16=True))
    d1_bf16 = jax.block_until_ready(bf16_block(x_nhwc, p1["w"], p1["g"], p1["b"]))
    assert d1_bf16.shape == d1_ref.shape
    assert jnp.allclose(d1_bf16, d1_ref, atol=2e-1, rtol=2e-1), (
        "bf16_d1", float(jnp.max(jnp.abs(d1_bf16 - d1_ref))))

    print("KERNEL_OK")
</pallas_src>

<mosaic_0001>
module attributes {stable_mosaic.version = 11 : i64} {
  func.func @_fused_conv_bn_act_kernel(%arg0: i32, %arg1: memref<512x64xf32, #tpu.memory_space<vmem>>, %arg2: memref<64x8xf32, #tpu.memory_space<vmem>>, %arg3: memref<1x8xf32, #tpu.memory_space<vmem>>, %arg4: memref<1x8xf32, #tpu.memory_space<vmem>>, %arg5: memref<8x8xf32, #tpu.memory_space<vmem>>, %arg6: memref<8x8xf32, #tpu.memory_space<vmem>>, %arg7: memref<512x8xf32, #tpu.memory_space<vmem>>, %arg8: memref<512x8xf32, #tpu.memory_space<vmem>>, %arg9: memref<1x8xf32, #tpu.memory_space<vmem>>, %arg10: memref<1x8xf32, #tpu.memory_space<vmem>>) attributes {dimension_semantics = [#tpu.dimension_semantics<arbitrary>], iteration_bounds = array<i64: 1>, scalar_prefetch = 0 : i64, scratch_operands = 3 : i64, tpu.core_type = #tpu.core_type<tc>, window_params = [{transform_indices = @transform_0, window_bounds = array<i64: 512, 64>}, {pipeline_mode = #tpu.pipeline_mode<synchronous>, transform_indices = @transform_1, window_bounds = array<i64: 64, 8>}, {pipeline_mode = #tpu.pipeline_mode<synchronous>, transform_indices = @transform_2, window_bounds = array<i64: 1, 8>}, {pipeline_mode = #tpu.pipeline_mode<synchronous>, transform_indices = @transform_3, window_bounds = array<i64: 1, 8>}, {pipeline_mode = #tpu.pipeline_mode<synchronous>, transform_indices = @transform_4, window_bounds = array<i64: 8, 8>}, {pipeline_mode = #tpu.pipeline_mode<synchronous>, transform_indices = @transform_5, window_bounds = array<i64: 8, 8>}, {pipeline_mode = #tpu.pipeline_mode<synchronous>, transform_indices = @transform_6, window_bounds = array<i64: 512, 8>}]} {
    %c0 = arith.constant 0 : index
    %c0_0 = arith.constant 0 : index
    %0 = vector.load %arg1[%c0, %c0_0] : memref<512x64xf32, #tpu.memory_space<vmem>>, vector<512x64xf32>
    %c0_1 = arith.constant 0 : index
    %c0_2 = arith.constant 0 : index
    %1 = vector.load %arg2[%c0_1, %c0_2] : memref<64x8xf32, #tpu.memory_space<vmem>>, vector<64x8xf32>
    %cst = arith.constant dense<0.000000e+00> : vector<512x8xf32>
    %2 = tpu.matmul %0, %1, %cst {dimension_numbers = #tpu.dot_dimension_numbers<[1], [0], [0], [1], [0, 0, 1, 1], [], []>} : vector<512x64xf32>, vector<64x8xf32>, vector<512x8xf32> -> vector<512x8xf32>
    %c0_i32 = arith.constant 0 : i32
    %3 = arith.cmpi eq, %arg0, %c0_i32 : i32
    %4 = arith.extui %3 : i1 to i32
    %c0_i32_3 = arith.constant 0 : i32
    %5 = arith.cmpi ne, %4, %c0_i32_3 : i32
    scf.if %5 {
      %cst_30 = arith.constant 0.000000e+00 : f32
      %39 = vector.broadcast %cst_30 : f32 to vector<1x8xf32>
      %c0_31 = arith.constant 0 : index
      %c0_32 = arith.constant 0 : index
      %40 = vector.load %arg9[%c0_31, %c0_32] : memref<1x8xf32, #tpu.memory_space<vmem>>, vector<1x8xf32>
      tpu.vector_store %arg9[%c0_31, %c0_32], %39 {strides = array<i32>} : memref<1x8xf32, #tpu.memory_space<vmem>>, vector<1x8xf32>,
      %cst_33 = arith.constant 0.000000e+00 : f32
      %41 = vector.broadcast %cst_33 : f32 to vector<1x8xf32>
      %c0_34 = arith.constant 0 : index
      %c0_35 = arith.constant 0 : index
      %42 = vector.load %arg10[%c0_34, %c0_35] : memref<1x8xf32, #tpu.memory_space<vmem>>, vector<1x8xf32>
      tpu.vector_store %arg10[%c0_34, %c0_35], %41 {strides = array<i32>} : memref<1x8xf32, #tpu.memory_space<vmem>>, vector<1x8xf32>,
    } else {
    }
    %c0_4 = arith.constant 0 : index
    %c0_5 = arith.constant 0 : index
    %6 = vector.load %arg9[%c0_4, %c0_5] : memref<1x8xf32, #tpu.memory_space<vmem>>, vector<1x8xf32>
    %cst_6 = arith.constant dense<0.000000e+00> : vector<8xf32>
    %7 = vector.multi_reduction <add>, %2, %cst_6 [0] : vector<512x8xf32> to vector<8xf32>
    %8 = vector.shape_cast %7 : vector<8xf32> to vector<1x8xf32>
    %9 = arith.addf %6, %8 : vector<1x8xf32>
    %c0_7 = arith.constant 0 : index
    %c0_8 = arith.constant 0 : index
    %10 = vector.load %arg9[%c0_7, %c0_8] : memref<1x8xf32, #tpu.memory_space<vmem>>, vector<1x8xf32>
    tpu.vector_store %arg9[%c0_7, %c0_8], %9 {strides = array<i32>} : memref<1x8xf32, #tpu.memory_space<vmem>>, vector<1x8xf32>,
    %c0_9 = arith.constant 0 : index
    %c0_10 = arith.constant 0 : index
    %11 = vector.load %arg10[%c0_9, %c0_10] : memref<1x8xf32, #tpu.memory_space<vmem>>, vector<1x8xf32>
    %12 = arith.mulf %2, %2 : vector<512x8xf32>
    %cst_11 = arith.constant dense<0.000000e+00> : vector<8xf32>
    %13 = vector.multi_reduction <add>, %12, %cst_11 [0] : vector<512x8xf32> to vector<8xf32>
    %14 = vector.shape_cast %13 : vector<8xf32> to vector<1x8xf32>
    %15 = arith.addf %11, %14 : vector<1x8xf32>
    %c0_12 = arith.constant 0 : index
    %c0_13 = arith.constant 0 : index
    %16 = vector.load %arg10[%c0_12, %c0_13] : memref<1x8xf32, #tpu.memory_space<vmem>>, vector<1x8xf32>
    tpu.vector_store %arg10[%c0_12, %c0_13], %15 {strides = array<i32>} : memref<1x8xf32, #tpu.memory_space<vmem>>, vector<1x8xf32>,
    %c0_14 = arith.constant 0 : index
    %c0_15 = arith.constant 0 : index
    %17 = vector.load %arg8[%c0_14, %c0_15] : memref<512x8xf32, #tpu.memory_space<vmem>>, vector<512x8xf32>
    tpu.vector_store %arg8[%c0_14, %c0_15], %2 {strides = array<i32>} : memref<512x8xf32, #tpu.memory_space<vmem>>, vector<512x8xf32>,
    %c0_16 = arith.constant 0 : index
    %c0_17 = arith.constant 0 : index
    %18 = vector.load %arg9[%c0_16, %c0_17] : memref<1x8xf32, #tpu.memory_space<vmem>>, vector<1x8xf32>
    %c0_18 = arith.constant 0 : index
    %c0_19 = arith.constant 0 : index
    %19 = vector.load %arg10[%c0_18, %c0_19] : memref<1x8xf32, #tpu.memory_space<vmem>>, vector<1x8xf32>
    %cst_20 = arith.constant 0.001953125 : f32
    %20 = vector.broadcast %cst_20 : f32 to vector<1x8xf32>
    %21 = arith.mulf %18, %20 : vector<1x8xf32>
    %cst_21 = arith.constant 0.001953125 : f32
    %22 = vector.broadcast %cst_21 : f32 to vector<1x8xf32>
    %23 = arith.mulf %19, %22 : vector<1x8xf32>
    %24 = arith.mulf %21, %21 : vector<1x8xf32>
    %25 = arith.subf %23, %24 : vector<1x8xf32>
    %cst_22 = arith.constant 0.000000e+00 : f32
    %26 = vector.broadcast %cst_22 : f32 to vector<1x8xf32>
    %27 = arith.maximumf %25, %26 : vector<1x8xf32>
    %c0_23 = arith.constant 0 : index
    %c0_24 = arith.constant 0 : index
    %28 = vector.load %arg3[%c0_23, %c0_24] : memref<1x8xf32, #tpu.memory_space<vmem>>, vector<1x8xf32>
    %cst_25 = arith.constant 9.99999974E-6 : f32
    %29 = vector.broadcast %cst_25 : f32 to vector<1x8xf32>
    %30 = arith.addf %27, %29 : vector<1x8xf32>
    %31 = math.rsqrt %30 : vector<1x8xf32>
    %32 = arith.mulf %28, %31 : vector<1x8xf32>
    %c0_26 = arith.constant 0 : index
    %c0_27 = arith.constant 0 : index
    %33 = vector.load %arg4[%c0_26, %c0_27] : memref<1x8xf32, #tpu.memory_space<vmem>>, vector<1x8xf32>
    %34 = arith.mulf %21, %32 : vector<1x8xf32>
    %35 = arith.subf %33, %34 : vector<1x8xf32>
    %c0_i32_28 = arith.constant 0 : i32
    %36 = arith.cmpi eq, %arg0, %c0_i32_28 : i32
    %37 = arith.extui %36 : i1 to i32
    %c0_i32_29 = arith.constant 0 : i32
    %38 = arith.cmpi ne, %37, %c0_i32_29 : i32
    scf.if %38 {
      %c0_30 = arith.constant 0 : index
      %c0_31 = arith.constant 0 : index
      %39 = vector.load %arg8[%c0_30, %c0_31] : memref<512x8xf32, #tpu.memory_space<vmem>>, vector<512x8xf32>
      %40 = vector.broadcast %32 : vector<1x8xf32> to vector<512x8xf32>
      %41 = arith.mulf %39, %40 : vector<512x8xf32>
      %42 = vector.broadcast %35 : vector<1x8xf32> to vector<512x8xf32>
      %43 = arith.addf %41, %42 : vector<512x8xf32>
      %cst_32 = arith.constant 0.000000e+00 : f32
      %44 = vector.broadcast %cst_32 : f32 to vector<512x8xf32>
      %45 = arith.cmpf oge, %43, %44 : vector<512x8xf32>
      %cst_33 = arith.constant 2.000000e-01 : f32
      %46 = vector.broadcast %cst_33 : f32 to vector<512x8xf32>
      %47 = arith.mulf %46, %43 : vector<512x8xf32>
      %48 = arith.select %45, %43, %47 : vector<512x8xi1>, vector<512x8xf32>
      %c0_34 = arith.constant 0 : index
      %c0_35 = arith.constant 0 : index
      %49 = vector.load %arg7[%c0_34, %c0_35] : memref<512x8xf32, #tpu.memory_space<vmem>>, vector<512x8xf32>
      tpu.vector_store %arg7[%c0_34, %c0_35], %48 {strides = array<i32>} : memref<512x8xf32, #tpu.memory_space<vmem>>, vector<512x8xf32>,
    } else {
    }
    return
  }
  func.func @transform_0(%arg0: i32) -> (i32, i32) {
    %c0_i32 = arith.constant 0 : i32
    %c0_i32_0 = arith.constant 0 : i32
    return %arg0, %c0_i32 : i32, i32
  }
  func.func @transform_1(%arg0: i32) -> (i32, i32) {
    %c0_i32 = arith.constant 0 : i32
    %c0_i32_0 = arith.constant 0 : i32
    %c0_i32_1 = arith.constant 0 : i32
    return %c0_i32, %c0_i32_0 : i32, i32
  }
  func.func @transform_2(%arg0: i32) -> (i32, i32) {
    %c0_i32 = arith.constant 0 : i32
    %c0_i32_0 = arith.constant 0 : i32
    %c0_i32_1 = arith.constant 0 : i32
    return %c0_i32, %c0_i32_0 : i32, i32
  }
  func.func @transform_3(%arg0: i32) -> (i32, i32) {
    %c0_i32 = arith.constant 0 : i32
    %c0_i32_0 = arith.constant 0 : i32
    %c0_i32_1 = arith.constant 0 : i32
    return %c0_i32, %c0_i32_0 : i32, i32
  }
  func.func @transform_4(%arg0: i32) -> (i32, i32) {
    %c0_i32 = arith.constant 0 : i32
    %c0_i32_0 = arith.constant 0 : i32
    %c0_i32_1 = arith.constant 0 : i32
    return %c0_i32, %c0_i32_0 : i32, i32
  }
  func.func @transform_5(%arg0: i32) -> (i32, i32) {
    %c0_i32 = arith.constant 0 : i32
    %c0_i32_0 = arith.constant 0 : i32
    %c0_i32_1 = arith.constant 0 : i32
    return %c0_i32, %c0_i32_0 : i32, i32
  }
  func.func @transform_6(%arg0: i32) -> (i32, i32) {
    %c0_i32 = arith.constant 0 : i32
    %c0_i32_0 = arith.constant 0 : i32
    %c0_i32_1 = arith.constant 0 : i32
    return %c0_i32, %c0_i32_0 : i32, i32
  }
}

module attributes {stable_mosaic.version = 11 : i64} {
  func.func @_fused_conv_bn_act_kernel(%arg0: i32, %arg1: memref<128x128xf32, #tpu.memory_space<vmem>>, %arg2: memref<128x16xf32, #tpu.memory_space<vmem>>, %arg3: memref<1x16xf32, #tpu.memory_space<vmem>>, %arg4: memref<1x16xf32, #tpu.memory_space<vmem>>, %arg5: memref<16x16xf32, #tpu.memory_space<vmem>>, %arg6: memref<16x16xf32, #tpu.memory_space<vmem>>, %arg7: memref<128x16xf32, #tpu.memory_space<vmem>>, %arg8: memref<128x16xf32, #tpu.memory_space<vmem>>, %arg9: memref<1x16xf32, #tpu.memory_space<vmem>>, %arg10: memref<1x16xf32, #tpu.memory_space<vmem>>) attributes {dimension_semantics = [#tpu.dimension_semantics<arbitrary>], iteration_bounds = array<i64: 1>, scalar_prefetch = 0 : i64, scratch_operands = 3 : i64, tpu.core_type = #tpu.core_type<tc>, window_params = [{transform_indices = @transform_0, window_bounds = array<i64: 128, 128>}, {pipeline_mode = #tpu.pipeline_mode<synchronous>, transform_indices = @transform_1, window_bounds = array<i64: 128, 16>}, {pipeline_mode = #tpu.pipeline_mode<synchronous>, transform_indices = @transform_2, window_bounds = array<i64: 1, 16>}, {pipeline_mode = #tpu.pipeline_mode<synchronous>, transform_indices = @transform_3, window_bounds = array<i64: 1, 16>}, {pipeline_mode = #tpu.pipeline_mode<synchronous>, transform_indices = @transform_4, window_bounds = array<i64: 16, 16>}, {pipeline_mode = #tpu.pipeline_mode<synchronous>, transform_indices = @transform_5, window_bounds = array<i64: 16, 16>}, {pipeline_mode = #tpu.pipeline_mode<synchronous>, transform_indices = @transform_6, window_bounds = array<i64: 128, 16>}]} {
    %c0 = arith.constant 0 : index
    %c0_0 = arith.constant 0 : index
    %0 = vector.load %arg1[%c0, %c0_0] : memref<128x128xf32, #tpu.memory_space<vmem>>, vector<128x128xf32>
    %c0_1 = arith.constant 0 : index
    %c0_2 = arith.constant 0 : index
    %1 = vector.load %arg2[%c0_1, %c0_2] : memref<128x16xf32, #tpu.memory_space<vmem>>, vector<128x16xf32>
    %cst = arith.constant dense<0.000000e+00> : vector<128x16xf32>
    %2 = tpu.matmul %0, %1, %cst {dimension_numbers = #tpu.dot_dimension_numbers<[1], [0], [0], [1], [0, 0, 1, 1], [], []>} : vector<128x128xf32>, vector<128x16xf32>, vector<128x16xf32> -> vector<128x16xf32>
    %c0_i32 = arith.constant 0 : i32
    %3 = arith.cmpi eq, %arg0, %c0_i32 : i32
    %4 = arith.extui %3 : i1 to i32
    %c0_i32_3 = arith.constant 0 : i32
    %5 = arith.cmpi ne, %4, %c0_i32_3 : i32
    scf.if %5 {
      %cst_30 = arith.constant 0.000000e+00 : f32
      %39 = vector.broadcast %cst_30 : f32 to vector<1x16xf32>
      %c0_31 = arith.constant 0 : index
      %c0_32 = arith.constant 0 : index
      %40 = vector.load %arg9[%c0_31, %c0_32] : memref<1x16xf32, #tpu.memory_space<vmem>>, vector<1x16xf32>
      tpu.vector_store %arg9[%c0_31, %c0_32], %39 {strides = array<i32>} : memref<1x16xf32, #tpu.memory_space<vmem>>, vector<1x16xf32>,
      %cst_33 = arith.constant 0.000000e+00 : f32
      %41 = vector.broadcast %cst_33 : f32 to vector<1x16xf32>
      %c0_34 = arith.constant 0 : index
      %c0_35 = arith.constant 0 : index
      %42 = vector.load %arg10[%c0_34, %c0_35] : memref<1x16xf32, #tpu.memory_space<vmem>>, vector<1x16xf32>
      tpu.vector_store %arg10[%c0_34, %c0_35], %41 {strides = array<i32>} : memref<1x16xf32, #tpu.memory_space<vmem>>, vector<1x16xf32>,
    } else {
    }
    %c0_4 = arith.constant 0 : index
    %c0_5 = arith.constant 0 : index
    %6 = vector.load %arg9[%c0_4, %c0_5] : memref<1x16xf32, #tpu.memory_space<vmem>>, vector<1x16xf32>
    %cst_6 = arith.constant dense<0.000000e+00> : vector<16xf32>
    %7 = vector.multi_reduction <add>, %2, %cst_6 [0] : vector<128x16xf32> to vector<16xf32>
    %8 = vector.shape_cast %7 : vector<16xf32> to vector<1x16xf32>
    %9 = arith.addf %6, %8 : vector<1x16xf32>
    %c0_7 = arith.constant 0 : index
    %c0_8 = arith.constant 0 : index
    %10 = vector.load %arg9[%c0_7, %c0_8] : memref<1x16xf32, #tpu.memory_space<vmem>>, vector<1x16xf32>
    tpu.vector_store %arg9[%c0_7, %c0_8], %9 {strides = array<i32>} : memref<1x16xf32, #tpu.memory_space<vmem>>, vector<1x16xf32>,
    %c0_9 = arith.constant 0 : index
    %c0_10 = arith.constant 0 : index
    %11 = vector.load %arg10[%c0_9, %c0_10] : memref<1x16xf32, #tpu.memory_space<vmem>>, vector<1x16xf32>
    %12 = arith.mulf %2, %2 : vector<128x16xf32>
    %cst_11 = arith.constant dense<0.000000e+00> : vector<16xf32>
    %13 = vector.multi_reduction <add>, %12, %cst_11 [0] : vector<128x16xf32> to vector<16xf32>
    %14 = vector.shape_cast %13 : vector<16xf32> to vector<1x16xf32>
    %15 = arith.addf %11, %14 : vector<1x16xf32>
    %c0_12 = arith.constant 0 : index
    %c0_13 = arith.constant 0 : index
    %16 = vector.load %arg10[%c0_12, %c0_13] : memref<1x16xf32, #tpu.memory_space<vmem>>, vector<1x16xf32>
    tpu.vector_store %arg10[%c0_12, %c0_13], %15 {strides = array<i32>} : memref<1x16xf32, #tpu.memory_space<vmem>>, vector<1x16xf32>,
    %c0_14 = arith.constant 0 : index
    %c0_15 = arith.constant 0 : index
    %17 = vector.load %arg8[%c0_14, %c0_15] : memref<128x16xf32, #tpu.memory_space<vmem>>, vector<128x16xf32>
    tpu.vector_store %arg8[%c0_14, %c0_15], %2 {strides = array<i32>} : memref<128x16xf32, #tpu.memory_space<vmem>>, vector<128x16xf32>,
    %c0_16 = arith.constant 0 : index
    %c0_17 = arith.constant 0 : index
    %18 = vector.load %arg9[%c0_16, %c0_17] : memref<1x16xf32, #tpu.memory_space<vmem>>, vector<1x16xf32>
    %c0_18 = arith.constant 0 : index
    %c0_19 = arith.constant 0 : index
    %19 = vector.load %arg10[%c0_18, %c0_19] : memref<1x16xf32, #tpu.memory_space<vmem>>, vector<1x16xf32>
    %cst_20 = arith.constant 7.812500e-03 : f32
    %20 = vector.broadcast %cst_20 : f32 to vector<1x16xf32>
    %21 = arith.mulf %18, %20 : vector<1x16xf32>
    %cst_21 = arith.constant 7.812500e-03 : f32
    %22 = vector.broadcast %cst_21 : f32 to vector<1x16xf32>
    %23 = arith.mulf %19, %22 : vector<1x16xf32>
    %24 = arith.mulf %21, %21 : vector<1x16xf32>
    %25 = arith.subf %23, %24 : vector<1x16xf32>
    %cst_22 = arith.constant 0.000000e+00 : f32
    %26 = vector.broadcast %cst_22 : f32 to vector<1x16xf32>
    %27 = arith.maximumf %25, %26 : vector<1x16xf32>
    %c0_23 = arith.constant 0 : index
    %c0_24 = arith.constant 0 : index
    %28 = vector.load %arg3[%c0_23, %c0_24] : memref<1x16xf32, #tpu.memory_space<vmem>>, vector<1x16xf32>
    %cst_25 = arith.constant 9.99999974E-6 : f32
    %29 = vector.broadcast %cst_25 : f32 to vector<1x16xf32>
    %30 = arith.addf %27, %29 : vector<1x16xf32>
    %31 = math.rsqrt %30 : vector<1x16xf32>
    %32 = arith.mulf %28, %31 : vector<1x16xf32>
    %c0_26 = arith.constant 0 : index
    %c0_27 = arith.constant 0 : index
    %33 = vector.load %arg4[%c0_26, %c0_27] : memref<1x16xf32, #tpu.memory_space<vmem>>, vector<1x16xf32>
    %34 = arith.mulf %21, %32 : vector<1x16xf32>
    %35 = arith.subf %33, %34 : vector<1x16xf32>
    %c0_i32_28 = arith.constant 0 : i32
    %36 = arith.cmpi eq, %arg0, %c0_i32_28 : i32
    %37 = arith.extui %36 : i1 to i32
    %c0_i32_29 = arith.constant 0 : i32
    %38 = arith.cmpi ne, %37, %c0_i32_29 : i32
    scf.if %38 {
      %c0_30 = arith.constant 0 : index
      %c0_31 = arith.constant 0 : index
      %39 = vector.load %arg8[%c0_30, %c0_31] : memref<128x16xf32, #tpu.memory_space<vmem>>, vector<128x16xf32>
      %40 = vector.broadcast %32 : vector<1x16xf32> to vector<128x16xf32>
      %41 = arith.mulf %39, %40 : vector<128x16xf32>
      %42 = vector.broadcast %35 : vector<1x16xf32> to vector<128x16xf32>
      %43 = arith.addf %41, %42 : vector<128x16xf32>
      %cst_32 = arith.constant 0.000000e+00 : f32
      %44 = vector.broadcast %cst_32 : f32 to vector<128x16xf32>
      %45 = arith.cmpf oge, %43, %44 : vector<128x16xf32>
      %cst_33 = arith.constant 2.000000e-01 : f32
      %46 = vector.broadcast %cst_33 : f32 to vector<128x16xf32>
      %47 = arith.mulf %46, %43 : vector<128x16xf32>
      %48 = arith.select %45, %43, %47 : vector<128x16xi1>, vector<128x16xf32>
      %c0_34 = arith.constant 0 : index
      %c0_35 = arith.constant 0 : index
      %49 = vector.load %arg7[%c0_34, %c0_35] : memref<128x16xf32, #tpu.memory_space<vmem>>, vector<128x16xf32>
      tpu.vector_store %arg7[%c0_34, %c0_35], %48 {strides = array<i32>} : memref<128x16xf32, #tpu.memory_space<vmem>>, vector<128x16xf32>,
    } else {
    }
    return
  }
  func.func @transform_0(%arg0: i32) -> (i32, i32) {
    %c0_i32 = arith.constant 0 : i32
    %c0_i32_0 = arith.constant 0 : i32
    return %arg0, %c0_i32 : i32, i32
  }
  func.func @transform_1(%arg0: i32) -> (i32, i32) {
    %c0_i32 = arith.constant 0 : i32
    %c0_i32_0 = arith.constant 0 : i32
    %c0_i32_1 = arith.constant 0 : i32
    return %c0_i32, %c0_i32_0 : i32, i32
  }
  func.func @transform_2(%arg0: i32) -> (i32, i32) {
    %c0_i32 = arith.constant 0 : i32
    %c0_i32_0 = arith.constant 0 : i32
    %c0_i32_1 = arith.constant 0 : i32
    return %c0_i32, %c0_i32_0 : i32, i32
  }
  func.func @transform_3(%arg0: i32) -> (i32, i32) {
    %c0_i32 = arith.constant 0 : i32
    %c0_i32_0 = arith.constant 0 : i32
    %c0_i32_1 = arith.constant 0 : i32
    return %c0_i32, %c0_i32_0 : i32, i32
  }
  func.func @transform_4(%arg0: i32) -> (i32, i32) {
    %c0_i32 = arith.constant 0 : i32
    %c0_i32_0 = arith.constant 0 : i32
    %c0_i32_1 = arith.constant 0 : i32
    return %c0_i32, %c0_i32_0 : i32, i32
  }
  func.func @transform_5(%arg0: i32) -> (i32, i32) {
    %c0_i32 = arith.constant 0 : i32
    %c0_i32_0 = arith.constant 0 : i32
    %c0_i32_1 = arith.constant 0 : i32
    return %c0_i32, %c0_i32_0 : i32, i32
  }
  func.func @transform_6(%arg0: i32) -> (i32, i32) {
    %c0_i32 = arith.constant 0 : i32
    %c0_i32_0 = arith.constant 0 : i32
    %c0_i32_1 = arith.constant 0 : i32
    return %c0_i32, %c0_i32_0 : i32, i32
  }
}

module attributes {stable_mosaic.version = 11 : i64} {
  func.func @_fused_conv_bn_act_kernel(%arg0: i32, %arg1: memref<32x256xf32, #tpu.memory_space<vmem>>, %arg2: memref<256x32xf32, #tpu.memory_space<vmem>>, %arg3: memref<1x32xf32, #tpu.memory_space<vmem>>, %arg4: memref<1x32xf32, #tpu.memory_space<vmem>>, %arg5: memref<32x32xf32, #tpu.memory_space<vmem>>, %arg6: memref<32x32xf32, #tpu.memory_space<vmem>>, %arg7: memref<32x32xf32, #tpu.memory_space<vmem>>, %arg8: memref<32x32xf32, #tpu.memory_space<vmem>>, %arg9: memref<1x32xf32, #tpu.memory_space<vmem>>, %arg10: memref<1x32xf32, #tpu.memory_space<vmem>>) attributes {dimension_semantics = [#tpu.dimension_semantics<arbitrary>], iteration_bounds = array<i64: 1>, scalar_prefetch = 0 : i64, scratch_operands = 3 : i64, tpu.core_type = #tpu.core_type<tc>, window_params = [{transform_indices = @transform_0, window_bounds = array<i64: 32, 256>}, {pipeline_mode = #tpu.pipeline_mode<synchronous>, transform_indices = @transform_1, window_bounds = array<i64: 256, 32>}, {pipeline_mode = #tpu.pipeline_mode<synchronous>, transform_indices = @transform_2, window_bounds = array<i64: 1, 32>}, {pipeline_mode = #tpu.pipeline_mode<synchronous>, transform_indices = @transform_3, window_bounds = array<i64: 1, 32>}, {pipeline_mode = #tpu.pipeline_mode<synchronous>, transform_indices = @transform_4, window_bounds = array<i64: 32, 32>}, {pipeline_mode = #tpu.pipeline_mode<synchronous>, transform_indices = @transform_5, window_bounds = array<i64: 32, 32>}, {pipeline_mode = #tpu.pipeline_mode<synchronous>, transform_indices = @transform_6, window_bounds = array<i64: 32, 32>}]} {
    %c0 = arith.constant 0 : index
    %c0_0 = arith.constant 0 : index
    %0 = vector.load %arg1[%c0, %c0_0] : memref<32x256xf32, #tpu.memory_space<vmem>>, vector<32x256xf32>
    %c0_1 = arith.constant 0 : index
    %c0_2 = arith.constant 0 : index
    %1 = vector.load %arg2[%c0_1, %c0_2] : memref<256x32xf32, #tpu.memory_space<vmem>>, vector<256x32xf32>
    %cst = arith.constant dense<0.000000e+00> : vector<32x32xf32>
    %2 = tpu.matmul %0, %1, %cst {dimension_numbers = #tpu.dot_dimension_numbers<[1], [0], [0], [1], [0, 0, 1, 1], [], []>} : vector<32x256xf32>, vector<256x32xf32>, vector<32x32xf32> -> vector<32x32xf32>
    %c0_i32 = arith.constant 0 : i32
    %3 = arith.cmpi eq, %arg0, %c0_i32 : i32
    %4 = arith.extui %3 : i1 to i32
    %c0_i32_3 = arith.constant 0 : i32
    %5 = arith.cmpi ne, %4, %c0_i32_3 : i32
    scf.if %5 {
      %cst_30 = arith.constant 0.000000e+00 : f32
      %39 = vector.broadcast %cst_30 : f32 to vector<1x32xf32>
      %c0_31 = arith.constant 0 : index
      %c0_32 = arith.constant 0 : index
      %40 = vector.load %arg9[%c0_31, %c0_32] : memref<1x32xf32, #tpu.memory_space<vmem>>, vector<1x32xf32>
      tpu.vector_store %arg9[%c0_31, %c0_32], %39 {strides = array<i32>} : memref<1x32xf32, #tpu.memory_space<vmem>>, vector<1x32xf32>,
      %cst_33 = arith.constant 0.000000e+00 : f32
      %41 = vector.broadcast %cst_33 : f32 to vector<1x32xf32>
      %c0_34 = arith.constant 0 : index
      %c0_35 = arith.constant 0 : index
      %42 = vector.load %arg10[%c0_34, %c0_35] : memref<1x32xf32, #tpu.memory_space<vmem>>, vector<1x32xf32>
      tpu.vector_store %arg10[%c0_34, %c0_35], %41 {strides = array<i32>} : memref<1x32xf32, #tpu.memory_space<vmem>>, vector<1x32xf32>,
    } else {
    }
    %c0_4 = arith.constant 0 : index
    %c0_5 = arith.constant 0 : index
    %6 = vector.load %arg9[%c0_4, %c0_5] : memref<1x32xf32, #tpu.memory_space<vmem>>, vector<1x32xf32>
    %cst_6 = arith.constant dense<0.000000e+00> : vector<32xf32>
    %7 = vector.multi_reduction <add>, %2, %cst_6 [0] : vector<32x32xf32> to vector<32xf32>
    %8 = vector.shape_cast %7 : vector<32xf32> to vector<1x32xf32>
    %9 = arith.addf %6, %8 : vector<1x32xf32>
    %c0_7 = arith.constant 0 : index
    %c0_8 = arith.constant 0 : index
    %10 = vector.load %arg9[%c0_7, %c0_8] : memref<1x32xf32, #tpu.memory_space<vmem>>, vector<1x32xf32>
    tpu.vector_store %arg9[%c0_7, %c0_8], %9 {strides = array<i32>} : memref<1x32xf32, #tpu.memory_space<vmem>>, vector<1x32xf32>,
    %c0_9 = arith.constant 0 : index
    %c0_10 = arith.constant 0 : index
    %11 = vector.load %arg10[%c0_9, %c0_10] : memref<1x32xf32, #tpu.memory_space<vmem>>, vector<1x32xf32>
    %12 = arith.mulf %2, %2 : vector<32x32xf32>
    %cst_11 = arith.constant dense<0.000000e+00> : vector<32xf32>
    %13 = vector.multi_reduction <add>, %12, %cst_11 [0] : vector<32x32xf32> to vector<32xf32>
    %14 = vector.shape_cast %13 : vector<32xf32> to vector<1x32xf32>
    %15 = arith.addf %11, %14 : vector<1x32xf32>
    %c0_12 = arith.constant 0 : index
    %c0_13 = arith.constant 0 : index
    %16 = vector.load %arg10[%c0_12, %c0_13] : memref<1x32xf32, #tpu.memory_space<vmem>>, vector<1x32xf32>
    tpu.vector_store %arg10[%c0_12, %c0_13], %15 {strides = array<i32>} : memref<1x32xf32, #tpu.memory_space<vmem>>, vector<1x32xf32>,
    %c0_14 = arith.constant 0 : index
    %c0_15 = arith.constant 0 : index
    %17 = vector.load %arg8[%c0_14, %c0_15] : memref<32x32xf32, #tpu.memory_space<vmem>>, vector<32x32xf32>
    tpu.vector_store %arg8[%c0_14, %c0_15], %2 {strides = array<i32>} : memref<32x32xf32, #tpu.memory_space<vmem>>, vector<32x32xf32>,
    %c0_16 = arith.constant 0 : index
    %c0_17 = arith.constant 0 : index
    %18 = vector.load %arg9[%c0_16, %c0_17] : memref<1x32xf32, #tpu.memory_space<vmem>>, vector<1x32xf32>
    %c0_18 = arith.constant 0 : index
    %c0_19 = arith.constant 0 : index
    %19 = vector.load %arg10[%c0_18, %c0_19] : memref<1x32xf32, #tpu.memory_space<vmem>>, vector<1x32xf32>
    %cst_20 = arith.constant 3.125000e-02 : f32
    %20 = vector.broadcast %cst_20 : f32 to vector<1x32xf32>
    %21 = arith.mulf %18, %20 : vector<1x32xf32>
    %cst_21 = arith.constant 3.125000e-02 : f32
    %22 = vector.broadcast %cst_21 : f32 to vector<1x32xf32>
    %23 = arith.mulf %19, %22 : vector<1x32xf32>
    %24 = arith.mulf %21, %21 : vector<1x32xf32>
    %25 = arith.subf %23, %24 : vector<1x32xf32>
    %cst_22 = arith.constant 0.000000e+00 : f32
    %26 = vector.broadcast %cst_22 : f32 to vector<1x32xf32>
    %27 = arith.maximumf %25, %26 : vector<1x32xf32>
    %c0_23 = arith.constant 0 : index
    %c0_24 = arith.constant 0 : index
    %28 = vector.load %arg3[%c0_23, %c0_24] : memref<1x32xf32, #tpu.memory_space<vmem>>, vector<1x32xf32>
    %cst_25 = arith.constant 9.99999974E-6 : f32
    %29 = vector.broadcast %cst_25 : f32 to vector<1x32xf32>
    %30 = arith.addf %27, %29 : vector<1x32xf32>
    %31 = math.rsqrt %30 : vector<1x32xf32>
    %32 = arith.mulf %28, %31 : vector<1x32xf32>
    %c0_26 = arith.constant 0 : index
    %c0_27 = arith.constant 0 : index
    %33 = vector.load %arg4[%c0_26, %c0_27] : memref<1x32xf32, #tpu.memory_space<vmem>>, vector<1x32xf32>
    %34 = arith.mulf %21, %32 : vector<1x32xf32>
    %35 = arith.subf %33, %34 : vector<1x32xf32>
    %c0_i32_28 = arith.constant 0 : i32
    %36 = arith.cmpi eq, %arg0, %c0_i32_28 : i32
    %37 = arith.extui %36 : i1 to i32
    %c0_i32_29 = arith.constant 0 : i32
    %38 = arith.cmpi ne, %37, %c0_i32_29 : i32
    scf.if %38 {
      %c0_30 = arith.constant 0 : index
      %c0_31 = arith.constant 0 : index
      %39 = vector.load %arg8[%c0_30, %c0_31] : memref<32x32xf32, #tpu.memory_space<vmem>>, vector<32x32xf32>
      %40 = vector.broadcast %32 : vector<1x32xf32> to vector<32x32xf32>
      %41 = arith.mulf %39, %40 : vector<32x32xf32>
      %42 = vector.broadcast %35 : vector<1x32xf32> to vector<32x32xf32>
      %43 = arith.addf %41, %42 : vector<32x32xf32>
      %cst_32 = arith.constant 0.000000e+00 : f32
      %44 = vector.broadcast %cst_32 : f32 to vector<32x32xf32>
      %45 = arith.cmpf oge, %43, %44 : vector<32x32xf32>
      %cst_33 = arith.constant 2.000000e-01 : f32
      %46 = vector.broadcast %cst_33 : f32 to vector<32x32xf32>
      %47 = arith.mulf %46, %43 : vector<32x32xf32>
      %48 = arith.select %45, %43, %47 : vector<32x32xi1>, vector<32x32xf32>
      %c0_34 = arith.constant 0 : index
      %c0_35 = arith.constant 0 : index
      %49 = vector.load %arg7[%c0_34, %c0_35] : memref<32x32xf32, #tpu.memory_space<vmem>>, vector<32x32xf32>
      tpu.vector_store %arg7[%c0_34, %c0_35], %48 {strides = array<i32>} : memref<32x32xf32, #tpu.memory_space<vmem>>, vector<32x32xf32>,
    } else {
    }
    return
  }
  func.func @transform_0(%arg0: i32) -> (i32, i32) {
    %c0_i32 = arith.constant 0 : i32
    %c0_i32_0 = arith.constant 0 : i32
    return %arg0, %c0_i32 : i32, i32
  }
  func.func @transform_1(%arg0: i32) -> (i32, i32) {
    %c0_i32 = arith.constant 0 : i32
    %c0_i32_0 = arith.constant 0 : i32
    %c0_i32_1 = arith.constant 0 : i32
    return %c0_i32, %c0_i32_0 : i32, i32
  }
  func.func @transform_2(%arg0: i32) -> (i32, i32) {
    %c0_i32 = arith.constant 0 : i32
    %c0_i32_0 = arith.constant 0 : i32
    %c0_i32_1 = arith.constant 0 : i32
    return %c0_i32, %c0_i32_0 : i32, i32
  }
  func.func @transform_3(%arg0: i32) -> (i32, i32) {
    %c0_i32 = arith.constant 0 : i32
    %c0_i32_0 = arith.constant 0 : i32
    %c0_i32_1 = arith.constant 0 : i32
    return %c0_i32, %c0_i32_0 : i32, i32
  }
  func.func @transform_4(%arg0: i32) -> (i32, i32) {
    %c0_i32 = arith.constant 0 : i32
    %c0_i32_0 = arith.constant 0 : i32
    %c0_i32_1 = arith.constant 0 : i32
    return %c0_i32, %c0_i32_0 : i32, i32
  }
  func.func @transform_5(%arg0: i32) -> (i32, i32) {
    %c0_i32 = arith.constant 0 : i32
    %c0_i32_0 = arith.constant 0 : i32
    %c0_i32_1 = arith.constant 0 : i32
    return %c0_i32, %c0_i32_0 : i32, i32
  }
  func.func @transform_6(%arg0: i32) -> (i32, i32) {
    %c0_i32 = arith.constant 0 : i32
    %c0_i32_0 = arith.constant 0 : i32
    %c0_i32_1 = arith.constant 0 : i32
    return %c0_i32, %c0_i32_0 : i32, i32
  }
}

module attributes {stable_mosaic.version = 11 : i64} {
  func.func @_fused_conv_bn_act_kernel(%arg0: i32, %arg1: memref<8x512xf32, #tpu.memory_space<vmem>>, %arg2: memref<512x64xf32, #tpu.memory_space<vmem>>, %arg3: memref<1x64xf32, #tpu.memory_space<vmem>>, %arg4: memref<1x64xf32, #tpu.memory_space<vmem>>, %arg5: memref<64x64xf32, #tpu.memory_space<vmem>>, %arg6: memref<64x64xf32, #tpu.memory_space<vmem>>, %arg7: memref<8x64xf32, #tpu.memory_space<vmem>>, %arg8: memref<8x64xf32, #tpu.memory_space<vmem>>, %arg9: memref<1x64xf32, #tpu.memory_space<vmem>>, %arg10: memref<1x64xf32, #tpu.memory_space<vmem>>) attributes {dimension_semantics = [#tpu.dimension_semantics<arbitrary>], iteration_bounds = array<i64: 1>, scalar_prefetch = 0 : i64, scratch_operands = 3 : i64, tpu.core_type = #tpu.core_type<tc>, window_params = [{transform_indices = @transform_0, window_bounds = array<i64: 8, 512>}, {pipeline_mode = #tpu.pipeline_mode<synchronous>, transform_indices = @transform_1, window_bounds = array<i64: 512, 64>}, {pipeline_mode = #tpu.pipeline_mode<synchronous>, transform_indices = @transform_2, window_bounds = array<i64: 1, 64>}, {pipeline_mode = #tpu.pipeline_mode<synchronous>, transform_indices = @transform_3, window_bounds = array<i64: 1, 64>}, {pipeline_mode = #tpu.pipeline_mode<synchronous>, transform_indices = @transform_4, window_bounds = array<i64: 64, 64>}, {pipeline_mode = #tpu.pipeline_mode<synchronous>, transform_indices = @transform_5, window_bounds = array<i64: 64, 64>}, {pipeline_mode = #tpu.pipeline_mode<synchronous>, transform_indices = @transform_6, window_bounds = array<i64: 8, 64>}]} {
    %c0 = arith.constant 0 : index
    %c0_0 = arith.constant 0 : index
    %0 = vector.load %arg1[%c0, %c0_0] : memref<8x512xf32, #tpu.memory_space<vmem>>, vector<8x512xf32>
    %c0_1 = arith.constant 0 : index
    %c0_2 = arith.constant 0 : index
    %1 = vector.load %arg2[%c0_1, %c0_2] : memref<512x64xf32, #tpu.memory_space<vmem>>, vector<512x64xf32>
    %cst = arith.constant dense<0.000000e+00> : vector<8x64xf32>
    %2 = tpu.matmul %0, %1, %cst {dimension_numbers = #tpu.dot_dimension_numbers<[1], [0], [0], [1], [0, 0, 1, 1], [], []>} : vector<8x512xf32>, vector<512x64xf32>, vector<8x64xf32> -> vector<8x64xf32>
    %c0_i32 = arith.constant 0 : i32
    %3 = arith.cmpi eq, %arg0, %c0_i32 : i32
    %4 = arith.extui %3 : i1 to i32
    %c0_i32_3 = arith.constant 0 : i32
    %5 = arith.cmpi ne, %4, %c0_i32_3 : i32
    scf.if %5 {
      %cst_30 = arith.constant 0.000000e+00 : f32
      %39 = vector.broadcast %cst_30 : f32 to vector<1x64xf32>
      %c0_31 = arith.constant 0 : index
      %c0_32 = arith.constant 0 : index
      %40 = vector.load %arg9[%c0_31, %c0_32] : memref<1x64xf32, #tpu.memory_space<vmem>>, vector<1x64xf32>
      tpu.vector_store %arg9[%c0_31, %c0_32], %39 {strides = array<i32>} : memref<1x64xf32, #tpu.memory_space<vmem>>, vector<1x64xf32>,
      %cst_33 = arith.constant 0.000000e+00 : f32
      %41 = vector.broadcast %cst_33 : f32 to vector<1x64xf32>
      %c0_34 = arith.constant 0 : index
      %c0_35 = arith.constant 0 : index
      %42 = vector.load %arg10[%c0_34, %c0_35] : memref<1x64xf32, #tpu.memory_space<vmem>>, vector<1x64xf32>
      tpu.vector_store %arg10[%c0_34, %c0_35], %41 {strides = array<i32>} : memref<1x64xf32, #tpu.memory_space<vmem>>, vector<1x64xf32>,
    } else {
    }
    %c0_4 = arith.constant 0 : index
    %c0_5 = arith.constant 0 : index
    %6 = vector.load %arg9[%c0_4, %c0_5] : memref<1x64xf32, #tpu.memory_space<vmem>>, vector<1x64xf32>
    %cst_6 = arith.constant dense<0.000000e+00> : vector<64xf32>
    %7 = vector.multi_reduction <add>, %2, %cst_6 [0] : vector<8x64xf32> to vector<64xf32>
    %8 = vector.shape_cast %7 : vector<64xf32> to vector<1x64xf32>
    %9 = arith.addf %6, %8 : vector<1x64xf32>
    %c0_7 = arith.constant 0 : index
    %c0_8 = arith.constant 0 : index
    %10 = vector.load %arg9[%c0_7, %c0_8] : memref<1x64xf32, #tpu.memory_space<vmem>>, vector<1x64xf32>
    tpu.vector_store %arg9[%c0_7, %c0_8], %9 {strides = array<i32>} : memref<1x64xf32, #tpu.memory_space<vmem>>, vector<1x64xf32>,
    %c0_9 = arith.constant 0 : index
    %c0_10 = arith.constant 0 : index
    %11 = vector.load %arg10[%c0_9, %c0_10] : memref<1x64xf32, #tpu.memory_space<vmem>>, vector<1x64xf32>
    %12 = arith.mulf %2, %2 : vector<8x64xf32>
    %cst_11 = arith.constant dense<0.000000e+00> : vector<64xf32>
    %13 = vector.multi_reduction <add>, %12, %cst_11 [0] : vector<8x64xf32> to vector<64xf32>
    %14 = vector.shape_cast %13 : vector<64xf32> to vector<1x64xf32>
    %15 = arith.addf %11, %14 : vector<1x64xf32>
    %c0_12 = arith.constant 0 : index
    %c0_13 = arith.constant 0 : index
    %16 = vector.load %arg10[%c0_12, %c0_13] : memref<1x64xf32, #tpu.memory_space<vmem>>, vector<1x64xf32>
    tpu.vector_store %arg10[%c0_12, %c0_13], %15 {strides = array<i32>} : memref<1x64xf32, #tpu.memory_space<vmem>>, vector<1x64xf32>,
    %c0_14 = arith.constant 0 : index
    %c0_15 = arith.constant 0 : index
    %17 = vector.load %arg8[%c0_14, %c0_15] : memref<8x64xf32, #tpu.memory_space<vmem>>, vector<8x64xf32>
    tpu.vector_store %arg8[%c0_14, %c0_15], %2 {strides = array<i32>} : memref<8x64xf32, #tpu.memory_space<vmem>>, vector<8x64xf32>,
    %c0_16 = arith.constant 0 : index
    %c0_17 = arith.constant 0 : index
    %18 = vector.load %arg9[%c0_16, %c0_17] : memref<1x64xf32, #tpu.memory_space<vmem>>, vector<1x64xf32>
    %c0_18 = arith.constant 0 : index
    %c0_19 = arith.constant 0 : index
    %19 = vector.load %arg10[%c0_18, %c0_19] : memref<1x64xf32, #tpu.memory_space<vmem>>, vector<1x64xf32>
    %cst_20 = arith.constant 1.250000e-01 : f32
    %20 = vector.broadcast %cst_20 : f32 to vector<1x64xf32>
    %21 = arith.mulf %18, %20 : vector<1x64xf32>
    %cst_21 = arith.constant 1.250000e-01 : f32
    %22 = vector.broadcast %cst_21 : f32 to vector<1x64xf32>
    %23 = arith.mulf %19, %22 : vector<1x64xf32>
    %24 = arith.mulf %21, %21 : vector<1x64xf32>
    %25 = arith.subf %23, %24 : vector<1x64xf32>
    %cst_22 = arith.constant 0.000000e+00 : f32
    %26 = vector.broadcast %cst_22 : f32 to vector<1x64xf32>
    %27 = arith.maximumf %25, %26 : vector<1x64xf32>
    %c0_23 = arith.constant 0 : index
    %c0_24 = arith.constant 0 : index
    %28 = vector.load %arg3[%c0_23, %c0_24] : memref<1x64xf32, #tpu.memory_space<vmem>>, vector<1x64xf32>
    %cst_25 = arith.constant 9.99999974E-6 : f32
    %29 = vector.broadcast %cst_25 : f32 to vector<1x64xf32>
    %30 = arith.addf %27, %29 : vector<1x64xf32>
    %31 = math.rsqrt %30 : vector<1x64xf32>
    %32 = arith.mulf %28, %31 : vector<1x64xf32>
    %c0_26 = arith.constant 0 : index
    %c0_27 = arith.constant 0 : index
    %33 = vector.load %arg4[%c0_26, %c0_27] : memref<1x64xf32, #tpu.memory_space<vmem>>, vector<1x64xf32>
    %34 = arith.mulf %21, %32 : vector<1x64xf32>
    %35 = arith.subf %33, %34 : vector<1x64xf32>
    %c0_i32_28 = arith.constant 0 : i32
    %36 = arith.cmpi eq, %arg0, %c0_i32_28 : i32
    %37 = arith.extui %36 : i1 to i32
    %c0_i32_29 = arith.constant 0 : i32
    %38 = arith.cmpi ne, %37, %c0_i32_29 : i32
    scf.if %38 {
      %c0_30 = arith.constant 0 : index
      %c0_31 = arith.constant 0 : index
      %39 = vector.load %arg8[%c0_30, %c0_31] : memref<8x64xf32, #tpu.memory_space<vmem>>, vector<8x64xf32>
      %40 = vector.broadcast %32 : vector<1x64xf32> to vector<8x64xf32>
      %41 = arith.mulf %39, %40 : vector<8x64xf32>
      %42 = vector.broadcast %35 : vector<1x64xf32> to vector<8x64xf32>
      %43 = arith.addf %41, %42 : vector<8x64xf32>
      %cst_32 = arith.constant 0.000000e+00 : f32
      %44 = vector.broadcast %cst_32 : f32 to vector<8x64xf32>
      %45 = arith.cmpf oge, %43, %44 : vector<8x64xf32>
      %cst_33 = arith.constant 2.000000e-01 : f32
      %46 = vector.broadcast %cst_33 : f32 to vector<8x64xf32>
      %47 = arith.mulf %46, %43 : vector<8x64xf32>
      %48 = arith.select %45, %43, %47 : vector<8x64xi1>, vector<8x64xf32>
      %c0_34 = arith.constant 0 : index
      %c0_35 = arith.constant 0 : index
      %49 = vector.load %arg7[%c0_34, %c0_35] : memref<8x64xf32, #tpu.memory_space<vmem>>, vector<8x64xf32>
      tpu.vector_store %arg7[%c0_34, %c0_35], %48 {strides = array<i32>} : memref<8x64xf32, #tpu.memory_space<vmem>>, vector<8x64xf32>,
    } else {
    }
    return
  }
  func.func @transform_0(%arg0: i32) -> (i32, i32) {
    %c0_i32 = arith.constant 0 : i32
    %c0_i32_0 = arith.constant 0 : i32
    return %arg0, %c0_i32 : i32, i32
  }
  func.func @transform_1(%arg0: i32) -> (i32, i32) {
    %c0_i32 = arith.constant 0 : i32
    %c0_i32_0 = arith.constant 0 : i32
    %c0_i32_1 = arith.constant 0 : i32
    return %c0_i32, %c0_i32_0 : i32, i32
  }
  func.func @transform_2(%arg0: i32) -> (i32, i32) {
    %c0_i32 = arith.constant 0 : i32
    %c0_i32_0 = arith.constant 0 : i32
    %c0_i32_1 = arith.constant 0 : i32
    return %c0_i32, %c0_i32_0 : i32, i32
  }
  func.func @transform_3(%arg0: i32) -> (i32, i32) {
    %c0_i32 = arith.constant 0 : i32
    %c0_i32_0 = arith.constant 0 : i32
    %c0_i32_1 = arith.constant 0 : i32
    return %c0_i32, %c0_i32_0 : i32, i32
  }
  func.func @transform_4(%arg0: i32) -> (i32, i32) {
    %c0_i32 = arith.constant 0 : i32
    %c0_i32_0 = arith.constant 0 : i32
    %c0_i32_1 = arith.constant 0 : i32
    return %c0_i32, %c0_i32_0 : i32, i32
  }
  func.func @transform_5(%arg0: i32) -> (i32, i32) {
    %c0_i32 = arith.constant 0 : i32
    %c0_i32_0 = arith.constant 0 : i32
    %c0_i32_1 = arith.constant 0 : i32
    return %c0_i32, %c0_i32_0 : i32, i32
  }
  func.func @transform_6(%arg0: i32) -> (i32, i32) {
    %c0_i32 = arith.constant 0 : i32
    %c0_i32_0 = arith.constant 0 : i32
    %c0_i32_1 = arith.constant 0 : i32
    return %c0_i32, %c0_i32_0 : i32, i32
  }
}

module attributes {stable_mosaic.version = 11 : i64} {
  func.func @_fused_conv_bn_act_kernel(%arg0: i32, %arg1: memref<8x576xf32, #tpu.memory_space<vmem>>, %arg2: memref<576x128xf32, #tpu.memory_space<vmem>>, %arg3: memref<1x32xf32, #tpu.memory_space<vmem>>, %arg4: memref<1x32xf32, #tpu.memory_space<vmem>>, %arg5: memref<128x32xf32, #tpu.memory_space<vmem>>, %arg6: memref<32x128xf32, #tpu.memory_space<vmem>>, %arg7: memref<8x128xf32, #tpu.memory_space<vmem>>, %arg8: memref<8x128xf32, #tpu.memory_space<vmem>>, %arg9: memref<1x128xf32, #tpu.memory_space<vmem>>, %arg10: memref<1x128xf32, #tpu.memory_space<vmem>>) attributes {dimension_semantics = [#tpu.dimension_semantics<arbitrary>], iteration_bounds = array<i64: 1>, scalar_prefetch = 0 : i64, scratch_operands = 3 : i64, tpu.core_type = #tpu.core_type<tc>, window_params = [{transform_indices = @transform_0, window_bounds = array<i64: 8, 576>}, {pipeline_mode = #tpu.pipeline_mode<synchronous>, transform_indices = @transform_1, window_bounds = array<i64: 576, 128>}, {pipeline_mode = #tpu.pipeline_mode<synchronous>, transform_indices = @transform_2, window_bounds = array<i64: 1, 32>}, {pipeline_mode = #tpu.pipeline_mode<synchronous>, transform_indices = @transform_3, window_bounds = array<i64: 1, 32>}, {pipeline_mode = #tpu.pipeline_mode<synchronous>, transform_indices = @transform_4, window_bounds = array<i64: 128, 32>}, {pipeline_mode = #tpu.pipeline_mode<synchronous>, transform_indices = @transform_5, window_bounds = array<i64: 32, 128>}, {pipeline_mode = #tpu.pipeline_mode<synchronous>, transform_indices = @transform_6, window_bounds = array<i64: 8, 128>}]} {
    %c0 = arith.constant 0 : index
    %c0_0 = arith.constant 0 : index
    %0 = vector.load %arg1[%c0, %c0_0] : memref<8x576xf32, #tpu.memory_space<vmem>>, vector<8x576xf32>
    %c0_1 = arith.constant 0 : index
    %c0_2 = arith.constant 0 : index
    %1 = vector.load %arg2[%c0_1, %c0_2] : memref<576x128xf32, #tpu.memory_space<vmem>>, vector<576x128xf32>
    %cst = arith.constant dense<0.000000e+00> : vector<8x128xf32>
    %2 = tpu.matmul %0, %1, %cst {dimension_numbers = #tpu.dot_dimension_numbers<[1], [0], [0], [1], [0, 0, 1, 1], [], []>} : vector<8x576xf32>, vector<576x128xf32>, vector<8x128xf32> -> vector<8x128xf32>
    %c0_i32 = arith.constant 0 : i32
    %3 = arith.cmpi eq, %arg0, %c0_i32 : i32
    %4 = arith.extui %3 : i1 to i32
    %c0_i32_3 = arith.constant 0 : i32
    %5 = arith.cmpi ne, %4, %c0_i32_3 : i32
    scf.if %5 {
      %cst_42 = arith.constant 0.000000e+00 : f32
      %47 = vector.broadcast %cst_42 : f32 to vector<1x128xf32>
      %c0_43 = arith.constant 0 : index
      %c0_44 = arith.constant 0 : index
      %48 = vector.load %arg9[%c0_43, %c0_44] : memref<1x128xf32, #tpu.memory_space<vmem>>, vector<1x128xf32>
      tpu.vector_store %arg9[%c0_43, %c0_44], %47 {strides = array<i32>} : memref<1x128xf32, #tpu.memory_space<vmem>>, vector<1x128xf32>,
      %cst_45 = arith.constant 0.000000e+00 : f32
      %49 = vector.broadcast %cst_45 : f32 to vector<1x128xf32>
      %c0_46 = arith.constant 0 : index
      %c0_47 = arith.constant 0 : index
      %50 = vector.load %arg10[%c0_46, %c0_47] : memref<1x128xf32, #tpu.memory_space<vmem>>, vector<1x128xf32>
      tpu.vector_store %arg10[%c0_46, %c0_47], %49 {strides = array<i32>} : memref<1x128xf32, #tpu.memory_space<vmem>>, vector<1x128xf32>,
    } else {
    }
    %c0_4 = arith.constant 0 : index
    %c0_5 = arith.constant 0 : index
    %6 = vector.load %arg9[%c0_4, %c0_5] : memref<1x128xf32, #tpu.memory_space<vmem>>, vector<1x128xf32>
    %cst_6 = arith.constant dense<0.000000e+00> : vector<128xf32>
    %7 = vector.multi_reduction <add>, %2, %cst_6 [0] : vector<8x128xf32> to vector<128xf32>
    %8 = vector.shape_cast %7 : vector<128xf32> to vector<1x128xf32>
    %9 = arith.addf %6, %8 : vector<1x128xf32>
    %c0_7 = arith.constant 0 : index
    %c0_8 = arith.constant 0 : index
    %10 = vector.load %arg9[%c0_7, %c0_8] : memref<1x128xf32, #tpu.memory_space<vmem>>, vector<1x128xf32>
    tpu.vector_store %arg9[%c0_7, %c0_8], %9 {strides = array<i32>} : memref<1x128xf32, #tpu.memory_space<vmem>>, vector<1x128xf32>,
    %c0_9 = arith.constant 0 : index
    %c0_10 = arith.constant 0 : index
    %11 = vector.load %arg10[%c0_9, %c0_10] : memref<1x128xf32, #tpu.memory_space<vmem>>, vector<1x128xf32>
    %12 = arith.mulf %2, %2 : vector<8x128xf32>
    %cst_11 = arith.constant dense<0.000000e+00> : vector<128xf32>
    %13 = vector.multi_reduction <add>, %12, %cst_11 [0] : vector<8x128xf32> to vector<128xf32>
    %14 = vector.shape_cast %13 : vector<128xf32> to vector<1x128xf32>
    %15 = arith.addf %11, %14 : vector<1x128xf32>
    %c0_12 = arith.constant 0 : index
    %c0_13 = arith.constant 0 : index
    %16 = vector.load %arg10[%c0_12, %c0_13] : memref<1x128xf32, #tpu.memory_space<vmem>>, vector<1x128xf32>
    tpu.vector_store %arg10[%c0_12, %c0_13], %15 {strides = array<i32>} : memref<1x128xf32, #tpu.memory_space<vmem>>, vector<1x128xf32>,
    %c0_14 = arith.constant 0 : index
    %c0_15 = arith.constant 0 : index
    %17 = vector.load %arg8[%c0_14, %c0_15] : memref<8x128xf32, #tpu.memory_space<vmem>>, vector<8x128xf32>
    tpu.vector_store %arg8[%c0_14, %c0_15], %2 {strides = array<i32>} : memref<8x128xf32, #tpu.memory_space<vmem>>, vector<8x128xf32>,
    %c0_16 = arith.constant 0 : index
    %c0_17 = arith.constant 0 : index
    %18 = vector.load %arg9[%c0_16, %c0_17] : memref<1x128xf32, #tpu.memory_space<vmem>>, vector<1x128xf32>
    %c0_18 = arith.constant 0 : index
    %c0_19 = arith.constant 0 : index
    %19 = vector.load %arg5[%c0_18, %c0_19] : memref<128x32xf32, #tpu.memory_space<vmem>>, vector<128x32xf32>
    %cst_20 = arith.constant dense<0.000000e+00> : vector<1x32xf32>
    %20 = tpu.matmul %18, %19, %cst_20 {dimension_numbers = #tpu.dot_dimension_numbers<[1], [0], [0], [1], [0, 0, 1, 1], [], []>} : vector<1x128xf32>, vector<128x32xf32>, vector<1x32xf32> -> vector<1x32xf32>
    %c0_21 = arith.constant 0 : index
    %c0_22 = arith.constant 0 : index
    %21 = vector.load %arg10[%c0_21, %c0_22] : memref<1x128xf32, #tpu.memory_space<vmem>>, vector<1x128xf32>
    %c0_23 = arith.constant 0 : index
    %c0_24 = arith.constant 0 : index
    %22 = vector.load %arg5[%c0_23, %c0_24] : memref<128x32xf32, #tpu.memory_space<vmem>>, vector<128x32xf32>
    %cst_25 = arith.constant dense<0.000000e+00> : vector<1x32xf32>
    %23 = tpu.matmul %21, %22, %cst_25 {dimension_numbers = #tpu.dot_dimension_numbers<[1], [0], [0], [1], [0, 0, 1, 1], [], []>} : vector<1x128xf32>, vector<128x32xf32>, vector<1x32xf32> -> vector<1x32xf32>
    %cst_26 = arith.constant 3.125000e-02 : f32
    %24 = vector.broadcast %cst_26 : f32 to vector<1x32xf32>
    %25 = arith.mulf %20, %24 : vector<1x32xf32>
    %cst_27 = arith.constant 3.125000e-02 : f32
    %26 = vector.broadcast %cst_27 : f32 to vector<1x32xf32>
    %27 = arith.mulf %23, %26 : vector<1x32xf32>
    %28 = arith.mulf %25, %25 : vector<1x32xf32>
    %29 = arith.subf %27, %28 : vector<1x32xf32>
    %cst_28 = arith.constant 0.000000e+00 : f32
    %30 = vector.broadcast %cst_28 : f32 to vector<1x32xf32>
    %31 = arith.maximumf %29, %30 : vector<1x32xf32>
    %c0_29 = arith.constant 0 : index
    %c0_30 = arith.constant 0 : index
    %32 = vector.load %arg3[%c0_29, %c0_30] : memref<1x32xf32, #tpu.memory_space<vmem>>, vector<1x32xf32>
    %cst_31 = arith.constant 9.99999974E-6 : f32
    %33 = vector.broadcast %cst_31 : f32 to vector<1x32xf32>
    %34 = arith.addf %31, %33 : vector<1x32xf32>
    %35 = math.rsqrt %34 : vector<1x32xf32>
    %36 = arith.mulf %32, %35 : vector<1x32xf32>
    %c0_32 = arith.constant 0 : index
    %c0_33 = arith.constant 0 : index
    %37 = vector.load %arg4[%c0_32, %c0_33] : memref<1x32xf32, #tpu.memory_space<vmem>>, vector<1x32xf32>
    %38 = arith.mulf %25, %36 : vector<1x32xf32>
    %39 = arith.subf %37, %38 : vector<1x32xf32>
    %c0_34 = arith.constant 0 : index
    %c0_35 = arith.constant 0 : index
    %40 = vector.load %arg6[%c0_34, %c0_35] : memref<32x128xf32, #tpu.memory_space<vmem>>, vector<32x128xf32>
    %cst_36 = arith.constant dense<0.000000e+00> : vector<1x128xf32>
    %41 = tpu.matmul %36, %40, %cst_36 {dimension_numbers = #tpu.dot_dimension_numbers<[1], [0], [0], [1], [0, 0, 1, 1], [], []>} : vector<1x32xf32>, vector<32x128xf32>, vector<1x128xf32> -> vector<1x128xf32>
    %c0_37 = arith.constant 0 : index
    %c0_38 = arith.constant 0 : index
    %42 = vector.load %arg6[%c0_37, %c0_38] : memref<32x128xf32, #tpu.memory_space<vmem>>, vector<32x128xf32>
    %cst_39 = arith.constant dense<0.000000e+00> : vector<1x128xf32>
    %43 = tpu.matmul %39, %42, %cst_39 {dimension_numbers = #tpu.dot_dimension_numbers<[1], [0], [0], [1], [0, 0, 1, 1], [], []>} : vector<1x32xf32>, vector<32x128xf32>, vector<1x128xf32> -> vector<1x128xf32>
    %c0_i32_40 = arith.constant 0 : i32
    %44 = arith.cmpi eq, %arg0, %c0_i32_40 : i32
    %45 = arith.extui %44 : i1 to i32
    %c0_i32_41 = arith.constant 0 : i32
    %46 = arith.cmpi ne, %45, %c0_i32_41 : i32
    scf.if %46 {
      %c0_42 = arith.constant 0 : index
      %c0_43 = arith.constant 0 : index
      %47 = vector.load %arg8[%c0_42, %c0_43] : memref<8x128xf32, #tpu.memory_space<vmem>>, vector<8x128xf32>
      %48 = vector.broadcast %41 : vector<1x128xf32> to vector<8x128xf32>
      %49 = arith.mulf %47, %48 : vector<8x128xf32>
      %50 = vector.broadcast %43 : vector<1x128xf32> to vector<8x128xf32>
      %51 = arith.addf %49, %50 : vector<8x128xf32>
      %cst_44 = arith.constant 0.000000e+00 : f32
      %52 = vector.broadcast %cst_44 : f32 to vector<8x128xf32>
      %53 = arith.cmpf oge, %51, %52 : vector<8x128xf32>
      %cst_45 = arith.constant 0.000000e+00 : f32
      %54 = vector.broadcast %cst_45 : f32 to vector<8x128xf32>
      %55 = arith.mulf %54, %51 : vector<8x128xf32>
      %56 = arith.select %53, %51, %55 : vector<8x128xi1>, vector<8x128xf32>
      %c0_46 = arith.constant 0 : index
      %c0_47 = arith.constant 0 : index
      %57 = vector.load %arg7[%c0_46, %c0_47] : memref<8x128xf32, #tpu.memory_space<vmem>>, vector<8x128xf32>
      tpu.vector_store %arg7[%c0_46, %c0_47], %56 {strides = array<i32>} : memref<8x128xf32, #tpu.memory_space<vmem>>, vector<8x128xf32>,
    } else {
    }
    return
  }
  func.func @transform_0(%arg0: i32) -> (i32, i32) {
    %c0_i32 = arith.constant 0 : i32
    %c0_i32_0 = arith.constant 0 : i32
    return %arg0, %c0_i32 : i32, i32
  }
  func.func @transform_1(%arg0: i32) -> (i32, i32) {
    %c0_i32 = arith.constant 0 : i32
    %c0_i32_0 = arith.constant 0 : i32
    %c0_i32_1 = arith.constant 0 : i32
    return %c0_i32, %c0_i32_0 : i32, i32
  }
  func.func @transform_2(%arg0: i32) -> (i32, i32) {
    %c0_i32 = arith.constant 0 : i32
    %c0_i32_0 = arith.constant 0 : i32
    %c0_i32_1 = arith.constant 0 : i32
    return %c0_i32, %c0_i32_0 : i32, i32
  }
  func.func @transform_3(%arg0: i32) -> (i32, i32) {
    %c0_i32 = arith.constant 0 : i32
    %c0_i32_0 = arith.constant 0 : i32
    %c0_i32_1 = arith.constant 0 : i32
    return %c0_i32, %c0_i32_0 : i32, i32
  }
  func.func @transform_4(%arg0: i32) -> (i32, i32) {
    %c0_i32 = arith.constant 0 : i32
    %c0_i32_0 = arith.constant 0 : i32
    %c0_i32_1 = arith.constant 0 : i32
    return %c0_i32, %c0_i32_0 : i32, i32
  }
  func.func @transform_5(%arg0: i32) -> (i32, i32) {
    %c0_i32 = arith.constant 0 : i32
    %c0_i32_0 = arith.constant 0 : i32
    %c0_i32_1 = arith.constant 0 : i32
    return %c0_i32, %c0_i32_0 : i32, i32
  }
  func.func @transform_6(%arg0: i32) -> (i32, i32) {
    %c0_i32 = arith.constant 0 : i32
    %c0_i32_0 = arith.constant 0 : i32
    %c0_i32_1 = arith.constant 0 : i32
    return %c0_i32, %c0_i32_0 : i32, i32
  }
}

module attributes {stable_mosaic.version = 11 : i64} {
  func.func @_fused_conv_bn_act_kernel(%arg0: i32, %arg1: memref<32x576xf32, #tpu.memory_space<vmem>>, %arg2: memref<576x64xf32, #tpu.memory_space<vmem>>, %arg3: memref<1x16xf32, #tpu.memory_space<vmem>>, %arg4: memref<1x16xf32, #tpu.memory_space<vmem>>, %arg5: memref<64x16xf32, #tpu.memory_space<vmem>>, %arg6: memref<16x64xf32, #tpu.memory_space<vmem>>, %arg7: memref<32x64xf32, #tpu.memory_space<vmem>>, %arg8: memref<32x64xf32, #tpu.memory_space<vmem>>, %arg9: memref<1x64xf32, #tpu.memory_space<vmem>>, %arg10: memref<1x64xf32, #tpu.memory_space<vmem>>) attributes {dimension_semantics = [#tpu.dimension_semantics<arbitrary>], iteration_bounds = array<i64: 1>, scalar_prefetch = 0 : i64, scratch_operands = 3 : i64, tpu.core_type = #tpu.core_type<tc>, window_params = [{transform_indices = @transform_0, window_bounds = array<i64: 32, 576>}, {pipeline_mode = #tpu.pipeline_mode<synchronous>, transform_indices = @transform_1, window_bounds = array<i64: 576, 64>}, {pipeline_mode = #tpu.pipeline_mode<synchronous>, transform_indices = @transform_2, window_bounds = array<i64: 1, 16>}, {pipeline_mode = #tpu.pipeline_mode<synchronous>, transform_indices = @transform_3, window_bounds = array<i64: 1, 16>}, {pipeline_mode = #tpu.pipeline_mode<synchronous>, transform_indices = @transform_4, window_bounds = array<i64: 64, 16>}, {pipeline_mode = #tpu.pipeline_mode<synchronous>, transform_indices = @transform_5, window_bounds = array<i64: 16, 64>}, {pipeline_mode = #tpu.pipeline_mode<synchronous>, transform_indices = @transform_6, window_bounds = array<i64: 32, 64>}]} {
    %c0 = arith.constant 0 : index
    %c0_0 = arith.constant 0 : index
    %0 = vector.load %arg1[%c0, %c0_0] : memref<32x576xf32, #tpu.memory_space<vmem>>, vector<32x576xf32>
    %c0_1 = arith.constant 0 : index
    %c0_2 = arith.constant 0 : index
    %1 = vector.load %arg2[%c0_1, %c0_2] : memref<576x64xf32, #tpu.memory_space<vmem>>, vector<576x64xf32>
    %cst = arith.constant dense<0.000000e+00> : vector<32x64xf32>
    %2 = tpu.matmul %0, %1, %cst {dimension_numbers = #tpu.dot_dimension_numbers<[1], [0], [0], [1], [0, 0, 1, 1], [], []>} : vector<32x576xf32>, vector<576x64xf32>, vector<32x64xf32> -> vector<32x64xf32>
    %c0_i32 = arith.constant 0 : i32
    %3 = arith.cmpi eq, %arg0, %c0_i32 : i32
    %4 = arith.extui %3 : i1 to i32
    %c0_i32_3 = arith.constant 0 : i32
    %5 = arith.cmpi ne, %4, %c0_i32_3 : i32
    scf.if %5 {
      %cst_42 = arith.constant 0.000000e+00 : f32
      %47 = vector.broadcast %cst_42 : f32 to vector<1x64xf32>
      %c0_43 = arith.constant 0 : index
      %c0_44 = arith.constant 0 : index
      %48 = vector.load %arg9[%c0_43, %c0_44] : memref<1x64xf32, #tpu.memory_space<vmem>>, vector<1x64xf32>
      tpu.vector_store %arg9[%c0_43, %c0_44], %47 {strides = array<i32>} : memref<1x64xf32, #tpu.memory_space<vmem>>, vector<1x64xf32>,
      %cst_45 = arith.constant 0.000000e+00 : f32
      %49 = vector.broadcast %cst_45 : f32 to vector<1x64xf32>
      %c0_46 = arith.constant 0 : index
      %c0_47 = arith.constant 0 : index
      %50 = vector.load %arg10[%c0_46, %c0_47] : memref<1x64xf32, #tpu.memory_space<vmem>>, vector<1x64xf32>
      tpu.vector_store %arg10[%c0_46, %c0_47], %49 {strides = array<i32>} : memref<1x64xf32, #tpu.memory_space<vmem>>, vector<1x64xf32>,
    } else {
    }
    %c0_4 = arith.constant 0 : index
    %c0_5 = arith.constant 0 : index
    %6 = vector.load %arg9[%c0_4, %c0_5] : memref<1x64xf32, #tpu.memory_space<vmem>>, vector<1x64xf32>
    %cst_6 = arith.constant dense<0.000000e+00> : vector<64xf32>
    %7 = vector.multi_reduction <add>, %2, %cst_6 [0] : vector<32x64xf32> to vector<64xf32>
    %8 = vector.shape_cast %7 : vector<64xf32> to vector<1x64xf32>
    %9 = arith.addf %6, %8 : vector<1x64xf32>
    %c0_7 = arith.constant 0 : index
    %c0_8 = arith.constant 0 : index
    %10 = vector.load %arg9[%c0_7, %c0_8] : memref<1x64xf32, #tpu.memory_space<vmem>>, vector<1x64xf32>
    tpu.vector_store %arg9[%c0_7, %c0_8], %9 {strides = array<i32>} : memref<1x64xf32, #tpu.memory_space<vmem>>, vector<1x64xf32>,
    %c0_9 = arith.constant 0 : index
    %c0_10 = arith.constant 0 : index
    %11 = vector.load %arg10[%c0_9, %c0_10] : memref<1x64xf32, #tpu.memory_space<vmem>>, vector<1x64xf32>
    %12 = arith.mulf %2, %2 : vector<32x64xf32>
    %cst_11 = arith.constant dense<0.000000e+00> : vector<64xf32>
    %13 = vector.multi_reduction <add>, %12, %cst_11 [0] : vector<32x64xf32> to vector<64xf32>
    %14 = vector.shape_cast %13 : vector<64xf32> to vector<1x64xf32>
    %15 = arith.addf %11, %14 : vector<1x64xf32>
    %c0_12 = arith.constant 0 : index
    %c0_13 = arith.constant 0 : index
    %16 = vector.load %arg10[%c0_12, %c0_13] : memref<1x64xf32, #tpu.memory_space<vmem>>, vector<1x64xf32>
    tpu.vector_store %arg10[%c0_12, %c0_13], %15 {strides = array<i32>} : memref<1x64xf32, #tpu.memory_space<vmem>>, vector<1x64xf32>,
    %c0_14 = arith.constant 0 : index
    %c0_15 = arith.constant 0 : index
    %17 = vector.load %arg8[%c0_14, %c0_15] : memref<32x64xf32, #tpu.memory_space<vmem>>, vector<32x64xf32>
    tpu.vector_store %arg8[%c0_14, %c0_15], %2 {strides = array<i32>} : memref<32x64xf32, #tpu.memory_space<vmem>>, vector<32x64xf32>,
    %c0_16 = arith.constant 0 : index
    %c0_17 = arith.constant 0 : index
    %18 = vector.load %arg9[%c0_16, %c0_17] : memref<1x64xf32, #tpu.memory_space<vmem>>, vector<1x64xf32>
    %c0_18 = arith.constant 0 : index
    %c0_19 = arith.constant 0 : index
    %19 = vector.load %arg5[%c0_18, %c0_19] : memref<64x16xf32, #tpu.memory_space<vmem>>, vector<64x16xf32>
    %cst_20 = arith.constant dense<0.000000e+00> : vector<1x16xf32>
    %20 = tpu.matmul %18, %19, %cst_20 {dimension_numbers = #tpu.dot_dimension_numbers<[1], [0], [0], [1], [0, 0, 1, 1], [], []>} : vector<1x64xf32>, vector<64x16xf32>, vector<1x16xf32> -> vector<1x16xf32>
    %c0_21 = arith.constant 0 : index
    %c0_22 = arith.constant 0 : index
    %21 = vector.load %arg10[%c0_21, %c0_22] : memref<1x64xf32, #tpu.memory_space<vmem>>, vector<1x64xf32>
    %c0_23 = arith.constant 0 : index
    %c0_24 = arith.constant 0 : index
    %22 = vector.load %arg5[%c0_23, %c0_24] : memref<64x16xf32, #tpu.memory_space<vmem>>, vector<64x16xf32>
    %cst_25 = arith.constant dense<0.000000e+00> : vector<1x16xf32>
    %23 = tpu.matmul %21, %22, %cst_25 {dimension_numbers = #tpu.dot_dimension_numbers<[1], [0], [0], [1], [0, 0, 1, 1], [], []>} : vector<1x64xf32>, vector<64x16xf32>, vector<1x16xf32> -> vector<1x16xf32>
    %cst_26 = arith.constant 7.812500e-03 : f32
    %24 = vector.broadcast %cst_26 : f32 to vector<1x16xf32>
    %25 = arith.mulf %20, %24 : vector<1x16xf32>
    %cst_27 = arith.constant 7.812500e-03 : f32
    %26 = vector.broadcast %cst_27 : f32 to vector<1x16xf32>
    %27 = arith.mulf %23, %26 : vector<1x16xf32>
    %28 = arith.mulf %25, %25 : vector<1x16xf32>
    %29 = arith.subf %27, %28 : vector<1x16xf32>
    %cst_28 = arith.constant 0.000000e+00 : f32
    %30 = vector.broadcast %cst_28 : f32 to vector<1x16xf32>
    %31 = arith.maximumf %29, %30 : vector<1x16xf32>
    %c0_29 = arith.constant 0 : index
    %c0_30 = arith.constant 0 : index
    %32 = vector.load %arg3[%c0_29, %c0_30] : memref<1x16xf32, #tpu.memory_space<vmem>>, vector<1x16xf32>
    %cst_31 = arith.constant 9.99999974E-6 : f32
    %33 = vector.broadcast %cst_31 : f32 to vector<1x16xf32>
    %34 = arith.addf %31, %33 : vector<1x16xf32>
    %35 = math.rsqrt %34 : vector<1x16xf32>
    %36 = arith.mulf %32, %35 : vector<1x16xf32>
    %c0_32 = arith.constant 0 : index
    %c0_33 = arith.constant 0 : index
    %37 = vector.load %arg4[%c0_32, %c0_33] : memref<1x16xf32, #tpu.memory_space<vmem>>, vector<1x16xf32>
    %38 = arith.mulf %25, %36 : vector<1x16xf32>
    %39 = arith.subf %37, %38 : vector<1x16xf32>
    %c0_34 = arith.constant 0 : index
    %c0_35 = arith.constant 0 : index
    %40 = vector.load %arg6[%c0_34, %c0_35] : memref<16x64xf32, #tpu.memory_space<vmem>>, vector<16x64xf32>
    %cst_36 = arith.constant dense<0.000000e+00> : vector<1x64xf32>
    %41 = tpu.matmul %36, %40, %cst_36 {dimension_numbers = #tpu.dot_dimension_numbers<[1], [0], [0], [1], [0, 0, 1, 1], [], []>} : vector<1x16xf32>, vector<16x64xf32>, vector<1x64xf32> -> vector<1x64xf32>
    %c0_37 = arith.constant 0 : index
    %c0_38 = arith.constant 0 : index
    %42 = vector.load %arg6[%c0_37, %c0_38] : memref<16x64xf32, #tpu.memory_space<vmem>>, vector<16x64xf32>
    %cst_39 = arith.constant dense<0.000000e+00> : vector<1x64xf32>
    %43 = tpu.matmul %39, %42, %cst_39 {dimension_numbers = #tpu.dot_dimension_numbers<[1], [0], [0], [1], [0, 0, 1, 1], [], []>} : vector<1x16xf32>, vector<16x64xf32>, vector<1x64xf32> -> vector<1x64xf32>
    %c0_i32_40 = arith.constant 0 : i32
    %44 = arith.cmpi eq, %arg0, %c0_i32_40 : i32
    %45 = arith.extui %44 : i1 to i32
    %c0_i32_41 = arith.constant 0 : i32
    %46 = arith.cmpi ne, %45, %c0_i32_41 : i32
    scf.if %46 {
      %c0_42 = arith.constant 0 : index
      %c0_43 = arith.constant 0 : index
      %47 = vector.load %arg8[%c0_42, %c0_43] : memref<32x64xf32, #tpu.memory_space<vmem>>, vector<32x64xf32>
      %48 = vector.broadcast %41 : vector<1x64xf32> to vector<32x64xf32>
      %49 = arith.mulf %47, %48 : vector<32x64xf32>
      %50 = vector.broadcast %43 : vector<1x64xf32> to vector<32x64xf32>
      %51 = arith.addf %49, %50 : vector<32x64xf32>
      %cst_44 = arith.constant 0.000000e+00 : f32
      %52 = vector.broadcast %cst_44 : f32 to vector<32x64xf32>
      %53 = arith.cmpf oge, %51, %52 : vector<32x64xf32>
      %cst_45 = arith.constant 0.000000e+00 : f32
      %54 = vector.broadcast %cst_45 : f32 to vector<32x64xf32>
      %55 = arith.mulf %54, %51 : vector<32x64xf32>
      %56 = arith.select %53, %51, %55 : vector<32x64xi1>, vector<32x64xf32>
      %c0_46 = arith.constant 0 : index
      %c0_47 = arith.constant 0 : index
      %57 = vector.load %arg7[%c0_46, %c0_47] : memref<32x64xf32, #tpu.memory_space<vmem>>, vector<32x64xf32>
      tpu.vector_store %arg7[%c0_46, %c0_47], %56 {strides = array<i32>} : memref<32x64xf32, #tpu.memory_space<vmem>>, vector<32x64xf32>,
    } else {
    }
    return
  }
  func.func @transform_0(%arg0: i32) -> (i32, i32) {
    %c0_i32 = arith.constant 0 : i32
    %c0_i32_0 = arith.constant 0 : i32
    return %arg0, %c0_i32 : i32, i32
  }
  func.func @transform_1(%arg0: i32) -> (i32, i32) {
    %c0_i32 = arith.constant 0 : i32
    %c0_i32_0 = arith.constant 0 : i32
    %c0_i32_1 = arith.constant 0 : i32
    return %c0_i32, %c0_i32_0 : i32, i32
  }
  func.func @transform_2(%arg0: i32) -> (i32, i32) {
    %c0_i32 = arith.constant 0 : i32
    %c0_i32_0 = arith.constant 0 : i32
    %c0_i32_1 = arith.constant 0 : i32
    return %c0_i32, %c0_i32_0 : i32, i32
  }
  func.func @transform_3(%arg0: i32) -> (i32, i32) {
    %c0_i32 = arith.constant 0 : i32
    %c0_i32_0 = arith.constant 0 : i32
    %c0_i32_1 = arith.constant 0 : i32
    return %c0_i32, %c0_i32_0 : i32, i32
  }
  func.func @transform_4(%arg0: i32) -> (i32, i32) {
    %c0_i32 = arith.constant 0 : i32
    %c0_i32_0 = arith.constant 0 : i32
    %c0_i32_1 = arith.constant 0 : i32
    return %c0_i32, %c0_i32_0 : i32, i32
  }
  func.func @transform_5(%arg0: i32) -> (i32, i32) {
    %c0_i32 = arith.constant 0 : i32
    %c0_i32_0 = arith.constant 0 : i32
    %c0_i32_1 = arith.constant 0 : i32
    return %c0_i32, %c0_i32_0 : i32, i32
  }
  func.func @transform_6(%arg0: i32) -> (i32, i32) {
    %c0_i32 = arith.constant 0 : i32
    %c0_i32_0 = arith.constant 0 : i32
    %c0_i32_1 = arith.constant 0 : i32
    return %c0_i32, %c0_i32_0 : i32, i32
  }
}

module attributes {stable_mosaic.version = 11 : i64} {
  func.func @_fused_conv_bn_act_kernel(%arg0: i32, %arg1: memref<128x288xf32, #tpu.memory_space<vmem>>, %arg2: memref<288x32xf32, #tpu.memory_space<vmem>>, %arg3: memref<1x8xf32, #tpu.memory_space<vmem>>, %arg4: memref<1x8xf32, #tpu.memory_space<vmem>>, %arg5: memref<32x8xf32, #tpu.memory_space<vmem>>, %arg6: memref<8x32xf32, #tpu.memory_space<vmem>>, %arg7: memref<128x32xf32, #tpu.memory_space<vmem>>, %arg8: memref<128x32xf32, #tpu.memory_space<vmem>>, %arg9: memref<1x32xf32, #tpu.memory_space<vmem>>, %arg10: memref<1x32xf32, #tpu.memory_space<vmem>>) attributes {dimension_semantics = [#tpu.dimension_semantics<arbitrary>], iteration_bounds = array<i64: 1>, scalar_prefetch = 0 : i64, scratch_operands = 3 : i64, tpu.core_type = #tpu.core_type<tc>, window_params = [{transform_indices = @transform_0, window_bounds = array<i64: 128, 288>}, {pipeline_mode = #tpu.pipeline_mode<synchronous>, transform_indices = @transform_1, window_bounds = array<i64: 288, 32>}, {pipeline_mode = #tpu.pipeline_mode<synchronous>, transform_indices = @transform_2, window_bounds = array<i64: 1, 8>}, {pipeline_mode = #tpu.pipeline_mode<synchronous>, transform_indices = @transform_3, window_bounds = array<i64: 1, 8>}, {pipeline_mode = #tpu.pipeline_mode<synchronous>, transform_indices = @transform_4, window_bounds = array<i64: 32, 8>}, {pipeline_mode = #tpu.pipeline_mode<synchronous>, transform_indices = @transform_5, window_bounds = array<i64: 8, 32>}, {pipeline_mode = #tpu.pipeline_mode<synchronous>, transform_indices = @transform_6, window_bounds = array<i64: 128, 32>}]} {
    %c0 = arith.constant 0 : index
    %c0_0 = arith.constant 0 : index
    %0 = vector.load %arg1[%c0, %c0_0] : memref<128x288xf32, #tpu.memory_space<vmem>>, vector<128x288xf32>
    %c0_1 = arith.constant 0 : index
    %c0_2 = arith.constant 0 : index
    %1 = vector.load %arg2[%c0_1, %c0_2] : memref<288x32xf32, #tpu.memory_space<vmem>>, vector<288x32xf32>
    %cst = arith.constant dense<0.000000e+00> : vector<128x32xf32>
    %2 = tpu.matmul %0, %1, %cst {dimension_numbers = #tpu.dot_dimension_numbers<[1], [0], [0], [1], [0, 0, 1, 1], [], []>} : vector<128x288xf32>, vector<288x32xf32>, vector<128x32xf32> -> vector<128x32xf32>
    %c0_i32 = arith.constant 0 : i32
    %3 = arith.cmpi eq, %arg0, %c0_i32 : i32
    %4 = arith.extui %3 : i1 to i32
    %c0_i32_3 = arith.constant 0 : i32
    %5 = arith.cmpi ne, %4, %c0_i32_3 : i32
    scf.if %5 {
      %cst_42 = arith.constant 0.000000e+00 : f32
      %47 = vector.broadcast %cst_42 : f32 to vector<1x32xf32>
      %c0_43 = arith.constant 0 : index
      %c0_44 = arith.constant 0 : index
      %48 = vector.load %arg9[%c0_43, %c0_44] : memref<1x32xf32, #tpu.memory_space<vmem>>, vector<1x32xf32>
      tpu.vector_store %arg9[%c0_43, %c0_44], %47 {strides = array<i32>} : memref<1x32xf32, #tpu.memory_space<vmem>>, vector<1x32xf32>,
      %cst_45 = arith.constant 0.000000e+00 : f32
      %49 = vector.broadcast %cst_45 : f32 to vector<1x32xf32>
      %c0_46 = arith.constant 0 : index
      %c0_47 = arith.constant 0 : index
      %50 = vector.load %arg10[%c0_46, %c0_47] : memref<1x32xf32, #tpu.memory_space<vmem>>, vector<1x32xf32>
      tpu.vector_store %arg10[%c0_46, %c0_47], %49 {strides = array<i32>} : memref<1x32xf32, #tpu.memory_space<vmem>>, vector<1x32xf32>,
    } else {
    }
    %c0_4 = arith.constant 0 : index
    %c0_5 = arith.constant 0 : index
    %6 = vector.load %arg9[%c0_4, %c0_5] : memref<1x32xf32, #tpu.memory_space<vmem>>, vector<1x32xf32>
    %cst_6 = arith.constant dense<0.000000e+00> : vector<32xf32>
    %7 = vector.multi_reduction <add>, %2, %cst_6 [0] : vector<128x32xf32> to vector<32xf32>
    %8 = vector.shape_cast %7 : vector<32xf32> to vector<1x32xf32>
    %9 = arith.addf %6, %8 : vector<1x32xf32>
    %c0_7 = arith.constant 0 : index
    %c0_8 = arith.constant 0 : index
    %10 = vector.load %arg9[%c0_7, %c0_8] : memref<1x32xf32, #tpu.memory_space<vmem>>, vector<1x32xf32>
    tpu.vector_store %arg9[%c0_7, %c0_8], %9 {strides = array<i32>} : memref<1x32xf32, #tpu.memory_space<vmem>>, vector<1x32xf32>,
    %c0_9 = arith.constant 0 : index
    %c0_10 = arith.constant 0 : index
    %11 = vector.load %arg10[%c0_9, %c0_10] : memref<1x32xf32, #tpu.memory_space<vmem>>, vector<1x32xf32>
    %12 = arith.mulf %2, %2 : vector<128x32xf32>
    %cst_11 = arith.constant dense<0.000000e+00> : vector<32xf32>
    %13 = vector.multi_reduction <add>, %12, %cst_11 [0] : vector<128x32xf32> to vector<32xf32>
    %14 = vector.shape_cast %13 : vector<32xf32> to vector<1x32xf32>
    %15 = arith.addf %11, %14 : vector<1x32xf32>
    %c0_12 = arith.constant 0 : index
    %c0_13 = arith.constant 0 : index
    %16 = vector.load %arg10[%c0_12, %c0_13] : memref<1x32xf32, #tpu.memory_space<vmem>>, vector<1x32xf32>
    tpu.vector_store %arg10[%c0_12, %c0_13], %15 {strides = array<i32>} : memref<1x32xf32, #tpu.memory_space<vmem>>, vector<1x32xf32>,
    %c0_14 = arith.constant 0 : index
    %c0_15 = arith.constant 0 : index
    %17 = vector.load %arg8[%c0_14, %c0_15] : memref<128x32xf32, #tpu.memory_space<vmem>>, vector<128x32xf32>
    tpu.vector_store %arg8[%c0_14, %c0_15], %2 {strides = array<i32>} : memref<128x32xf32, #tpu.memory_space<vmem>>, vector<128x32xf32>,
    %c0_16 = arith.constant 0 : index
    %c0_17 = arith.constant 0 : index
    %18 = vector.load %arg9[%c0_16, %c0_17] : memref<1x32xf32, #tpu.memory_space<vmem>>, vector<1x32xf32>
    %c0_18 = arith.constant 0 : index
    %c0_19 = arith.constant 0 : index
    %19 = vector.load %arg5[%c0_18, %c0_19] : memref<32x8xf32, #tpu.memory_space<vmem>>, vector<32x8xf32>
    %cst_20 = arith.constant dense<0.000000e+00> : vector<1x8xf32>
    %20 = tpu.matmul %18, %19, %cst_20 {dimension_numbers = #tpu.dot_dimension_numbers<[1], [0], [0], [1], [0, 0, 1, 1], [], []>} : vector<1x32xf32>, vector<32x8xf32>, vector<1x8xf32> -> vector<1x8xf32>
    %c0_21 = arith.constant 0 : index
    %c0_22 = arith.constant 0 : index
    %21 = vector.load %arg10[%c0_21, %c0_22] : memref<1x32xf32, #tpu.memory_space<vmem>>, vector<1x32xf32>
    %c0_23 = arith.constant 0 : index
    %c0_24 = arith.constant 0 : index
    %22 = vector.load %arg5[%c0_23, %c0_24] : memref<32x8xf32, #tpu.memory_space<vmem>>, vector<32x8xf32>
    %cst_25 = arith.constant dense<0.000000e+00> : vector<1x8xf32>
    %23 = tpu.matmul %21, %22, %cst_25 {dimension_numbers = #tpu.dot_dimension_numbers<[1], [0], [0], [1], [0, 0, 1, 1], [], []>} : vector<1x32xf32>, vector<32x8xf32>, vector<1x8xf32> -> vector<1x8xf32>
    %cst_26 = arith.constant 0.001953125 : f32
    %24 = vector.broadcast %cst_26 : f32 to vector<1x8xf32>
    %25 = arith.mulf %20, %24 : vector<1x8xf32>
    %cst_27 = arith.constant 0.001953125 : f32
    %26 = vector.broadcast %cst_27 : f32 to vector<1x8xf32>
    %27 = arith.mulf %23, %26 : vector<1x8xf32>
    %28 = arith.mulf %25, %25 : vector<1x8xf32>
    %29 = arith.subf %27, %28 : vector<1x8xf32>
    %cst_28 = arith.constant 0.000000e+00 : f32
    %30 = vector.broadcast %cst_28 : f32 to vector<1x8xf32>
    %31 = arith.maximumf %29, %30 : vector<1x8xf32>
    %c0_29 = arith.constant 0 : index
    %c0_30 = arith.constant 0 : index
    %32 = vector.load %arg3[%c0_29, %c0_30] : memref<1x8xf32, #tpu.memory_space<vmem>>, vector<1x8xf32>
    %cst_31 = arith.constant 9.99999974E-6 : f32
    %33 = vector.broadcast %cst_31 : f32 to vector<1x8xf32>
    %34 = arith.addf %31, %33 : vector<1x8xf32>
    %35 = math.rsqrt %34 : vector<1x8xf32>
    %36 = arith.mulf %32, %35 : vector<1x8xf32>
    %c0_32 = arith.constant 0 : index
    %c0_33 = arith.constant 0 : index
    %37 = vector.load %arg4[%c0_32, %c0_33] : memref<1x8xf32, #tpu.memory_space<vmem>>, vector<1x8xf32>
    %38 = arith.mulf %25, %36 : vector<1x8xf32>
    %39 = arith.subf %37, %38 : vector<1x8xf32>
    %c0_34 = arith.constant 0 : index
    %c0_35 = arith.constant 0 : index
    %40 = vector.load %arg6[%c0_34, %c0_35] : memref<8x32xf32, #tpu.memory_space<vmem>>, vector<8x32xf32>
    %cst_36 = arith.constant dense<0.000000e+00> : vector<1x32xf32>
    %41 = tpu.matmul %36, %40, %cst_36 {dimension_numbers = #tpu.dot_dimension_numbers<[1], [0], [0], [1], [0, 0, 1, 1], [], []>} : vector<1x8xf32>, vector<8x32xf32>, vector<1x32xf32> -> vector<1x32xf32>
    %c0_37 = arith.constant 0 : index
    %c0_38 = arith.constant 0 : index
    %42 = vector.load %arg6[%c0_37, %c0_38] : memref<8x32xf32, #tpu.memory_space<vmem>>, vector<8x32xf32>
    %cst_39 = arith.constant dense<0.000000e+00> : vector<1x32xf32>
    %43 = tpu.matmul %39, %42, %cst_39 {dimension_numbers = #tpu.dot_dimension_numbers<[1], [0], [0], [1], [0, 0, 1, 1], [], []>} : vector<1x8xf32>, vector<8x32xf32>, vector<1x32xf32> -> vector<1x32xf32>
    %c0_i32_40 = arith.constant 0 : i32
    %44 = arith.cmpi eq, %arg0, %c0_i32_40 : i32
    %45 = arith.extui %44 : i1 to i32
    %c0_i32_41 = arith.constant 0 : i32
    %46 = arith.cmpi ne, %45, %c0_i32_41 : i32
    scf.if %46 {
      %c0_42 = arith.constant 0 : index
      %c0_43 = arith.constant 0 : index
      %47 = vector.load %arg8[%c0_42, %c0_43] : memref<128x32xf32, #tpu.memory_space<vmem>>, vector<128x32xf32>
      %48 = vector.broadcast %41 : vector<1x32xf32> to vector<128x32xf32>
      %49 = arith.mulf %47, %48 : vector<128x32xf32>
      %50 = vector.broadcast %43 : vector<1x32xf32> to vector<128x32xf32>
      %51 = arith.addf %49, %50 : vector<128x32xf32>
      %cst_44 = arith.constant 0.000000e+00 : f32
      %52 = vector.broadcast %cst_44 : f32 to vector<128x32xf32>
      %53 = arith.cmpf oge, %51, %52 : vector<128x32xf32>
      %cst_45 = arith.constant 0.000000e+00 : f32
      %54 = vector.broadcast %cst_45 : f32 to vector<128x32xf32>
      %55 = arith.mulf %54, %51 : vector<128x32xf32>
      %56 = arith.select %53, %51, %55 : vector<128x32xi1>, vector<128x32xf32>
      %c0_46 = arith.constant 0 : index
      %c0_47 = arith.constant 0 : index
      %57 = vector.load %arg7[%c0_46, %c0_47] : memref<128x32xf32, #tpu.memory_space<vmem>>, vector<128x32xf32>
      tpu.vector_store %arg7[%c0_46, %c0_47], %56 {strides = array<i32>} : memref<128x32xf32, #tpu.memory_space<vmem>>, vector<128x32xf32>,
    } else {
    }
    return
  }
  func.func @transform_0(%arg0: i32) -> (i32, i32) {
    %c0_i32 = arith.constant 0 : i32
    %c0_i32_0 = arith.constant 0 : i32
    return %arg0, %c0_i32 : i32, i32
  }
  func.func @transform_1(%arg0: i32) -> (i32, i32) {
    %c0_i32 = arith.constant 0 : i32
    %c0_i32_0 = arith.constant 0 : i32
    %c0_i32_1 = arith.constant 0 : i32
    return %c0_i32, %c0_i32_0 : i32, i32
  }
  func.func @transform_2(%arg0: i32) -> (i32, i32) {
    %c0_i32 = arith.constant 0 : i32
    %c0_i32_0 = arith.constant 0 : i32
    %c0_i32_1 = arith.constant 0 : i32
    return %c0_i32, %c0_i32_0 : i32, i32
  }
  func.func @transform_3(%arg0: i32) -> (i32, i32) {
    %c0_i32 = arith.constant 0 : i32
    %c0_i32_0 = arith.constant 0 : i32
    %c0_i32_1 = arith.constant 0 : i32
    return %c0_i32, %c0_i32_0 : i32, i32
  }
  func.func @transform_4(%arg0: i32) -> (i32, i32) {
    %c0_i32 = arith.constant 0 : i32
    %c0_i32_0 = arith.constant 0 : i32
    %c0_i32_1 = arith.constant 0 : i32
    return %c0_i32, %c0_i32_0 : i32, i32
  }
  func.func @transform_5(%arg0: i32) -> (i32, i32) {
    %c0_i32 = arith.constant 0 : i32
    %c0_i32_0 = arith.constant 0 : i32
    %c0_i32_1 = arith.constant 0 : i32
    return %c0_i32, %c0_i32_0 : i32, i32
  }
  func.func @transform_6(%arg0: i32) -> (i32, i32) {
    %c0_i32 = arith.constant 0 : i32
    %c0_i32_0 = arith.constant 0 : i32
    %c0_i32_1 = arith.constant 0 : i32
    return %c0_i32, %c0_i32_0 : i32, i32
  }
}

module attributes {stable_mosaic.version = 11 : i64} {
  func.func @_conv_bias_act_kernel(%arg0: i32, %arg1: memref<2x1024xf32, #tpu.memory_space<vmem>>, %arg2: memref<1024x64xf32, #tpu.memory_space<vmem>>, %arg3: memref<1x64xf32, #tpu.memory_space<vmem>>, %arg4: memref<2x64xf32, #tpu.memory_space<vmem>>) attributes {dimension_semantics = [#tpu.dimension_semantics<parallel>], iteration_bounds = array<i64: 1>, scalar_prefetch = 0 : i64, scratch_operands = 0 : i64, tpu.core_type = #tpu.core_type<tc>, window_params = [{transform_indices = @transform_0, window_bounds = array<i64: 2, 1024>}, {pipeline_mode = #tpu.pipeline_mode<synchronous>, transform_indices = @transform_1, window_bounds = array<i64: 1024, 64>}, {pipeline_mode = #tpu.pipeline_mode<synchronous>, transform_indices = @transform_2, window_bounds = array<i64: 1, 64>}, {transform_indices = @transform_3, window_bounds = array<i64: 2, 64>}]} {
    %c0 = arith.constant 0 : index
    %c0_0 = arith.constant 0 : index
    %0 = vector.load %arg1[%c0, %c0_0] : memref<2x1024xf32, #tpu.memory_space<vmem>>, vector<2x1024xf32>
    %c0_1 = arith.constant 0 : index
    %c0_2 = arith.constant 0 : index
    %1 = vector.load %arg2[%c0_1, %c0_2] : memref<1024x64xf32, #tpu.memory_space<vmem>>, vector<1024x64xf32>
    %cst = arith.constant dense<0.000000e+00> : vector<2x64xf32>
    %2 = tpu.matmul %0, %1, %cst {dimension_numbers = #tpu.dot_dimension_numbers<[1], [0], [0], [1], [0, 0, 1, 1], [], []>} : vector<2x1024xf32>, vector<1024x64xf32>, vector<2x64xf32> -> vector<2x64xf32>
    %c0_3 = arith.constant 0 : index
    %c0_4 = arith.constant 0 : index
    %3 = vector.load %arg3[%c0_3, %c0_4] : memref<1x64xf32, #tpu.memory_space<vmem>>, vector<1x64xf32>
    %4 = vector.broadcast %3 : vector<1x64xf32> to vector<2x64xf32>
    %5 = arith.addf %2, %4 : vector<2x64xf32>
    %cst_5 = arith.constant 0.000000e+00 : f32
    %6 = vector.broadcast %cst_5 : f32 to vector<2x64xf32>
    %7 = arith.cmpf oge, %5, %6 : vector<2x64xf32>
    %cst_6 = arith.constant 0.000000e+00 : f32
    %8 = vector.broadcast %cst_6 : f32 to vector<2x64xf32>
    %9 = arith.mulf %8, %5 : vector<2x64xf32>
    %10 = arith.select %7, %5, %9 : vector<2x64xi1>, vector<2x64xf32>
    %c0_7 = arith.constant 0 : index
    %c0_8 = arith.constant 0 : index
    %11 = vector.load %arg4[%c0_7, %c0_8] : memref<2x64xf32, #tpu.memory_space<vmem>>, vector<2x64xf32>
    tpu.vector_store %arg4[%c0_7, %c0_8], %10 {strides = array<i32>} : memref<2x64xf32, #tpu.memory_space<vmem>>, vector<2x64xf32>,
    return
  }
  func.func @transform_0(%arg0: i32) -> (i32, i32) {
    %c0_i32 = arith.constant 0 : i32
    %c0_i32_0 = arith.constant 0 : i32
    return %arg0, %c0_i32 : i32, i32
  }
  func.func @transform_1(%arg0: i32) -> (i32, i32) {
    %c0_i32 = arith.constant 0 : i32
    %c0_i32_0 = arith.constant 0 : i32
    %c0_i32_1 = arith.constant 0 : i32
    return %c0_i32, %c0_i32_0 : i32, i32
  }
  func.func @transform_2(%arg0: i32) -> (i32, i32) {
    %c0_i32 = arith.constant 0 : i32
    %c0_i32_0 = arith.constant 0 : i32
    %c0_i32_1 = arith.constant 0 : i32
    return %c0_i32, %c0_i32_0 : i32, i32
  }
  func.func @transform_3(%arg0: i32) -> (i32, i32) {
    %c0_i32 = arith.constant 0 : i32
    %c0_i32_0 = arith.constant 0 : i32
    return %arg0, %c0_i32 : i32, i32
  }
}

</mosaic_0001>

<llo_original>
// kernel: inner_unet_forward.8
$region0: #{inner_unet_forward.8}
  #allocation0 [shape = 'u32[]', space=smem, size = 0x4, offset = 0x4, fixed_abs, tag = 'smem constant byte address 0x4 - core index']
  #allocation1 [shape = 'u32[144,128]{1,0:T(1,128)}', space=vmem, size = 0x12000, scoped, tag = 'internal scratch']
  #allocation2 [shape = 'f32[512,8]{1,0:T(8,128)}', space=vmem, size = 0x40000, scoped, tag = 'scratch operand']
  #allocation3 [shape = 'f32[1,8]{1,0:T(1,128)}', space=vmem, size = 0x200, scoped, tag = 'scratch operand']
  #allocation4 [shape = 'f32[1,8]{1,0:T(1,128)}', space=vmem, size = 0x200, scoped, tag = 'scratch operand']
  %s0 = inlined_call_operand.vmem [shape: f32[512,64], index: 0, kind: input, shape index: {}]
  %s1 = inlined_call_operand.vmem [shape: f32[64,8], index: 1, kind: input, shape index: {}]
  %s2 = inlined_call_operand.vmem [shape: f32[1,8], index: 2, kind: input, shape index: {}]
  %s3 = inlined_call_operand.vmem [shape: f32[1,8], index: 3, kind: input, shape index: {}]
  %s4 = inlined_call_operand.vmem [shape: f32[8,8], index: 4, kind: input, shape index: {}, may-alias: {4,5}]
  %s5 = inlined_call_operand.vmem [shape: f32[8,8], index: 5, kind: input, shape index: {}, may-alias: {4,5}]
  %s6 = inlined_call_operand.vmem [shape: f32[512,8], index: 6, kind: output, shape index: {}]
  %s7 = sld [smem:[#allocation0]]
  $region42: #{inner_unet_forward.8} parent=0
    _
  %s9 = ssub.s32 1, %s7
  %s10 = scalar_select 0, %s9, %s7
  // Predicated region
  $region2: #{inner_unet_forward.8} parent=0 // pred_check
    _
  $region3: #{inner_unet_forward.8} parent=0 // pred_check_branch
    %12 = sbr.rel (0) target = $region5
  $region4: #{inner_unet_forward.8} parent=0 // pred_region
    _
  $region5: #{inner_unet_forward.8} parent=0 // pred_fallthru
    _
  // Predicated region
  $region6: #{inner_unet_forward.8} parent=0 // pred_check
    _
  $region7: #{inner_unet_forward.8} parent=0 // pred_check_branch
    %14 = sbr.rel (0) target = $region9
  $region8: #{inner_unet_forward.8} parent=0 // pred_region
    _
  $region9: #{inner_unet_forward.8} parent=0 // pred_fallthru
    _
  // Predicated region
  $region10: #{inner_unet_forward.8} parent=0 // pred_check
    _
  $region11: #{inner_unet_forward.8} parent=0 // pred_check_branch
    %16 = sbr.rel (0) target = $region13
  $region12: #{inner_unet_forward.8} parent=0 // pred_region
    _
  $region13: #{inner_unet_forward.8} parent=0 // pred_fallthru
    _
  // Predicated region
  $region14: #{inner_unet_forward.8} parent=0 // pred_check
    _
  $region15: #{inner_unet_forward.8} parent=0 // pred_check_branch
    %18 = sbr.rel (0) target = $region17
  $region16: #{inner_unet_forward.8} parent=0 // pred_region
    _
  $region17: #{inner_unet_forward.8} parent=0 // pred_fallthru
    _
  // Predicated region
  $region18: #{inner_unet_forward.8} parent=0 // pred_check
    _
  $region19: #{inner_unet_forward.8} parent=0 // pred_check_branch
    %20 = sbr.rel (0) target = $region21
  $region20: #{inner_unet_forward.8} parent=0 // pred_region
    _
  $region21: #{inner_unet_forward.8} parent=0 // pred_fallthru
    _
  // Predicated region
  $region22: #{inner_unet_forward.8} parent=0 // pred_check
    _
  $region23: #{inner_unet_forward.8} parent=0 // pred_check_branch
    %22 = sbr.rel (0) target = $region25
  $region24: #{inner_unet_forward.8} parent=0 // pred_region
    _
  $region25: #{inner_unet_forward.8} parent=0 // pred_fallthru
    _
  %v23 = vld [vmem:[%s0] sm:$0xff]
  %v24 = vld [vmem:[%s0 + $0x8] sm:$0xff]
  %v25 = vld [vmem:[%s0 + $0x10] sm:$0xff]
  %v26 = vld [vmem:[%s0 + $0x18] sm:$0xff]
  %v27 = vld [vmem:[%s0 + $0x20] sm:$0xff]
  %v28 = vld [vmem:[%s0 + $0x28] sm:$0xff]
  %v29 = vld [vmem:[%s0 + $0x30] sm:$0xff]
  %v30 = vld [vmem:[%s0 + $0x38] sm:$0xff]
  %v31 = vld [vmem:[%s0 + $0x40] sm:$0xff]
  %v32 = vld [vmem:[%s0 + $0x48] sm:$0xff]
  %v33 = vld [vmem:[%s0 + $0x50] sm:$0xff]
  %v34 = vld [vmem:[%s0 + $0x58] sm:$0xff]
  %v35 = vld [vmem:[%s0 + $0x60] sm:$0xff]
  %v36 = vld [vmem:[%s0 + $0x68] sm:$0xff]
  %v37 = vld [vmem:[%s0 + $0x70] sm:$0xff]
  %v38 = vld [vmem:[%s0 + $0x78] sm:$0xff]
  %v39 = vld [vmem:[%s0 + $0x80] sm:$0xff]
  %v40 = vld [vmem:[%s0 + $0x88] sm:$0xff]
  %v41 = vld [vmem:[%s0 + $0x90] sm:$0xff]
  %v42 = vld [vmem:[%s0 + $0x98] sm:$0xff]
  %v43 = vld [vmem:[%s0 + $0xa0] sm:$0xff]
  %v44 = vld [vmem:[%s0 + $0xa8] sm:$0xff]
  %v45 = vld [vmem:[%s0 + $0xb0] sm:$0xff]
  %v46 = vld [vmem:[%s0 + $0xb8] sm:$0xff]
  %v47 = vld [vmem:[%s0 + $0xc0] sm:$0xff]
  %v48 = vld [vmem:[%s0 + $0xc8] sm:$0xff]
  %v49 = vld [vmem:[%s0 + $0xd0] sm:$0xff]
  %v50 = vld [vmem:[%s0 + $0xd8] sm:$0xff]
  %v51 = vld [vmem:[%s0 + $0xe0] sm:$0xff]
  %v52 = vld [vmem:[%s0 + $0xe8] sm:$0xff]
  %v53 = vld [vmem:[%s0 + $0xf0] sm:$0xff]
  %v54 = vld [vmem:[%s0 + $0xf8] sm:$0xff]
  %v55 = vld [vmem:[%s0 + $0x100] sm:$0xff]
  %v56 = vld [vmem:[%s0 + $0x108] sm:$0xff]
  %v57 = vld [vmem:[%s0 + $0x110] sm:$0xff]
  %v58 = vld [vmem:[%s0 + $0x118] sm:$0xff]
  %v59 = vld [vmem:[%s0 + $0x120] sm:$0xff]
  %v60 = vld [vmem:[%s0 + $0x128] sm:$0xff]
  %v61 = vld [vmem:[%s0 + $0x130] sm:$0xff]
  %v62 = vld [vmem:[%s0 + $0x138] sm:$0xff]
  %v63 = vld [vmem:[%s0 + $0x140] sm:$0xff]
  %v64 = vld [vmem:[%s0 + $0x148] sm:$0xff]
  %v65 = vld [vmem:[%s0 + $0x150] sm:$0xff]
  %v66 = vld [vmem:[%s0 + $0x158] sm:$0xff]
  %v67 = vld [vmem:[%s0 + $0x160] sm:$0xff]
  %v68 = vld [vmem:[%s0 + $0x168] sm:$0xff]
  %v69 = vld [vmem:[%s0 + $0x170] sm:$0xff]
  %v70 = vld [vmem:[%s0 + $0x178] sm:$0xff]
  %v71 = vld [vmem:[%s0 + $0x180] sm:$0xff]
  %v72 = vld [vmem:[%s0 + $0x188] sm:$0xff]
  %v73 = vld [vmem:[%s0 + $0x190] sm:$0xff]
  %v74 = vld [vmem:[%s0 + $0x198] sm:$0xff]
  %v75 = vld [vmem:[%s0 + $0x1a0] sm:$0xff]
  %v76 = vld [vmem:[%s0 + $0x1a8] sm:$0xff]
  %v77 = vld [vmem:[%s0 + $0x1b0] sm:$0xff]
  %v78 = vld [vmem:[%s0 + $0x1b8] sm:$0xff]
  %v79 = vld [vmem:[%s0 + $0x1c0] sm:$0xff]
  %v80 = vld [vmem:[%s0 + $0x1c8] sm:$0xff]
  %v81 = vld [vmem:[%s0 + $0x1d0] sm:$0xff]
  %v82 = vld [vmem:[%s0 + $0x1d8] sm:$0xff]
  %v83 = vld [vmem:[%s0 + $0x1e0] sm:$0xff]
  %v84 = vld [vmem:[%s0 + $0x1e8] sm:$0xff]
  %v85 = vld [vmem:[%s0 + $0x1f0] sm:$0xff]
  %v86 = vld [vmem:[%s0 + $0x1f8] sm:$0xff]
  %v87 = vld [vmem:[%s1] sm:$0xff]
  %v88 = vld [vmem:[%s1 + $0x8] sm:$0xff]
  %v89 = vld [vmem:[%s1 + $0x10] sm:$0xff]
  %v90 = vld [vmem:[%s1 + $0x18] sm:$0xff]
  %v91 = vld [vmem:[%s1 + $0x20] sm:$0xff]
  %v92 = vld [vmem:[%s1 + $0x28] sm:$0xff]
  %v93 = vld [vmem:[%s1 + $0x30] sm:$0xff]
  %v94 = vld [vmem:[%s1 + $0x38] sm:$0xff]
  %vm95 = vcmask 523264
  %v97 = vsel %vm95, %v23, 0
  %v100 = vsel %vm95, %v24, 0
  %v103 = vsel %vm95, %v25, 0
  %v106 = vsel %vm95, %v26, 0
  %v109 = vsel %vm95, %v27, 0
  %v112 = vsel %vm95, %v28, 0
  %v115 = vsel %vm95, %v29, 0
  %v118 = vsel %vm95, %v30, 0
  %v121 = vsel %vm95, %v31, 0
  %v124 = vsel %vm95, %v32, 0
  %v127 = vsel %vm95, %v33, 0
  %v130 = vsel %vm95, %v34, 0
  %v133 = vsel %vm95, %v35, 0
  %v136 = vsel %vm95, %v36, 0
  %v139 = vsel %vm95, %v37, 0
  %v142 = vsel %vm95, %v38, 0
  %v145 = vsel %vm95, %v39, 0
  %v148 = vsel %vm95, %v40, 0
  %v151 = vsel %vm95, %v41, 0
  %v154 = vsel %vm95, %v42, 0
  %v157 = vsel %vm95, %v43, 0
  %v160 = vsel %vm95, %v44, 0
  %v163 = vsel %vm95, %v45, 0
  %v166 = vsel %vm95, %v46, 0
  %v169 = vsel %vm95, %v47, 0
  %v172 = vsel %vm95, %v48, 0
  %v175 = vsel %vm95, %v49, 0
  %v178 = vsel %vm95, %v50, 0
  %v181 = vsel %vm95, %v51, 0
  %v184 = vsel %vm95, %v52, 0
  %v187 = vsel %vm95, %v53, 0
  %v190 = vsel %vm95, %v54, 0
  %v193 = vsel %vm95, %v55, 0
  %v196 = vsel %vm95, %v56, 0
  %v199 = vsel %vm95, %v57, 0
  %v202 = vsel %vm95, %v58, 0
  %v205 = vsel %vm95, %v59, 0
  %v208 = vsel %vm95, %v60, 0
  %v211 = vsel %vm95, %v61, 0
  %v214 = vsel %vm95, %v62, 0
  %v217 = vsel %vm95, %v63, 0
  %v220 = vsel %vm95, %v64, 0
  %v223 = vsel %vm95, %v65, 0
  %v226 = vsel %vm95, %v66, 0
  %v229 = vsel %vm95, %v67, 0
  %v232 = vsel %vm95, %v68, 0
  %v235 = vsel %vm95, %v69, 0
  %v238 = vsel %vm95, %v70, 0
  %v241 = vsel %vm95, %v71, 0
  %v244 = vsel %vm95, %v72, 0
  %v247 = vsel %vm95, %v73, 0
  %v250 = vsel %vm95, %v74, 0
  %v253 = vsel %vm95, %v75, 0
  %v256 = vsel %vm95, %v76, 0
  %v259 = vsel %vm95, %v77, 0
  %v262 = vsel %vm95, %v78, 0
  %v265 = vsel %vm95, %v79, 0
  %v268 = vsel %vm95, %v80, 0
  %v271 = vsel %vm95, %v81, 0
  %v274 = vsel %vm95, %v82, 0
  %v277 = vsel %vm95, %v83, 0
  %v280 = vsel %vm95, %v84, 0
  %v283 = vsel %vm95, %v85, 0
  %v286 = vsel %vm95, %v86, 0
  %288 = vmatprep.subr.mxu0 0.0
  %289 = vmatpush1.msra.mxu0 %v87
  %290 = vmatprep.subr.mxu0 0.0
  %291 = vmatpush1.msra.mxu0 %v88
  %292 = vmatprep.subr.mxu0 0.0
  %293 = vmatpush1.msra.mxu0 %v89
  %294 = vmatprep.subr.mxu0 0.0
  %295 = vmatpush1.msra.mxu0 %v90
  %296 = vmatprep.subr.mxu0 0.0
  %297 = vmatpush1.msra.mxu0 %v91
  %298 = vmatprep.subr.mxu0 0.0
  %299 = vmatpush1.msra.mxu0 %v92
  %300 = vmatprep.subr.mxu0 0.0
  %301 = vmatpush1.msra.mxu0 %v93
  %302 = vmatprep.subr.mxu0 0.0
  %303 = vmatpush1.msra.mxu0 %v94
  %304 = vmatprep.subr.mxu0 0.0
  %305 = vmatpush1.msra.mxu0 0.0
  %306 = vmatprep.subr.mxu0 0.0
  %307 = vmatpush1.msra.mxu0 0.0
  %308 = vmatprep.subr.mxu0 0.0
  %309 = vmatpush1.msra.mxu0 0.0
  %310 = vmatprep.subr.mxu0 0.0
  %311 = vmatpush1.msra.mxu0 0.0
  %312 = vmatprep.subr.mxu0 0.0
  %313 = vmatpush1.msra.mxu0 0.0
  %314 = vmatprep.subr.mxu0 0.0
  %315 = vmatpush1.msra.mxu0 0.0
  %316 = vmatprep.subr.mxu0 0.0
  %317 = vmatpush1.msra.mxu0 0.0
  %318 = vmatprep.subr.mxu0 0.0
  %319 = vmatpush1.msra.mxu0 0.0
  %320 = vmatprep.subr.mxu0 0.0
  %321 = vmatpush1.msra.mxu0 0.0
  %322 = vmatprep.subr.mxu0 0.0
  %323 = vmatpush1.msra.mxu0 0.0
  %324 = vmatprep.subr.mxu0 0.0
  %325 = vmatpush1.msra.mxu0 0.0
  %326 = vmatprep.subr.mxu0 0.0
  %327 = vmatpush1.msra.mxu0 0.0
  %328 = vmatprep.subr.mxu0 0.0
  %329 = vmatpush1.msra.mxu0 0.0
  %330 = vmatprep.subr.mxu0 0.0
  %331 = vmatpush1.msra.mxu0 0.0
  %332 = vmatprep.subr.mxu0 0.0
  %333 = vmatpush1.msra.mxu0 0.0
  %334 = vmatprep.subr.mxu0 0.0
  %335 = vmatpush1.msra.mxu0 0.0
  %336 = vmatprep.subr.mxu0 0.0
  %337 = vmatpush1.msra.mxu0 0.0
  %338 = vmatprep.subr.mxu0 0.0
  %339 = vmatpush1.msra.mxu0 0.0
  %340 = vmatprep.subr.mxu0 0.0
  %341 = vmatpush1.msra.mxu0 0.0
  %342 = vmatprep.subr.mxu0 0.0
  %343 = vmatpush1.msra.mxu0 0.0
  %344 = vmatprep.subr.mxu0 0.0
  %345 = vmatpush1.msra.mxu0 0.0
  %346 = vmatprep.subr.mxu0 0.0
  %347 = vmatpush1.msra.mxu0 0.0
  %348 = vmatprep.subr.mxu0 0.0
  %349 = vmatpush1.msra.mxu0 0.0
  %350 = vmatprep.subr.mxu0 0.0
  %351 = vmatpush1.msra.mxu0 0.0
  %352 = vmatprep.mubr.f32.mxu0 0.0
  %353 = vmatmul.mubr.f32.gmra.mrb[0].mxu0 %v97
  %v354 = vpop.f32.mrb[0].mxu0
  %v355 = vadd.f32 0.0, %v354
  %v356 = vpop.f32.mrb[0].mxu0
  %357 = vmatprep.mubr.f32.mxu0 0.0
  %358 = vmatmul.mubr.f32.gmra.mrb[0].mxu0 %v100
  %v359 = vpop.f32.mrb[0].mxu0
  %v360 = vadd.f32 0.0, %v359
  %v361 = vpop.f32.mrb[0].mxu0
  %362 = vmatprep.mubr.f32.mxu0 0.0
  %363 = vmatmul.mubr.f32.gmra.mrb[0].mxu0 %v103
  %v364 = vpop.f32.mrb[0].mxu0
  %v365 = vadd.f32 0.0, %v364
  %v366 = vpop.f32.mrb[0].mxu0
  %367 = vmatprep.mubr.f32.mxu0 0.0
  %368 = vmatmul.mubr.f32.gmra.mrb[0].mxu0 %v106
  %v369 = vpop.f32.mrb[0].mxu0
  %v370 = vadd.f32 0.0, %v369
  %v371 = vpop.f32.mrb[0].mxu0
  %372 = vmatprep.mubr.f32.mxu0 0.0
  %373 = vmatmul.mubr.f32.gmra.mrb[0].mxu0 %v109
  %v374 = vpop.f32.mrb[0].mxu0
  %v375 = vadd.f32 0.0, %v374
  %v376 = vpop.f32.mrb[0].mxu0
  %377 = vmatprep.mubr.f32.mxu0 0.0
  %378 = vmatmul.mubr.f32.gmra.mrb[0].mxu0 %v112
  %v379 = vpop.f32.mrb[0].mxu0
  %v380 = vadd.f32 0.0, %v379
  %v381 = vpop.f32.mrb[0].mxu0
  %382 = vmatprep.mubr.f32.mxu0 0.0
  %383 = vmatmul.mubr.f32.gmra.mrb[0].mxu0 %v115
  %v384 = vpop.f32.mrb[0].mxu0
  %v385 = vadd.f32 0.0, %v384
  %v386 = vpop.f32.mrb[0].mxu0
  %387 = vmatprep.mubr.f32.mxu0 0.0
  %388 = vmatmul.mubr.f32.gmra.mrb[0].mxu0 %v118
  %v389 = vpop.f32.mrb[0].mxu0
  %v390 = vadd.f32 0.0, %v389
  %v391 = vpop.f32.mrb[0].mxu0
  %392 = vmatprep.mubr.f32.mxu0 0.0
  %393 = vmatmul.mubr.f32.gmra.mrb[0].mxu0 %v121
  %v394 = vpop.f32.mrb[0].mxu0
  %v395 = vadd.f32 0.0, %v394
  %v396 = vpop.f32.mrb[0].mxu0
  %397 = vmatprep.mubr.f32.mxu0 0.0
  %398 = vmatmul.mubr.f32.gmra.mrb[0].mxu0 %v124
  %v399 = vpop.f32.mrb[0].mxu0
  %v400 = vadd.f32 0.0, %v399
  %v401 = vpop.f32.mrb[0].mxu0
  %402 = vmatprep.mubr.f32.mxu0 0.0
  %403 = vmatmul.mubr.f32.gmra.mrb[0].mxu0 %v127
  %v404 = vpop.f32.mrb[0].mxu0
  %v405 = vadd.f32 0.0, %v404
  %v406 = vpop.f32.mrb[0].mxu0
  %407 = vmatprep.mubr.f32.mxu0 0.0
  %408 = vmatmul.mubr.f32.gmra.mrb[0].mxu0 %v130
  %v409 = vpop.f32.mrb[0].mxu0
  %v410 = vadd.f32 0.0, %v409
  %v411 = vpop.f32.mrb[0].mxu0
  %412 = vmatprep.mubr.f32.mxu0 0.0
  %413 = vmatmul.mubr.f32.gmra.mrb[0].mxu0 %v133
  %v414 = vpop.f32.mrb[0].mxu0
  %v415 = vadd.f32 0.0, %v414
  %v416 = vpop.f32.mrb[0].mxu0
  %417 = vmatprep.mubr.f32.mxu0 0.0
  %418 = vmatmul.mubr.f32.gmra.mrb[0].mxu0 %v136
  %v419 = vpop.f32.mrb[0].mxu0
  %v420 = vadd.f32 0.0, %v419
  %v421 = vpop.f32.mrb[0].mxu0
  %422 = vmatprep.mubr.f32.mxu0 0.0
  %423 = vmatmul.mubr.f32.gmra.mrb[0].mxu0 %v139
  %v424 = vpop.f32.mrb[0].mxu0
  %v425 = vadd.f32 0.0, %v424
  %v426 = vpop.f32.mrb[0].mxu0
  %427 = vmatprep.mubr.f32.mxu0 0.0
  %428 = vmatmul.mubr.f32.gmra.mrb[0].mxu0 %v142
  %v429 = vpop.f32.mrb[0].mxu0
  %v430 = vadd.f32 0.0, %v429
  %v431 = vpop.f32.mrb[0].mxu0
  %432 = vmatprep.mubr.f32.mxu0 0.0
  %433 = vmatmul.mubr.f32.gmra.mrb[0].mxu0 %v145
  %v434 = vpop.f32.mrb[0].mxu0
  %v435 = vadd.f32 0.0, %v434
  %v436 = vpop.f32.mrb[0].mxu0
  %437 = vmatprep.mubr.f32.mxu0 0.0
  %438 = vmatmul.mubr.f32.gmra.mrb[0].mxu0 %v148
  %v439 = vpop.f32.mrb[0].mxu0
  %v440 = vadd.f32 0.0, %v439
  %v441 = vpop.f32.mrb[0].mxu0
  %442 = vmatprep.mubr.f32.mxu0 0.0
  %443 = vmatmul.mubr.f32.gmra.mrb[0].mxu0 %v151
  %v444 = vpop.f32.mrb[0].mxu0
  %v445 = vadd.f32 0.0, %v444
  %v446 = vpop.f32.mrb[0].mxu0
  %447 = vmatprep.mubr.f32.mxu0 0.0
  %448 = vmatmul.mubr.f32.gmra.mrb[0].mxu0 %v154
  %v449 = vpop.f32.mrb[0].mxu0
  %v450 = vadd.f32 0.0, %v449
  %v451 = vpop.f32.mrb[0].mxu0
  %452 = vmatprep.mubr.f32.mxu0 0.0
  %453 = vmatmul.mubr.f32.gmra.mrb[0].mxu0 %v157
  %v454 = vpop.f32.mrb[0].mxu0
  %v455 = vadd.f32 0.0, %v454
  %v456 = vpop.f32.mrb[0].mxu0
  %457 = vmatprep.mubr.f32.mxu0 0.0
  %458 = vmatmul.mubr.f32.gmra.mrb[0].mxu0 %v160
  %v459 = vpop.f32.mrb[0].mxu0
  %v460 = vadd.f32 0.0, %v459
  %v461 = vpop.f32.mrb[0].mxu0
  %462 = vmatprep.mubr.f32.mxu0 0.0
  %463 = vmatmul.mubr.f32.gmra.mrb[0].mxu0 %v163
  %v464 = vpop.f32.mrb[0].mxu0
  %v465 = vadd.f32 0.0, %v464
  %v466 = vpop.f32.mrb[0].mxu0
  %467 = vmatprep.mubr.f32.mxu0 0.0
  %468 = vmatmul.mubr.f32.gmra.mrb[0].mxu0 %v166
  %v469 = vpop.f32.mrb[0].mxu0
  %v470 = vadd.f32 0.0, %v469
  %v471 = vpop.f32.mrb[0].mxu0
  %472 = vmatprep.mubr.f32.mxu0 0.0
  %473 = vmatmul.mubr.f32.gmra.mrb[0].mxu0 %v169
  %v474 = vpop.f32.mrb[0].mxu0
  %v475 = vadd.f32 0.0, %v474
  %v476 = vpop.f32.mrb[0].mxu0
  %477 = vmatprep.mubr.f32.mxu0 0.0
  %478 = vmatmul.mubr.f32.gmra.mrb[0].mxu0 %v172
  %v479 = vpop.f32.mrb[0].mxu0
  %v480 = vadd.f32 0.0, %v479
  %v481 = vpop.f32.mrb[0].mxu0
  %482 = vmatprep.mubr.f32.mxu0 0.0
  %483 = vmatmul.mubr.f32.gmra.mrb[0].mxu0 %v175
  %v484 = vpop.f32.mrb[0].mxu0
  %v485 = vadd.f32 0.0, %v484
  %v486 = vpop.f32.mrb[0].mxu0
  %487 = vmatprep.mubr.f32.mxu0 0.0
  %488 = vmatmul.mubr.f32.gmra.mrb[0].mxu0 %v178
  %v489 = vpop.f32.mrb[0].mxu0
  %v490 = vadd.f32 0.0, %v489
  %v491 = vpop.f32.mrb[0].mxu0
  %492 = vmatprep.mubr.f32.mxu0 0.0
  %493 = vmatmul.mubr.f32.gmra.mrb[0].mxu0 %v181
  %v494 = vpop.f32.mrb[0].mxu0
  %v495 = vadd.f32 0.0, %v494
  %v496 = vpop.f32.mrb[0].mxu0
  %497 = vmatprep.mubr.f32.mxu0 0.0
  %498 = vmatmul.mubr.f32.gmra.mrb[0].mxu0 %v184
  %v499 = vpop.f32.mrb[0].mxu0
  %v500 = vadd.f32 0.0, %v499
  %v501 = vpop.f32.mrb[0].mxu0
  %502 = vmatprep.mubr.f32.mxu0 0.0
  %503 = vmatmul.mubr.f32.gmra.mrb[0].mxu0 %v187
  %v504 = vpop.f32.mrb[0].mxu0
  %v505 = vadd.f32 0.0, %v504
  %v506 = vpop.f32.mrb[0].mxu0
  %507 = vmatprep.mubr.f32.mxu0 0.0
  %508 = vmatmul.mubr.f32.gmra.mrb[0].mxu0 %v190
  %v509 = vpop.f32.mrb[0].mxu0
  %v510 = vadd.f32 0.0, %v509
  %v511 = vpop.f32.mrb[0].mxu0
  %512 = vmatprep.mubr.f32.mxu0 0.0
  %513 = vmatmul.mubr.f32.gmra.mrb[0].mxu0 %v193
  %v514 = vpop.f32.mrb[0].mxu0
  %v515 = vadd.f32 0.0, %v514
  %v516 = vpop.f32.mrb[0].mxu0
  %517 = vmatprep.mubr.f32.mxu0 0.0
  %518 = vmatmul.mubr.f32.gmra.mrb[0].mxu0 %v196
  %v519 = vpop.f32.mrb[0].mxu0
  %v520 = vadd.f32 0.0, %v519
  %v521 = vpop.f32.mrb[0].mxu0
  %522 = vmatprep.mubr.f32.mxu0 0.0
  %523 = vmatmul.mubr.f32.gmra.mrb[0].mxu0 %v199
  %v524 = vpop.f32.mrb[0].mxu0
  %v525 = vadd.f32 0.0, %v524
  %v526 = vpop.f32.mrb[0].mxu0
  %527 = vmatprep.mubr.f32.mxu0 0.0
  %528 = vmatmul.mubr.f32.gmra.mrb[0].mxu0 %v202
  %v529 = vpop.f32.mrb[0].mxu0
  %v530 = vadd.f32 0.0, %v529
  %v531 = vpop.f32.mrb[0].mxu0
  %532 = vmatprep.mubr.f32.mxu0 0.0
  %533 = vmatmul.mubr.f32.gmra.mrb[0].mxu0 %v205
  %v534 = vpop.f32.mrb[0].mxu0
  %v535 = vadd.f32 0.0, %v534
  %v536 = vpop.f32.mrb[0].mxu0
  %537 = vmatprep.mubr.f32.mxu0 0.0
  %538 = vmatmul.mubr.f32.gmra.mrb[0].mxu0 %v208
  %v539 = vpop.f32.mrb[0].mxu0
  %v540 = vadd.f32 0.0, %v539
  %v541 = vpop.f32.mrb[0].mxu0
  %542 = vmatprep.mubr.f32.mxu0 0.0
  %543 = vmatmul.mubr.f32.gmra.mrb[0].mxu0 %v211
  %v544 = vpop.f32.mrb[0].mxu0
  %v545 = vadd.f32 0.0, %v544
  %v546 = vpop.f32.mrb[0].mxu0
  %547 = vmatprep.mubr.f32.mxu0 0.0
  %548 = vmatmul.mubr.f32.gmra.mrb[0].mxu0 %v214
  %v549 = vpop.f32.mrb[0].mxu0
  %v550 = vadd.f32 0.0, %v549
  %v551 = vpop.f32.mrb[0].mxu0
  %552 = vmatprep.mubr.f32.mxu0 0.0
  %553 = vmatmul.mubr.f32.gmra.mrb[0].mxu0 %v217
  %v554 = vpop.f32.mrb[0].mxu0
  %v555 = vadd.f32 0.0, %v554
  %v556 = vpop.f32.mrb[0].mxu0
  %557 = vmatprep.mubr.f32.mxu0 0.0
  %558 = vmatmul.mubr.f32.gmra.mrb[0].mxu0 %v220
  %v559 = vpop.f32.mrb[0].mxu0
  %v560 = vadd.f32 0.0, %v559
  %v561 = vpop.f32.mrb[0].mxu0
  %562 = vmatprep.mubr.f32.mxu0 0.0
  %563 = vmatmul.mubr.f32.gmra.mrb[0].mxu0 %v223
  %v564 = vpop.f32.mrb[0].mxu0
  %v565 = vadd.f32 0.0, %v564
  %v566 = vpop.f32.mrb[0].mxu0
  %567 = vmatprep.mubr.f32.mxu0 0.0
  %568 = vmatmul.mubr.f32.gmra.mrb[0].mxu0 %v226
  %v569 = vpop.f32.mrb[0].mxu0
  %v570 = vadd.f32 0.0, %v569
  %v571 = vpop.f32.mrb[0].mxu0
  %572 = vmatprep.mubr.f32.mxu0 0.0
  %573 = vmatmul.mubr.f32.gmra.mrb[0].mxu0 %v229
  %v574 = vpop.f32.mrb[0].mxu0
  %v575 = vadd.f32 0.0, %v574
  %v576 = vpop.f32.mrb[0].mxu0
  %577 = vmatprep.mubr.f32.mxu0 0.0
  %578 = vmatmul.mubr.f32.gmra.mrb[0].mxu0 %v232
  %v579 = vpop.f32.mrb[0].mxu0
  %v580 = vadd.f32 0.0, %v579
  %v581 = vpop.f32.mrb[0].mxu0
  %582 = vmatprep.mubr.f32.mxu0 0.0
  %583 = vmatmul.mubr.f32.gmra.mrb[0].mxu0 %v235
  %v584 = vpop.f32.mrb[0].mxu0
  %v585 = vadd.f32 0.0, %v584
  %v586 = vpop.f32.mrb[0].mxu0
  %587 = vmatprep.mubr.f32.mxu0 0.0
  %588 = vmatmul.mubr.f32.gmra.mrb[0].mxu0 %v238
  %v589 = vpop.f32.mrb[0].mxu0
  %v590 = vadd.f32 0.0, %v589
  %v591 = vpop.f32.mrb[0].mxu0
  %592 = vmatprep.mubr.f32.mxu0 0.0
  %593 = vmatmul.mubr.f32.gmra.mrb[0].mxu0 %v241
  %v594 = vpop.f32.mrb[0].mxu0
  %v595 = vadd.f32 0.0, %v594
  %v596 = vpop.f32.mrb[0].mxu0
  %597 = vmatprep.mubr.f32.mxu0 0.0
  %598 = vmatmul.mubr.f32.gmra.mrb[0].mxu0 %v244
  %v599 = vpop.f32.mrb[0].mxu0
  %v600 = vadd.f32 0.0, %v599
  %v601 = vpop.f32.mrb[0].mxu0
  %602 = vmatprep.mubr.f32.mxu0 0.0
  %603 = vmatmul.mubr.f32.gmra.mrb[0].mxu0 %v247
  %v604 = vpop.f32.mrb[0].mxu0
  %v605 = vadd.f32 0.0, %v604
  %v606 = vpop.f32.mrb[0].mxu0
  %607 = vmatprep.mubr.f32.mxu0 0.0
  %608 = vmatmul.mubr.f32.gmra.mrb[0].mxu0 %v250
  %v609 = vpop.f32.mrb[0].mxu0
  %v610 = vadd.f32 0.0, %v609
  %v611 = vpop.f32.mrb[0].mxu0
  %612 = vmatprep.mubr.f32.mxu0 0.0
  %613 = vmatmul.mubr.f32.gmra.mrb[0].mxu0 %v253
  %v614 = vpop.f32.mrb[0].mxu0
  %v615 = vadd.f32 0.0, %v614
  %v616 = vpop.f32.mrb[0].mxu0
  %617 = vmatprep.mubr.f32.mxu0 0.0
  %618 = vmatmul.mubr.f32.gmra.mrb[0].mxu0 %v256
  %v619 = vpop.f32.mrb[0].mxu0
  %v620 = vadd.f32 0.0, %v619
  %v621 = vpop.f32.mrb[0].mxu0
  %622 = vmatprep.mubr.f32.mxu0 0.0
  %623 = vmatmul.mubr.f32.gmra.mrb[0].mxu0 %v259
  %v624 = vpop.f32.mrb[0].mxu0
  %v625 = vadd.f32 0.0, %v624
  %v626 = vpop.f32.mrb[0].mxu0
  %627 = vmatprep.mubr.f32.mxu0 0.0
  %628 = vmatmul.mubr.f32.gmra.mrb[0].mxu0 %v262
  %v629 = vpop.f32.mrb[0].mxu0
  %v630 = vadd.f32 0.0, %v629
  %v631 = vpop.f32.mrb[0].mxu0
  %632 = vmatprep.mubr.f32.mxu0 0.0
  %633 = vmatmul.mubr.f32.gmra.mrb[0].mxu0 %v265
  %v634 = vpop.f32.mrb[0].mxu0
  %v635 = vadd.f32 0.0, %v634
  %v636 = vpop.f32.mrb[0].mxu0
  %637 = vmatprep.mubr.f32.mxu0 0.0
  %638 = vmatmul.mubr.f32.gmra.mrb[0].mxu0 %v268
  %v639 = vpop.f32.mrb[0].mxu0
  %v640 = vadd.f32 0.0, %v639
  %v641 = vpop.f32.mrb[0].mxu0
  %642 = vmatprep.mubr.f32.mxu0 0.0
  %643 = vmatmul.mubr.f32.gmra.mrb[0].mxu0 %v271
  %v644 = vpop.f32.mrb[0].mxu0
  %v645 = vadd.f32 0.0, %v644
  %v646 = vpop.f32.mrb[0].mxu0
  %647 = vmatprep.mubr.f32.mxu0 0.0
  %648 = vmatmul.mubr.f32.gmra.mrb[0].mxu0 %v274
  %v649 = vpop.f32.mrb[0].mxu0
  %v650 = vadd.f32 0.0, %v649
  %v651 = vpop.f32.mrb[0].mxu0
  %652 = vmatprep.mubr.f32.mxu0 0.0
  %653 = vmatmul.mubr.f32.gmra.mrb[0].mxu0 %v277
  %v654 = vpop.f32.mrb[0].mxu0
  %v655 = vadd.f32 0.0, %v654
  %v656 = vpop.f32.mrb[0].mxu0
  %657 = vmatprep.mubr.f32.mxu0 0.0
  %658 = vmatmul.mubr.f32.gmra.mrb[0].mxu0 %v280
  %v659 = vpop.f32.mrb[0].mxu0
  %v660 = vadd.f32 0.0, %v659
  %v661 = vpop.f32.mrb[0].mxu0
  %662 = vmatprep.mubr.f32.mxu0 0.0
  %663 = vmatmul.mubr.f32.gmra.mrb[0].mxu0 %v283
  %v664 = vpop.f32.mrb[0].mxu0
  %v665 = vadd.f32 0.0, %v664
  %v666 = vpop.f32.mrb[0].mxu0
  %667 = vmatprep.mubr.f32.mxu0 0.0
  %668 = vmatmul.mubr.f32.gmra.mrb[0].mxu0 %v286
  %v669 = vpop.f32.mrb[0].mxu0
  %v670 = vadd.f32 0.0, %v669
  %v671 = vpop.f32.mrb[0].mxu0
  %672 = vdwg.mxu0
  %p673 = scmp.eq.s32.totalorder 0, 0
  // Predicated region
  $region26: #{inner_unet_forward.8} parent=0 // pred_check
    %p674 = pneg %p673
  $region27: #{inner_unet_forward.8} parent=0 // pred_check_branch
    %676 = sbr.rel (%p674) target = $region29
  $region28: #{inner_unet_forward.8} parent=0 // pred_region
    %vm677 = vcmask 57344
    %678 = vst.msk [vmem:[#allocation3] sm:$0x1] %vm677, 0.0
    %679 = vst.msk [vmem:[#allocation4] sm:$0x1] %vm677, 0.0
  $region29: #{inner_unet_forward.8} parent=0 // pred_fallthru
    _
  %v680 = vld [vmem:[#allocation3] sm:$0x1]
  %vm681 = vcmask 64512
  %v682 = vsel %vm681, %v355, 0.0
  %v683 = vsel %vm681, %v360, 0.0
  %v684 = vadd.f32 %v682, %v683
  %v685 = vsel %vm681, %v365, 0.0
  %v686 = vadd.f32 %v684, %v685
  %v687 = vsel %vm681, %v370, 0.0
  %v688 = vadd.f32 %v686, %v687
  %v689 = vsel %vm681, %v375, 0.0
  %v690 = vadd.f32 %v688, %v689
  %v691 = vsel %vm681, %v380, 0.0
  %v692 = vadd.f32 %v690, %v691
  %v693 = vsel %vm681, %v385, 0.0
  %v694 = vadd.f32 %v692, %v693
  %v695 = vsel %vm681, %v390, 0.0
  %v696 = vadd.f32 %v694, %v695
  %v697 = vsel %vm681, %v395, 0.0
  %v698 = vadd.f32 %v696, %v697
  %v699 = vsel %vm681, %v400, 0.0
  %v700 = vadd.f32 %v698, %v699
  %v701 = vsel %vm681, %v405, 0.0
  %v702 = vadd.f32 %v700, %v701
  %v703 = vsel %vm681, %v410, 0.0
  %v704 = vadd.f32 %v702, %v703
  %v705 = vsel %vm681, %v415, 0.0
  %v706 = vadd.f32 %v704, %v705
  %v707 = vsel %vm681, %v420, 0.0
  %v708 = vadd.f32 %v706, %v707
  %v709 = vsel %vm681, %v425, 0.0
  %v710 = vadd.f32 %v708, %v709
  %v711 = vsel %vm681, %v430, 0.0
  %v712 = vadd.f32 %v710, %v711
  %v713 = vsel %vm681, %v435, 0.0
  %v714 = vadd.f32 %v712, %v713
  %v715 = vsel %vm681, %v440, 0.0
  %v716 = vadd.f32 %v714, %v715
  %v717 = vsel %vm681, %v445, 0.0
  %v718 = vadd.f32 %v716, %v717
  %v719 = vsel %vm681, %v450, 0.0
  %v720 = vadd.f32 %v718, %v719
  %v721 = vsel %vm681, %v455, 0.0
  %v722 = vadd.f32 %v720, %v721
  %v723 = vsel %vm681, %v460, 0.0
  %v724 = vadd.f32 %v722, %v723
  %v725 = vsel %vm681, %v465, 0.0
  %v726 = vadd.f32 %v724, %v725
  %v727 = vsel %vm681, %v470, 0.0
  %v728 = vadd.f32 %v726, %v727
  %v729 = vsel %vm681, %v475, 0.0
  %v730 = vadd.f32 %v728, %v729
  %v731 = vsel %vm681, %v480, 0.0
  %v732 = vadd.f32 %v730, %v731
  %v733 = vsel %vm681, %v485, 0.0
  %v734 = vadd.f32 %v732, %v733
  %v735 = vsel %vm681, %v490, 0.0
  %v736 = vadd.f32 %v734, %v735
  %v737 = vsel %vm681, %v495, 0.0
  %v738 = vadd.f32 %v736, %v737
  %v739 = vsel %vm681, %v500, 0.0
  %v740 = vadd.f32 %v738, %v739
  %v741 = vsel %vm681, %v505, 0.0
  %v742 = vadd.f32 %v740, %v741
  %v743 = vsel %vm681, %v510, 0.0
  %v744 = vadd.f32 %v742, %v743
  %v745 = vsel %vm681, %v515, 0.0
  %v746 = vadd.f32 %v744, %v745
  %v747 = vsel %vm681, %v520, 0.0
  %v748 = vadd.f32 %v746, %v747
  %v749 = vsel %vm681, %v525, 0.0
  %v750 = vadd.f32 %v748, %v749
  %v751 = vsel %vm681, %v530, 0.0
  %v752 = vadd.f32 %v750, %v751
  %v753 = vsel %vm681, %v535, 0.0
  %v754 = vadd.f32 %v752, %v753
  %v755 = vsel %vm681, %v540, 0.0
  %v756 = vadd.f32 %v754, %v755
  %v757 = vsel %vm681, %v545, 0.0
  %v758 = vadd.f32 %v756, %v757
  %v759 = vsel %vm681, %v550, 0.0
  %v760 = vadd.f32 %v758, %v759
  %v761 = vsel %vm681, %v555, 0.0
  %v762 = vadd.f32 %v760, %v761
  %v763 = vsel %vm681, %v560, 0.0
  %v764 = vadd.f32 %v762, %v763
  %v765 = vsel %vm681, %v565, 0.0
  %v766 = vadd.f32 %v764, %v765
  %v767 = vsel %vm681, %v570, 0.0
  %v768 = vadd.f32 %v766, %v767
  %v769 = vsel %vm681, %v575, 0.0
  %v770 = vadd.f32 %v768, %v769
  %v771 = vsel %vm681, %v580, 0.0
  %v772 = vadd.f32 %v770, %v771
  %v773 = vsel %vm681, %v585, 0.0
  %v774 = vadd.f32 %v772, %v773
  %v775 = vsel %vm681, %v590, 0.0
  %v776 = vadd.f32 %v774, %v775
  %v777 = vsel %vm681, %v595, 0.0
  %v778 = vadd.f32 %v776, %v777
  %v779 = vsel %vm681, %v600, 0.0
  %v780 = vadd.f32 %v778, %v779
  %v781 = vsel %vm681, %v605, 0.0
  %v782 = vadd.f32 %v780, %v781
  %v783 = vsel %vm681, %v610, 0.0
  %v784 = vadd.f32 %v782, %v783
  %v785 = vsel %vm681, %v615, 0.0
  %v786 = vadd.f32 %v784, %v785
  %v787 = vsel %vm681, %v620, 0.0
  %v788 = vadd.f32 %v786, %v787
  %v789 = vsel %vm681, %v625, 0.0
  %v790 = vadd.f32 %v788, %v789
  %v791 = vsel %vm681, %v630, 0.0
  %v792 = vadd.f32 %v790, %v791
  %v793 = vsel %vm681, %v635, 0.0
  %v794 = vadd.f32 %v792, %v793
  %v795 = vsel %vm681, %v640, 0.0
  %v796 = vadd.f32 %v794, %v795
  %v797 = vsel %vm681, %v645, 0.0
  %v798 = vadd.f32 %v796, %v797
  %v799 = vsel %vm681, %v650, 0.0
  %v800 = vadd.f32 %v798, %v799
  %v801 = vsel %vm681, %v655, 0.0
  %v802 = vadd.f32 %v800, %v801
  %v803 = vsel %vm681, %v660, 0.0
  %v804 = vadd.f32 %v802, %v803
  %v805 = vsel %vm681, %v665, 0.0
  %v806 = vadd.f32 %v804, %v805
  %v807 = vsel %vm681, %v670, 0.0
  %v808 = vadd.f32 %v806, %v807
  %v809 = vrot.slane %v808, 4
  %v810 = vadd.f32 %v808, %v809
  %v811 = vrot.slane %v810, 2
  %v812 = vadd.f32 %v810, %v811
  %v813 = vrot.slane %v812, 1
  %v814 = vadd.f32 %v812, %v813
  %v815 = vadd.f32 %v680, %v814
  %vm816 = vcmask 57344
  %817 = vst.msk [vmem:[#allocation3] sm:$0x1] %vm816, %v815
  %v818 = vld [vmem:[#allocation4] sm:$0x1]
  %v819 = vmul.f32 %v355, %v355
  %v820 = vmul.f32 %v360, %v360
  %v821 = vmul.f32 %v365, %v365
  %v822 = vmul.f32 %v370, %v370
  %v823 = vmul.f32 %v375, %v375
  %v824 = vmul.f32 %v380, %v380
  %v825 = vmul.f32 %v385, %v385
  %v826 = vmul.f32 %v390, %v390
  %v827 = vmul.f32 %v395, %v395
  %v828 = vmul.f32 %v400, %v400
  %v829 = vmul.f32 %v405, %v405
  %v830 = vmul.f32 %v410, %v410
  %v831 = vmul.f32 %v415, %v415
  %v832 = vmul.f32 %v420, %v420
  %v833 = vmul.f32 %v425, %v425
  %v834 = vmul.f32 %v430, %v430
  %v835 = vmul.f32 %v435, %v435
  %v836 = vmul.f32 %v440, %v440
  %v837 = vmul.f32 %v445, %v445
  %v838 = vmul.f32 %v450, %v450
  %v839 = vmul.f32 %v455, %v455
  %v840 = vmul.f32 %v460, %v460
  %v841 = vmul.f32 %v465, %v465
  %v842 = vmul.f32 %v470, %v470
  %v843 = vmul.f32 %v475, %v475
  %v844 = vmul.f32 %v480, %v480
  %v845 = vmul.f32 %v485, %v485
  %v846 = vmul.f32 %v490, %v490
  %v847 = vmul.f32 %v495, %v495
  %v848 = vmul.f32 %v500, %v500
  %v849 = vmul.f32 %v505, %v505
  %v850 = vmul.f32 %v510, %v510
  %v851 = vmul.f32 %v515, %v515
  %v852 = vmul.f32 %v520, %v520
  %v853 = vmul.f32 %v525, %v525
  %v854 = vmul.f32 %v530, %v530
  %v855 = vmul.f32 %v535, %v535
  %v856 = vmul.f32 %v540, %v540
  %v857 = vmul.f32 %v545, %v545
  %v858 = vmul.f32 %v550, %v550
  %v859 = vmul.f32 %v555, %v555
  %v860 = vmul.f32 %v560, %v560
  %v861 = vmul.f32 %v565, %v565
  %v862 = vmul.f32 %v570, %v570
  %v863 = vmul.f32 %v575, %v575
  %v864 = vmul.f32 %v580, %v580
  %v865 = vmul.f32 %v585, %v585
  %v866 = vmul.f32 %v590, %v590
  %v867 = vmul.f32 %v595, %v595
  %v868 = vmul.f32 %v600, %v600
  %v869 = vmul.f32 %v605, %v605
  %v870 = vmul.f32 %v610, %v610
  %v871 = vmul.f32 %v615, %v615
  %v872 = vmul.f32 %v620, %v620
  %v873 = vmul.f32 %v625, %v625
  %v874 = vmul.f32 %v630, %v630
  %v875 = vmul.f32 %v635, %v635
  %v876 = vmul.f32 %v640, %v640
  %v877 = vmul.f32 %v645, %v645
  %v878 = vmul.f32 %v650, %v650
  %v879 = vmul.f32 %v655, %v655
  %v880 = vmul.f32 %v660, %v660
  %v881 = vmul.f32 %v665, %v665
  %v882 = vmul.f32 %v670, %v670
  %v883 = vsel %vm681, %v819, 0.0
  %v884 = vsel %vm681, %v820, 0.0
  %v885 = vadd.f32 %v883, %v884
  %v886 = vsel %vm681, %v821, 0.0
  %v887 = vadd.f32 %v885, %v886
  %v888 = vsel %vm681, %v822, 0.0
  %v889 = vadd.f32 %v887, %v888
  %v890 = vsel %vm681, %v823, 0.0
  %v891 = vadd.f32 %v889, %v890
  %v892 = vsel %vm681, %v824, 0.0
  %v893 = vadd.f32 %v891, %v892
  %v894 = vsel %vm681, %v825, 0.0
  %v895 = vadd.f32 %v893, %v894
  %v896 = vsel %vm681, %v826, 0.0
  %v897 = vadd.f32 %v895, %v896
  %v898 = vsel %vm681, %v827, 0.0
  %v899 = vadd.f32 %v897, %v898
  %v900 = vsel %vm681, %v828, 0.0
  %v901 = vadd.f32 %v899, %v900
  %v902 = vsel %vm681, %v829, 0.0
  %v903 = vadd.f32 %v901, %v902
  %v904 = vsel %vm681, %v830, 0.0
  %v905 = vadd.f32 %v903, %v904
  %v906 = vsel %vm681, %v831, 0.0
  %v907 = vadd.f32 %v905, %v906
  %v908 = vsel %vm681, %v832, 0.0
  %v909 = vadd.f32 %v907, %v908
  %v910 = vsel %vm681, %v833, 0.0
  %v911 = vadd.f32 %v909, %v910
  %v912 = vsel %vm681, %v834, 0.0
  %v913 = vadd.f32 %v911, %v912
  %v914 = vsel %vm681, %v835, 0.0
  %v915 = vadd.f32 %v913, %v914
  %v916 = vsel %vm681, %v836, 0.0
  %v917 = vadd.f32 %v915, %v916
  %v918 = vsel %vm681, %v837, 0.0
  %v919 = vadd.f32 %v917, %v918
  %v920 = vsel %vm681, %v838, 0.0
  %v921 = vadd.f32 %v919, %v920
  %v922 = vsel %vm681, %v839, 0.0
  %v923 = vadd.f32 %v921, %v922
  %v924 = vsel %vm681, %v840, 0.0
  %v925 = vadd.f32 %v923, %v924
  %v926 = vsel %vm681, %v841, 0.0
  %v927 = vadd.f32 %v925, %v926
  %v928 = vsel %vm681, %v842, 0.0
  %v929 = vadd.f32 %v927, %v928
  %v930 = vsel %vm681, %v843, 0.0
  %v931 = vadd.f32 %v929, %v930
  %v932 = vsel %vm681, %v844, 0.0
  %v933 = vadd.f32 %v931, %v932
  %v934 = vsel %vm681, %v845, 0.0
  %v935 = vadd.f32 %v933, %v934
  %v936 = vsel %vm681, %v846, 0.0
  %v937 = vadd.f32 %v935, %v936
  %v938 = vsel %vm681, %v847, 0.0
  %v939 = vadd.f32 %v937, %v938
  %v940 = vsel %vm681, %v848, 0.0
  %v941 = vadd.f32 %v939, %v940
  %v942 = vsel %vm681, %v849, 0.0
  %v943 = vadd.f32 %v941, %v942
  %v944 = vsel %vm681, %v850, 0.0
  %v945 = vadd.f32 %v943, %v944
  %v946 = vsel %vm681, %v851, 0.0
  %v947 = vadd.f32 %v945, %v946
  %v948 = vsel %vm681, %v852, 0.0
  %v949 = vadd.f32 %v947, %v948
  %v950 = vsel %vm681, %v853, 0.0
  %v951 = vadd.f32 %v949, %v950
  %v952 = vsel %vm681, %v854, 0.0
  %v953 = vadd.f32 %v951, %v952
  %v954 = vsel %vm681, %v855, 0.0
  %v955 = vadd.f32 %v953, %v954
  %v956 = vsel %vm681, %v856, 0.0
  %v957 = vadd.f32 %v955, %v956
  %v958 = vsel %vm681, %v857, 0.0
  %v959 = vadd.f32 %v957, %v958
  %v960 = vsel %vm681, %v858, 0.0
  %v961 = vadd.f32 %v959, %v960
  %v962 = vsel %vm681, %v859, 0.0
  %v963 = vadd.f32 %v961, %v962
  %v964 = vsel %vm681, %v860, 0.0
  %v965 = vadd.f32 %v963, %v964
  %v966 = vsel %vm681, %v861, 0.0
  %v967 = vadd.f32 %v965, %v966
  %v968 = vsel %vm681, %v862, 0.0
  %v969 = vadd.f32 %v967, %v968
  %v970 = vsel %vm681, %v863, 0.0
  %v971 = vadd.f32 %v969, %v970
  %v972 = vsel %vm681, %v864, 0.0
  %v973 = vadd.f32 %v971, %v972
  %v974 = vsel %vm681, %v865, 0.0
  %v975 = vadd.f32 %v973, %v974
  %v976 = vsel %vm681, %v866, 0.0
  %v977 = vadd.f32 %v975, %v976
  %v978 = vsel %vm681, %v867, 0.0
  %v979 = vadd.f32 %v977, %v978
  %v980 = vsel %vm681, %v868, 0.0
  %v981 = vadd.f32 %v979, %v980
  %v982 = vsel %vm681, %v869, 0.0
  %v983 = vadd.f32 %v981, %v982
  %v984 = vsel %vm681, %v870, 0.0
  %v985 = vadd.f32 %v983, %v984
  %v986 = vsel %vm681, %v871, 0.0
  %v987 = vadd.f32 %v985, %v986
  %v988 = vsel %vm681, %v872, 0.0
  %v989 = vadd.f32 %v987, %v988
  %v990 = vsel %vm681, %v873, 0.0
  %v991 = vadd.f32 %v989, %v990
  %v992 = vsel %vm681, %v874, 0.0
  %v993 = vadd.f32 %v991, %v992
  %v994 = vsel %vm681, %v875, 0.0
  %v995 = vadd.f32 %v993, %v994
  %v996 = vsel %vm681, %v876, 0.0
  %v997 = vadd.f32 %v995, %v996
  %v998 = vsel %vm681, %v877, 0.0
  %v999 = vadd.f32 %v997, %v998
  %v1000 = vsel %vm681, %v878, 0.0
  %v1001 = vadd.f32 %v999, %v1000
  %v1002 = vsel %vm681, %v879, 0.0
  %v1003 = vadd.f32 %v1001, %v1002
  %v1004 = vsel %vm681, %v880, 0.0
  %v1005 = vadd.f32 %v1003, %v1004
  %v1006 = vsel %vm681, %v881, 0.0
  %v1007 = vadd.f32 %v1005, %v1006
  %v1008 = vsel %vm681, %v882, 0.0
  %v1009 = vadd.f32 %v1007, %v1008
  %v1010 = vrot.slane %v1009, 4
  %v1011 = vadd.f32 %v1009, %v1010
  %v1012 = vrot.slane %v1011, 2
  %v1013 = vadd.f32 %v1011, %v1012
  %v1014 = vrot.slane %v1013, 1
  %v1015 = vadd.f32 %v1013, %v1014
  %v1016 = vadd.f32 %v818, %v1015
  %1017 = vst.msk [vmem:[#allocation4] sm:$0x1] %vm816, %v1016
  %1018 = vst.msk [vmem:[#allocation2] sm:$0xff] %vm681, %v355
  %1019 = vst.msk [vmem:[#allocation2 + $0x8] sm:$0xff] %vm681, %v360
  %1020 = vst.msk [vmem:[#allocation2 + $0x10] sm:$0xff] %vm681, %v365
  %1021 = vst.msk [vmem:[#allocation2 + $0x18] sm:$0xff] %vm681, %v370
  %1022 = vst.msk [vmem:[#allocation2 + $0x20] sm:$0xff] %vm681, %v375
  %1023 = vst.msk [vmem:[#allocation2 + $0x28] sm:$0xff] %vm681, %v380
  %1024 = vst.msk [vmem:[#allocation2 + $0x30] sm:$0xff] %vm681, %v385
  %1025 = vst.msk [vmem:[#allocation2 + $0x38] sm:$0xff] %vm681, %v390
  %1026 = vst.msk [vmem:[#allocation2 + $0x40] sm:$0xff] %vm681, %v395
  %1027 = vst.msk [vmem:[#allocation2 + $0x48] sm:$0xff] %vm681, %v400
  %1028 = vst.msk [vmem:[#allocation2 + $0x50] sm:$0xff] %vm681, %v405
  %1029 = vst.msk [vmem:[#allocation2 + $0x58] sm:$0xff] %vm681, %v410
  %1030 = vst.msk [vmem:[#allocation2 + $0x60] sm:$0xff] %vm681, %v415
  %1031 = vst.msk [vmem:[#allocation2 + $0x68] sm:$0xff] %vm681, %v420
  %1032 = vst.msk [vmem:[#allocation2 + $0x70] sm:$0xff] %vm681, %v425
  %1033 = vst.msk [vmem:[#allocation2 + $0x78] sm:$0xff] %vm681, %v430
  %1034 = vst.msk [vmem:[#allocation2 + $0x80] sm:$0xff] %vm681, %v435
  %1035 = vst.msk [vmem:[#allocation2 + $0x88] sm:$0xff] %vm681, %v440
  %1036 = vst.msk [vmem:[#allocation2 + $0x90] sm:$0xff] %vm681, %v445
  %1037 = vst.msk [vmem:[#allocation2 + $0x98] sm:$0xff] %vm681, %v450
  %1038 = vst.msk [vmem:[#allocation2 + $0xa0] sm:$0xff] %vm681, %v455
  %1039 = vst.msk [vmem:[#allocation2 + $0xa8] sm:$0xff] %vm681, %v460
  %1040 = vst.msk [vmem:[#allocation2 + $0xb0] sm:$0xff] %vm681, %v465
  %1041 = vst.msk [vmem:[#allocation2 + $0xb8] sm:$0xff] %vm681, %v470
  %1042 = vst.msk [vmem:[#allocation2 + $0xc0] sm:$0xff] %vm681, %v475
  %1043 = vst.msk [vmem:[#allocation2 + $0xc8] sm:$0xff] %vm681, %v480
  %1044 = vst.msk [vmem:[#allocation2 + $0xd0] sm:$0xff] %vm681, %v485
  %1045 = vst.msk [vmem:[#allocation2 + $0xd8] sm:$0xff] %vm681, %v490
  %1046 = vst.msk [vmem:[#allocation2 + $0xe0] sm:$0xff] %vm681, %v495
  %1047 = vst.msk [vmem:[#allocation2 + $0xe8] sm:$0xff] %vm681, %v500
  %1048 = vst.msk [vmem:[#allocation2 + $0xf0] sm:$0xff] %vm681, %v505
  %1049 = vst.msk [vmem:[#allocation2 + $0xf8] sm:$0xff] %vm681, %v510
  %1050 = vst.msk [vmem:[#allocation2 + $0x100] sm:$0xff] %vm681, %v515
  %1051 = vst.msk [vmem:[#allocation2 + $0x108] sm:$0xff] %vm681, %v520
  %1052 = vst.msk [vmem:[#allocation2 + $0x110] sm:$0xff] %vm681, %v525
  %1053 = vst.msk [vmem:[#allocation2 + $0x118] sm:$0xff] %vm681, %v530
  %1054 = vst.msk [vmem:[#allocation2 + $0x120] sm:$0xff] %vm681, %v535
  %1055 = vst.msk [vmem:[#allocation2 + $0x128] sm:$0xff] %vm681, %v540
  %1056 = vst.msk [vmem:[#allocation2 + $0x130] sm:$0xff] %vm681, %v545
  %1057 = vst.msk [vmem:[#allocation2 + $0x138] sm:$0xff] %vm681, %v550
  %1058 = vst.msk [vmem:[#allocation2 + $0x140] sm:$0xff] %vm681, %v555
  %1059 = vst.msk [vmem:[#allocation2 + $0x148] sm:$0xff] %vm681, %v560
  %1060 = vst.msk [vmem:[#allocation2 + $0x150] sm:$0xff] %vm681, %v565
  %1061 = vst.msk [vmem:[#allocation2 + $0x158] sm:$0xff] %vm681, %v570
  %1062 = vst.msk [vmem:[#allocation2 + $0x160] sm:$0xff] %vm681, %v575
  %1063 = vst.msk [vmem:[#allocation2 + $0x168] sm:$0xff] %vm681, %v580
  %1064 = vst.msk [vmem:[#allocation2 + $0x170] sm:$0xff] %vm681, %v585
  %1065 = vst.msk [vmem:[#allocation2 + $0x178] sm:$0xff] %vm681, %v590
  %1066 = vst.msk [vmem:[#allocation2 + $0x180] sm:$0xff] %vm681, %v595
  %1067 = vst.msk [vmem:[#allocation2 + $0x188] sm:$0xff] %vm681, %v600
  %1068 = vst.msk [vmem:[#allocation2 + $0x190] sm:$0xff] %vm681, %v605
  %1069 = vst.msk [vmem:[#allocation2 + $0x198] sm:$0xff] %vm681, %v610
  %1070 = vst.msk [vmem:[#allocation2 + $0x1a0] sm:$0xff] %vm681, %v615
  %1071 = vst.msk [vmem:[#allocation2 + $0x1a8] sm:$0xff] %vm681, %v620
  %1072 = vst.msk [vmem:[#allocation2 + $0x1b0] sm:$0xff] %vm681, %v625
  %1073 = vst.msk [vmem:[#allocation2 + $0x1b8] sm:$0xff] %vm681, %v630
  %1074 = vst.msk [vmem:[#allocation2 + $0x1c0] sm:$0xff] %vm681, %v635
  %1075 = vst.msk [vmem:[#allocation2 + $0x1c8] sm:$0xff] %vm681, %v640
  %1076 = vst.msk [vmem:[#allocation2 + $0x1d0] sm:$0xff] %vm681, %v645
  %1077 = vst.msk [vmem:[#allocation2 + $0x1d8] sm:$0xff] %vm681, %v650
  %1078 = vst.msk [vmem:[#allocation2 + $0x1e0] sm:$0xff] %vm681, %v655
  %1079 = vst.msk [vmem:[#allocation2 + $0x1e8] sm:$0xff] %vm681, %v660
  %1080 = vst.msk [vmem:[#allocation2 + $0x1f0] sm:$0xff] %vm681, %v665
  %1081 = vst.msk [vmem:[#allocation2 + $0x1f8] sm:$0xff] %vm681, %v670
  %v1082 = vld [vmem:[#allocation3] sm:$0x1]
  %v1083 = vld [vmem:[#allocation4] sm:$0x1]
  %v1084 = vmul.f32 %v1082, 0.001953125
  %v1085 = vmul.f32 %v1083, 0.001953125
  %v1086 = vmul.f32 %v1084, %v1084
  %v1087 = vsub.f32 %v1085, %v1086
  %v1088 = vmax.f32 %v1087, 0.0
  %v1089 = vld [vmem:[%s2] sm:$0x1]
  %v1090 = vadd.f32 %v1088, 1e-05
  %v1091 = vrsqrt.pop %v1090
  %v1092 = vmul.f32 %v1089, %v1091
  %v1093 = vld [vmem:[%s3] sm:$0x1]
  %v1094 = vmul.f32 %v1084, %v1092
  %v1095 = vsub.f32 %v1093, %v1094
  // Predicated region
  $region30: #{inner_unet_forward.8} parent=0 // pred_check
    %p1096 = pneg %p673
  $region31: #{inner_unet_forward.8} parent=0 // pred_check_branch
    %1098 = sbr.rel (%p1096) target = $region33
  $region32: #{inner_unet_forward.8} parent=0 // pred_region
    %v1099 = vld [vmem:[#allocation2] sm:$0xff]
    %v1100 = vld [vmem:[#allocation2 + $0x8] sm:$0xff]
    %v1101 = vld [vmem:[#allocation2 + $0x10] sm:$0xff]
    %v1102 = vld [vmem:[#allocation2 + $0x18] sm:$0xff]
    %v1103 = vld [vmem:[#allocation2 + $0x20] sm:$0xff]
    %v1104 = vld [vmem:[#allocation2 + $0x28] sm:$0xff]
    %v1105 = vld [vmem:[#allocation2 + $0x30] sm:$0xff]
    %v1106 = vld [vmem:[#allocation2 + $0x38] sm:$0xff]
    %v1107 = vld [vmem:[#allocation2 + $0x40] sm:$0xff]
    %v1108 = vld [vmem:[#allocation2 + $0x48] sm:$0xff]
    %v1109 = vld [vmem:[#allocation2 + $0x50] sm:$0xff]
    %v1110 = vld [vmem:[#allocation2 + $0x58] sm:$0xff]
    %v1111 = vld [vmem:[#allocation2 + $0x60] sm:$0xff]
    %v1112 = vld [vmem:[#allocation2 + $0x68] sm:$0xff]
    %v1113 = vld [vmem:[#allocation2 + $0x70] sm:$0xff]
    %v1114 = vld [vmem:[#allocation2 + $0x78] sm:$0xff]
    %v1115 = vld [vmem:[#allocation2 + $0x80] sm:$0xff]
    %v1116 = vld [vmem:[#allocation2 + $0x88] sm:$0xff]
    %v1117 = vld [vmem:[#allocation2 + $0x90] sm:$0xff]
    %v1118 = vld [vmem:[#allocation2 + $0x98] sm:$0xff]
    %v1119 = vld [vmem:[#allocation2 + $0xa0] sm:$0xff]
    %v1120 = vld [vmem:[#allocation2 + $0xa8] sm:$0xff]
    %v1121 = vld [vmem:[#allocation2 + $0xb0] sm:$0xff]
    %v1122 = vld [vmem:[#allocation2 + $0xb8] sm:$0xff]
    %v1123 = vld [vmem:[#allocation2 + $0xc0] sm:$0xff]
    %v1124 = vld [vmem:[#allocation2 + $0xc8] sm:$0xff]
    %v1125 = vld [vmem:[#allocation2 + $0xd0] sm:$0xff]
    %v1126 = vld [vmem:[#allocation2 + $0xd8] sm:$0xff]
    %v1127 = vld [vmem:[#allocation2 + $0xe0] sm:$0xff]
    %v1128 = vld [vmem:[#allocation2 + $0xe8] sm:$0xff]
    %v1129 = vld [vmem:[#allocation2 + $0xf0] sm:$0xff]
    %v1130 = vld [vmem:[#allocation2 + $0xf8] sm:$0xff]
    %v1131 = vld [vmem:[#allocation2 + $0x100] sm:$0xff]
    %v1132 = vld [vmem:[#allocation2 + $0x108] sm:$0xff]
    %v1133 = vld [vmem:[#allocation2 + $0x110] sm:$0xff]
    %v1134 = vld [vmem:[#allocation2 + $0x118] sm:$0xff]
    %v1135 = vld [vmem:[#allocation2 + $0x120] sm:$0xff]
    %v1136 = vld [vmem:[#allocation2 + $0x128] sm:$0xff]
    %v1137 = vld [vmem:[#allocation2 + $0x130] sm:$0xff]
    %v1138 = vld [vmem:[#allocation2 + $0x138] sm:$0xff]
    %v1139 = vld [vmem:[#allocation2 + $0x140] sm:$0xff]
    %v1140 = vld [vmem:[#allocation2 + $0x148] sm:$0xff]
    %v1141 = vld [vmem:[#allocation2 + $0x150] sm:$0xff]
    %v1142 = vld [vmem:[#allocation2 + $0x158] sm:$0xff]
    %v1143 = vld [vmem:[#allocation2 + $0x160] sm:$0xff]
    %v1144 = vld [vmem:[#allocation2 + $0x168] sm:$0xff]
    %v1145 = vld [vmem:[#allocation2 + $0x170] sm:$0xff]
    %v1146 = vld [vmem:[#allocation2 + $0x178] sm:$0xff]
    %v1147 = vld [vmem:[#allocation2 + $0x180] sm:$0xff]
    %v1148 = vld [vmem:[#allocation2 + $0x188] sm:$0xff]
    %v1149 = vld [vmem:[#allocation2 + $0x190] sm:$0xff]
    %v1150 = vld [vmem:[#allocation2 + $0x198] sm:$0xff]
    %v1151 = vld [vmem:[#allocation2 + $0x1a0] sm:$0xff]
    %v1152 = vld [vmem:[#allocation2 + $0x1a8] sm:$0xff]
    %v1153 = vld [vmem:[#allocation2 + $0x1b0] sm:$0xff]
    %v1154 = vld [vmem:[#allocation2 + $0x1b8] sm:$0xff]
    %v1155 = vld [vmem:[#allocation2 + $0x1c0] sm:$0xff]
    %v1156 = vld [vmem:[#allocation2 + $0x1c8] sm:$0xff]
    %v1157 = vld [vmem:[#allocation2 + $0x1d0] sm:$0xff]
    %v1158 = vld [vmem:[#allocation2 + $0x1d8] sm:$0xff]
    %v1159 = vld [vmem:[#allocation2 + $0x1e0] sm:$0xff]
    %v1160 = vld [vmem:[#allocation2 + $0x1e8] sm:$0xff]
    %v1161 = vld [vmem:[#allocation2 + $0x1f0] sm:$0xff]
    %v1162 = vld [vmem:[#allocation2 + $0x1f8] sm:$0xff]
    %v1164 = vlaneseq
    %v1165 = vshrl.u32 %v1164, 7
    %v1166 = vsub.s32 0, %v1165
    %v1167 = vrot.slane %v1092, %v1166
    %v1169 = vmul.f32 %v1099, %v1167
    %v1170 = vmul.f32 %v1100, %v1167
    %v1171 = vmul.f32 %v1101, %v1167
    %v1172 = vmul.f32 %v1102, %v1167
    %v1173 = vmul.f32 %v1103, %v1167
    %v1174 = vmul.f32 %v1104, %v1167
    %v1175 = vmul.f32 %v1105, %v1167
    %v1176 = vmul.f32 %v1106, %v1167
    %v1177 = vmul.f32 %v1107, %v1167
    %v1178 = vmul.f32 %v1108, %v1167
    %v1179 = vmul.f32 %v1109, %v1167
    %v1180 = vmul.f32 %v1110, %v1167
    %v1181 = vmul.f32 %v1111, %v1167
    %v1182 = vmul.f32 %v1112, %v1167
    %v1183 = vmul.f32 %v1113, %v1167
    %v1184 = vmul.f32 %v1114, %v1167
    %v1185 = vmul.f32 %v1115, %v1167
    %v1186 = vmul.f32 %v1116, %v1167
    %v1187 = vmul.f32 %v1117, %v1167
    %v1188 = vmul.f32 %v1118, %v1167
    %v1189 = vmul.f32 %v1119, %v1167
    %v1190 = vmul.f32 %v1120, %v1167
    %v1191 = vmul.f32 %v1121, %v1167
    %v1192 = vmul.f32 %v1122, %v1167
    %v1193 = vmul.f32 %v1123, %v1167
    %v1194 = vmul.f32 %v1124, %v1167
    %v1195 = vmul.f32 %v1125, %v1167
    %v1196 = vmul.f32 %v1126, %v1167
    %v1197 = vmul.f32 %v1127, %v1167
    %v1198 = vmul.f32 %v1128, %v1167
    %v1199 = vmul.f32 %v1129, %v1167
    %v1200 = vmul.f32 %v1130, %v1167
    %v1201 = vmul.f32 %v1131, %v1167
    %v1202 = vmul.f32 %v1132, %v1167
    %v1203 = vmul.f32 %v1133, %v1167
    %v1204 = vmul.f32 %v1134, %v1167
    %v1205 = vmul.f32 %v1135, %v1167
    %v1206 = vmul.f32 %v1136, %v1167
    %v1207 = vmul.f32 %v1137, %v1167
    %v1208 = vmul.f32 %v1138, %v1167
    %v1209 = vmul.f32 %v1139, %v1167
    %v1210 = vmul.f32 %v1140, %v1167
    %v1211 = vmul.f32 %v1141, %v1167
    %v1212 = vmul.f32 %v1142, %v1167
    %v1213 = vmul.f32 %v1143, %v1167
    %v1214 = vmul.f32 %v1144, %v1167
    %v1215 = vmul.f32 %v1145, %v1167
    %v1216 = vmul.f32 %v1146, %v1167
    %v1217 = vmul.f32 %v1147, %v1167
    %v1218 = vmul.f32 %v1148, %v1167
    %v1219 = vmul.f32 %v1149, %v1167
    %v1220 = vmul.f32 %v1150, %v1167
    %v1221 = vmul.f32 %v1151, %v1167
    %v1222 = vmul.f32 %v1152, %v1167
    %v1223 = vmul.f32 %v1153, %v1167
    %v1224 = vmul.f32 %v1154, %v1167
    %v1225 = vmul.f32 %v1155, %v1167
    %v1226 = vmul.f32 %v1156, %v1167
    %v1227 = vmul.f32 %v1157, %v1167
    %v1228 = vmul.f32 %v1158, %v1167
    %v1229 = vmul.f32 %v1159, %v1167
    %v1230 = vmul.f32 %v1160, %v1167
    %v1231 = vmul.f32 %v1161, %v1167
    %v1232 = vmul.f32 %v1162, %v1167
    %v1234 = vlaneseq
    %v1235 = vshrl.u32 %v1234, 7
    %v1236 = vsub.s32 0, %v1235
    %v1237 = vrot.slane %v1095, %v1236
    %v1239 = vadd.f32 %v1169, %v1237
    %v1240 = vadd.f32 %v1170, %v1237
    %v1241 = vadd.f32 %v1171, %v1237
    %v1242 = vadd.f32 %v1172, %v1237
    %v1243 = vadd.f32 %v1173, %v1237
    %v1244 = vadd.f32 %v1174, %v1237
    %v1245 = vadd.f32 %v1175, %v1237
    %v1246 = vadd.f32 %v1176, %v1237
    %v1247 = vadd.f32 %v1177, %v1237
    %v1248 = vadd.f32 %v1178, %v1237
    %v1249 = vadd.f32 %v1179, %v1237
    %v1250 = vadd.f32 %v1180, %v1237
    %v1251 = vadd.f32 %v1181, %v1237
    %v1252 = vadd.f32 %v1182, %v1237
    %v1253 = vadd.f32 %v1183, %v1237
    %v1254 = vadd.f32 %v1184, %v1237
    %v1255 = vadd.f32 %v1185, %v1237
    %v1256 = vadd.f32 %v1186, %v1237
    %v1257 = vadd.f32 %v1187, %v1237
    %v1258 = vadd.f32 %v1188, %v1237
    %v1259 = vadd.f32 %v1189, %v1237
    %v1260 = vadd.f32 %v1190, %v1237
    %v1261 = vadd.f32 %v1191, %v1237
    %v1262 = vadd.f32 %v1192, %v1237
    %v1263 = vadd.f32 %v1193, %v1237
    %v1264 = vadd.f32 %v1194, %v1237
    %v1265 = vadd.f32 %v1195, %v1237
    %v1266 = vadd.f32 %v1196, %v1237
    %v1267 = vadd.f32 %v1197, %v1237
    %v1268 = vadd.f32 %v1198, %v1237
    %v1269 = vadd.f32 %v1199, %v1237
    %v1270 = vadd.f32 %v1200, %v1237
    %v1271 = vadd.f32 %v1201, %v1237
    %v1272 = vadd.f32 %v1202, %v1237
    %v1273 = vadd.f32 %v1203, %v1237
    %v1274 = vadd.f32 %v1204, %v1237
    %v1275 = vadd.f32 %v1205, %v1237
    %v1276 = vadd.f32 %v1206, %v1237
    %v1277 = vadd.f32 %v1207, %v1237
    %v1278 = vadd.f32 %v1208, %v1237
    %v1279 = vadd.f32 %v1209, %v1237
    %v1280 = vadd.f32 %v1210, %v1237
    %v1281 = vadd.f32 %v1211, %v1237
    %v1282 = vadd.f32 %v1212, %v1237
    %v1283 = vadd.f32 %v1213, %v1237
    %v1284 = vadd.f32 %v1214, %v1237
    %v1285 = vadd.f32 %v1215, %v1237
    %v1286 = vadd.f32 %v1216, %v1237
    %v1287 = vadd.f32 %v1217, %v1237
    %v1288 = vadd.f32 %v1218, %v1237
    %v1289 = vadd.f32 %v1219, %v1237
    %v1290 = vadd.f32 %v1220, %v1237
    %v1291 = vadd.f32 %v1221, %v1237
    %v1292 = vadd.f32 %v1222, %v1237
    %v1293 = vadd.f32 %v1223, %v1237
    %v1294 = vadd.f32 %v1224, %v1237
    %v1295 = vadd.f32 %v1225, %v1237
    %v1296 = vadd.f32 %v1226, %v1237
    %v1297 = vadd.f32 %v1227, %v1237
    %v1298 = vadd.f32 %v1228, %v1237
    %v1299 = vadd.f32 %v1229, %v1237
    %v1300 = vadd.f32 %v1230, %v1237
    %v1301 = vadd.f32 %v1231, %v1237
    %v1302 = vadd.f32 %v1232, %v1237
    %vm1303 = vcmp.ge.f32.partialorder %v1239, 0.0
    %vm1304 = vcmp.ge.f32.partialorder %v1240, 0.0
    %vm1305 = vcmp.ge.f32.partialorder %v1241, 0.0
    %vm1306 = vcmp.ge.f32.partialorder %v1242, 0.0
    %vm1307 = vcmp.ge.f32.partialorder %v1243, 0.0
    %vm1308 = vcmp.ge.f32.partialorder %v1244, 0.0
    %vm1309 = vcmp.ge.f32.partialorder %v1245, 0.0
    %vm1310 = vcmp.ge.f32.partialorder %v1246, 0.0
    %vm1311 = vcmp.ge.f32.partialorder %v1247, 0.0
    %vm1312 = vcmp.ge.f32.partialorder %v1248, 0.0
    %vm1313 = vcmp.ge.f32.partialorder %v1249, 0.0
    %vm1314 = vcmp.ge.f32.partialorder %v1250, 0.0
    %vm1315 = vcmp.ge.f32.partialorder %v1251, 0.0
    %vm1316 = vcmp.ge.f32.partialorder %v1252, 0.0
    %vm1317 = vcmp.ge.f32.partialorder %v1253, 0.0
    %vm1318 = vcmp.ge.f32.partialorder %v1254, 0.0
    %vm1319 = vcmp.ge.f32.partialorder %v1255, 0.0
    %vm1320 = vcmp.ge.f32.partialorder %v1256, 0.0
    %vm1321 = vcmp.ge.f32.partialorder %v1257, 0.0
    %vm1322 = vcmp.ge.f32.partialorder %v1258, 0.0
    %vm1323 = vcmp.ge.f32.partialorder %v1259, 0.0
    %vm1324 = vcmp.ge.f32.partialorder %v1260, 0.0
    %vm1325 = vcmp.ge.f32.partialorder %v1261, 0.0
    %vm1326 = vcmp.ge.f32.partialorder %v1262, 0.0
    %vm1327 = vcmp.ge.f32.partialorder %v1263, 0.0
    %vm1328 = vcmp.ge.f32.partialorder %v1264, 0.0
    %vm1329 = vcmp.ge.f32.partialorder %v1265, 0.0
    %vm1330 = vcmp.ge.f32.partialorder %v1266, 0.0
    %vm1331 = vcmp.ge.f32.partialorder %v1267, 0.0
    %vm1332 = vcmp.ge.f32.partialorder %v1268, 0.0
    %vm1333 = vcmp.ge.f32.partialorder %v1269, 0.0
    %vm1334 = vcmp.ge.f32.partialorder %v1270, 0.0
    %vm1335 = vcmp.ge.f32.partialorder %v1271, 0.0
    %vm1336 = vcmp.ge.f32.partialorder %v1272, 0.0
    %vm1337 = vcmp.ge.f32.partialorder %v1273, 0.0
    %vm1338 = vcmp.ge.f32.partialorder %v1274, 0.0
    %vm1339 = vcmp.ge.f32.partialorder %v1275, 0.0
    %vm1340 = vcmp.ge.f32.partialorder %v1276, 0.0
    %vm1341 = vcmp.ge.f32.partialorder %v1277, 0.0
    %vm1342 = vcmp.ge.f32.partialorder %v1278, 0.0
    %vm1343 = vcmp.ge.f32.partialorder %v1279, 0.0
    %vm1344 = vcmp.ge.f32.partialorder %v1280, 0.0
    %vm1345 = vcmp.ge.f32.partialorder %v1281, 0.0
    %vm1346 = vcmp.ge.f32.partialorder %v1282, 0.0
    %vm1347 = vcmp.ge.f32.partialorder %v1283, 0.0
    %vm1348 = vcmp.ge.f32.partialorder %v1284, 0.0
    %vm1349 = vcmp.ge.f32.partialorder %v1285, 0.0
    %vm1350 = vcmp.ge.f32.partialorder %v1286, 0.0
    %vm1351 = vcmp.ge.f32.partialorder %v1287, 0.0
    %vm1352 = vcmp.ge.f32.partialorder %v1288, 0.0
    %vm1353 = vcmp.ge.f32.partialorder %v1289, 0.0
    %vm1354 = vcmp.ge.f32.partialorder %v1290, 0.0
    %vm1355 = vcmp.ge.f32.partialorder %v1291, 0.0
    %vm1356 = vcmp.ge.f32.partialorder %v1292, 0.0
    %vm1357 = vcmp.ge.f32.partialorder %v1293, 0.0
    %vm1358 = vcmp.ge.f32.partialorder %v1294, 0.0
    %vm1359 = vcmp.ge.f32.partialorder %v1295, 0.0
    %vm1360 = vcmp.ge.f32.partialorder %v1296, 0.0
    %vm1361 = vcmp.ge.f32.partialorder %v1297, 0.0
    %vm1362 = vcmp.ge.f32.partialorder %v1298, 0.0
    %vm1363 = vcmp.ge.f32.partialorder %v1299, 0.0
    %vm1364 = vcmp.ge.f32.partialorder %v1300, 0.0
    %vm1365 = vcmp.ge.f32.partialorder %v1301, 0.0
    %vm1366 = vcmp.ge.f32.partialorder %v1302, 0.0
    %v1367 = vmul.f32 %v1239, 0.2
    %v1368 = vmul.f32 %v1240, 0.2
    %v1369 = vmul.f32 %v1241, 0.2
    %v1370 = vmul.f32 %v1242, 0.2
    %v1371 = vmul.f32 %v1243, 0.2
    %v1372 = vmul.f32 %v1244, 0.2
    %v1373 = vmul.f32 %v1245, 0.2
    %v1374 = vmul.f32 %v1246, 0.2
    %v1375 = vmul.f32 %v1247, 0.2
    %v1376 = vmul.f32 %v1248, 0.2
    %v1377 = vmul.f32 %v1249, 0.2
    %v1378 = vmul.f32 %v1250, 0.2
    %v1379 = vmul.f32 %v1251, 0.2
    %v1380 = vmul.f32 %v1252, 0.2
    %v1381 = vmul.f32 %v1253, 0.2
    %v1382 = vmul.f32 %v1254, 0.2
    %v1383 = vmul.f32 %v1255, 0.2
    %v1384 = vmul.f32 %v1256, 0.2
    %v1385 = vmul.f32 %v1257, 0.2
    %v1386 = vmul.f32 %v1258, 0.2
    %v1387 = vmul.f32 %v1259, 0.2
    %v1388 = vmul.f32 %v1260, 0.2
    %v1389 = vmul.f32 %v1261, 0.2
    %v1390 = vmul.f32 %v1262, 0.2
    %v1391 = vmul.f32 %v1263, 0.2
    %v1392 = vmul.f32 %v1264, 0.2
    %v1393 = vmul.f32 %v1265, 0.2
    %v1394 = vmul.f32 %v1266, 0.2
    %v1395 = vmul.f32 %v1267, 0.2
    %v1396 = vmul.f32 %v1268, 0.2
    %v1397 = vmul.f32 %v1269, 0.2
    %v1398 = vmul.f32 %v1270, 0.2
    %v1399 = vmul.f32 %v1271, 0.2
    %v1400 = vmul.f32 %v1272, 0.2
    %v1401 = vmul.f32 %v1273, 0.2
    %v1402 = vmul.f32 %v1274, 0.2
    %v1403 = vmul.f32 %v1275, 0.2
    %v1404 = vmul.f32 %v1276, 0.2
    %v1405 = vmul.f32 %v1277, 0.2
    %v1406 = vmul.f32 %v1278, 0.2
    %v1407 = vmul.f32 %v1279, 0.2
    %v1408 = vmul.f32 %v1280, 0.2
    %v1409 = vmul.f32 %v1281, 0.2
    %v1410 = vmul.f32 %v1282, 0.2
    %v1411 = vmul.f32 %v1283, 0.2
    %v1412 = vmul.f32 %v1284, 0.2
    %v1413 = vmul.f32 %v1285, 0.2
    %v1414 = vmul.f32 %v1286, 0.2
    %v1415 = vmul.f32 %v1287, 0.2
    %v1416 = vmul.f32 %v1288, 0.2
    %v1417 = vmul.f32 %v1289, 0.2
    %v1418 = vmul.f32 %v1290, 0.2
    %v1419 = vmul.f32 %v1291, 0.2
    %v1420 = vmul.f32 %v1292, 0.2
    %v1421 = vmul.f32 %v1293, 0.2
    %v1422 = vmul.f32 %v1294, 0.2
    %v1423 = vmul.f32 %v1295, 0.2
    %v1424 = vmul.f32 %v1296, 0.2
    %v1425 = vmul.f32 %v1297, 0.2
    %v1426 = vmul.f32 %v1298, 0.2
    %v1427 = vmul.f32 %v1299, 0.2
    %v1428 = vmul.f32 %v1300, 0.2
    %v1429 = vmul.f32 %v1301, 0.2
    %v1430 = vmul.f32 %v1302, 0.2
    %v1431 = vsel %vm1303, %v1239, %v1367
    %v1432 = vsel %vm1304, %v1240, %v1368
    %v1433 = vsel %vm1305, %v1241, %v1369
    %v1434 = vsel %vm1306, %v1242, %v1370
    %v1435 = vsel %vm1307, %v1243, %v1371
    %v1436 = vsel %vm1308, %v1244, %v1372
    %v1437 = vsel %vm1309, %v1245, %v1373
    %v1438 = vsel %vm1310, %v1246, %v1374
    %v1439 = vsel %vm1311, %v1247, %v1375
    %v1440 = vsel %vm1312, %v1248, %v1376
    %v1441 = vsel %vm1313, %v1249, %v1377
    %v1442 = vsel %vm1314, %v1250, %v1378
    %v1443 = vsel %vm1315, %v1251, %v1379
    %v1444 = vsel %vm1316, %v1252, %v1380
    %v1445 = vsel %vm1317, %v1253, %v1381
    %v1446 = vsel %vm1318, %v1254, %v1382
    %v1447 = vsel %vm1319, %v1255, %v1383
    %v1448 = vsel %vm1320, %v1256, %v1384
    %v1449 = vsel %vm1321, %v1257, %v1385
    %v1450 = vsel %vm1322, %v1258, %v1386
    %v1451 = vsel %vm1323, %v1259, %v1387
    %v1452 = vsel %vm1324, %v1260, %v1388
    %v1453 = vsel %vm1325, %v1261, %v1389
    %v1454 = vsel %vm1326, %v1262, %v1390
    %v1455 = vsel %vm1327, %v1263, %v1391
    %v1456 = vsel %vm1328, %v1264, %v1392
    %v1457 = vsel %vm1329, %v1265, %v1393
    %v1458 = vsel %vm1330, %v1266, %v1394
    %v1459 = vsel %vm1331, %v1267, %v1395
    %v1460 = vsel %vm1332, %v1268, %v1396
    %v1461 = vsel %vm1333, %v1269, %v1397
    %v1462 = vsel %vm1334, %v1270, %v1398
    %v1463 = vsel %vm1335, %v1271, %v1399
    %v1464 = vsel %vm1336, %v1272, %v1400
    %v1465 = vsel %vm1337, %v1273, %v1401
    %v1466 = vsel %vm1338, %v1274, %v1402
    %v1467 = vsel %vm1339, %v1275, %v1403
    %v1468 = vsel %vm1340, %v1276, %v1404
    %v1469 = vsel %vm1341, %v1277, %v1405
    %v1470 = vsel %vm1342, %v1278, %v1406
    %v1471 = vsel %vm1343, %v1279, %v1407
    %v1472 = vsel %vm1344, %v1280, %v1408
    %v1473 = vsel %vm1345, %v1281, %v1409
    %v1474 = vsel %vm1346, %v1282, %v1410
    %v1475 = vsel %vm1347, %v1283, %v1411
    %v1476 = vsel %vm1348, %v1284, %v1412
    %v1477 = vsel %vm1349, %v1285, %v1413
    %v1478 = vsel %vm1350, %v1286, %v1414
    %v1479 = vsel %vm1351, %v1287, %v1415
    %v1480 = vsel %vm1352, %v1288, %v1416
    %v1481 = vsel %vm1353, %v1289, %v1417
    %v1482 = vsel %vm1354, %v1290, %v1418
    %v1483 = vsel %vm1355, %v1291, %v1419
    %v1484 = vsel %vm1356, %v1292, %v1420
    %v1485 = vsel %vm1357, %v1293, %v1421
    %v1486 = vsel %vm1358, %v1294, %v1422
    %v1487 = vsel %vm1359, %v1295, %v1423
    %v1488 = vsel %vm1360, %v1296, %v1424
    %v1489 = vsel %vm1361, %v1297, %v1425
    %v1490 = vsel %vm1362, %v1298, %v1426
    %v1491 = vsel %vm1363, %v1299, %v1427
    %v1492 = vsel %vm1364, %v1300, %v1428
    %v1493 = vsel %vm1365, %v1301, %v1429
    %v1494 = vsel %vm1366, %v1302, %v1430
    %1495 = vst.msk [vmem:[%s6] sm:$0xff] %vm681, %v1431
    %1496 = vst.msk [vmem:[%s6 + $0x8] sm:$0xff] %vm681, %v1432
    %1497 = vst.msk [vmem:[%s6 + $0x10] sm:$0xff] %vm681, %v1433
    %1498 = vst.msk [vmem:[%s6 + $0x18] sm:$0xff] %vm681, %v1434
    %1499 = vst.msk [vmem:[%s6 + $0x20] sm:$0xff] %vm681, %v1435
    %1500 = vst.msk [vmem:[%s6 + $0x28] sm:$0xff] %vm681, %v1436
    %1501 = vst.msk [vmem:[%s6 + $0x30] sm:$0xff] %vm681, %v1437
    %1502 = vst.msk [vmem:[%s6 + $0x38] sm:$0xff] %vm681, %v1438
    %1503 = vst.msk [vmem:[%s6 + $0x40] sm:$0xff] %vm681, %v1439
    %1504 = vst.msk [vmem:[%s6 + $0x48] sm:$0xff] %vm681, %v1440
    %1505 = vst.msk [vmem:[%s6 + $0x50] sm:$0xff] %vm681, %v1441
    %1506 = vst.msk [vmem:[%s6 + $0x58] sm:$0xff] %vm681, %v1442
    %1507 = vst.msk [vmem:[%s6 + $0x60] sm:$0xff] %vm681, %v1443
    %1508 = vst.msk [vmem:[%s6 + $0x68] sm:$0xff] %vm681, %v1444
    %1509 = vst.msk [vmem:[%s6 + $0x70] sm:$0xff] %vm681, %v1445
    %1510 = vst.msk [vmem:[%s6 + $0x78] sm:$0xff] %vm681, %v1446
    %1511 = vst.msk [vmem:[%s6 + $0x80] sm:$0xff] %vm681, %v1447
    %1512 = vst.msk [vmem:[%s6 + $0x88] sm:$0xff] %vm681, %v1448
    %1513 = vst.msk [vmem:[%s6 + $0x90] sm:$0xff] %vm681, %v1449
    %1514 = vst.msk [vmem:[%s6 + $0x98] sm:$0xff] %vm681, %v1450
    %1515 = vst.msk [vmem:[%s6 + $0xa0] sm:$0xff] %vm681, %v1451
    %1516 = vst.msk [vmem:[%s6 + $0xa8] sm:$0xff] %vm681, %v1452
    %1517 = vst.msk [vmem:[%s6 + $0xb0] sm:$0xff] %vm681, %v1453
    %1518 = vst.msk [vmem:[%s6 + $0xb8] sm:$0xff] %vm681, %v1454
    %1519 = vst.msk [vmem:[%s6 + $0xc0] sm:$0xff] %vm681, %v1455
    %1520 = vst.msk [vmem:[%s6 + $0xc8] sm:$0xff] %vm681, %v1456
    %1521 = vst.msk [vmem:[%s6 + $0xd0] sm:$0xff] %vm681, %v1457
    %1522 = vst.msk [vmem:[%s6 + $0xd8] sm:$0xff] %vm681, %v1458
    %1523 = vst.msk [vmem:[%s6 + $0xe0] sm:$0xff] %vm681, %v1459
    %1524 = vst.msk [vmem:[%s6 + $0xe8] sm:$0xff] %vm681, %v1460
    %1525 = vst.msk [vmem:[%s6 + $0xf0] sm:$0xff] %vm681, %v1461
    %1526 = vst.msk [vmem:[%s6 + $0xf8] sm:$0xff] %vm681, %v1462
    %1527 = vst.msk [vmem:[%s6 + $0x100] sm:$0xff] %vm681, %v1463
    %1528 = vst.msk [vmem:[%s6 + $0x108] sm:$0xff] %vm681, %v1464
    %1529 = vst.msk [vmem:[%s6 + $0x110] sm:$0xff] %vm681, %v1465
    %1530 = vst.msk [vmem:[%s6 + $0x118] sm:$0xff] %vm681, %v1466
    %1531 = vst.msk [vmem:[%s6 + $0x120] sm:$0xff] %vm681, %v1467
    %1532 = vst.msk [vmem:[%s6 + $0x128] sm:$0xff] %vm681, %v1468
    %1533 = vst.msk [vmem:[%s6 + $0x130] sm:$0xff] %vm681, %v1469
    %1534 = vst.msk [vmem:[%s6 + $0x138] sm:$0xff] %vm681, %v1470
    %1535 = vst.msk [vmem:[%s6 + $0x140] sm:$0xff] %vm681, %v1471
    %1536 = vst.msk [vmem:[%s6 + $0x148] sm:$0xff] %vm681, %v1472
    %1537 = vst.msk [vmem:[%s6 + $0x150] sm:$0xff] %vm681, %v1473
    %1538 = vst.msk [vmem:[%s6 + $0x158] sm:$0xff] %vm681, %v1474
    %1539 = vst.msk [vmem:[%s6 + $0x160] sm:$0xff] %vm681, %v1475
    %1540 = vst.msk [vmem:[%s6 + $0x168] sm:$0xff] %vm681, %v1476
    %1541 = vst.msk [vmem:[%s6 + $0x170] sm:$0xff] %vm681, %v1477
    %1542 = vst.msk [vmem:[%s6 + $0x178] sm:$0xff] %vm681, %v1478
    %1543 = vst.msk [vmem:[%s6 + $0x180] sm:$0xff] %vm681, %v1479
    %1544 = vst.msk [vmem:[%s6 + $0x188] sm:$0xff] %vm681, %v1480
    %1545 = vst.msk [vmem:[%s6 + $0x190] sm:$0xff] %vm681, %v1481
    %1546 = vst.msk [vmem:[%s6 + $0x198] sm:$0xff] %vm681, %v1482
    %1547 = vst.msk [vmem:[%s6 + $0x1a0] sm:$0xff] %vm681, %v1483
    %1548 = vst.msk [vmem:[%s6 + $0x1a8] sm:$0xff] %vm681, %v1484
    %1549 = vst.msk [vmem:[%s6 + $0x1b0] sm:$0xff] %vm681, %v1485
    %1550 = vst.msk [vmem:[%s6 + $0x1b8] sm:$0xff] %vm681, %v1486
    %1551 = vst.msk [vmem:[%s6 + $0x1c0] sm:$0xff] %vm681, %v1487
    %1552 = vst.msk [vmem:[%s6 + $0x1c8] sm:$0xff] %vm681, %v1488
    %1553 = vst.msk [vmem:[%s6 + $0x1d0] sm:$0xff] %vm681, %v1489
    %1554 = vst.msk [vmem:[%s6 + $0x1d8] sm:$0xff] %vm681, %v1490
    %1555 = vst.msk [vmem:[%s6 + $0x1e0] sm:$0xff] %vm681, %v1491
    %1556 = vst.msk [vmem:[%s6 + $0x1e8] sm:$0xff] %vm681, %v1492
    %1557 = vst.msk [vmem:[%s6 + $0x1f0] sm:$0xff] %vm681, %v1493
    %1558 = vst.msk [vmem:[%s6 + $0x1f8] sm:$0xff] %vm681, %v1494
  $region33: #{inner_unet_forward.8} parent=0 // pred_fallthru
    _
  // Predicated region
  $region34: #{inner_unet_forward.8} parent=0 // pred_check
    _
  $region35: #{inner_unet_forward.8} parent=0 // pred_check_branch
    %1560 = sbr.rel (0) target = $region37
  $region36: #{inner_unet_forward.8} parent=0 // pred_region
    _
  $region37: #{inner_unet_forward.8} parent=0 // pred_fallthru
    _
  // Predicated region
  $region38: #{inner_unet_forward.8} parent=0 // pred_check
    _
  $region39: #{inner_unet_forward.8} parent=0 // pred_check_branch
    %1562 = sbr.rel (0) target = $region41
  $region40: #{inner_unet_forward.8} parent=0 // pred_region
    _
  $region41: #{inner_unet_forward.8} parent=0 // pred_fallthru
    _

// kernel: inner_unet_forward.9
$region0: #{inner_unet_forward.9}
  #allocation0 [shape = 'u32[]', space=smem, size = 0x4, offset = 0x4, fixed_abs, tag = 'smem constant byte address 0x4 - core index']
  #allocation1 [shape = 'u32[144,128]{1,0:T(1,128)}', space=vmem, size = 0x12000, scoped, tag = 'internal scratch']
  #allocation2 [shape = 'f32[128,16]{1,0:T(8,128)}', space=vmem, size = 0x10000, scoped, tag = 'scratch operand']
  #allocation3 [shape = 'f32[1,16]{1,0:T(1,128)}', space=vmem, size = 0x200, scoped, tag = 'scratch operand']
  #allocation4 [shape = 'f32[1,16]{1,0:T(1,128)}', space=vmem, size = 0x200, scoped, tag = 'scratch operand']
  %s0 = inlined_call_operand.vmem [shape: f32[128,128], index: 0, kind: input, shape index: {}]
  %s1 = inlined_call_operand.vmem [shape: f32[128,16], index: 1, kind: input, shape index: {}]
  %s2 = inlined_call_operand.vmem [shape: f32[1,16], index: 2, kind: input, shape index: {}]
  %s3 = inlined_call_operand.vmem [shape: f32[1,16], index: 3, kind: input, shape index: {}]
  %s4 = inlined_call_operand.vmem [shape: f32[16,16], index: 4, kind: input, shape index: {}, may-alias: {4,5}]
  %s5 = inlined_call_operand.vmem [shape: f32[16,16], index: 5, kind: input, shape index: {}, may-alias: {4,5}]
  %s6 = inlined_call_operand.vmem [shape: f32[128,16], index: 6, kind: output, shape index: {}]
  %s7 = sld [smem:[#allocation0]]
  $region42: #{inner_unet_forward.9} parent=0
    _
  %s9 = ssub.s32 1, %s7
  %s10 = scalar_select 0, %s9, %s7
  // Predicated region
  $region2: #{inner_unet_forward.9} parent=0 // pred_check
    _
  $region3: #{inner_unet_forward.9} parent=0 // pred_check_branch
    %12 = sbr.rel (0) target = $region5
  $region4: #{inner_unet_forward.9} parent=0 // pred_region
    _
  $region5: #{inner_unet_forward.9} parent=0 // pred_fallthru
    _
  // Predicated region
  $region6: #{inner_unet_forward.9} parent=0 // pred_check
    _
  $region7: #{inner_unet_forward.9} parent=0 // pred_check_branch
    %14 = sbr.rel (0) target = $region9
  $region8: #{inner_unet_forward.9} parent=0 // pred_region
    _
  $region9: #{inner_unet_forward.9} parent=0 // pred_fallthru
    _
  // Predicated region
  $region10: #{inner_unet_forward.9} parent=0 // pred_check
    _
  $region11: #{inner_unet_forward.9} parent=0 // pred_check_branch
    %16 = sbr.rel (0) target = $region13
  $region12: #{inner_unet_forward.9} parent=0 // pred_region
    _
  $region13: #{inner_unet_forward.9} parent=0 // pred_fallthru
    _
  // Predicated region
  $region14: #{inner_unet_forward.9} parent=0 // pred_check
    _
  $region15: #{inner_unet_forward.9} parent=0 // pred_check_branch
    %18 = sbr.rel (0) target = $region17
  $region16: #{inner_unet_forward.9} parent=0 // pred_region
    _
  $region17: #{inner_unet_forward.9} parent=0 // pred_fallthru
    _
  // Predicated region
  $region18: #{inner_unet_forward.9} parent=0 // pred_check
    _
  $region19: #{inner_unet_forward.9} parent=0 // pred_check_branch
    %20 = sbr.rel (0) target = $region21
  $region20: #{inner_unet_forward.9} parent=0 // pred_region
    _
  $region21: #{inner_unet_forward.9} parent=0 // pred_fallthru
    _
  // Predicated region
  $region22: #{inner_unet_forward.9} parent=0 // pred_check
    _
  $region23: #{inner_unet_forward.9} parent=0 // pred_check_branch
    %22 = sbr.rel (0) target = $region25
  $region24: #{inner_unet_forward.9} parent=0 // pred_region
    _
  $region25: #{inner_unet_forward.9} parent=0 // pred_fallthru
    _
  %v23 = vld [vmem:[%s0] sm:$0xff]
  %v24 = vld [vmem:[%s0 + $0x8] sm:$0xff]
  %v25 = vld [vmem:[%s0 + $0x10] sm:$0xff]
  %v26 = vld [vmem:[%s0 + $0x18] sm:$0xff]
  %v27 = vld [vmem:[%s0 + $0x20] sm:$0xff]
  %v28 = vld [vmem:[%s0 + $0x28] sm:$0xff]
  %v29 = vld [vmem:[%s0 + $0x30] sm:$0xff]
  %v30 = vld [vmem:[%s0 + $0x38] sm:$0xff]
  %v31 = vld [vmem:[%s0 + $0x40] sm:$0xff]
  %v32 = vld [vmem:[%s0 + $0x48] sm:$0xff]
  %v33 = vld [vmem:[%s0 + $0x50] sm:$0xff]
  %v34 = vld [vmem:[%s0 + $0x58] sm:$0xff]
  %v35 = vld [vmem:[%s0 + $0x60] sm:$0xff]
  %v36 = vld [vmem:[%s0 + $0x68] sm:$0xff]
  %v37 = vld [vmem:[%s0 + $0x70] sm:$0xff]
  %v38 = vld [vmem:[%s0 + $0x78] sm:$0xff]
  %v39 = vld [vmem:[%s1] sm:$0xff]
  %v40 = vld [vmem:[%s1 + $0x8] sm:$0xff]
  %v41 = vld [vmem:[%s1 + $0x10] sm:$0xff]
  %v42 = vld [vmem:[%s1 + $0x18] sm:$0xff]
  %v43 = vld [vmem:[%s1 + $0x20] sm:$0xff]
  %v44 = vld [vmem:[%s1 + $0x28] sm:$0xff]
  %v45 = vld [vmem:[%s1 + $0x30] sm:$0xff]
  %v46 = vld [vmem:[%s1 + $0x38] sm:$0xff]
  %v47 = vld [vmem:[%s1 + $0x40] sm:$0xff]
  %v48 = vld [vmem:[%s1 + $0x48] sm:$0xff]
  %v49 = vld [vmem:[%s1 + $0x50] sm:$0xff]
  %v50 = vld [vmem:[%s1 + $0x58] sm:$0xff]
  %v51 = vld [vmem:[%s1 + $0x60] sm:$0xff]
  %v52 = vld [vmem:[%s1 + $0x68] sm:$0xff]
  %v53 = vld [vmem:[%s1 + $0x70] sm:$0xff]
  %v54 = vld [vmem:[%s1 + $0x78] sm:$0xff]
  %55 = vmatprep.subr.mxu0 0.0
  %56 = vmatpush1.msra.mxu0 %v39
  %57 = vmatprep.subr.mxu0 0.0
  %58 = vmatpush1.msra.mxu0 %v40
  %59 = vmatprep.subr.mxu0 0.0
  %60 = vmatpush1.msra.mxu0 %v41
  %61 = vmatprep.subr.mxu0 0.0
  %62 = vmatpush1.msra.mxu0 %v42
  %63 = vmatprep.subr.mxu0 0.0
  %64 = vmatpush1.msra.mxu0 %v43
  %65 = vmatprep.subr.mxu0 0.0
  %66 = vmatpush1.msra.mxu0 %v44
  %67 = vmatprep.subr.mxu0 0.0
  %68 = vmatpush1.msra.mxu0 %v45
  %69 = vmatprep.subr.mxu0 0.0
  %70 = vmatpush1.msra.mxu0 %v46
  %71 = vmatprep.subr.mxu0 0.0
  %72 = vmatpush1.msra.mxu0 %v47
  %73 = vmatprep.subr.mxu0 0.0
  %74 = vmatpush1.msra.mxu0 %v48
  %75 = vmatprep.subr.mxu0 0.0
  %76 = vmatpush1.msra.mxu0 %v49
  %77 = vmatprep.subr.mxu0 0.0
  %78 = vmatpush1.msra.mxu0 %v50
  %79 = vmatprep.subr.mxu0 0.0
  %80 = vmatpush1.msra.mxu0 %v51
  %81 = vmatprep.subr.mxu0 0.0
  %82 = vmatpush1.msra.mxu0 %v52
  %83 = vmatprep.subr.mxu0 0.0
  %84 = vmatpush1.msra.mxu0 %v53
  %85 = vmatprep.subr.mxu0 0.0
  %86 = vmatpush1.msra.mxu0 %v54
  %87 = vmatprep.subr.mxu0 0.0
  %88 = vmatpush1.msra.mxu0 0.0
  %89 = vmatprep.subr.mxu0 0.0
  %90 = vmatpush1.msra.mxu0 0.0
  %91 = vmatprep.subr.mxu0 0.0
  %92 = vmatpush1.msra.mxu0 0.0
  %93 = vmatprep.subr.mxu0 0.0
  %94 = vmatpush1.msra.mxu0 0.0
  %95 = vmatprep.subr.mxu0 0.0
  %96 = vmatpush1.msra.mxu0 0.0
  %97 = vmatprep.subr.mxu0 0.0
  %98 = vmatpush1.msra.mxu0 0.0
  %99 = vmatprep.subr.mxu0 0.0
  %100 = vmatpush1.msra.mxu0 0.0
  %101 = vmatprep.subr.mxu0 0.0
  %102 = vmatpush1.msra.mxu0 0.0
  %103 = vmatprep.subr.mxu0 0.0
  %104 = vmatpush1.msra.mxu0 0.0
  %105 = vmatprep.subr.mxu0 0.0
  %106 = vmatpush1.msra.mxu0 0.0
  %107 = vmatprep.subr.mxu0 0.0
  %108 = vmatpush1.msra.mxu0 0.0
  %109 = vmatprep.subr.mxu0 0.0
  %110 = vmatpush1.msra.mxu0 0.0
  %111 = vmatprep.subr.mxu0 0.0
  %112 = vmatpush1.msra.mxu0 0.0
  %113 = vmatprep.subr.mxu0 0.0
  %114 = vmatpush1.msra.mxu0 0.0
  %115 = vmatprep.subr.mxu0 0.0
  %116 = vmatpush1.msra.mxu0 0.0
  %117 = vmatprep.subr.mxu0 0.0
  %118 = vmatpush1.msra.mxu0 0.0
  %119 = vmatprep.mubr.f32.mxu0 0.0
  %120 = vmatmul.mubr.f32.gmra.mrb[0].mxu0 %v23
  %v121 = vpop.f32.mrb[0].mxu0
  %v122 = vadd.f32 0.0, %v121
  %v123 = vpop.f32.mrb[0].mxu0
  %124 = vmatprep.mubr.f32.mxu0 0.0
  %125 = vmatmul.mubr.f32.gmra.mrb[0].mxu0 %v24
  %v126 = vpop.f32.mrb[0].mxu0
  %v127 = vadd.f32 0.0, %v126
  %v128 = vpop.f32.mrb[0].mxu0
  %129 = vmatprep.mubr.f32.mxu0 0.0
  %130 = vmatmul.mubr.f32.gmra.mrb[0].mxu0 %v25
  %v131 = vpop.f32.mrb[0].mxu0
  %v132 = vadd.f32 0.0, %v131
  %v133 = vpop.f32.mrb[0].mxu0
  %134 = vmatprep.mubr.f32.mxu0 0.0
  %135 = vmatmul.mubr.f32.gmra.mrb[0].mxu0 %v26
  %v136 = vpop.f32.mrb[0].mxu0
  %v137 = vadd.f32 0.0, %v136
  %v138 = vpop.f32.mrb[0].mxu0
  %139 = vmatprep.mubr.f32.mxu0 0.0
  %140 = vmatmul.mubr.f32.gmra.mrb[0].mxu0 %v27
  %v141 = vpop.f32.mrb[0].mxu0
  %v142 = vadd.f32 0.0, %v141
  %v143 = vpop.f32.mrb[0].mxu0
  %144 = vmatprep.mubr.f32.mxu0 0.0
  %145 = vmatmul.mubr.f32.gmra.mrb[0].mxu0 %v28
  %v146 = vpop.f32.mrb[0].mxu0
  %v147 = vadd.f32 0.0, %v146
  %v148 = vpop.f32.mrb[0].mxu0
  %149 = vmatprep.mubr.f32.mxu0 0.0
  %150 = vmatmul.mubr.f32.gmra.mrb[0].mxu0 %v29
  %v151 = vpop.f32.mrb[0].mxu0
  %v152 = vadd.f32 0.0, %v151
  %v153 = vpop.f32.mrb[0].mxu0
  %154 = vmatprep.mubr.f32.mxu0 0.0
  %155 = vmatmul.mubr.f32.gmra.mrb[0].mxu0 %v30
  %v156 = vpop.f32.mrb[0].mxu0
  %v157 = vadd.f32 0.0, %v156
  %v158 = vpop.f32.mrb[0].mxu0
  %159 = vmatprep.mubr.f32.mxu0 0.0
  %160 = vmatmul.mubr.f32.gmra.mrb[0].mxu0 %v31
  %v161 = vpop.f32.mrb[0].mxu0
  %v162 = vadd.f32 0.0, %v161
  %v163 = vpop.f32.mrb[0].mxu0
  %164 = vmatprep.mubr.f32.mxu0 0.0
  %165 = vmatmul.mubr.f32.gmra.mrb[0].mxu0 %v32
  %v166 = vpop.f32.mrb[0].mxu0
  %v167 = vadd.f32 0.0, %v166
  %v168 = vpop.f32.mrb[0].mxu0
  %169 = vmatprep.mubr.f32.mxu0 0.0
  %170 = vmatmul.mubr.f32.gmra.mrb[0].mxu0 %v33
  %v171 = vpop.f32.mrb[0].mxu0
  %v172 = vadd.f32 0.0, %v171
  %v173 = vpop.f32.mrb[0].mxu0
  %174 = vmatprep.mubr.f32.mxu0 0.0
  %175 = vmatmul.mubr.f32.gmra.mrb[0].mxu0 %v34
  %v176 = vpop.f32.mrb[0].mxu0
  %v177 = vadd.f32 0.0, %v176
  %v178 = vpop.f32.mrb[0].mxu0
  %179 = vmatprep.mubr.f32.mxu0 0.0
  %180 = vmatmul.mubr.f32.gmra.mrb[0].mxu0 %v35
  %v181 = vpop.f32.mrb[0].mxu0
  %v182 = vadd.f32 0.0, %v181
  %v183 = vpop.f32.mrb[0].mxu0
  %184 = vmatprep.mubr.f32.mxu0 0.0
  %185 = vmatmul.mubr.f32.gmra.mrb[0].mxu0 %v36
  %v186 = vpop.f32.mrb[0].mxu0
  %v187 = vadd.f32 0.0, %v186
  %v188 = vpop.f32.mrb[0].mxu0
  %189 = vmatprep.mubr.f32.mxu0 0.0
  %190 = vmatmul.mubr.f32.gmra.mrb[0].mxu0 %v37
  %v191 = vpop.f32.mrb[0].mxu0
  %v192 = vadd.f32 0.0, %v191
  %v193 = vpop.f32.mrb[0].mxu0
  %194 = vmatprep.mubr.f32.mxu0 0.0
  %195 = vmatmul.mubr.f32.gmra.mrb[0].mxu0 %v38
  %v196 = vpop.f32.mrb[0].mxu0
  %v197 = vadd.f32 0.0, %v196
  %v198 = vpop.f32.mrb[0].mxu0
  %199 = vdwg.mxu0
  %p200 = scmp.eq.s32.totalorder 0, 0
  // Predicated region
  $region26: #{inner_unet_forward.9} parent=0 // pred_check
    %p201 = pneg %p200
  $region27: #{inner_unet_forward.9} parent=0 // pred_check_branch
    %203 = sbr.rel (%p201) target = $region29
  $region28: #{inner_unet_forward.9} parent=0 // pred_region
    %vm204 = vcmask 122880
    %205 = vst.msk [vmem:[#allocation3] sm:$0x1] %vm204, 0.0
    %206 = vst.msk [vmem:[#allocation4] sm:$0x1] %vm204, 0.0
  $region29: #{inner_unet_forward.9} parent=0 // pred_fallthru
    _
  %v207 = vld [vmem:[#allocation3] sm:$0x1]
  %vm208 = vcmask 130048
  %v209 = vsel %vm208, %v122, 0.0
  %v210 = vsel %vm208, %v127, 0.0
  %v211 = vadd.f32 %v209, %v210
  %v212 = vsel %vm208, %v132, 0.0
  %v213 = vadd.f32 %v211, %v212
  %v214 = vsel %vm208, %v137, 0.0
  %v215 = vadd.f32 %v213, %v214
  %v216 = vsel %vm208, %v142, 0.0
  %v217 = vadd.f32 %v215, %v216
  %v218 = vsel %vm208, %v147, 0.0
  %v219 = vadd.f32 %v217, %v218
  %v220 = vsel %vm208, %v152, 0.0
  %v221 = vadd.f32 %v219, %v220
  %v222 = vsel %vm208, %v157, 0.0
  %v223 = vadd.f32 %v221, %v222
  %v224 = vsel %vm208, %v162, 0.0
  %v225 = vadd.f32 %v223, %v224
  %v226 = vsel %vm208, %v167, 0.0
  %v227 = vadd.f32 %v225, %v226
  %v228 = vsel %vm208, %v172, 0.0
  %v229 = vadd.f32 %v227, %v228
  %v230 = vsel %vm208, %v177, 0.0
  %v231 = vadd.f32 %v229, %v230
  %v232 = vsel %vm208, %v182, 0.0
  %v233 = vadd.f32 %v231, %v232
  %v234 = vsel %vm208, %v187, 0.0
  %v235 = vadd.f32 %v233, %v234
  %v236 = vsel %vm208, %v192, 0.0
  %v237 = vadd.f32 %v235, %v236
  %v238 = vsel %vm208, %v197, 0.0
  %v239 = vadd.f32 %v237, %v238
  %v240 = vrot.slane %v239, 4
  %v241 = vadd.f32 %v239, %v240
  %v242 = vrot.slane %v241, 2
  %v243 = vadd.f32 %v241, %v242
  %v244 = vrot.slane %v243, 1
  %v245 = vadd.f32 %v243, %v244
  %v246 = vadd.f32 %v207, %v245
  %vm247 = vcmask 122880
  %248 = vst.msk [vmem:[#allocation3] sm:$0x1] %vm247, %v246
  %v249 = vld [vmem:[#allocation4] sm:$0x1]
  %v250 = vmul.f32 %v122, %v122
  %v251 = vmul.f32 %v127, %v127
  %v252 = vmul.f32 %v132, %v132
  %v253 = vmul.f32 %v137, %v137
  %v254 = vmul.f32 %v142, %v142
  %v255 = vmul.f32 %v147, %v147
  %v256 = vmul.f32 %v152, %v152
  %v257 = vmul.f32 %v157, %v157
  %v258 = vmul.f32 %v162, %v162
  %v259 = vmul.f32 %v167, %v167
  %v260 = vmul.f32 %v172, %v172
  %v261 = vmul.f32 %v177, %v177
  %v262 = vmul.f32 %v182, %v182
  %v263 = vmul.f32 %v187, %v187
  %v264 = vmul.f32 %v192, %v192
  %v265 = vmul.f32 %v197, %v197
  %v266 = vsel %vm208, %v250, 0.0
  %v267 = vsel %vm208, %v251, 0.0
  %v268 = vadd.f32 %v266, %v267
  %v269 = vsel %vm208, %v252, 0.0
  %v270 = vadd.f32 %v268, %v269
  %v271 = vsel %vm208, %v253, 0.0
  %v272 = vadd.f32 %v270, %v271
  %v273 = vsel %vm208, %v254, 0.0
  %v274 = vadd.f32 %v272, %v273
  %v275 = vsel %vm208, %v255, 0.0
  %v276 = vadd.f32 %v274, %v275
  %v277 = vsel %vm208, %v256, 0.0
  %v278 = vadd.f32 %v276, %v277
  %v279 = vsel %vm208, %v257, 0.0
  %v280 = vadd.f32 %v278, %v279
  %v281 = vsel %vm208, %v258, 0.0
  %v282 = vadd.f32 %v280, %v281
  %v283 = vsel %vm208, %v259, 0.0
  %v284 = vadd.f32 %v282, %v283
  %v285 = vsel %vm208, %v260, 0.0
  %v286 = vadd.f32 %v284, %v285
  %v287 = vsel %vm208, %v261, 0.0
  %v288 = vadd.f32 %v286, %v287
  %v289 = vsel %vm208, %v262, 0.0
  %v290 = vadd.f32 %v288, %v289
  %v291 = vsel %vm208, %v263, 0.0
  %v292 = vadd.f32 %v290, %v291
  %v293 = vsel %vm208, %v264, 0.0
  %v294 = vadd.f32 %v292, %v293
  %v295 = vsel %vm208, %v265, 0.0
  %v296 = vadd.f32 %v294, %v295
  %v297 = vrot.slane %v296, 4
  %v298 = vadd.f32 %v296, %v297
  %v299 = vrot.slane %v298, 2
  %v300 = vadd.f32 %v298, %v299
  %v301 = vrot.slane %v300, 1
  %v302 = vadd.f32 %v300, %v301
  %v303 = vadd.f32 %v249, %v302
  %304 = vst.msk [vmem:[#allocation4] sm:$0x1] %vm247, %v303
  %305 = vst.msk [vmem:[#allocation2] sm:$0xff] %vm208, %v122
  %306 = vst.msk [vmem:[#allocation2 + $0x8] sm:$0xff] %vm208, %v127
  %307 = vst.msk [vmem:[#allocation2 + $0x10] sm:$0xff] %vm208, %v132
  %308 = vst.msk [vmem:[#allocation2 + $0x18] sm:$0xff] %vm208, %v137
  %309 = vst.msk [vmem:[#allocation2 + $0x20] sm:$0xff] %vm208, %v142
  %310 = vst.msk [vmem:[#allocation2 + $0x28] sm:$0xff] %vm208, %v147
  %311 = vst.msk [vmem:[#allocation2 + $0x30] sm:$0xff] %vm208, %v152
  %312 = vst.msk [vmem:[#allocation2 + $0x38] sm:$0xff] %vm208, %v157
  %313 = vst.msk [vmem:[#allocation2 + $0x40] sm:$0xff] %vm208, %v162
  %314 = vst.msk [vmem:[#allocation2 + $0x48] sm:$0xff] %vm208, %v167
  %315 = vst.msk [vmem:[#allocation2 + $0x50] sm:$0xff] %vm208, %v172
  %316 = vst.msk [vmem:[#allocation2 + $0x58] sm:$0xff] %vm208, %v177
  %317 = vst.msk [vmem:[#allocation2 + $0x60] sm:$0xff] %vm208, %v182
  %318 = vst.msk [vmem:[#allocation2 + $0x68] sm:$0xff] %vm208, %v187
  %319 = vst.msk [vmem:[#allocation2 + $0x70] sm:$0xff] %vm208, %v192
  %320 = vst.msk [vmem:[#allocation2 + $0x78] sm:$0xff] %vm208, %v197
  %v321 = vld [vmem:[#allocation3] sm:$0x1]
  %v322 = vld [vmem:[#allocation4] sm:$0x1]
  %v323 = vmul.f32 %v321, 0.0078125
  %v324 = vmul.f32 %v322, 0.0078125
  %v325 = vmul.f32 %v323, %v323
  %v326 = vsub.f32 %v324, %v325
  %v327 = vmax.f32 %v326, 0.0
  %v328 = vld [vmem:[%s2] sm:$0x1]
  %v329 = vadd.f32 %v327, 1e-05
  %v330 = vrsqrt.pop %v329
  %v331 = vmul.f32 %v328, %v330
  %v332 = vld [vmem:[%s3] sm:$0x1]
  %v333 = vmul.f32 %v323, %v331
  %v334 = vsub.f32 %v332, %v333
  // Predicated region
  $region30: #{inner_unet_forward.9} parent=0 // pred_check
    %p335 = pneg %p200
  $region31: #{inner_unet_forward.9} parent=0 // pred_check_branch
    %337 = sbr.rel (%p335) target = $region33
  $region32: #{inner_unet_forward.9} parent=0 // pred_region
    %v338 = vld [vmem:[#allocation2] sm:$0xff]
    %v339 = vld [vmem:[#allocation2 + $0x8] sm:$0xff]
    %v340 = vld [vmem:[#allocation2 + $0x10] sm:$0xff]
    %v341 = vld [vmem:[#allocation2 + $0x18] sm:$0xff]
    %v342 = vld [vmem:[#allocation2 + $0x20] sm:$0xff]
    %v343 = vld [vmem:[#allocation2 + $0x28] sm:$0xff]
    %v344 = vld [vmem:[#allocation2 + $0x30] sm:$0xff]
    %v345 = vld [vmem:[#allocation2 + $0x38] sm:$0xff]
    %v346 = vld [vmem:[#allocation2 + $0x40] sm:$0xff]
    %v347 = vld [vmem:[#allocation2 + $0x48] sm:$0xff]
    %v348 = vld [vmem:[#allocation2 + $0x50] sm:$0xff]
    %v349 = vld [vmem:[#allocation2 + $0x58] sm:$0xff]
    %v350 = vld [vmem:[#allocation2 + $0x60] sm:$0xff]
    %v351 = vld [vmem:[#allocation2 + $0x68] sm:$0xff]
    %v352 = vld [vmem:[#allocation2 + $0x70] sm:$0xff]
    %v353 = vld [vmem:[#allocation2 + $0x78] sm:$0xff]
    %v355 = vlaneseq
    %v356 = vshrl.u32 %v355, 7
    %v357 = vsub.s32 0, %v356
    %v358 = vrot.slane %v331, %v357
    %v360 = vmul.f32 %v338, %v358
    %v361 = vmul.f32 %v339, %v358
    %v362 = vmul.f32 %v340, %v358
    %v363 = vmul.f32 %v341, %v358
    %v364 = vmul.f32 %v342, %v358
    %v365 = vmul.f32 %v343, %v358
    %v366 = vmul.f32 %v344, %v358
    %v367 = vmul.f32 %v345, %v358
    %v368 = vmul.f32 %v346, %v358
    %v369 = vmul.f32 %v347, %v358
    %v370 = vmul.f32 %v348, %v358
    %v371 = vmul.f32 %v349, %v358
    %v372 = vmul.f32 %v350, %v358
    %v373 = vmul.f32 %v351, %v358
    %v374 = vmul.f32 %v352, %v358
    %v375 = vmul.f32 %v353, %v358
    %v377 = vlaneseq
    %v378 = vshrl.u32 %v377, 7
    %v379 = vsub.s32 0, %v378
    %v380 = vrot.slane %v334, %v379
    %v382 = vadd.f32 %v360, %v380
    %v383 = vadd.f32 %v361, %v380
    %v384 = vadd.f32 %v362, %v380
    %v385 = vadd.f32 %v363, %v380
    %v386 = vadd.f32 %v364, %v380
    %v387 = vadd.f32 %v365, %v380
    %v388 = vadd.f32 %v366, %v380
    %v389 = vadd.f32 %v367, %v380
    %v390 = vadd.f32 %v368, %v380
    %v391 = vadd.f32 %v369, %v380
    %v392 = vadd.f32 %v370, %v380
    %v393 = vadd.f32 %v371, %v380
    %v394 = vadd.f32 %v372, %v380
    %v395 = vadd.f32 %v373, %v380
    %v396 = vadd.f32 %v374, %v380
    %v397 = vadd.f32 %v375, %v380
    %vm398 = vcmp.ge.f32.partialorder %v382, 0.0
    %vm399 = vcmp.ge.f32.partialorder %v383, 0.0
    %vm400 = vcmp.ge.f32.partialorder %v384, 0.0
    %vm401 = vcmp.ge.f32.partialorder %v385, 0.0
    %vm402 = vcmp.ge.f32.partialorder %v386, 0.0
    %vm403 = vcmp.ge.f32.partialorder %v387, 0.0
    %vm404 = vcmp.ge.f32.partialorder %v388, 0.0
    %vm405 = vcmp.ge.f32.partialorder %v389, 0.0
    %vm406 = vcmp.ge.f32.partialorder %v390, 0.0
    %vm407 = vcmp.ge.f32.partialorder %v391, 0.0
    %vm408 = vcmp.ge.f32.partialorder %v392, 0.0
    %vm409 = vcmp.ge.f32.partialorder %v393, 0.0
    %vm410 = vcmp.ge.f32.partialorder %v394, 0.0
    %vm411 = vcmp.ge.f32.partialorder %v395, 0.0
    %vm412 = vcmp.ge.f32.partialorder %v396, 0.0
    %vm413 = vcmp.ge.f32.partialorder %v397, 0.0
    %v414 = vmul.f32 %v382, 0.2
    %v415 = vmul.f32 %v383, 0.2
    %v416 = vmul.f32 %v384, 0.2
    %v417 = vmul.f32 %v385, 0.2
    %v418 = vmul.f32 %v386, 0.2
    %v419 = vmul.f32 %v387, 0.2
    %v420 = vmul.f32 %v388, 0.2
    %v421 = vmul.f32 %v389, 0.2
    %v422 = vmul.f32 %v390, 0.2
    %v423 = vmul.f32 %v391, 0.2
    %v424 = vmul.f32 %v392, 0.2
    %v425 = vmul.f32 %v393, 0.2
    %v426 = vmul.f32 %v394, 0.2
    %v427 = vmul.f32 %v395, 0.2
    %v428 = vmul.f32 %v396, 0.2
    %v429 = vmul.f32 %v397, 0.2
    %v430 = vsel %vm398, %v382, %v414
    %v431 = vsel %vm399, %v383, %v415
    %v432 = vsel %vm400, %v384, %v416
    %v433 = vsel %vm401, %v385, %v417
    %v434 = vsel %vm402, %v386, %v418
    %v435 = vsel %vm403, %v387, %v419
    %v436 = vsel %vm404, %v388, %v420
    %v437 = vsel %vm405, %v389, %v421
    %v438 = vsel %vm406, %v390, %v422
    %v439 = vsel %vm407, %v391, %v423
    %v440 = vsel %vm408, %v392, %v424
    %v441 = vsel %vm409, %v393, %v425
    %v442 = vsel %vm410, %v394, %v426
    %v443 = vsel %vm411, %v395, %v427
    %v444 = vsel %vm412, %v396, %v428
    %v445 = vsel %vm413, %v397, %v429
    %446 = vst.msk [vmem:[%s6] sm:$0xff] %vm208, %v430
    %447 = vst.msk [vmem:[%s6 + $0x8] sm:$0xff] %vm208, %v431
    %448 = vst.msk [vmem:[%s6 + $0x10] sm:$0xff] %vm208, %v432
    %449 = vst.msk [vmem:[%s6 + $0x18] sm:$0xff] %vm208, %v433
    %450 = vst.msk [vmem:[%s6 + $0x20] sm:$0xff] %vm208, %v434
    %451 = vst.msk [vmem:[%s6 + $0x28] sm:$0xff] %vm208, %v435
    %452 = vst.msk [vmem:[%s6 + $0x30] sm:$0xff] %vm208, %v436
    %453 = vst.msk [vmem:[%s6 + $0x38] sm:$0xff] %vm208, %v437
    %454 = vst.msk [vmem:[%s6 + $0x40] sm:$0xff] %vm208, %v438
    %455 = vst.msk [vmem:[%s6 + $0x48] sm:$0xff] %vm208, %v439
    %456 = vst.msk [vmem:[%s6 + $0x50] sm:$0xff] %vm208, %v440
    %457 = vst.msk [vmem:[%s6 + $0x58] sm:$0xff] %vm208, %v441
    %458 = vst.msk [vmem:[%s6 + $0x60] sm:$0xff] %vm208, %v442
    %459 = vst.msk [vmem:[%s6 + $0x68] sm:$0xff] %vm208, %v443
    %460 = vst.msk [vmem:[%s6 + $0x70] sm:$0xff] %vm208, %v444
    %461 = vst.msk [vmem:[%s6 + $0x78] sm:$0xff] %vm208, %v445
  $region33: #{inner_unet_forward.9} parent=0 // pred_fallthru
    _
  // Predicated region
  $region34: #{inner_unet_forward.9} parent=0 // pred_check
    _
  $region35: #{inner_unet_forward.9} parent=0 // pred_check_branch
    %463 = sbr.rel (0) target = $region37
  $region36: #{inner_unet_forward.9} parent=0 // pred_region
    _
  $region37: #{inner_unet_forward.9} parent=0 // pred_fallthru
    _
  // Predicated region
  $region38: #{inner_unet_forward.9} parent=0 // pred_check
    _
  $region39: #{inner_unet_forward.9} parent=0 // pred_check_branch
    %465 = sbr.rel (0) target = $region41
  $region40: #{inner_unet_forward.9} parent=0 // pred_region
    _
  $region41: #{inner_unet_forward.9} parent=0 // pred_fallthru
    _

// kernel: inner_unet_forward.10
$region0: #{inner_unet_forward.10}
  #allocation0 [shape = 'u32[]', space=smem, size = 0x4, offset = 0x4, fixed_abs, tag = 'smem constant byte address 0x4 - core index']
  #allocation1 [shape = 'u32[144,128]{1,0:T(1,128)}', space=vmem, size = 0x12000, scoped, tag = 'internal scratch']
  #allocation2 [shape = 'f32[32,32]{1,0:T(8,128)}', space=vmem, size = 0x4000, scoped, tag = 'scratch operand']
  #allocation3 [shape = 'f32[1,32]{1,0:T(1,128)}', space=vmem, size = 0x200, scoped, tag = 'scratch operand']
  #allocation4 [shape = 'f32[1,32]{1,0:T(1,128)}', space=vmem, size = 0x200, scoped, tag = 'scratch operand']
  %s0 = inlined_call_operand.vmem [shape: f32[32,256], index: 0, kind: input, shape index: {}]
  %s1 = inlined_call_operand.vmem [shape: f32[256,32], index: 1, kind: input, shape index: {}]
  %s2 = inlined_call_operand.vmem [shape: f32[1,32], index: 2, kind: input, shape index: {}]
  %s3 = inlined_call_operand.vmem [shape: f32[1,32], index: 3, kind: input, shape index: {}]
  %s4 = inlined_call_operand.vmem [shape: f32[32,32], index: 4, kind: input, shape index: {}, may-alias: {4,5}]
  %s5 = inlined_call_operand.vmem [shape: f32[32,32], index: 5, kind: input, shape index: {}, may-alias: {4,5}]
  %s6 = inlined_call_operand.vmem [shape: f32[32,32], index: 6, kind: output, shape index: {}]
  %s7 = sld [smem:[#allocation0]]
  $region42: #{inner_unet_forward.10} parent=0
    _
  %s9 = ssub.s32 1, %s7
  %s10 = scalar_select 0, %s9, %s7
  // Predicated region
  $region2: #{inner_unet_forward.10} parent=0 // pred_check
    _
  $region3: #{inner_unet_forward.10} parent=0 // pred_check_branch
    %12 = sbr.rel (0) target = $region5
  $region4: #{inner_unet_forward.10} parent=0 // pred_region
    _
  $region5: #{inner_unet_forward.10} parent=0 // pred_fallthru
    _
  // Predicated region
  $region6: #{inner_unet_forward.10} parent=0 // pred_check
    _
  $region7: #{inner_unet_forward.10} parent=0 // pred_check_branch
    %14 = sbr.rel (0) target = $region9
  $region8: #{inner_unet_forward.10} parent=0 // pred_region
    _
  $region9: #{inner_unet_forward.10} parent=0 // pred_fallthru
    _
  // Predicated region
  $region10: #{inner_unet_forward.10} parent=0 // pred_check
    _
  $region11: #{inner_unet_forward.10} parent=0 // pred_check_branch
    %16 = sbr.rel (0) target = $region13
  $region12: #{inner_unet_forward.10} parent=0 // pred_region
    _
  $region13: #{inner_unet_forward.10} parent=0 // pred_fallthru
    _
  // Predicated region
  $region14: #{inner_unet_forward.10} parent=0 // pred_check
    _
  $region15: #{inner_unet_forward.10} parent=0 // pred_check_branch
    %18 = sbr.rel (0) target = $region17
  $region16: #{inner_unet_forward.10} parent=0 // pred_region
    _
  $region17: #{inner_unet_forward.10} parent=0 // pred_fallthru
    _
  // Predicated region
  $region18: #{inner_unet_forward.10} parent=0 // pred_check
    _
  $region19: #{inner_unet_forward.10} parent=0 // pred_check_branch
    %20 = sbr.rel (0) target = $region21
  $region20: #{inner_unet_forward.10} parent=0 // pred_region
    _
  $region21: #{inner_unet_forward.10} parent=0 // pred_fallthru
    _
  // Predicated region
  $region22: #{inner_unet_forward.10} parent=0 // pred_check
    _
  $region23: #{inner_unet_forward.10} parent=0 // pred_check_branch
    %22 = sbr.rel (0) target = $region25
  $region24: #{inner_unet_forward.10} parent=0 // pred_region
    _
  $region25: #{inner_unet_forward.10} parent=0 // pred_fallthru
    _
  %v23 = vld [vmem:[%s0] sm:$0xff]
  %v24 = vld [vmem:[%s0 + $0x8] sm:$0xff]
  %v25 = vld [vmem:[%s0 + $0x10] sm:$0xff]
  %v26 = vld [vmem:[%s0 + $0x18] sm:$0xff]
  %v27 = vld [vmem:[%s0 + $0x20] sm:$0xff]
  %v28 = vld [vmem:[%s0 + $0x28] sm:$0xff]
  %v29 = vld [vmem:[%s0 + $0x30] sm:$0xff]
  %v30 = vld [vmem:[%s0 + $0x38] sm:$0xff]
  %v31 = vld [vmem:[%s1] sm:$0xff]
  %v32 = vld [vmem:[%s1 + $0x8] sm:$0xff]
  %v33 = vld [vmem:[%s1 + $0x10] sm:$0xff]
  %v34 = vld [vmem:[%s1 + $0x18] sm:$0xff]
  %v35 = vld [vmem:[%s1 + $0x20] sm:$0xff]
  %v36 = vld [vmem:[%s1 + $0x28] sm:$0xff]
  %v37 = vld [vmem:[%s1 + $0x30] sm:$0xff]
  %v38 = vld [vmem:[%s1 + $0x38] sm:$0xff]
  %v39 = vld [vmem:[%s1 + $0x40] sm:$0xff]
  %v40 = vld [vmem:[%s1 + $0x48] sm:$0xff]
  %v41 = vld [vmem:[%s1 + $0x50] sm:$0xff]
  %v42 = vld [vmem:[%s1 + $0x58] sm:$0xff]
  %v43 = vld [vmem:[%s1 + $0x60] sm:$0xff]
  %v44 = vld [vmem:[%s1 + $0x68] sm:$0xff]
  %v45 = vld [vmem:[%s1 + $0x70] sm:$0xff]
  %v46 = vld [vmem:[%s1 + $0x78] sm:$0xff]
  %v47 = vld [vmem:[%s1 + $0x80] sm:$0xff]
  %v48 = vld [vmem:[%s1 + $0x88] sm:$0xff]
  %v49 = vld [vmem:[%s1 + $0x90] sm:$0xff]
  %v50 = vld [vmem:[%s1 + $0x98] sm:$0xff]
  %v51 = vld [vmem:[%s1 + $0xa0] sm:$0xff]
  %v52 = vld [vmem:[%s1 + $0xa8] sm:$0xff]
  %v53 = vld [vmem:[%s1 + $0xb0] sm:$0xff]
  %v54 = vld [vmem:[%s1 + $0xb8] sm:$0xff]
  %v55 = vld [vmem:[%s1 + $0xc0] sm:$0xff]
  %v56 = vld [vmem:[%s1 + $0xc8] sm:$0xff]
  %v57 = vld [vmem:[%s1 + $0xd0] sm:$0xff]
  %v58 = vld [vmem:[%s1 + $0xd8] sm:$0xff]
  %v59 = vld [vmem:[%s1 + $0xe0] sm:$0xff]
  %v60 = vld [vmem:[%s1 + $0xe8] sm:$0xff]
  %v61 = vld [vmem:[%s1 + $0xf0] sm:$0xff]
  %v62 = vld [vmem:[%s1 + $0xf8] sm:$0xff]
  %63 = vmatprep.subr.mxu0 0.0
  %64 = vmatpush1.msra.mxu0 %v31
  %65 = vmatprep.subr.mxu0 0.0
  %66 = vmatpush1.msra.mxu0 %v32
  %67 = vmatprep.subr.mxu0 0.0
  %68 = vmatpush1.msra.mxu0 %v33
  %69 = vmatprep.subr.mxu0 0.0
  %70 = vmatpush1.msra.mxu0 %v34
  %71 = vmatprep.subr.mxu0 0.0
  %72 = vmatpush1.msra.mxu0 %v35
  %73 = vmatprep.subr.mxu0 0.0
  %74 = vmatpush1.msra.mxu0 %v36
  %75 = vmatprep.subr.mxu0 0.0
  %76 = vmatpush1.msra.mxu0 %v37
  %77 = vmatprep.subr.mxu0 0.0
  %78 = vmatpush1.msra.mxu0 %v38
  %79 = vmatprep.subr.mxu0 0.0
  %80 = vmatpush1.msra.mxu0 %v39
  %81 = vmatprep.subr.mxu0 0.0
  %82 = vmatpush1.msra.mxu0 %v40
  %83 = vmatprep.subr.mxu0 0.0
  %84 = vmatpush1.msra.mxu0 %v41
  %85 = vmatprep.subr.mxu0 0.0
  %86 = vmatpush1.msra.mxu0 %v42
  %87 = vmatprep.subr.mxu0 0.0
  %88 = vmatpush1.msra.mxu0 %v43
  %89 = vmatprep.subr.mxu0 0.0
  %90 = vmatpush1.msra.mxu0 %v44
  %91 = vmatprep.subr.mxu0 0.0
  %92 = vmatpush1.msra.mxu0 %v45
  %93 = vmatprep.subr.mxu0 0.0
  %94 = vmatpush1.msra.mxu0 %v46
  %95 = vmatprep.subr.mxu0 0.0
  %96 = vmatpush1.msra.mxu0 %v47
  %97 = vmatprep.subr.mxu0 0.0
  %98 = vmatpush1.msra.mxu0 %v48
  %99 = vmatprep.subr.mxu0 0.0
  %100 = vmatpush1.msra.mxu0 %v49
  %101 = vmatprep.subr.mxu0 0.0
  %102 = vmatpush1.msra.mxu0 %v50
  %103 = vmatprep.subr.mxu0 0.0
  %104 = vmatpush1.msra.mxu0 %v51
  %105 = vmatprep.subr.mxu0 0.0
  %106 = vmatpush1.msra.mxu0 %v52
  %107 = vmatprep.subr.mxu0 0.0
  %108 = vmatpush1.msra.mxu0 %v53
  %109 = vmatprep.subr.mxu0 0.0
  %110 = vmatpush1.msra.mxu0 %v54
  %111 = vmatprep.subr.mxu0 0.0
  %112 = vmatpush1.msra.mxu0 %v55
  %113 = vmatprep.subr.mxu0 0.0
  %114 = vmatpush1.msra.mxu0 %v56
  %115 = vmatprep.subr.mxu0 0.0
  %116 = vmatpush1.msra.mxu0 %v57
  %117 = vmatprep.subr.mxu0 0.0
  %118 = vmatpush1.msra.mxu0 %v58
  %119 = vmatprep.subr.mxu0 0.0
  %120 = vmatpush1.msra.mxu0 %v59
  %121 = vmatprep.subr.mxu0 0.0
  %122 = vmatpush1.msra.mxu0 %v60
  %123 = vmatprep.subr.mxu0 0.0
  %124 = vmatpush1.msra.mxu0 %v61
  %125 = vmatprep.subr.mxu0 0.0
  %126 = vmatpush1.msra.mxu0 %v62
  %127 = vmatprep.mubr.f32.mxu0 %v24
  %128 = vmatmul.mubr.f32.gmra.mrb[0].mxu0 %v23
  %v129 = vpop.f32.mrb[0].mxu0
  %v130 = vadd.f32 0.0, %v129
  %v131 = vpop.f32.mrb[0].mxu0
  %132 = vmatprep.mubr.f32.mxu0 %v26
  %133 = vmatmul.mubr.f32.gmra.mrb[0].mxu0 %v25
  %v134 = vpop.f32.mrb[0].mxu0
  %v135 = vadd.f32 0.0, %v134
  %v136 = vpop.f32.mrb[0].mxu0
  %137 = vmatprep.mubr.f32.mxu0 %v28
  %138 = vmatmul.mubr.f32.gmra.mrb[0].mxu0 %v27
  %v139 = vpop.f32.mrb[0].mxu0
  %v140 = vadd.f32 0.0, %v139
  %v141 = vpop.f32.mrb[0].mxu0
  %142 = vmatprep.mubr.f32.mxu0 %v30
  %143 = vmatmul.mubr.f32.gmra.mrb[0].mxu0 %v29
  %v144 = vpop.f32.mrb[0].mxu0
  %v145 = vadd.f32 0.0, %v144
  %v146 = vpop.f32.mrb[0].mxu0
  %147 = vdwg.mxu0
  %p148 = scmp.eq.s32.totalorder 0, 0
  // Predicated region
  $region26: #{inner_unet_forward.10} parent=0 // pred_check
    %p149 = pneg %p148
  $region27: #{inner_unet_forward.10} parent=0 // pred_check_branch
    %151 = sbr.rel (%p149) target = $region29
  $region28: #{inner_unet_forward.10} parent=0 // pred_region
    %vm152 = vcmask 253952
    %153 = vst.msk [vmem:[#allocation3] sm:$0x1] %vm152, 0.0
    %154 = vst.msk [vmem:[#allocation4] sm:$0x1] %vm152, 0.0
  $region29: #{inner_unet_forward.10} parent=0 // pred_fallthru
    _
  %v155 = vld [vmem:[#allocation3] sm:$0x1]
  %vm156 = vcmask 261120
  %v157 = vsel %vm156, %v130, 0.0
  %v158 = vsel %vm156, %v135, 0.0
  %v159 = vadd.f32 %v157, %v158
  %v160 = vsel %vm156, %v140, 0.0
  %v161 = vadd.f32 %v159, %v160
  %v162 = vsel %vm156, %v145, 0.0
  %v163 = vadd.f32 %v161, %v162
  %v164 = vrot.slane %v163, 4
  %v165 = vadd.f32 %v163, %v164
  %v166 = vrot.slane %v165, 2
  %v167 = vadd.f32 %v165, %v166
  %v168 = vrot.slane %v167, 1
  %v169 = vadd.f32 %v167, %v168
  %v170 = vadd.f32 %v155, %v169
  %vm171 = vcmask 253952
  %172 = vst.msk [vmem:[#allocation3] sm:$0x1] %vm171, %v170
  %v173 = vld [vmem:[#allocation4] sm:$0x1]
  %v174 = vmul.f32 %v130, %v130
  %v175 = vmul.f32 %v135, %v135
  %v176 = vmul.f32 %v140, %v140
  %v177 = vmul.f32 %v145, %v145
  %v178 = vsel %vm156, %v174, 0.0
  %v179 = vsel %vm156, %v175, 0.0
  %v180 = vadd.f32 %v178, %v179
  %v181 = vsel %vm156, %v176, 0.0
  %v182 = vadd.f32 %v180, %v181
  %v183 = vsel %vm156, %v177, 0.0
  %v184 = vadd.f32 %v182, %v183
  %v185 = vrot.slane %v184, 4
  %v186 = vadd.f32 %v184, %v185
  %v187 = vrot.slane %v186, 2
  %v188 = vadd.f32 %v186, %v187
  %v189 = vrot.slane %v188, 1
  %v190 = vadd.f32 %v188, %v189
  %v191 = vadd.f32 %v173, %v190
  %192 = vst.msk [vmem:[#allocation4] sm:$0x1] %vm171, %v191
  %193 = vst.msk [vmem:[#allocation2] sm:$0xff] %vm156, %v130
  %194 = vst.msk [vmem:[#allocation2 + $0x8] sm:$0xff] %vm156, %v135
  %195 = vst.msk [vmem:[#allocation2 + $0x10] sm:$0xff] %vm156, %v140
  %196 = vst.msk [vmem:[#allocation2 + $0x18] sm:$0xff] %vm156, %v145
  %v197 = vld [vmem:[#allocation3] sm:$0x1]
  %v198 = vld [vmem:[#allocation4] sm:$0x1]
  %v199 = vmul.f32 %v197, 0.03125
  %v200 = vmul.f32 %v198, 0.03125
  %v201 = vmul.f32 %v199, %v199
  %v202 = vsub.f32 %v200, %v201
  %v203 = vmax.f32 %v202, 0.0
  %v204 = vld [vmem:[%s2] sm:$0x1]
  %v205 = vadd.f32 %v203, 1e-05
  %v206 = vrsqrt.pop %v205
  %v207 = vmul.f32 %v204, %v206
  %v208 = vld [vmem:[%s3] sm:$0x1]
  %v209 = vmul.f32 %v199, %v207
  %v210 = vsub.f32 %v208, %v209
  // Predicated region
  $region30: #{inner_unet_forward.10} parent=0 // pred_check
    %p211 = pneg %p148
  $region31: #{inner_unet_forward.10} parent=0 // pred_check_branch
    %213 = sbr.rel (%p211) target = $region33
  $region32: #{inner_unet_forward.10} parent=0 // pred_region
    %v214 = vld [vmem:[#allocation2] sm:$0xff]
    %v215 = vld [vmem:[#allocation2 + $0x8] sm:$0xff]
    %v216 = vld [vmem:[#allocation2 + $0x10] sm:$0xff]
    %v217 = vld [vmem:[#allocation2 + $0x18] sm:$0xff]
    %v219 = vlaneseq
    %v220 = vshrl.u32 %v219, 7
    %v221 = vsub.s32 0, %v220
    %v222 = vrot.slane %v207, %v221
    %v224 = vmul.f32 %v214, %v222
    %v225 = vmul.f32 %v215, %v222
    %v226 = vmul.f32 %v216, %v222
    %v227 = vmul.f32 %v217, %v222
    %v229 = vlaneseq
    %v230 = vshrl.u32 %v229, 7
    %v231 = vsub.s32 0, %v230
    %v232 = vrot.slane %v210, %v231
    %v234 = vadd.f32 %v224, %v232
    %v235 = vadd.f32 %v225, %v232
    %v236 = vadd.f32 %v226, %v232
    %v237 = vadd.f32 %v227, %v232
    %vm238 = vcmp.ge.f32.partialorder %v234, 0.0
    %vm239 = vcmp.ge.f32.partialorder %v235, 0.0
    %vm240 = vcmp.ge.f32.partialorder %v236, 0.0
    %vm241 = vcmp.ge.f32.partialorder %v237, 0.0
    %v242 = vmul.f32 %v234, 0.2
    %v243 = vmul.f32 %v235, 0.2
    %v244 = vmul.f32 %v236, 0.2
    %v245 = vmul.f32 %v237, 0.2
    %v246 = vsel %vm238, %v234, %v242
    %v247 = vsel %vm239, %v235, %v243
    %v248 = vsel %vm240, %v236, %v244
    %v249 = vsel %vm241, %v237, %v245
    %250 = vst.msk [vmem:[%s6] sm:$0xff] %vm156, %v246
    %251 = vst.msk [vmem:[%s6 + $0x8] sm:$0xff] %vm156, %v247
    %252 = vst.msk [vmem:[%s6 + $0x10] sm:$0xff] %vm156, %v248
    %253 = vst.msk [vmem:[%s6 + $0x18] sm:$0xff] %vm156, %v249
  $region33: #{inner_unet_forward.10} parent=0 // pred_fallthru
    _
  // Predicated region
  $region34: #{inner_unet_forward.10} parent=0 // pred_check
    _
  $region35: #{inner_unet_forward.10} parent=0 // pred_check_branch
    %255 = sbr.rel (0) target = $region37
  $region36: #{inner_unet_forward.10} parent=0 // pred_region
    _
  $region37: #{inner_unet_forward.10} parent=0 // pred_fallthru
    _
  // Predicated region
  $region38: #{inner_unet_forward.10} parent=0 // pred_check
    _
  $region39: #{inner_unet_forward.10} parent=0 // pred_check_branch
    %257 = sbr.rel (0) target = $region41
  $region40: #{inner_unet_forward.10} parent=0 // pred_region
    _
  $region41: #{inner_unet_forward.10} parent=0 // pred_fallthru
    _

// kernel: inner_unet_forward.11
$region0: #{inner_unet_forward.11}
  #allocation0 [shape = 'u32[]', space=smem, size = 0x4, offset = 0x4, fixed_abs, tag = 'smem constant byte address 0x4 - core index']
  #allocation1 [shape = 'u32[144,128]{1,0:T(1,128)}', space=vmem, size = 0x12000, scoped, tag = 'internal scratch']
  #allocation2 [shape = 'f32[8,64]{1,0:T(8,128)}', space=vmem, size = 0x1000, scoped, tag = 'scratch operand']
  #allocation3 [shape = 'f32[1,64]{1,0:T(1,128)}', space=vmem, size = 0x200, scoped, tag = 'scratch operand']
  #allocation4 [shape = 'f32[1,64]{1,0:T(1,128)}', space=vmem, size = 0x200, scoped, tag = 'scratch operand']
  %s0 = inlined_call_operand.vmem [shape: f32[8,512], index: 0, kind: input, shape index: {}]
  %s1 = inlined_call_operand.vmem [shape: f32[512,64], index: 1, kind: input, shape index: {}]
  %s2 = inlined_call_operand.vmem [shape: f32[1,64], index: 2, kind: input, shape index: {}]
  %s3 = inlined_call_operand.vmem [shape: f32[1,64], index: 3, kind: input, shape index: {}]
  %s4 = inlined_call_operand.vmem [shape: f32[64,64], index: 4, kind: input, shape index: {}, may-alias: {4,5}]
  %s5 = inlined_call_operand.vmem [shape: f32[64,64], index: 5, kind: input, shape index: {}, may-alias: {4,5}]
  %s6 = inlined_call_operand.vmem [shape: f32[8,64], index: 6, kind: output, shape index: {}]
  %s7 = sld [smem:[#allocation0]]
  $region42: #{inner_unet_forward.11} parent=0
    _
  %s9 = ssub.s32 1, %s7
  %s10 = scalar_select 0, %s9, %s7
  // Predicated region
  $region2: #{inner_unet_forward.11} parent=0 // pred_check
    _
  $region3: #{inner_unet_forward.11} parent=0 // pred_check_branch
    %12 = sbr.rel (0) target = $region5
  $region4: #{inner_unet_forward.11} parent=0 // pred_region
    _
  $region5: #{inner_unet_forward.11} parent=0 // pred_fallthru
    _
  // Predicated region
  $region6: #{inner_unet_forward.11} parent=0 // pred_check
    _
  $region7: #{inner_unet_forward.11} parent=0 // pred_check_branch
    %14 = sbr.rel (0) target = $region9
  $region8: #{inner_unet_forward.11} parent=0 // pred_region
    _
  $region9: #{inner_unet_forward.11} parent=0 // pred_fallthru
    _
  // Predicated region
  $region10: #{inner_unet_forward.11} parent=0 // pred_check
    _
  $region11: #{inner_unet_forward.11} parent=0 // pred_check_branch
    %16 = sbr.rel (0) target = $region13
  $region12: #{inner_unet_forward.11} parent=0 // pred_region
    _
  $region13: #{inner_unet_forward.11} parent=0 // pred_fallthru
    _
  // Predicated region
  $region14: #{inner_unet_forward.11} parent=0 // pred_check
    _
  $region15: #{inner_unet_forward.11} parent=0 // pred_check_branch
    %18 = sbr.rel (0) target = $region17
  $region16: #{inner_unet_forward.11} parent=0 // pred_region
    _
  $region17: #{inner_unet_forward.11} parent=0 // pred_fallthru
    _
  // Predicated region
  $region18: #{inner_unet_forward.11} parent=0 // pred_check
    _
  $region19: #{inner_unet_forward.11} parent=0 // pred_check_branch
    %20 = sbr.rel (0) target = $region21
  $region20: #{inner_unet_forward.11} parent=0 // pred_region
    _
  $region21: #{inner_unet_forward.11} parent=0 // pred_fallthru
    _
  // Predicated region
  $region22: #{inner_unet_forward.11} parent=0 // pred_check
    _
  $region23: #{inner_unet_forward.11} parent=0 // pred_check_branch
    %22 = sbr.rel (0) target = $region25
  $region24: #{inner_unet_forward.11} parent=0 // pred_region
    _
  $region25: #{inner_unet_forward.11} parent=0 // pred_fallthru
    _
  %v23 = vld [vmem:[%s0] sm:$0xff]
  %v24 = vld [vmem:[%s0 + $0x8] sm:$0xff]
  %v25 = vld [vmem:[%s0 + $0x10] sm:$0xff]
  %v26 = vld [vmem:[%s0 + $0x18] sm:$0xff]
  %v27 = vld [vmem:[%s1] sm:$0xff]
  %v28 = vld [vmem:[%s1 + $0x8] sm:$0xff]
  %v29 = vld [vmem:[%s1 + $0x10] sm:$0xff]
  %v30 = vld [vmem:[%s1 + $0x18] sm:$0xff]
  %v31 = vld [vmem:[%s1 + $0x20] sm:$0xff]
  %v32 = vld [vmem:[%s1 + $0x28] sm:$0xff]
  %v33 = vld [vmem:[%s1 + $0x30] sm:$0xff]
  %v34 = vld [vmem:[%s1 + $0x38] sm:$0xff]
  %v35 = vld [vmem:[%s1 + $0x40] sm:$0xff]
  %v36 = vld [vmem:[%s1 + $0x48] sm:$0xff]
  %v37 = vld [vmem:[%s1 + $0x50] sm:$0xff]
  %v38 = vld [vmem:[%s1 + $0x58] sm:$0xff]
  %v39 = vld [vmem:[%s1 + $0x60] sm:$0xff]
  %v40 = vld [vmem:[%s1 + $0x68] sm:$0xff]
  %v41 = vld [vmem:[%s1 + $0x70] sm:$0xff]
  %v42 = vld [vmem:[%s1 + $0x78] sm:$0xff]
  %v43 = vld [vmem:[%s1 + $0x80] sm:$0xff]
  %v44 = vld [vmem:[%s1 + $0x88] sm:$0xff]
  %v45 = vld [vmem:[%s1 + $0x90] sm:$0xff]
  %v46 = vld [vmem:[%s1 + $0x98] sm:$0xff]
  %v47 = vld [vmem:[%s1 + $0xa0] sm:$0xff]
  %v48 = vld [vmem:[%s1 + $0xa8] sm:$0xff]
  %v49 = vld [vmem:[%s1 + $0xb0] sm:$0xff]
  %v50 = vld [vmem:[%s1 + $0xb8] sm:$0xff]
  %v51 = vld [vmem:[%s1 + $0xc0] sm:$0xff]
  %v52 = vld [vmem:[%s1 + $0xc8] sm:$0xff]
  %v53 = vld [vmem:[%s1 + $0xd0] sm:$0xff]
  %v54 = vld [vmem:[%s1 + $0xd8] sm:$0xff]
  %v55 = vld [vmem:[%s1 + $0xe0] sm:$0xff]
  %v56 = vld [vmem:[%s1 + $0xe8] sm:$0xff]
  %v57 = vld [vmem:[%s1 + $0xf0] sm:$0xff]
  %v58 = vld [vmem:[%s1 + $0xf8] sm:$0xff]
  %v59 = vld [vmem:[%s1 + $0x100] sm:$0xff]
  %v60 = vld [vmem:[%s1 + $0x108] sm:$0xff]
  %v61 = vld [vmem:[%s1 + $0x110] sm:$0xff]
  %v62 = vld [vmem:[%s1 + $0x118] sm:$0xff]
  %v63 = vld [vmem:[%s1 + $0x120] sm:$0xff]
  %v64 = vld [vmem:[%s1 + $0x128] sm:$0xff]
  %v65 = vld [vmem:[%s1 + $0x130] sm:$0xff]
  %v66 = vld [vmem:[%s1 + $0x138] sm:$0xff]
  %v67 = vld [vmem:[%s1 + $0x140] sm:$0xff]
  %v68 = vld [vmem:[%s1 + $0x148] sm:$0xff]
  %v69 = vld [vmem:[%s1 + $0x150] sm:$0xff]
  %v70 = vld [vmem:[%s1 + $0x158] sm:$0xff]
  %v71 = vld [vmem:[%s1 + $0x160] sm:$0xff]
  %v72 = vld [vmem:[%s1 + $0x168] sm:$0xff]
  %v73 = vld [vmem:[%s1 + $0x170] sm:$0xff]
  %v74 = vld [vmem:[%s1 + $0x178] sm:$0xff]
  %v75 = vld [vmem:[%s1 + $0x180] sm:$0xff]
  %v76 = vld [vmem:[%s1 + $0x188] sm:$0xff]
  %v77 = vld [vmem:[%s1 + $0x190] sm:$0xff]
  %v78 = vld [vmem:[%s1 + $0x198] sm:$0xff]
  %v79 = vld [vmem:[%s1 + $0x1a0] sm:$0xff]
  %v80 = vld [vmem:[%s1 + $0x1a8] sm:$0xff]
  %v81 = vld [vmem:[%s1 + $0x1b0] sm:$0xff]
  %v82 = vld [vmem:[%s1 + $0x1b8] sm:$0xff]
  %v83 = vld [vmem:[%s1 + $0x1c0] sm:$0xff]
  %v84 = vld [vmem:[%s1 + $0x1c8] sm:$0xff]
  %v85 = vld [vmem:[%s1 + $0x1d0] sm:$0xff]
  %v86 = vld [vmem:[%s1 + $0x1d8] sm:$0xff]
  %v87 = vld [vmem:[%s1 + $0x1e0] sm:$0xff]
  %v88 = vld [vmem:[%s1 + $0x1e8] sm:$0xff]
  %v89 = vld [vmem:[%s1 + $0x1f0] sm:$0xff]
  %v90 = vld [vmem:[%s1 + $0x1f8] sm:$0xff]
  %91 = vmatprep.subr.mxu0 0.0
  %92 = vmatpush1.msra.mxu0 %v27
  %93 = vmatprep.subr.mxu0 0.0
  %94 = vmatpush1.msra.mxu0 %v28
  %95 = vmatprep.subr.mxu0 0.0
  %96 = vmatpush1.msra.mxu0 %v29
  %97 = vmatprep.subr.mxu0 0.0
  %98 = vmatpush1.msra.mxu0 %v30
  %99 = vmatprep.subr.mxu0 0.0
  %100 = vmatpush1.msra.mxu0 %v31
  %101 = vmatprep.subr.mxu0 0.0
  %102 = vmatpush1.msra.mxu0 %v32
  %103 = vmatprep.subr.mxu0 0.0
  %104 = vmatpush1.msra.mxu0 %v33
  %105 = vmatprep.subr.mxu0 0.0
  %106 = vmatpush1.msra.mxu0 %v34
  %107 = vmatprep.subr.mxu0 0.0
  %108 = vmatpush1.msra.mxu0 %v35
  %109 = vmatprep.subr.mxu0 0.0
  %110 = vmatpush1.msra.mxu0 %v36
  %111 = vmatprep.subr.mxu0 0.0
  %112 = vmatpush1.msra.mxu0 %v37
  %113 = vmatprep.subr.mxu0 0.0
  %114 = vmatpush1.msra.mxu0 %v38
  %115 = vmatprep.subr.mxu0 0.0
  %116 = vmatpush1.msra.mxu0 %v39
  %117 = vmatprep.subr.mxu0 0.0
  %118 = vmatpush1.msra.mxu0 %v40
  %119 = vmatprep.subr.mxu0 0.0
  %120 = vmatpush1.msra.mxu0 %v41
  %121 = vmatprep.subr.mxu0 0.0
  %122 = vmatpush1.msra.mxu0 %v42
  %123 = vmatprep.subr.mxu0 0.0
  %124 = vmatpush1.msra.mxu0 %v43
  %125 = vmatprep.subr.mxu0 0.0
  %126 = vmatpush1.msra.mxu0 %v44
  %127 = vmatprep.subr.mxu0 0.0
  %128 = vmatpush1.msra.mxu0 %v45
  %129 = vmatprep.subr.mxu0 0.0
  %130 = vmatpush1.msra.mxu0 %v46
  %131 = vmatprep.subr.mxu0 0.0
  %132 = vmatpush1.msra.mxu0 %v47
  %133 = vmatprep.subr.mxu0 0.0
  %134 = vmatpush1.msra.mxu0 %v48
  %135 = vmatprep.subr.mxu0 0.0
  %136 = vmatpush1.msra.mxu0 %v49
  %137 = vmatprep.subr.mxu0 0.0
  %138 = vmatpush1.msra.mxu0 %v50
  %139 = vmatprep.subr.mxu0 0.0
  %140 = vmatpush1.msra.mxu0 %v51
  %141 = vmatprep.subr.mxu0 0.0
  %142 = vmatpush1.msra.mxu0 %v52
  %143 = vmatprep.subr.mxu0 0.0
  %144 = vmatpush1.msra.mxu0 %v53
  %145 = vmatprep.subr.mxu0 0.0
  %146 = vmatpush1.msra.mxu0 %v54
  %147 = vmatprep.subr.mxu0 0.0
  %148 = vmatpush1.msra.mxu0 %v55
  %149 = vmatprep.subr.mxu0 0.0
  %150 = vmatpush1.msra.mxu0 %v56
  %151 = vmatprep.subr.mxu0 0.0
  %152 = vmatpush1.msra.mxu0 %v57
  %153 = vmatprep.subr.mxu0 0.0
  %154 = vmatpush1.msra.mxu0 %v58
  %155 = vmatprep.mubr.f32.mxu0 %v24
  %156 = vmatmul.mubr.f32.gmra.mrb[0].mxu0 %v23
  %v157 = vpop.f32.mrb[0].mxu0
  %v158 = vadd.f32 0.0, %v157
  %v159 = vpop.f32.mrb[0].mxu0
  %160 = vdwg.mxu0
  %161 = vmatprep.subr.mxu0 0.0
  %162 = vmatpush1.msra.mxu0 %v59
  %163 = vmatprep.subr.mxu0 0.0
  %164 = vmatpush1.msra.mxu0 %v60
  %165 = vmatprep.subr.mxu0 0.0
  %166 = vmatpush1.msra.mxu0 %v61
  %167 = vmatprep.subr.mxu0 0.0
  %168 = vmatpush1.msra.mxu0 %v62
  %169 = vmatprep.subr.mxu0 0.0
  %170 = vmatpush1.msra.mxu0 %v63
  %171 = vmatprep.subr.mxu0 0.0
  %172 = vmatpush1.msra.mxu0 %v64
  %173 = vmatprep.subr.mxu0 0.0
  %174 = vmatpush1.msra.mxu0 %v65
  %175 = vmatprep.subr.mxu0 0.0
  %176 = vmatpush1.msra.mxu0 %v66
  %177 = vmatprep.subr.mxu0 0.0
  %178 = vmatpush1.msra.mxu0 %v67
  %179 = vmatprep.subr.mxu0 0.0
  %180 = vmatpush1.msra.mxu0 %v68
  %181 = vmatprep.subr.mxu0 0.0
  %182 = vmatpush1.msra.mxu0 %v69
  %183 = vmatprep.subr.mxu0 0.0
  %184 = vmatpush1.msra.mxu0 %v70
  %185 = vmatprep.subr.mxu0 0.0
  %186 = vmatpush1.msra.mxu0 %v71
  %187 = vmatprep.subr.mxu0 0.0
  %188 = vmatpush1.msra.mxu0 %v72
  %189 = vmatprep.subr.mxu0 0.0
  %190 = vmatpush1.msra.mxu0 %v73
  %191 = vmatprep.subr.mxu0 0.0
  %192 = vmatpush1.msra.mxu0 %v74
  %193 = vmatprep.subr.mxu0 0.0
  %194 = vmatpush1.msra.mxu0 %v75
  %195 = vmatprep.subr.mxu0 0.0
  %196 = vmatpush1.msra.mxu0 %v76
  %197 = vmatprep.subr.mxu0 0.0
  %198 = vmatpush1.msra.mxu0 %v77
  %199 = vmatprep.subr.mxu0 0.0
  %200 = vmatpush1.msra.mxu0 %v78
  %201 = vmatprep.subr.mxu0 0.0
  %202 = vmatpush1.msra.mxu0 %v79
  %203 = vmatprep.subr.mxu0 0.0
  %204 = vmatpush1.msra.mxu0 %v80
  %205 = vmatprep.subr.mxu0 0.0
  %206 = vmatpush1.msra.mxu0 %v81
  %207 = vmatprep.subr.mxu0 0.0
  %208 = vmatpush1.msra.mxu0 %v82
  %209 = vmatprep.subr.mxu0 0.0
  %210 = vmatpush1.msra.mxu0 %v83
  %211 = vmatprep.subr.mxu0 0.0
  %212 = vmatpush1.msra.mxu0 %v84
  %213 = vmatprep.subr.mxu0 0.0
  %214 = vmatpush1.msra.mxu0 %v85
  %215 = vmatprep.subr.mxu0 0.0
  %216 = vmatpush1.msra.mxu0 %v86
  %217 = vmatprep.subr.mxu0 0.0
  %218 = vmatpush1.msra.mxu0 %v87
  %219 = vmatprep.subr.mxu0 0.0
  %220 = vmatpush1.msra.mxu0 %v88
  %221 = vmatprep.subr.mxu0 0.0
  %222 = vmatpush1.msra.mxu0 %v89
  %223 = vmatprep.subr.mxu0 0.0
  %224 = vmatpush1.msra.mxu0 %v90
  %225 = vmatprep.mubr.f32.mxu0 %v26
  %226 = vmatmul.mubr.f32.gmra.mrb[0].mxu0 %v25
  %v227 = vpop.f32.mrb[0].mxu0
  %v228 = vadd.f32 %v158, %v227
  %v229 = vpop.f32.mrb[0].mxu0
  %230 = vdwg.mxu0
  %p231 = scmp.eq.s32.totalorder 0, 0
  // Predicated region
  $region26: #{inner_unet_forward.11} parent=0 // pred_check
    %p232 = pneg %p231
  $region27: #{inner_unet_forward.11} parent=0 // pred_check_branch
    %234 = sbr.rel (%p232) target = $region29
  $region28: #{inner_unet_forward.11} parent=0 // pred_region
    %vm235 = vcmask 516096
    %236 = vst.msk [vmem:[#allocation3] sm:$0x1] %vm235, 0.0
    %237 = vst.msk [vmem:[#allocation4] sm:$0x1] %vm235, 0.0
  $region29: #{inner_unet_forward.11} parent=0 // pred_fallthru
    _
  %v238 = vld [vmem:[#allocation3] sm:$0x1]
  %vm239 = vcmask 523264
  %v240 = vsel %vm239, %v228, 0.0
  %v241 = vrot.slane %v240, 4
  %v242 = vadd.f32 %v240, %v241
  %v243 = vrot.slane %v242, 2
  %v244 = vadd.f32 %v242, %v243
  %v245 = vrot.slane %v244, 1
  %v246 = vadd.f32 %v244, %v245
  %v247 = vadd.f32 %v238, %v246
  %vm248 = vcmask 516096
  %249 = vst.msk [vmem:[#allocation3] sm:$0x1] %vm248, %v247
  %v250 = vld [vmem:[#allocation4] sm:$0x1]
  %v251 = vmul.f32 %v228, %v228
  %v252 = vsel %vm239, %v251, 0.0
  %v253 = vrot.slane %v252, 4
  %v254 = vadd.f32 %v252, %v253
  %v255 = vrot.slane %v254, 2
  %v256 = vadd.f32 %v254, %v255
  %v257 = vrot.slane %v256, 1
  %v258 = vadd.f32 %v256, %v257
  %v259 = vadd.f32 %v250, %v258
  %260 = vst.msk [vmem:[#allocation4] sm:$0x1] %vm248, %v259
  %261 = vst.msk [vmem:[#allocation2] sm:$0xff] %vm239, %v228
  %v262 = vld [vmem:[#allocation3] sm:$0x1]
  %v263 = vld [vmem:[#allocation4] sm:$0x1]
  %v264 = vmul.f32 %v262, 0.125
  %v265 = vmul.f32 %v263, 0.125
  %v266 = vmul.f32 %v264, %v264
  %v267 = vsub.f32 %v265, %v266
  %v268 = vmax.f32 %v267, 0.0
  %v269 = vld [vmem:[%s2] sm:$0x1]
  %v270 = vadd.f32 %v268, 1e-05
  %v271 = vrsqrt.pop %v270
  %v272 = vmul.f32 %v269, %v271
  %v273 = vld [vmem:[%s3] sm:$0x1]
  %v274 = vmul.f32 %v264, %v272
  %v275 = vsub.f32 %v273, %v274
  // Predicated region
  $region30: #{inner_unet_forward.11} parent=0 // pred_check
    %p276 = pneg %p231
  $region31: #{inner_unet_forward.11} parent=0 // pred_check_branch
    %278 = sbr.rel (%p276) target = $region33
  $region32: #{inner_unet_forward.11} parent=0 // pred_region
    %v279 = vld [vmem:[#allocation2] sm:$0xff]
    %v281 = vlaneseq
    %v282 = vshrl.u32 %v281, 7
    %v283 = vsub.s32 0, %v282
    %v284 = vrot.slane %v272, %v283
    %v286 = vmul.f32 %v279, %v284
    %v288 = vlaneseq
    %v289 = vshrl.u32 %v288, 7
    %v290 = vsub.s32 0, %v289
    %v291 = vrot.slane %v275, %v290
    %v293 = vadd.f32 %v286, %v291
    %vm294 = vcmp.ge.f32.partialorder %v293, 0.0
    %v295 = vmul.f32 %v293, 0.2
    %v296 = vsel %vm294, %v293, %v295
    %297 = vst.msk [vmem:[%s6] sm:$0xff] %vm239, %v296
  $region33: #{inner_unet_forward.11} parent=0 // pred_fallthru
    _
  // Predicated region
  $region34: #{inner_unet_forward.11} parent=0 // pred_check
    _
  $region35: #{inner_unet_forward.11} parent=0 // pred_check_branch
    %299 = sbr.rel (0) target = $region37
  $region36: #{inner_unet_forward.11} parent=0 // pred_region
    _
  $region37: #{inner_unet_forward.11} parent=0 // pred_fallthru
    _
  // Predicated region
  $region38: #{inner_unet_forward.11} parent=0 // pred_check
    _
  $region39: #{inner_unet_forward.11} parent=0 // pred_check_branch
    %301 = sbr.rel (0) target = $region41
  $region40: #{inner_unet_forward.11} parent=0 // pred_region
    _
  $region41: #{inner_unet_forward.11} parent=0 // pred_fallthru
    _

// kernel: tile.39
$region0: #{tile.39}
  %s0 = inlined_call_operand.vmem [shape: f32[32,4,32], index: 0, kind: input, shape index: {}]
  %s1 = inlined_call_operand.vmem [shape: f32[32,128], index: 1, kind: output, shape index: {}]
  $region1: #{tile.39} parent=0
    #allocation0 [shape = 'u8[131072]{0}', space=vmem, size = 0x20000, scoped, tag = 'scoped mem for input reshape']
    %s3 = sshllo.u32 0, 4
    %s4 = smul.addr 4, 31
    %s5 = scalar_lea.vmem %s0, %s4
    %v6 = vld [vmem:[%s5] sm:%s3]
    %s7 = scalar_lea.vmem [#allocation0], 248
    %8 = vst [vmem:[%s7] sm:%s3] %v6
    %s9 = smul.addr 4, 30
    %s10 = scalar_lea.vmem %s0, %s9
    %v11 = vld [vmem:[%s10] sm:%s3]
    %s12 = scalar_lea.vmem [#allocation0], 240
    %13 = vst [vmem:[%s12] sm:%s3] %v11
    %s14 = smul.addr 4, 29
    %s15 = scalar_lea.vmem %s0, %s14
    %v16 = vld [vmem:[%s15] sm:%s3]
    %s17 = scalar_lea.vmem [#allocation0], 232
    %18 = vst [vmem:[%s17] sm:%s3] %v16
    %s19 = smul.addr 4, 28
    %s20 = scalar_lea.vmem %s0, %s19
    %v21 = vld [vmem:[%s20] sm:%s3]
    %s22 = scalar_lea.vmem [#allocation0], 224
    %23 = vst [vmem:[%s22] sm:%s3] %v21
    %s24 = smul.addr 4, 27
    %s25 = scalar_lea.vmem %s0, %s24
    %v26 = vld [vmem:[%s25] sm:%s3]
    %s27 = scalar_lea.vmem [#allocation0], 216
    %28 = vst [vmem:[%s27] sm:%s3] %v26
    %s29 = smul.addr 4, 26
    %s30 = scalar_lea.vmem %s0, %s29
    %v31 = vld [vmem:[%s30] sm:%s3]
    %s32 = scalar_lea.vmem [#allocation0], 208
    %33 = vst [vmem:[%s32] sm:%s3] %v31
    %s34 = smul.addr 4, 25
    %s35 = scalar_lea.vmem %s0, %s34
    %v36 = vld [vmem:[%s35] sm:%s3]
    %s37 = scalar_lea.vmem [#allocation0], 200
    %38 = vst [vmem:[%s37] sm:%s3] %v36
    %s39 = smul.addr 4, 24
    %s40 = scalar_lea.vmem %s0, %s39
    %v41 = vld [vmem:[%s40] sm:%s3]
    %s42 = scalar_lea.vmem [#allocation0], 192
    %43 = vst [vmem:[%s42] sm:%s3] %v41
    %s44 = smul.addr 4, 23
    %s45 = scalar_lea.vmem %s0, %s44
    %v46 = vld [vmem:[%s45] sm:%s3]
    %s47 = scalar_lea.vmem [#allocation0], 184
    %48 = vst [vmem:[%s47] sm:%s3] %v46
    %s49 = smul.addr 4, 22
    %s50 = scalar_lea.vmem %s0, %s49
    %v51 = vld [vmem:[%s50] sm:%s3]
    %s52 = scalar_lea.vmem [#allocation0], 176
    %53 = vst [vmem:[%s52] sm:%s3] %v51
    %s54 = smul.addr 4, 21
    %s55 = scalar_lea.vmem %s0, %s54
    %v56 = vld [vmem:[%s55] sm:%s3]
    %s57 = scalar_lea.vmem [#allocation0], 168
    %58 = vst [vmem:[%s57] sm:%s3] %v56
    %s59 = smul.addr 4, 20
    %s60 = scalar_lea.vmem %s0, %s59
    %v61 = vld [vmem:[%s60] sm:%s3]
    %s62 = scalar_lea.vmem [#allocation0], 160
    %63 = vst [vmem:[%s62] sm:%s3] %v61
    %s64 = smul.addr 4, 19
    %s65 = scalar_lea.vmem %s0, %s64
    %v66 = vld [vmem:[%s65] sm:%s3]
    %s67 = scalar_lea.vmem [#allocation0], 152
    %68 = vst [vmem:[%s67] sm:%s3] %v66
    %s69 = smul.addr 4, 18
    %s70 = scalar_lea.vmem %s0, %s69
    %v71 = vld [vmem:[%s70] sm:%s3]
    %s72 = scalar_lea.vmem [#allocation0], 144
    %73 = vst [vmem:[%s72] sm:%s3] %v71
    %s74 = smul.addr 4, 17
    %s75 = scalar_lea.vmem %s0, %s74
    %v76 = vld [vmem:[%s75] sm:%s3]
    %s77 = scalar_lea.vmem [#allocation0], 136
    %78 = vst [vmem:[%s77] sm:%s3] %v76
    %s79 = smul.addr 4, 16
    %s80 = scalar_lea.vmem %s0, %s79
    %v81 = vld [vmem:[%s80] sm:%s3]
    %s82 = scalar_lea.vmem [#allocation0], 128
    %83 = vst [vmem:[%s82] sm:%s3] %v81
    %s84 = smul.addr 4, 15
    %s85 = scalar_lea.vmem %s0, %s84
    %v86 = vld [vmem:[%s85] sm:%s3]
    %s87 = scalar_lea.vmem [#allocation0], 120
    %88 = vst [vmem:[%s87] sm:%s3] %v86
    %s89 = smul.addr 4, 14
    %s90 = scalar_lea.vmem %s0, %s89
    %v91 = vld [vmem:[%s90] sm:%s3]
    %s92 = scalar_lea.vmem [#allocation0], 112
    %93 = vst [vmem:[%s92] sm:%s3] %v91
    %s94 = smul.addr 4, 13
    %s95 = scalar_lea.vmem %s0, %s94
    %v96 = vld [vmem:[%s95] sm:%s3]
    %s97 = scalar_lea.vmem [#allocation0], 104
    %98 = vst [vmem:[%s97] sm:%s3] %v96
    %s99 = smul.addr 4, 12
    %s100 = scalar_lea.vmem %s0, %s99
    %v101 = vld [vmem:[%s100] sm:%s3]
    %s102 = scalar_lea.vmem [#allocation0], 96
    %103 = vst [vmem:[%s102] sm:%s3] %v101
    %s104 = smul.addr 4, 11
    %s105 = scalar_lea.vmem %s0, %s104
    %v106 = vld [vmem:[%s105] sm:%s3]
    %s107 = scalar_lea.vmem [#allocation0], 88
    %108 = vst [vmem:[%s107] sm:%s3] %v106
    %s109 = smul.addr 4, 10
    %s110 = scalar_lea.vmem %s0, %s109
    %v111 = vld [vmem:[%s110] sm:%s3]
    %s112 = scalar_lea.vmem [#allocation0], 80
    %113 = vst [vmem:[%s112] sm:%s3] %v111
    %s114 = smul.addr 4, 9
    %s115 = scalar_lea.vmem %s0, %s114
    %v116 = vld [vmem:[%s115] sm:%s3]
    %s117 = scalar_lea.vmem [#allocation0], 72
    %118 = vst [vmem:[%s117] sm:%s3] %v116
    %s119 = smul.addr 4, 8
    %s120 = scalar_lea.vmem %s0, %s119
    %v121 = vld [vmem:[%s120] sm:%s3]
    %s122 = scalar_lea.vmem [#allocation0], 64
    %123 = vst [vmem:[%s122] sm:%s3] %v121
    %s124 = smul.addr 4, 7
    %s125 = scalar_lea.vmem %s0, %s124
    %v126 = vld [vmem:[%s125] sm:%s3]
    %s127 = scalar_lea.vmem [#allocation0], 56
    %128 = vst [vmem:[%s127] sm:%s3] %v126
    %s129 = smul.addr 4, 6
    %s130 = scalar_lea.vmem %s0, %s129
    %v131 = vld [vmem:[%s130] sm:%s3]
    %s132 = scalar_lea.vmem [#allocation0], 48
    %133 = vst [vmem:[%s132] sm:%s3] %v131
    %s134 = smul.addr 4, 5
    %s135 = scalar_lea.vmem %s0, %s134
    %v136 = vld [vmem:[%s135] sm:%s3]
    %s137 = scalar_lea.vmem [#allocation0], 40
    %138 = vst [vmem:[%s137] sm:%s3] %v136
    %s139 = smul.addr 4, 4
    %s140 = scalar_lea.vmem %s0, %s139
    %v141 = vld [vmem:[%s140] sm:%s3]
    %s142 = scalar_lea.vmem [#allocation0], 32
    %143 = vst [vmem:[%s142] sm:%s3] %v141
    %s144 = smul.addr 4, 3
    %s145 = scalar_lea.vmem %s0, %s144
    %v146 = vld [vmem:[%s145] sm:%s3]
    %s147 = scalar_lea.vmem [#allocation0], 24
    %148 = vst [vmem:[%s147] sm:%s3] %v146
    %s149 = smul.addr 4, 2
    %s150 = scalar_lea.vmem %s0, %s149
    %v151 = vld [vmem:[%s150] sm:%s3]
    %s152 = scalar_lea.vmem [#allocation0], 16
    %153 = vst [vmem:[%s152] sm:%s3] %v151
    %s154 = scalar_lea.vmem %s0, 4
    %v155 = vld [vmem:[%s154] sm:%s3]
    %s156 = scalar_lea.vmem [#allocation0], 8
    %157 = vst [vmem:[%s156] sm:%s3] %v155
    %v158 = vld [vmem:[%s0] sm:%s3]
    %159 = vst [vmem:[#allocation0] sm:%s3] %v158
    %v160 = vld [vmem:[#allocation0] ss:$8 sm:$0xf]
    %v161 = vld [vmem:[#allocation0] ss:$8 sm:$0xf0]
    %vm162 = vcmask 1047556
    %v163 = vsel %vm162, %v161, %v160
    %vm164 = vcmask 261120
    %165 = vst.msk [vmem:[%s1] sm:$0xff] %vm164, %v163
    %s166 = scalar_lea.vmem [#allocation0], 64
    %v167 = vld [vmem:[%s166] ss:$8 sm:$0xf]
    %s168 = scalar_lea.vmem [#allocation0], 64
    %v169 = vld [vmem:[%s168] ss:$8 sm:$0xf0]
    %vm170 = vcmask 1047556
    %v171 = vsel %vm170, %v169, %v167
    %vm172 = vcmask 261120
    %s173 = scalar_lea.vmem %s1, 8
    %174 = vst.msk [vmem:[%s173] sm:$0xff] %vm172, %v171
    %s175 = scalar_lea.vmem [#allocation0], 128
    %v176 = vld [vmem:[%s175] ss:$8 sm:$0xf]
    %s177 = scalar_lea.vmem [#allocation0], 128
    %v178 = vld [vmem:[%s177] ss:$8 sm:$0xf0]
    %vm179 = vcmask 1047556
    %v180 = vsel %vm179, %v178, %v176
    %vm181 = vcmask 261120
    %s182 = scalar_lea.vmem %s1, 16
    %183 = vst.msk [vmem:[%s182] sm:$0xff] %vm181, %v180
    %s184 = scalar_lea.vmem [#allocation0], 192
    %v185 = vld [vmem:[%s184] ss:$8 sm:$0xf]
    %s186 = scalar_lea.vmem [#allocation0], 192
    %v187 = vld [vmem:[%s186] ss:$8 sm:$0xf0]
    %vm188 = vcmask 1047556
    %v189 = vsel %vm188, %v187, %v185
    %vm190 = vcmask 261120
    %s191 = scalar_lea.vmem %s1, 24
    %192 = vst.msk [vmem:[%s191] sm:$0xff] %vm190, %v189
    %s193 = scalar_lea.vmem [#allocation0], 3
    %v194 = vld [vmem:[%s193] ss:$8 sm:$0xf]
    %s195 = scalar_lea.vmem [#allocation0], 3
    %v196 = vld [vmem:[%s195] ss:$8 sm:$0xf0]
    %vm197 = vcmask 1047556
    %v198 = vsel %vm197, %v196, %v194
    %199 = vrot.lane.b32.xlu0 %v198, 96
    %v200 = vpop.permute.xlu0 %199
    %vm201 = vcmask 1048320
    %202 = vst.msk [vmem:[%s1] sm:$0xff] %vm201, %v200
    %s203 = scalar_lea.vmem [#allocation0], 67
    %v204 = vld [vmem:[%s203] ss:$8 sm:$0xf]
    %s205 = scalar_lea.vmem [#allocation0], 67
    %v206 = vld [vmem:[%s205] ss:$8 sm:$0xf0]
    %vm207 = vcmask 1047556
    %v208 = vsel %vm207, %v206, %v204
    %209 = vrot.lane.b32.xlu0 %v208, 96
    %v210 = vpop.permute.xlu0 %209
    %vm211 = vcmask 1048320
    %s212 = scalar_lea.vmem %s1, 8
    %213 = vst.msk [vmem:[%s212] sm:$0xff] %vm211, %v210
    %s214 = scalar_lea.vmem [#allocation0], 131
    %v215 = vld [vmem:[%s214] ss:$8 sm:$0xf]
    %s216 = scalar_lea.vmem [#allocation0], 131
    %v217 = vld [vmem:[%s216] ss:$8 sm:$0xf0]
    %vm218 = vcmask 1047556
    %v219 = vsel %vm218, %v217, %v215
    %220 = vrot.lane.b32.xlu0 %v219, 96
    %v221 = vpop.permute.xlu0 %220
    %vm222 = vcmask 1048320
    %s223 = scalar_lea.vmem %s1, 16
    %224 = vst.msk [vmem:[%s223] sm:$0xff] %vm222, %v221
    %s225 = scalar_lea.vmem [#allocation0], 195
    %v226 = vld [vmem:[%s225] ss:$8 sm:$0xf]
    %s227 = scalar_lea.vmem [#allocation0], 195
    %v228 = vld [vmem:[%s227] ss:$8 sm:$0xf0]
    %vm229 = vcmask 1047556
    %v230 = vsel %vm229, %v228, %v226
    %231 = vrot.lane.b32.xlu0 %v230, 96
    %v232 = vpop.permute.xlu0 %231
    %vm233 = vcmask 1048320
    %s234 = scalar_lea.vmem %s1, 24
    %235 = vst.msk [vmem:[%s234] sm:$0xff] %vm233, %v232
    %s236 = scalar_lea.vmem [#allocation0], 2
    %v237 = vld [vmem:[%s236] ss:$8 sm:$0xf]
    %s238 = scalar_lea.vmem [#allocation0], 2
    %v239 = vld [vmem:[%s238] ss:$8 sm:$0xf0]
    %vm240 = vcmask 1047556
    %v241 = vsel %vm240, %v239, %v237
    %242 = vrot.lane.b32.xlu0 %v241, 64
    %v243 = vpop.permute.xlu0 %242
    %vm244 = vcmask 785920
    %245 = vst.msk [vmem:[%s1] sm:$0xff] %vm244, %v243
    %s246 = scalar_lea.vmem [#allocation0], 66
    %v247 = vld [vmem:[%s246] ss:$8 sm:$0xf]
    %s248 = scalar_lea.vmem [#allocation0], 66
    %v249 = vld [vmem:[%s248] ss:$8 sm:$0xf0]
    %vm250 = vcmask 1047556
    %v251 = vsel %vm250, %v249, %v247
    %252 = vrot.lane.b32.xlu0 %v251, 64
    %v253 = vpop.permute.xlu0 %252
    %vm254 = vcmask 785920
    %s255 = scalar_lea.vmem %s1, 8
    %256 = vst.msk [vmem:[%s255] sm:$0xff] %vm254, %v253
    %s257 = scalar_lea.vmem [#allocation0], 130
    %v258 = vld [vmem:[%s257] ss:$8 sm:$0xf]
    %s259 = scalar_lea.vmem [#allocation0], 130
    %v260 = vld [vmem:[%s259] ss:$8 sm:$0xf0]
    %vm261 = vcmask 1047556
    %v262 = vsel %vm261, %v260, %v258
    %263 = vrot.lane.b32.xlu0 %v262, 64
    %v264 = vpop.permute.xlu0 %263
    %vm265 = vcmask 785920
    %s266 = scalar_lea.vmem %s1, 16
    %267 = vst.msk [vmem:[%s266] sm:$0xff] %vm265, %v264
    %s268 = scalar_lea.vmem [#allocation0], 194
    %v269 = vld [vmem:[%s268] ss:$8 sm:$0xf]
    %s270 = scalar_lea.vmem [#allocation0], 194
    %v271 = vld [vmem:[%s270] ss:$8 sm:$0xf0]
    %vm272 = vcmask 1047556
    %v273 = vsel %vm272, %v271, %v269
    %274 = vrot.lane.b32.xlu0 %v273, 64
    %v275 = vpop.permute.xlu0 %274
    %vm276 = vcmask 785920
    %s277 = scalar_lea.vmem %s1, 24
    %278 = vst.msk [vmem:[%s277] sm:$0xff] %vm276, %v275
    %s279 = scalar_lea.vmem [#allocation0], 1
    %v280 = vld [vmem:[%s279] ss:$8 sm:$0xf]
    %s281 = scalar_lea.vmem [#allocation0], 1
    %v282 = vld [vmem:[%s281] ss:$8 sm:$0xf0]
    %vm283 = vcmask 1047556
    %v284 = vsel %vm283, %v282, %v280
    %285 = vrot.lane.b32.xlu0 %v284, 32
    %v286 = vpop.permute.xlu0 %285
    %vm287 = vcmask 523520
    %288 = vst.msk [vmem:[%s1] sm:$0xff] %vm287, %v286
    %s289 = scalar_lea.vmem [#allocation0], 65
    %v290 = vld [vmem:[%s289] ss:$8 sm:$0xf]
    %s291 = scalar_lea.vmem [#allocation0], 65
    %v292 = vld [vmem:[%s291] ss:$8 sm:$0xf0]
    %vm293 = vcmask 1047556
    %v294 = vsel %vm293, %v292, %v290
    %295 = vrot.lane.b32.xlu0 %v294, 32
    %v296 = vpop.permute.xlu0 %295
    %vm297 = vcmask 523520
    %s298 = scalar_lea.vmem %s1, 8
    %299 = vst.msk [vmem:[%s298] sm:$0xff] %vm297, %v296
    %s300 = scalar_lea.vmem [#allocation0], 129
    %v301 = vld [vmem:[%s300] ss:$8 sm:$0xf]
    %s302 = scalar_lea.vmem [#allocation0], 129
    %v303 = vld [vmem:[%s302] ss:$8 sm:$0xf0]
    %vm304 = vcmask 1047556
    %v305 = vsel %vm304, %v303, %v301
    %306 = vrot.lane.b32.xlu0 %v305, 32
    %v307 = vpop.permute.xlu0 %306
    %vm308 = vcmask 523520
    %s309 = scalar_lea.vmem %s1, 16
    %310 = vst.msk [vmem:[%s309] sm:$0xff] %vm308, %v307
    %s311 = scalar_lea.vmem [#allocation0], 193
    %v312 = vld [vmem:[%s311] ss:$8 sm:$0xf]
    %s313 = scalar_lea.vmem [#allocation0], 193
    %v314 = vld [vmem:[%s313] ss:$8 sm:$0xf0]
    %vm315 = vcmask 1047556
    %v316 = vsel %vm315, %v314, %v312
    %317 = vrot.lane.b32.xlu0 %v316, 32
    %v318 = vpop.permute.xlu0 %317
    %vm319 = vcmask 523520
    %s320 = scalar_lea.vmem %s1, 24
    %321 = vst.msk [vmem:[%s320] sm:$0xff] %vm319, %v318

// kernel: inner_unet_forward.13
$region0: #{inner_unet_forward.13}
  #allocation0 [shape = 'u32[]', space=smem, size = 0x4, offset = 0x4, fixed_abs, tag = 'smem constant byte address 0x4 - core index']
  #allocation1 [shape = 'u32[144,128]{1,0:T(1,128)}', space=vmem, size = 0x12000, scoped, tag = 'internal scratch']
  #allocation2 [shape = 'f32[8,128]{1,0:T(8,128)}', space=vmem, size = 0x1000, scoped, tag = 'scratch operand']
  #allocation3 [shape = 'f32[1,128]{1,0:T(1,128)}', space=vmem, size = 0x200, scoped, tag = 'scratch operand']
  #allocation4 [shape = 'f32[1,128]{1,0:T(1,128)}', space=vmem, size = 0x200, scoped, tag = 'scratch operand']
  %s0 = inlined_call_operand.vmem [shape: f32[8,576], index: 0, kind: input, shape index: {}]
  %s1 = inlined_call_operand.vmem [shape: f32[576,128], index: 1, kind: input, shape index: {}]
  %s2 = inlined_call_operand.vmem [shape: f32[1,32], index: 2, kind: input, shape index: {}]
  %s3 = inlined_call_operand.vmem [shape: f32[1,32], index: 3, kind: input, shape index: {}]
  %s4 = inlined_call_operand.vmem [shape: f32[128,32], index: 4, kind: input, shape index: {}]
  %s5 = inlined_call_operand.vmem [shape: f32[32,128], index: 5, kind: input, shape index: {}]
  %s6 = inlined_call_operand.vmem [shape: f32[8,128], index: 6, kind: output, shape index: {}]
  %s7 = sld [smem:[#allocation0]]
  $region42: #{inner_unet_forward.13} parent=0
    _
  %s9 = ssub.s32 1, %s7
  %s10 = scalar_select 0, %s9, %s7
  // Predicated region
  $region2: #{inner_unet_forward.13} parent=0 // pred_check
    _
  $region3: #{inner_unet_forward.13} parent=0 // pred_check_branch
    %12 = sbr.rel (0) target = $region5
  $region4: #{inner_unet_forward.13} parent=0 // pred_region
    _
  $region5: #{inner_unet_forward.13} parent=0 // pred_fallthru
    _
  // Predicated region
  $region6: #{inner_unet_forward.13} parent=0 // pred_check
    _
  $region7: #{inner_unet_forward.13} parent=0 // pred_check_branch
    %14 = sbr.rel (0) target = $region9
  $region8: #{inner_unet_forward.13} parent=0 // pred_region
    _
  $region9: #{inner_unet_forward.13} parent=0 // pred_fallthru
    _
  // Predicated region
  $region10: #{inner_unet_forward.13} parent=0 // pred_check
    _
  $region11: #{inner_unet_forward.13} parent=0 // pred_check_branch
    %16 = sbr.rel (0) target = $region13
  $region12: #{inner_unet_forward.13} parent=0 // pred_region
    _
  $region13: #{inner_unet_forward.13} parent=0 // pred_fallthru
    _
  // Predicated region
  $region14: #{inner_unet_forward.13} parent=0 // pred_check
    _
  $region15: #{inner_unet_forward.13} parent=0 // pred_check_branch
    %18 = sbr.rel (0) target = $region17
  $region16: #{inner_unet_forward.13} parent=0 // pred_region
    _
  $region17: #{inner_unet_forward.13} parent=0 // pred_fallthru
    _
  // Predicated region
  $region18: #{inner_unet_forward.13} parent=0 // pred_check
    _
  $region19: #{inner_unet_forward.13} parent=0 // pred_check_branch
    %20 = sbr.rel (0) target = $region21
  $region20: #{inner_unet_forward.13} parent=0 // pred_region
    _
  $region21: #{inner_unet_forward.13} parent=0 // pred_fallthru
    _
  // Predicated region
  $region22: #{inner_unet_forward.13} parent=0 // pred_check
    _
  $region23: #{inner_unet_forward.13} parent=0 // pred_check_branch
    %22 = sbr.rel (0) target = $region25
  $region24: #{inner_unet_forward.13} parent=0 // pred_region
    _
  $region25: #{inner_unet_forward.13} parent=0 // pred_fallthru
    _
  %v23 = vld [vmem:[%s0] sm:$0xff]
  %v24 = vld [vmem:[%s0 + $0x8] sm:$0xff]
  %v25 = vld [vmem:[%s0 + $0x10] sm:$0xff]
  %v26 = vld [vmem:[%s0 + $0x18] sm:$0xff]
  %v27 = vld [vmem:[%s0 + $0x20] sm:$0xff]
  %v28 = vld [vmem:[%s1] sm:$0xff]
  %v29 = vld [vmem:[%s1 + $0x8] sm:$0xff]
  %v30 = vld [vmem:[%s1 + $0x10] sm:$0xff]
  %v31 = vld [vmem:[%s1 + $0x18] sm:$0xff]
  %v32 = vld [vmem:[%s1 + $0x20] sm:$0xff]
  %v33 = vld [vmem:[%s1 + $0x28] sm:$0xff]
  %v34 = vld [vmem:[%s1 + $0x30] sm:$0xff]
  %v35 = vld [vmem:[%s1 + $0x38] sm:$0xff]
  %v36 = vld [vmem:[%s1 + $0x40] sm:$0xff]
  %v37 = vld [vmem:[%s1 + $0x48] sm:$0xff]
  %v38 = vld [vmem:[%s1 + $0x50] sm:$0xff]
  %v39 = vld [vmem:[%s1 + $0x58] sm:$0xff]
  %v40 = vld [vmem:[%s1 + $0x60] sm:$0xff]
  %v41 = vld [vmem:[%s1 + $0x68] sm:$0xff]
  %v42 = vld [vmem:[%s1 + $0x70] sm:$0xff]
  %v43 = vld [vmem:[%s1 + $0x78] sm:$0xff]
  %v44 = vld [vmem:[%s1 + $0x80] sm:$0xff]
  %v45 = vld [vmem:[%s1 + $0x88] sm:$0xff]
  %v46 = vld [vmem:[%s1 + $0x90] sm:$0xff]
  %v47 = vld [vmem:[%s1 + $0x98] sm:$0xff]
  %v48 = vld [vmem:[%s1 + $0xa0] sm:$0xff]
  %v49 = vld [vmem:[%s1 + $0xa8] sm:$0xff]
  %v50 = vld [vmem:[%s1 + $0xb0] sm:$0xff]
  %v51 = vld [vmem:[%s1 + $0xb8] sm:$0xff]
  %v52 = vld [vmem:[%s1 + $0xc0] sm:$0xff]
  %v53 = vld [vmem:[%s1 + $0xc8] sm:$0xff]
  %v54 = vld [vmem:[%s1 + $0xd0] sm:$0xff]
  %v55 = vld [vmem:[%s1 + $0xd8] sm:$0xff]
  %v56 = vld [vmem:[%s1 + $0xe0] sm:$0xff]
  %v57 = vld [vmem:[%s1 + $0xe8] sm:$0xff]
  %v58 = vld [vmem:[%s1 + $0xf0] sm:$0xff]
  %v59 = vld [vmem:[%s1 + $0xf8] sm:$0xff]
  %v60 = vld [vmem:[%s1 + $0x100] sm:$0xff]
  %v61 = vld [vmem:[%s1 + $0x108] sm:$0xff]
  %v62 = vld [vmem:[%s1 + $0x110] sm:$0xff]
  %v63 = vld [vmem:[%s1 + $0x118] sm:$0xff]
  %v64 = vld [vmem:[%s1 + $0x120] sm:$0xff]
  %v65 = vld [vmem:[%s1 + $0x128] sm:$0xff]
  %v66 = vld [vmem:[%s1 + $0x130] sm:$0xff]
  %v67 = vld [vmem:[%s1 + $0x138] sm:$0xff]
  %v68 = vld [vmem:[%s1 + $0x140] sm:$0xff]
  %v69 = vld [vmem:[%s1 + $0x148] sm:$0xff]
  %v70 = vld [vmem:[%s1 + $0x150] sm:$0xff]
  %v71 = vld [vmem:[%s1 + $0x158] sm:$0xff]
  %v72 = vld [vmem:[%s1 + $0x160] sm:$0xff]
  %v73 = vld [vmem:[%s1 + $0x168] sm:$0xff]
  %v74 = vld [vmem:[%s1 + $0x170] sm:$0xff]
  %v75 = vld [vmem:[%s1 + $0x178] sm:$0xff]
  %v76 = vld [vmem:[%s1 + $0x180] sm:$0xff]
  %v77 = vld [vmem:[%s1 + $0x188] sm:$0xff]
  %v78 = vld [vmem:[%s1 + $0x190] sm:$0xff]
  %v79 = vld [vmem:[%s1 + $0x198] sm:$0xff]
  %v80 = vld [vmem:[%s1 + $0x1a0] sm:$0xff]
  %v81 = vld [vmem:[%s1 + $0x1a8] sm:$0xff]
  %v82 = vld [vmem:[%s1 + $0x1b0] sm:$0xff]
  %v83 = vld [vmem:[%s1 + $0x1b8] sm:$0xff]
  %v84 = vld [vmem:[%s1 + $0x1c0] sm:$0xff]
  %v85 = vld [vmem:[%s1 + $0x1c8] sm:$0xff]
  %v86 = vld [vmem:[%s1 + $0x1d0] sm:$0xff]
  %v87 = vld [vmem:[%s1 + $0x1d8] sm:$0xff]
  %v88 = vld [vmem:[%s1 + $0x1e0] sm:$0xff]
  %v89 = vld [vmem:[%s1 + $0x1e8] sm:$0xff]
  %v90 = vld [vmem:[%s1 + $0x1f0] sm:$0xff]
  %v91 = vld [vmem:[%s1 + $0x1f8] sm:$0xff]
  %v92 = vld [vmem:[%s1 + $0x200] sm:$0xff]
  %v93 = vld [vmem:[%s1 + $0x208] sm:$0xff]
  %v94 = vld [vmem:[%s1 + $0x210] sm:$0xff]
  %v95 = vld [vmem:[%s1 + $0x218] sm:$0xff]
  %v96 = vld [vmem:[%s1 + $0x220] sm:$0xff]
  %v97 = vld [vmem:[%s1 + $0x228] sm:$0xff]
  %v98 = vld [vmem:[%s1 + $0x230] sm:$0xff]
  %v99 = vld [vmem:[%s1 + $0x238] sm:$0xff]
  %vm100 = vcmask 523264
  %v102 = vsel %vm100, %v27, 0
  %104 = vmatprep.subr.mxu0 0.0
  %105 = vmatpush1.msra.mxu0 %v28
  %106 = vmatprep.subr.mxu0 0.0
  %107 = vmatpush1.msra.mxu0 %v29
  %108 = vmatprep.subr.mxu0 0.0
  %109 = vmatpush1.msra.mxu0 %v30
  %110 = vmatprep.subr.mxu0 0.0
  %111 = vmatpush1.msra.mxu0 %v31
  %112 = vmatprep.subr.mxu0 0.0
  %113 = vmatpush1.msra.mxu0 %v32
  %114 = vmatprep.subr.mxu0 0.0
  %115 = vmatpush1.msra.mxu0 %v33
  %116 = vmatprep.subr.mxu0 0.0
  %117 = vmatpush1.msra.mxu0 %v34
  %118 = vmatprep.subr.mxu0 0.0
  %119 = vmatpush1.msra.mxu0 %v35
  %120 = vmatprep.subr.mxu0 0.0
  %121 = vmatpush1.msra.mxu0 %v36
  %122 = vmatprep.subr.mxu0 0.0
  %123 = vmatpush1.msra.mxu0 %v37
  %124 = vmatprep.subr.mxu0 0.0
  %125 = vmatpush1.msra.mxu0 %v38
  %126 = vmatprep.subr.mxu0 0.0
  %127 = vmatpush1.msra.mxu0 %v39
  %128 = vmatprep.subr.mxu0 0.0
  %129 = vmatpush1.msra.mxu0 %v40
  %130 = vmatprep.subr.mxu0 0.0
  %131 = vmatpush1.msra.mxu0 %v41
  %132 = vmatprep.subr.mxu0 0.0
  %133 = vmatpush1.msra.mxu0 %v42
  %134 = vmatprep.subr.mxu0 0.0
  %135 = vmatpush1.msra.mxu0 %v43
  %136 = vmatprep.subr.mxu0 0.0
  %137 = vmatpush1.msra.mxu0 %v44
  %138 = vmatprep.subr.mxu0 0.0
  %139 = vmatpush1.msra.mxu0 %v45
  %140 = vmatprep.subr.mxu0 0.0
  %141 = vmatpush1.msra.mxu0 %v46
  %142 = vmatprep.subr.mxu0 0.0
  %143 = vmatpush1.msra.mxu0 %v47
  %144 = vmatprep.subr.mxu0 0.0
  %145 = vmatpush1.msra.mxu0 %v48
  %146 = vmatprep.subr.mxu0 0.0
  %147 = vmatpush1.msra.mxu0 %v49
  %148 = vmatprep.subr.mxu0 0.0
  %149 = vmatpush1.msra.mxu0 %v50
  %150 = vmatprep.subr.mxu0 0.0
  %151 = vmatpush1.msra.mxu0 %v51
  %152 = vmatprep.subr.mxu0 0.0
  %153 = vmatpush1.msra.mxu0 %v52
  %154 = vmatprep.subr.mxu0 0.0
  %155 = vmatpush1.msra.mxu0 %v53
  %156 = vmatprep.subr.mxu0 0.0
  %157 = vmatpush1.msra.mxu0 %v54
  %158 = vmatprep.subr.mxu0 0.0
  %159 = vmatpush1.msra.mxu0 %v55
  %160 = vmatprep.subr.mxu0 0.0
  %161 = vmatpush1.msra.mxu0 %v56
  %162 = vmatprep.subr.mxu0 0.0
  %163 = vmatpush1.msra.mxu0 %v57
  %164 = vmatprep.subr.mxu0 0.0
  %165 = vmatpush1.msra.mxu0 %v58
  %166 = vmatprep.subr.mxu0 0.0
  %167 = vmatpush1.msra.mxu0 %v59
  %168 = vmatprep.mubr.f32.mxu0 %v24
  %169 = vmatmul.mubr.f32.gmra.mrb[0].mxu0 %v23
  %v170 = vpop.f32.mrb[0].mxu0
  %v171 = vadd.f32 0.0, %v170
  %v172 = vpop.f32.mrb[0].mxu0
  %173 = vdwg.mxu0
  %174 = vmatprep.subr.mxu0 0.0
  %175 = vmatpush1.msra.mxu0 %v60
  %176 = vmatprep.subr.mxu0 0.0
  %177 = vmatpush1.msra.mxu0 %v61
  %178 = vmatprep.subr.mxu0 0.0
  %179 = vmatpush1.msra.mxu0 %v62
  %180 = vmatprep.subr.mxu0 0.0
  %181 = vmatpush1.msra.mxu0 %v63
  %182 = vmatprep.subr.mxu0 0.0
  %183 = vmatpush1.msra.mxu0 %v64
  %184 = vmatprep.subr.mxu0 0.0
  %185 = vmatpush1.msra.mxu0 %v65
  %186 = vmatprep.subr.mxu0 0.0
  %187 = vmatpush1.msra.mxu0 %v66
  %188 = vmatprep.subr.mxu0 0.0
  %189 = vmatpush1.msra.mxu0 %v67
  %190 = vmatprep.subr.mxu0 0.0
  %191 = vmatpush1.msra.mxu0 %v68
  %192 = vmatprep.subr.mxu0 0.0
  %193 = vmatpush1.msra.mxu0 %v69
  %194 = vmatprep.subr.mxu0 0.0
  %195 = vmatpush1.msra.mxu0 %v70
  %196 = vmatprep.subr.mxu0 0.0
  %197 = vmatpush1.msra.mxu0 %v71
  %198 = vmatprep.subr.mxu0 0.0
  %199 = vmatpush1.msra.mxu0 %v72
  %200 = vmatprep.subr.mxu0 0.0
  %201 = vmatpush1.msra.mxu0 %v73
  %202 = vmatprep.subr.mxu0 0.0
  %203 = vmatpush1.msra.mxu0 %v74
  %204 = vmatprep.subr.mxu0 0.0
  %205 = vmatpush1.msra.mxu0 %v75
  %206 = vmatprep.subr.mxu0 0.0
  %207 = vmatpush1.msra.mxu0 %v76
  %208 = vmatprep.subr.mxu0 0.0
  %209 = vmatpush1.msra.mxu0 %v77
  %210 = vmatprep.subr.mxu0 0.0
  %211 = vmatpush1.msra.mxu0 %v78
  %212 = vmatprep.subr.mxu0 0.0
  %213 = vmatpush1.msra.mxu0 %v79
  %214 = vmatprep.subr.mxu0 0.0
  %215 = vmatpush1.msra.mxu0 %v80
  %216 = vmatprep.subr.mxu0 0.0
  %217 = vmatpush1.msra.mxu0 %v81
  %218 = vmatprep.subr.mxu0 0.0
  %219 = vmatpush1.msra.mxu0 %v82
  %220 = vmatprep.subr.mxu0 0.0
  %221 = vmatpush1.msra.mxu0 %v83
  %222 = vmatprep.subr.mxu0 0.0
  %223 = vmatpush1.msra.mxu0 %v84
  %224 = vmatprep.subr.mxu0 0.0
  %225 = vmatpush1.msra.mxu0 %v85
  %226 = vmatprep.subr.mxu0 0.0
  %227 = vmatpush1.msra.mxu0 %v86
  %228 = vmatprep.subr.mxu0 0.0
  %229 = vmatpush1.msra.mxu0 %v87
  %230 = vmatprep.subr.mxu0 0.0
  %231 = vmatpush1.msra.mxu0 %v88
  %232 = vmatprep.subr.mxu0 0.0
  %233 = vmatpush1.msra.mxu0 %v89
  %234 = vmatprep.subr.mxu0 0.0
  %235 = vmatpush1.msra.mxu0 %v90
  %236 = vmatprep.subr.mxu0 0.0
  %237 = vmatpush1.msra.mxu0 %v91
  %238 = vmatprep.mubr.f32.mxu0 %v26
  %239 = vmatmul.mubr.f32.gmra.mrb[0].mxu0 %v25
  %v240 = vpop.f32.mrb[0].mxu0
  %v241 = vadd.f32 %v171, %v240
  %v242 = vpop.f32.mrb[0].mxu0
  %243 = vdwg.mxu0
  %244 = vmatprep.subr.mxu0 0.0
  %245 = vmatpush1.msra.mxu0 %v92
  %246 = vmatprep.subr.mxu0 0.0
  %247 = vmatpush1.msra.mxu0 %v93
  %248 = vmatprep.subr.mxu0 0.0
  %249 = vmatpush1.msra.mxu0 %v94
  %250 = vmatprep.subr.mxu0 0.0
  %251 = vmatpush1.msra.mxu0 %v95
  %252 = vmatprep.subr.mxu0 0.0
  %253 = vmatpush1.msra.mxu0 %v96
  %254 = vmatprep.subr.mxu0 0.0
  %255 = vmatpush1.msra.mxu0 %v97
  %256 = vmatprep.subr.mxu0 0.0
  %257 = vmatpush1.msra.mxu0 %v98
  %258 = vmatprep.subr.mxu0 0.0
  %259 = vmatpush1.msra.mxu0 %v99
  %260 = vmatprep.subr.mxu0 0.0
  %261 = vmatpush1.msra.mxu0 0.0
  %262 = vmatprep.subr.mxu0 0.0
  %263 = vmatpush1.msra.mxu0 0.0
  %264 = vmatprep.subr.mxu0 0.0
  %265 = vmatpush1.msra.mxu0 0.0
  %266 = vmatprep.subr.mxu0 0.0
  %267 = vmatpush1.msra.mxu0 0.0
  %268 = vmatprep.subr.mxu0 0.0
  %269 = vmatpush1.msra.mxu0 0.0
  %270 = vmatprep.subr.mxu0 0.0
  %271 = vmatpush1.msra.mxu0 0.0
  %272 = vmatprep.subr.mxu0 0.0
  %273 = vmatpush1.msra.mxu0 0.0
  %274 = vmatprep.subr.mxu0 0.0
  %275 = vmatpush1.msra.mxu0 0.0
  %276 = vmatprep.subr.mxu0 0.0
  %277 = vmatpush1.msra.mxu0 0.0
  %278 = vmatprep.subr.mxu0 0.0
  %279 = vmatpush1.msra.mxu0 0.0
  %280 = vmatprep.subr.mxu0 0.0
  %281 = vmatpush1.msra.mxu0 0.0
  %282 = vmatprep.subr.mxu0 0.0
  %283 = vmatpush1.msra.mxu0 0.0
  %284 = vmatprep.subr.mxu0 0.0
  %285 = vmatpush1.msra.mxu0 0.0
  %286 = vmatprep.subr.mxu0 0.0
  %287 = vmatpush1.msra.mxu0 0.0
  %288 = vmatprep.subr.mxu0 0.0
  %289 = vmatpush1.msra.mxu0 0.0
  %290 = vmatprep.subr.mxu0 0.0
  %291 = vmatpush1.msra.mxu0 0.0
  %292 = vmatprep.subr.mxu0 0.0
  %293 = vmatpush1.msra.mxu0 0.0
  %294 = vmatprep.subr.mxu0 0.0
  %295 = vmatpush1.msra.mxu0 0.0
  %296 = vmatprep.subr.mxu0 0.0
  %297 = vmatpush1.msra.mxu0 0.0
  %298 = vmatprep.subr.mxu0 0.0
  %299 = vmatpush1.msra.mxu0 0.0
  %300 = vmatprep.subr.mxu0 0.0
  %301 = vmatpush1.msra.mxu0 0.0
  %302 = vmatprep.subr.mxu0 0.0
  %303 = vmatpush1.msra.mxu0 0.0
  %304 = vmatprep.subr.mxu0 0.0
  %305 = vmatpush1.msra.mxu0 0.0
  %306 = vmatprep.subr.mxu0 0.0
  %307 = vmatpush1.msra.mxu0 0.0
  %308 = vmatprep.mubr.f32.mxu0 0.0
  %309 = vmatmul.mubr.f32.gmra.mrb[0].mxu0 %v102
  %v310 = vpop.f32.mrb[0].mxu0
  %v311 = vadd.f32 %v241, %v310
  %v312 = vpop.f32.mrb[0].mxu0
  %313 = vdwg.mxu0
  %p314 = scmp.eq.s32.totalorder 0, 0
  // Predicated region
  $region26: #{inner_unet_forward.13} parent=0 // pred_check
    %p315 = pneg %p314
  $region27: #{inner_unet_forward.13} parent=0 // pred_check_branch
    %317 = sbr.rel (%p315) target = $region29
  $region28: #{inner_unet_forward.13} parent=0 // pred_region
    %318 = vst [vmem:[#allocation3] sm:$0x1] 0.0
    %319 = vst [vmem:[#allocation4] sm:$0x1] 0.0
  $region29: #{inner_unet_forward.13} parent=0 // pred_fallthru
    _
  %v320 = vld [vmem:[#allocation3] sm:$0x1]
  %v321 = vrot.slane %v311, 4
  %v322 = vadd.f32 %v311, %v321
  %v323 = vrot.slane %v322, 2
  %v324 = vadd.f32 %v322, %v323
  %v325 = vrot.slane %v324, 1
  %v326 = vadd.f32 %v324, %v325
  %v327 = vadd.f32 %v320, %v326
  %328 = vst [vmem:[#allocation3] sm:$0x1] %v327
  %v329 = vld [vmem:[#allocation4] sm:$0x1]
  %v330 = vmul.f32 %v311, %v311
  %v331 = vrot.slane %v330, 4
  %v332 = vadd.f32 %v330, %v331
  %v333 = vrot.slane %v332, 2
  %v334 = vadd.f32 %v332, %v333
  %v335 = vrot.slane %v334, 1
  %v336 = vadd.f32 %v334, %v335
  %v337 = vadd.f32 %v329, %v336
  %338 = vst [vmem:[#allocation4] sm:$0x1] %v337
  %339 = vst [vmem:[#allocation2] sm:$0xff] %v311
  %v340 = vld [vmem:[#allocation3] sm:$0x1]
  %v341 = vld [vmem:[%s4] sm:$0xff]
  %v342 = vld [vmem:[%s4 + $0x8] sm:$0xff]
  %v343 = vld [vmem:[%s4 + $0x10] sm:$0xff]
  %v344 = vld [vmem:[%s4 + $0x18] sm:$0xff]
  %v345 = vld [vmem:[%s4 + $0x20] sm:$0xff]
  %v346 = vld [vmem:[%s4 + $0x28] sm:$0xff]
  %v347 = vld [vmem:[%s4 + $0x30] sm:$0xff]
  %v348 = vld [vmem:[%s4 + $0x38] sm:$0xff]
  %v349 = vld [vmem:[%s4 + $0x40] sm:$0xff]
  %v350 = vld [vmem:[%s4 + $0x48] sm:$0xff]
  %v351 = vld [vmem:[%s4 + $0x50] sm:$0xff]
  %v352 = vld [vmem:[%s4 + $0x58] sm:$0xff]
  %v353 = vld [vmem:[%s4 + $0x60] sm:$0xff]
  %v354 = vld [vmem:[%s4 + $0x68] sm:$0xff]
  %v355 = vld [vmem:[%s4 + $0x70] sm:$0xff]
  %v356 = vld [vmem:[%s4 + $0x78] sm:$0xff]
  %357 = vmatprep.subr.mxu0 0.0
  %358 = vmatpush1.msra.mxu0 %v341
  %359 = vmatprep.subr.mxu0 0.0
  %360 = vmatpush1.msra.mxu0 %v342
  %361 = vmatprep.subr.mxu0 0.0
  %362 = vmatpush1.msra.mxu0 %v343
  %363 = vmatprep.subr.mxu0 0.0
  %364 = vmatpush1.msra.mxu0 %v344
  %365 = vmatprep.subr.mxu0 0.0
  %366 = vmatpush1.msra.mxu0 %v345
  %367 = vmatprep.subr.mxu0 0.0
  %368 = vmatpush1.msra.mxu0 %v346
  %369 = vmatprep.subr.mxu0 0.0
  %370 = vmatpush1.msra.mxu0 %v347
  %371 = vmatprep.subr.mxu0 0.0
  %372 = vmatpush1.msra.mxu0 %v348
  %373 = vmatprep.subr.mxu0 0.0
  %374 = vmatpush1.msra.mxu0 %v349
  %375 = vmatprep.subr.mxu0 0.0
  %376 = vmatpush1.msra.mxu0 %v350
  %377 = vmatprep.subr.mxu0 0.0
  %378 = vmatpush1.msra.mxu0 %v351
  %379 = vmatprep.subr.mxu0 0.0
  %380 = vmatpush1.msra.mxu0 %v352
  %381 = vmatprep.subr.mxu0 0.0
  %382 = vmatpush1.msra.mxu0 %v353
  %383 = vmatprep.subr.mxu0 0.0
  %384 = vmatpush1.msra.mxu0 %v354
  %385 = vmatprep.subr.mxu0 0.0
  %386 = vmatpush1.msra.mxu0 %v355
  %387 = vmatprep.subr.mxu0 0.0
  %388 = vmatpush1.msra.mxu0 %v356
  %389 = vmatprep.subr.mxu0 0.0
  %390 = vmatpush1.msra.mxu0 0.0
  %391 = vmatprep.subr.mxu0 0.0
  %392 = vmatpush1.msra.mxu0 0.0
  %393 = vmatprep.subr.mxu0 0.0
  %394 = vmatpush1.msra.mxu0 0.0
  %395 = vmatprep.subr.mxu0 0.0
  %396 = vmatpush1.msra.mxu0 0.0
  %397 = vmatprep.subr.mxu0 0.0
  %398 = vmatpush1.msra.mxu0 0.0
  %399 = vmatprep.subr.mxu0 0.0
  %400 = vmatpush1.msra.mxu0 0.0
  %401 = vmatprep.subr.mxu0 0.0
  %402 = vmatpush1.msra.mxu0 0.0
  %403 = vmatprep.subr.mxu0 0.0
  %404 = vmatpush1.msra.mxu0 0.0
  %405 = vmatprep.subr.mxu0 0.0
  %406 = vmatpush1.msra.mxu0 0.0
  %407 = vmatprep.subr.mxu0 0.0
  %408 = vmatpush1.msra.mxu0 0.0
  %409 = vmatprep.subr.mxu0 0.0
  %410 = vmatpush1.msra.mxu0 0.0
  %411 = vmatprep.subr.mxu0 0.0
  %412 = vmatpush1.msra.mxu0 0.0
  %413 = vmatprep.subr.mxu0 0.0
  %414 = vmatpush1.msra.mxu0 0.0
  %415 = vmatprep.subr.mxu0 0.0
  %416 = vmatpush1.msra.mxu0 0.0
  %417 = vmatprep.subr.mxu0 0.0
  %418 = vmatpush1.msra.mxu0 0.0
  %419 = vmatprep.subr.mxu0 0.0
  %420 = vmatpush1.msra.mxu0 0.0
  %421 = vmatprep.mubr.f32.mxu0 0.0
  %422 = vmatmul.mubr.f32.gmra.mrb[0].mxu0 %v340
  %v423 = vpop.f32.mrb[0].mxu0
  %v424 = vadd.f32 0.0, %v423
  %v425 = vpop.f32.mrb[0].mxu0
  %426 = vdwg.mxu0
  %v427 = vld [vmem:[#allocation4] sm:$0x1]
  %428 = vmatprep.subr.mxu0 0.0
  %429 = vmatpush1.msra.mxu0 %v341
  %430 = vmatprep.subr.mxu0 0.0
  %431 = vmatpush1.msra.mxu0 %v342
  %432 = vmatprep.subr.mxu0 0.0
  %433 = vmatpush1.msra.mxu0 %v343
  %434 = vmatprep.subr.mxu0 0.0
  %435 = vmatpush1.msra.mxu0 %v344
  %436 = vmatprep.subr.mxu0 0.0
  %437 = vmatpush1.msra.mxu0 %v345
  %438 = vmatprep.subr.mxu0 0.0
  %439 = vmatpush1.msra.mxu0 %v346
  %440 = vmatprep.subr.mxu0 0.0
  %441 = vmatpush1.msra.mxu0 %v347
  %442 = vmatprep.subr.mxu0 0.0
  %443 = vmatpush1.msra.mxu0 %v348
  %444 = vmatprep.subr.mxu0 0.0
  %445 = vmatpush1.msra.mxu0 %v349
  %446 = vmatprep.subr.mxu0 0.0
  %447 = vmatpush1.msra.mxu0 %v350
  %448 = vmatprep.subr.mxu0 0.0
  %449 = vmatpush1.msra.mxu0 %v351
  %450 = vmatprep.subr.mxu0 0.0
  %451 = vmatpush1.msra.mxu0 %v352
  %452 = vmatprep.subr.mxu0 0.0
  %453 = vmatpush1.msra.mxu0 %v353
  %454 = vmatprep.subr.mxu0 0.0
  %455 = vmatpush1.msra.mxu0 %v354
  %456 = vmatprep.subr.mxu0 0.0
  %457 = vmatpush1.msra.mxu0 %v355
  %458 = vmatprep.subr.mxu0 0.0
  %459 = vmatpush1.msra.mxu0 %v356
  %460 = vmatprep.subr.mxu0 0.0
  %461 = vmatpush1.msra.mxu0 0.0
  %462 = vmatprep.subr.mxu0 0.0
  %463 = vmatpush1.msra.mxu0 0.0
  %464 = vmatprep.subr.mxu0 0.0
  %465 = vmatpush1.msra.mxu0 0.0
  %466 = vmatprep.subr.mxu0 0.0
  %467 = vmatpush1.msra.mxu0 0.0
  %468 = vmatprep.subr.mxu0 0.0
  %469 = vmatpush1.msra.mxu0 0.0
  %470 = vmatprep.subr.mxu0 0.0
  %471 = vmatpush1.msra.mxu0 0.0
  %472 = vmatprep.subr.mxu0 0.0
  %473 = vmatpush1.msra.mxu0 0.0
  %474 = vmatprep.subr.mxu0 0.0
  %475 = vmatpush1.msra.mxu0 0.0
  %476 = vmatprep.subr.mxu0 0.0
  %477 = vmatpush1.msra.mxu0 0.0
  %478 = vmatprep.subr.mxu0 0.0
  %479 = vmatpush1.msra.mxu0 0.0
  %480 = vmatprep.subr.mxu0 0.0
  %481 = vmatpush1.msra.mxu0 0.0
  %482 = vmatprep.subr.mxu0 0.0
  %483 = vmatpush1.msra.mxu0 0.0
  %484 = vmatprep.subr.mxu0 0.0
  %485 = vmatpush1.msra.mxu0 0.0
  %486 = vmatprep.subr.mxu0 0.0
  %487 = vmatpush1.msra.mxu0 0.0
  %488 = vmatprep.subr.mxu0 0.0
  %489 = vmatpush1.msra.mxu0 0.0
  %490 = vmatprep.subr.mxu0 0.0
  %491 = vmatpush1.msra.mxu0 0.0
  %492 = vmatprep.mubr.f32.mxu0 0.0
  %493 = vmatmul.mubr.f32.gmra.mrb[0].mxu0 %v427
  %v494 = vpop.f32.mrb[0].mxu0
  %v495 = vadd.f32 0.0, %v494
  %v496 = vpop.f32.mrb[0].mxu0
  %497 = vdwg.mxu0
  %v498 = vmul.f32 %v424, 0.03125
  %v499 = vmul.f32 %v495, 0.03125
  %v500 = vmul.f32 %v498, %v498
  %v501 = vsub.f32 %v499, %v500
  %v502 = vmax.f32 %v501, 0.0
  %v503 = vld [vmem:[%s2] sm:$0x1]
  %v504 = vadd.f32 %v502, 1e-05
  %v505 = vrsqrt.pop %v504
  %v506 = vmul.f32 %v503, %v505
  %v507 = vld [vmem:[%s3] sm:$0x1]
  %v508 = vmul.f32 %v498, %v506
  %v509 = vsub.f32 %v507, %v508
  %v510 = vld [vmem:[%s5] sm:$0xff]
  %v511 = vld [vmem:[%s5 + $0x8] sm:$0xff]
  %v512 = vld [vmem:[%s5 + $0x10] sm:$0xff]
  %v513 = vld [vmem:[%s5 + $0x18] sm:$0xff]
  %vm514 = vcmask 261120
  %v516 = vsel %vm514, %v506, 0
  %518 = vmatprep.subr.mxu0 0.0
  %519 = vmatpush1.msra.mxu0 %v510
  %520 = vmatprep.subr.mxu0 0.0
  %521 = vmatpush1.msra.mxu0 %v511
  %522 = vmatprep.subr.mxu0 0.0
  %523 = vmatpush1.msra.mxu0 %v512
  %524 = vmatprep.subr.mxu0 0.0
  %525 = vmatpush1.msra.mxu0 %v513
  %526 = vmatprep.subr.mxu0 0.0
  %527 = vmatpush1.msra.mxu0 0.0
  %528 = vmatprep.subr.mxu0 0.0
  %529 = vmatpush1.msra.mxu0 0.0
  %530 = vmatprep.subr.mxu0 0.0
  %531 = vmatpush1.msra.mxu0 0.0
  %532 = vmatprep.subr.mxu0 0.0
  %533 = vmatpush1.msra.mxu0 0.0
  %534 = vmatprep.subr.mxu0 0.0
  %535 = vmatpush1.msra.mxu0 0.0
  %536 = vmatprep.subr.mxu0 0.0
  %537 = vmatpush1.msra.mxu0 0.0
  %538 = vmatprep.subr.mxu0 0.0
  %539 = vmatpush1.msra.mxu0 0.0
  %540 = vmatprep.subr.mxu0 0.0
  %541 = vmatpush1.msra.mxu0 0.0
  %542 = vmatprep.subr.mxu0 0.0
  %543 = vmatpush1.msra.mxu0 0.0
  %544 = vmatprep.subr.mxu0 0.0
  %545 = vmatpush1.msra.mxu0 0.0
  %546 = vmatprep.subr.mxu0 0.0
  %547 = vmatpush1.msra.mxu0 0.0
  %548 = vmatprep.subr.mxu0 0.0
  %549 = vmatpush1.msra.mxu0 0.0
  %550 = vmatprep.subr.mxu0 0.0
  %551 = vmatpush1.msra.mxu0 0.0
  %552 = vmatprep.subr.mxu0 0.0
  %553 = vmatpush1.msra.mxu0 0.0
  %554 = vmatprep.subr.mxu0 0.0
  %555 = vmatpush1.msra.mxu0 0.0
  %556 = vmatprep.subr.mxu0 0.0
  %557 = vmatpush1.msra.mxu0 0.0
  %558 = vmatprep.subr.mxu0 0.0
  %559 = vmatpush1.msra.mxu0 0.0
  %560 = vmatprep.subr.mxu0 0.0
  %561 = vmatpush1.msra.mxu0 0.0
  %562 = vmatprep.subr.mxu0 0.0
  %563 = vmatpush1.msra.mxu0 0.0
  %564 = vmatprep.subr.mxu0 0.0
  %565 = vmatpush1.msra.mxu0 0.0
  %566 = vmatprep.subr.mxu0 0.0
  %567 = vmatpush1.msra.mxu0 0.0
  %568 = vmatprep.subr.mxu0 0.0
  %569 = vmatpush1.msra.mxu0 0.0
  %570 = vmatprep.subr.mxu0 0.0
  %571 = vmatpush1.msra.mxu0 0.0
  %572 = vmatprep.subr.mxu0 0.0
  %573 = vmatpush1.msra.mxu0 0.0
  %574 = vmatprep.subr.mxu0 0.0
  %575 = vmatpush1.msra.mxu0 0.0
  %576 = vmatprep.subr.mxu0 0.0
  %577 = vmatpush1.msra.mxu0 0.0
  %578 = vmatprep.subr.mxu0 0.0
  %579 = vmatpush1.msra.mxu0 0.0
  %580 = vmatprep.subr.mxu0 0.0
  %581 = vmatpush1.msra.mxu0 0.0
  %582 = vmatprep.mubr.f32.mxu0 0.0
  %583 = vmatmul.mubr.f32.gmra.mrb[0].mxu0 %v516
  %v584 = vpop.f32.mrb[0].mxu0
  %v585 = vadd.f32 0.0, %v584
  %v586 = vpop.f32.mrb[0].mxu0
  %587 = vdwg.mxu0
  %v589 = vsel %vm514, %v509, 0
  %591 = vmatprep.subr.mxu0 0.0
  %592 = vmatpush1.msra.mxu0 %v510
  %593 = vmatprep.subr.mxu0 0.0
  %594 = vmatpush1.msra.mxu0 %v511
  %595 = vmatprep.subr.mxu0 0.0
  %596 = vmatpush1.msra.mxu0 %v512
  %597 = vmatprep.subr.mxu0 0.0
  %598 = vmatpush1.msra.mxu0 %v513
  %599 = vmatprep.subr.mxu0 0.0
  %600 = vmatpush1.msra.mxu0 0.0
  %601 = vmatprep.subr.mxu0 0.0
  %602 = vmatpush1.msra.mxu0 0.0
  %603 = vmatprep.subr.mxu0 0.0
  %604 = vmatpush1.msra.mxu0 0.0
  %605 = vmatprep.subr.mxu0 0.0
  %606 = vmatpush1.msra.mxu0 0.0
  %607 = vmatprep.subr.mxu0 0.0
  %608 = vmatpush1.msra.mxu0 0.0
  %609 = vmatprep.subr.mxu0 0.0
  %610 = vmatpush1.msra.mxu0 0.0
  %611 = vmatprep.subr.mxu0 0.0
  %612 = vmatpush1.msra.mxu0 0.0
  %613 = vmatprep.subr.mxu0 0.0
  %614 = vmatpush1.msra.mxu0 0.0
  %615 = vmatprep.subr.mxu0 0.0
  %616 = vmatpush1.msra.mxu0 0.0
  %617 = vmatprep.subr.mxu0 0.0
  %618 = vmatpush1.msra.mxu0 0.0
  %619 = vmatprep.subr.mxu0 0.0
  %620 = vmatpush1.msra.mxu0 0.0
  %621 = vmatprep.subr.mxu0 0.0
  %622 = vmatpush1.msra.mxu0 0.0
  %623 = vmatprep.subr.mxu0 0.0
  %624 = vmatpush1.msra.mxu0 0.0
  %625 = vmatprep.subr.mxu0 0.0
  %626 = vmatpush1.msra.mxu0 0.0
  %627 = vmatprep.subr.mxu0 0.0
  %628 = vmatpush1.msra.mxu0 0.0
  %629 = vmatprep.subr.mxu0 0.0
  %630 = vmatpush1.msra.mxu0 0.0
  %631 = vmatprep.subr.mxu0 0.0
  %632 = vmatpush1.msra.mxu0 0.0
  %633 = vmatprep.subr.mxu0 0.0
  %634 = vmatpush1.msra.mxu0 0.0
  %635 = vmatprep.subr.mxu0 0.0
  %636 = vmatpush1.msra.mxu0 0.0
  %637 = vmatprep.subr.mxu0 0.0
  %638 = vmatpush1.msra.mxu0 0.0
  %639 = vmatprep.subr.mxu0 0.0
  %640 = vmatpush1.msra.mxu0 0.0
  %641 = vmatprep.subr.mxu0 0.0
  %642 = vmatpush1.msra.mxu0 0.0
  %643 = vmatprep.subr.mxu0 0.0
  %644 = vmatpush1.msra.mxu0 0.0
  %645 = vmatprep.subr.mxu0 0.0
  %646 = vmatpush1.msra.mxu0 0.0
  %647 = vmatprep.subr.mxu0 0.0
  %648 = vmatpush1.msra.mxu0 0.0
  %649 = vmatprep.subr.mxu0 0.0
  %650 = vmatpush1.msra.mxu0 0.0
  %651 = vmatprep.subr.mxu0 0.0
  %652 = vmatpush1.msra.mxu0 0.0
  %653 = vmatprep.subr.mxu0 0.0
  %654 = vmatpush1.msra.mxu0 0.0
  %655 = vmatprep.mubr.f32.mxu0 0.0
  %656 = vmatmul.mubr.f32.gmra.mrb[0].mxu0 %v589
  %v657 = vpop.f32.mrb[0].mxu0
  %v658 = vadd.f32 0.0, %v657
  %v659 = vpop.f32.mrb[0].mxu0
  %660 = vdwg.mxu0
  // Predicated region
  $region30: #{inner_unet_forward.13} parent=0 // pred_check
    %p661 = pneg %p314
  $region31: #{inner_unet_forward.13} parent=0 // pred_check_branch
    %663 = sbr.rel (%p661) target = $region33
  $region32: #{inner_unet_forward.13} parent=0 // pred_region
    %v664 = vld [vmem:[#allocation2] sm:$0xff]
    %v665 = vlaneseq
    %v666 = vshrl.u32 %v665, 7
    %v667 = vsub.s32 0, %v666
    %v668 = vrot.slane %v585, %v667
    %v669 = vmul.f32 %v664, %v668
    %v670 = vlaneseq
    %v671 = vshrl.u32 %v670, 7
    %v672 = vsub.s32 0, %v671
    %v673 = vrot.slane %v658, %v672
    %v674 = vadd.f32 %v669, %v673
    %vm675 = vcmp.ge.f32.partialorder %v674, 0.0
    %v676 = vmul.f32 %v674, 0.0
    %v677 = vsel %vm675, %v674, %v676
    %678 = vst [vmem:[%s6] sm:$0xff] %v677
  $region33: #{inner_unet_forward.13} parent=0 // pred_fallthru
    _
  // Predicated region
  $region34: #{inner_unet_forward.13} parent=0 // pred_check
    _
  $region35: #{inner_unet_forward.13} parent=0 // pred_check_branch
    %680 = sbr.rel (0) target = $region37
  $region36: #{inner_unet_forward.13} parent=0 // pred_region
    _
  $region37: #{inner_unet_forward.13} parent=0 // pred_fallthru
    _
  // Predicated region
  $region38: #{inner_unet_forward.13} parent=0 // pred_check
    _
  $region39: #{inner_unet_forward.13} parent=0 // pred_check_branch
    %682 = sbr.rel (0) target = $region41
  $region40: #{inner_unet_forward.13} parent=0 // pred_region
    _
  $region41: #{inner_unet_forward.13} parent=0 // pred_fallthru
    _

// kernel: tile.49
$region0: #{tile.49}
  %s0 = inlined_call_operand.vmem [shape: f32[16,4,16], index: 0, kind: input, shape index: {}]
  %s1 = inlined_call_operand.vmem [shape: f32[16,64], index: 1, kind: output, shape index: {}]
  $region1: #{tile.49} parent=0
    #allocation0 [shape = 'u8[65536]{0}', space=vmem, size = 0x10000, scoped, tag = 'scoped mem for input reshape']
    %s3 = sshllo.u32 0, 4
    %s4 = smul.addr 4, 15
    %s5 = scalar_lea.vmem %s0, %s4
    %v6 = vld [vmem:[%s5] sm:%s3]
    %s7 = scalar_lea.vmem [#allocation0], 120
    %8 = vst [vmem:[%s7] sm:%s3] %v6
    %s9 = smul.addr 4, 14
    %s10 = scalar_lea.vmem %s0, %s9
    %v11 = vld [vmem:[%s10] sm:%s3]
    %s12 = scalar_lea.vmem [#allocation0], 112
    %13 = vst [vmem:[%s12] sm:%s3] %v11
    %s14 = smul.addr 4, 13
    %s15 = scalar_lea.vmem %s0, %s14
    %v16 = vld [vmem:[%s15] sm:%s3]
    %s17 = scalar_lea.vmem [#allocation0], 104
    %18 = vst [vmem:[%s17] sm:%s3] %v16
    %s19 = smul.addr 4, 12
    %s20 = scalar_lea.vmem %s0, %s19
    %v21 = vld [vmem:[%s20] sm:%s3]
    %s22 = scalar_lea.vmem [#allocation0], 96
    %23 = vst [vmem:[%s22] sm:%s3] %v21
    %s24 = smul.addr 4, 11
    %s25 = scalar_lea.vmem %s0, %s24
    %v26 = vld [vmem:[%s25] sm:%s3]
    %s27 = scalar_lea.vmem [#allocation0], 88
    %28 = vst [vmem:[%s27] sm:%s3] %v26
    %s29 = smul.addr 4, 10
    %s30 = scalar_lea.vmem %s0, %s29
    %v31 = vld [vmem:[%s30] sm:%s3]
    %s32 = scalar_lea.vmem [#allocation0], 80
    %33 = vst [vmem:[%s32] sm:%s3] %v31
    %s34 = smul.addr 4, 9
    %s35 = scalar_lea.vmem %s0, %s34
    %v36 = vld [vmem:[%s35] sm:%s3]
    %s37 = scalar_lea.vmem [#allocation0], 72
    %38 = vst [vmem:[%s37] sm:%s3] %v36
    %s39 = smul.addr 4, 8
    %s40 = scalar_lea.vmem %s0, %s39
    %v41 = vld [vmem:[%s40] sm:%s3]
    %s42 = scalar_lea.vmem [#allocation0], 64
    %43 = vst [vmem:[%s42] sm:%s3] %v41
    %s44 = smul.addr 4, 7
    %s45 = scalar_lea.vmem %s0, %s44
    %v46 = vld [vmem:[%s45] sm:%s3]
    %s47 = scalar_lea.vmem [#allocation0], 56
    %48 = vst [vmem:[%s47] sm:%s3] %v46
    %s49 = smul.addr 4, 6
    %s50 = scalar_lea.vmem %s0, %s49
    %v51 = vld [vmem:[%s50] sm:%s3]
    %s52 = scalar_lea.vmem [#allocation0], 48
    %53 = vst [vmem:[%s52] sm:%s3] %v51
    %s54 = smul.addr 4, 5
    %s55 = scalar_lea.vmem %s0, %s54
    %v56 = vld [vmem:[%s55] sm:%s3]
    %s57 = scalar_lea.vmem [#allocation0], 40
    %58 = vst [vmem:[%s57] sm:%s3] %v56
    %s59 = smul.addr 4, 4
    %s60 = scalar_lea.vmem %s0, %s59
    %v61 = vld [vmem:[%s60] sm:%s3]
    %s62 = scalar_lea.vmem [#allocation0], 32
    %63 = vst [vmem:[%s62] sm:%s3] %v61
    %s64 = smul.addr 4, 3
    %s65 = scalar_lea.vmem %s0, %s64
    %v66 = vld [vmem:[%s65] sm:%s3]
    %s67 = scalar_lea.vmem [#allocation0], 24
    %68 = vst [vmem:[%s67] sm:%s3] %v66
    %s69 = smul.addr 4, 2
    %s70 = scalar_lea.vmem %s0, %s69
    %v71 = vld [vmem:[%s70] sm:%s3]
    %s72 = scalar_lea.vmem [#allocation0], 16
    %73 = vst [vmem:[%s72] sm:%s3] %v71
    %s74 = scalar_lea.vmem %s0, 4
    %v75 = vld [vmem:[%s74] sm:%s3]
    %s76 = scalar_lea.vmem [#allocation0], 8
    %77 = vst [vmem:[%s76] sm:%s3] %v75
    %v78 = vld [vmem:[%s0] sm:%s3]
    %79 = vst [vmem:[#allocation0] sm:%s3] %v78
    %v80 = vld [vmem:[#allocation0] ss:$8 sm:$0xf]
    %v81 = vld [vmem:[#allocation0] ss:$8 sm:$0xf0]
    %vm82 = vcmask 1047556
    %v83 = vsel %vm82, %v81, %v80
    %vm84 = vcmask 130048
    %85 = vst.msk [vmem:[%s1] sm:$0xff] %vm84, %v83
    %s86 = scalar_lea.vmem [#allocation0], 64
    %v87 = vld [vmem:[%s86] ss:$8 sm:$0xf]
    %s88 = scalar_lea.vmem [#allocation0], 64
    %v89 = vld [vmem:[%s88] ss:$8 sm:$0xf0]
    %vm90 = vcmask 1047556
    %v91 = vsel %vm90, %v89, %v87
    %vm92 = vcmask 130048
    %s93 = scalar_lea.vmem %s1, 8
    %94 = vst.msk [vmem:[%s93] sm:$0xff] %vm92, %v91
    %s95 = scalar_lea.vmem [#allocation0], 3
    %v96 = vld [vmem:[%s95] ss:$8 sm:$0xf]
    %s97 = scalar_lea.vmem [#allocation0], 3
    %v98 = vld [vmem:[%s97] ss:$8 sm:$0xf0]
    %vm99 = vcmask 1047556
    %v100 = vsel %vm99, %v98, %v96
    %101 = vrot.lane.b32.xlu0 %v100, 48
    %v102 = vpop.permute.xlu0 %101
    %vm103 = vcmask 523648
    %104 = vst.msk [vmem:[%s1] sm:$0xff] %vm103, %v102
    %s105 = scalar_lea.vmem [#allocation0], 67
    %v106 = vld [vmem:[%s105] ss:$8 sm:$0xf]
    %s107 = scalar_lea.vmem [#allocation0], 67
    %v108 = vld [vmem:[%s107] ss:$8 sm:$0xf0]
    %vm109 = vcmask 1047556
    %v110 = vsel %vm109, %v108, %v106
    %111 = vrot.lane.b32.xlu0 %v110, 48
    %v112 = vpop.permute.xlu0 %111
    %vm113 = vcmask 523648
    %s114 = scalar_lea.vmem %s1, 8
    %115 = vst.msk [vmem:[%s114] sm:$0xff] %vm113, %v112
    %s116 = scalar_lea.vmem [#allocation0], 2
    %v117 = vld [vmem:[%s116] ss:$8 sm:$0xf]
    %s118 = scalar_lea.vmem [#allocation0], 2
    %v119 = vld [vmem:[%s118] ss:$8 sm:$0xf0]
    %vm120 = vcmask 1047556
    %v121 = vsel %vm120, %v119, %v117
    %122 = vrot.lane.b32.xlu0 %v121, 32
    %v123 = vpop.permute.xlu0 %122
    %vm124 = vcmask 392448
    %125 = vst.msk [vmem:[%s1] sm:$0xff] %vm124, %v123
    %s126 = scalar_lea.vmem [#allocation0], 66
    %v127 = vld [vmem:[%s126] ss:$8 sm:$0xf]
    %s128 = scalar_lea.vmem [#allocation0], 66
    %v129 = vld [vmem:[%s128] ss:$8 sm:$0xf0]
    %vm130 = vcmask 1047556
    %v131 = vsel %vm130, %v129, %v127
    %132 = vrot.lane.b32.xlu0 %v131, 32
    %v133 = vpop.permute.xlu0 %132
    %vm134 = vcmask 392448
    %s135 = scalar_lea.vmem %s1, 8
    %136 = vst.msk [vmem:[%s135] sm:$0xff] %vm134, %v133
    %s137 = scalar_lea.vmem [#allocation0], 1
    %v138 = vld [vmem:[%s137] ss:$8 sm:$0xf]
    %s139 = scalar_lea.vmem [#allocation0], 1
    %v140 = vld [vmem:[%s139] ss:$8 sm:$0xf0]
    %vm141 = vcmask 1047556
    %v142 = vsel %vm141, %v140, %v138
    %143 = vrot.lane.b32.xlu0 %v142, 16
    %v144 = vpop.permute.xlu0 %143
    %vm145 = vcmask 261248
    %146 = vst.msk [vmem:[%s1] sm:$0xff] %vm145, %v144
    %s147 = scalar_lea.vmem [#allocation0], 65
    %v148 = vld [vmem:[%s147] ss:$8 sm:$0xf]
    %s149 = scalar_lea.vmem [#allocation0], 65
    %v150 = vld [vmem:[%s149] ss:$8 sm:$0xf0]
    %vm151 = vcmask 1047556
    %v152 = vsel %vm151, %v150, %v148
    %153 = vrot.lane.b32.xlu0 %v152, 16
    %v154 = vpop.permute.xlu0 %153
    %vm155 = vcmask 261248
    %s156 = scalar_lea.vmem %s1, 8
    %157 = vst.msk [vmem:[%s156] sm:$0xff] %vm155, %v154

// kernel: inner_unet_forward.14
$region0: #{inner_unet_forward.14}
  #allocation0 [shape = 'u32[]', space=smem, size = 0x4, offset = 0x4, fixed_abs, tag = 'smem constant byte address 0x4 - core index']
  #allocation1 [shape = 'u32[144,128]{1,0:T(1,128)}', space=vmem, size = 0x12000, scoped, tag = 'internal scratch']
  #allocation2 [shape = 'f32[32,64]{1,0:T(8,128)}', space=vmem, size = 0x4000, scoped, tag = 'scratch operand']
  #allocation3 [shape = 'f32[1,64]{1,0:T(1,128)}', space=vmem, size = 0x200, scoped, tag = 'scratch operand']
  #allocation4 [shape = 'f32[1,64]{1,0:T(1,128)}', space=vmem, size = 0x200, scoped, tag = 'scratch operand']
  %s0 = inlined_call_operand.vmem [shape: f32[32,576], index: 0, kind: input, shape index: {}]
  %s1 = inlined_call_operand.vmem [shape: f32[576,64], index: 1, kind: input, shape index: {}]
  %s2 = inlined_call_operand.vmem [shape: f32[1,16], index: 2, kind: input, shape index: {}]
  %s3 = inlined_call_operand.vmem [shape: f32[1,16], index: 3, kind: input, shape index: {}]
  %s4 = inlined_call_operand.vmem [shape: f32[64,16], index: 4, kind: input, shape index: {}]
  %s5 = inlined_call_operand.vmem [shape: f32[16,64], index: 5, kind: input, shape index: {}]
  %s6 = inlined_call_operand.vmem [shape: f32[32,64], index: 6, kind: output, shape index: {}]
  %s7 = sld [smem:[#allocation0]]
  $region42: #{inner_unet_forward.14} parent=0
    _
  %s9 = ssub.s32 1, %s7
  %s10 = scalar_select 0, %s9, %s7
  // Predicated region
  $region2: #{inner_unet_forward.14} parent=0 // pred_check
    _
  $region3: #{inner_unet_forward.14} parent=0 // pred_check_branch
    %12 = sbr.rel (0) target = $region5
  $region4: #{inner_unet_forward.14} parent=0 // pred_region
    _
  $region5: #{inner_unet_forward.14} parent=0 // pred_fallthru
    _
  // Predicated region
  $region6: #{inner_unet_forward.14} parent=0 // pred_check
    _
  $region7: #{inner_unet_forward.14} parent=0 // pred_check_branch
    %14 = sbr.rel (0) target = $region9
  $region8: #{inner_unet_forward.14} parent=0 // pred_region
    _
  $region9: #{inner_unet_forward.14} parent=0 // pred_fallthru
    _
  // Predicated region
  $region10: #{inner_unet_forward.14} parent=0 // pred_check
    _
  $region11: #{inner_unet_forward.14} parent=0 // pred_check_branch
    %16 = sbr.rel (0) target = $region13
  $region12: #{inner_unet_forward.14} parent=0 // pred_region
    _
  $region13: #{inner_unet_forward.14} parent=0 // pred_fallthru
    _
  // Predicated region
  $region14: #{inner_unet_forward.14} parent=0 // pred_check
    _
  $region15: #{inner_unet_forward.14} parent=0 // pred_check_branch
    %18 = sbr.rel (0) target = $region17
  $region16: #{inner_unet_forward.14} parent=0 // pred_region
    _
  $region17: #{inner_unet_forward.14} parent=0 // pred_fallthru
    _
  // Predicated region
  $region18: #{inner_unet_forward.14} parent=0 // pred_check
    _
  $region19: #{inner_unet_forward.14} parent=0 // pred_check_branch
    %20 = sbr.rel (0) target = $region21
  $region20: #{inner_unet_forward.14} parent=0 // pred_region
    _
  $region21: #{inner_unet_forward.14} parent=0 // pred_fallthru
    _
  // Predicated region
  $region22: #{inner_unet_forward.14} parent=0 // pred_check
    _
  $region23: #{inner_unet_forward.14} parent=0 // pred_check_branch
    %22 = sbr.rel (0) target = $region25
  $region24: #{inner_unet_forward.14} parent=0 // pred_region
    _
  $region25: #{inner_unet_forward.14} parent=0 // pred_fallthru
    _
  %v23 = vld [vmem:[%s0] sm:$0xff]
  %v24 = vld [vmem:[%s0 + $0x8] sm:$0xff]
  %v25 = vld [vmem:[%s0 + $0x10] sm:$0xff]
  %v26 = vld [vmem:[%s0 + $0x18] sm:$0xff]
  %v27 = vld [vmem:[%s0 + $0x20] sm:$0xff]
  %v28 = vld [vmem:[%s0 + $0x28] sm:$0xff]
  %v29 = vld [vmem:[%s0 + $0x30] sm:$0xff]
  %v30 = vld [vmem:[%s0 + $0x38] sm:$0xff]
  %v31 = vld [vmem:[%s0 + $0x40] sm:$0xff]
  %v32 = vld [vmem:[%s0 + $0x48] sm:$0xff]
  %v33 = vld [vmem:[%s0 + $0x50] sm:$0xff]
  %v34 = vld [vmem:[%s0 + $0x58] sm:$0xff]
  %v35 = vld [vmem:[%s0 + $0x60] sm:$0xff]
  %v36 = vld [vmem:[%s0 + $0x68] sm:$0xff]
  %v37 = vld [vmem:[%s0 + $0x70] sm:$0xff]
  %v38 = vld [vmem:[%s0 + $0x78] sm:$0xff]
  %v39 = vld [vmem:[%s0 + $0x80] sm:$0xff]
  %v40 = vld [vmem:[%s0 + $0x88] sm:$0xff]
  %v41 = vld [vmem:[%s0 + $0x90] sm:$0xff]
  %v42 = vld [vmem:[%s0 + $0x98] sm:$0xff]
  %v43 = vld [vmem:[%s1] sm:$0xff]
  %v44 = vld [vmem:[%s1 + $0x8] sm:$0xff]
  %v45 = vld [vmem:[%s1 + $0x10] sm:$0xff]
  %v46 = vld [vmem:[%s1 + $0x18] sm:$0xff]
  %v47 = vld [vmem:[%s1 + $0x20] sm:$0xff]
  %v48 = vld [vmem:[%s1 + $0x28] sm:$0xff]
  %v49 = vld [vmem:[%s1 + $0x30] sm:$0xff]
  %v50 = vld [vmem:[%s1 + $0x38] sm:$0xff]
  %v51 = vld [vmem:[%s1 + $0x40] sm:$0xff]
  %v52 = vld [vmem:[%s1 + $0x48] sm:$0xff]
  %v53 = vld [vmem:[%s1 + $0x50] sm:$0xff]
  %v54 = vld [vmem:[%s1 + $0x58] sm:$0xff]
  %v55 = vld [vmem:[%s1 + $0x60] sm:$0xff]
  %v56 = vld [vmem:[%s1 + $0x68] sm:$0xff]
  %v57 = vld [vmem:[%s1 + $0x70] sm:$0xff]
  %v58 = vld [vmem:[%s1 + $0x78] sm:$0xff]
  %v59 = vld [vmem:[%s1 + $0x80] sm:$0xff]
  %v60 = vld [vmem:[%s1 + $0x88] sm:$0xff]
  %v61 = vld [vmem:[%s1 + $0x90] sm:$0xff]
  %v62 = vld [vmem:[%s1 + $0x98] sm:$0xff]
  %v63 = vld [vmem:[%s1 + $0xa0] sm:$0xff]
  %v64 = vld [vmem:[%s1 + $0xa8] sm:$0xff]
  %v65 = vld [vmem:[%s1 + $0xb0] sm:$0xff]
  %v66 = vld [vmem:[%s1 + $0xb8] sm:$0xff]
  %v67 = vld [vmem:[%s1 + $0xc0] sm:$0xff]
  %v68 = vld [vmem:[%s1 + $0xc8] sm:$0xff]
  %v69 = vld [vmem:[%s1 + $0xd0] sm:$0xff]
  %v70 = vld [vmem:[%s1 + $0xd8] sm:$0xff]
  %v71 = vld [vmem:[%s1 + $0xe0] sm:$0xff]
  %v72 = vld [vmem:[%s1 + $0xe8] sm:$0xff]
  %v73 = vld [vmem:[%s1 + $0xf0] sm:$0xff]
  %v74 = vld [vmem:[%s1 + $0xf8] sm:$0xff]
  %v75 = vld [vmem:[%s1 + $0x100] sm:$0xff]
  %v76 = vld [vmem:[%s1 + $0x108] sm:$0xff]
  %v77 = vld [vmem:[%s1 + $0x110] sm:$0xff]
  %v78 = vld [vmem:[%s1 + $0x118] sm:$0xff]
  %v79 = vld [vmem:[%s1 + $0x120] sm:$0xff]
  %v80 = vld [vmem:[%s1 + $0x128] sm:$0xff]
  %v81 = vld [vmem:[%s1 + $0x130] sm:$0xff]
  %v82 = vld [vmem:[%s1 + $0x138] sm:$0xff]
  %v83 = vld [vmem:[%s1 + $0x140] sm:$0xff]
  %v84 = vld [vmem:[%s1 + $0x148] sm:$0xff]
  %v85 = vld [vmem:[%s1 + $0x150] sm:$0xff]
  %v86 = vld [vmem:[%s1 + $0x158] sm:$0xff]
  %v87 = vld [vmem:[%s1 + $0x160] sm:$0xff]
  %v88 = vld [vmem:[%s1 + $0x168] sm:$0xff]
  %v89 = vld [vmem:[%s1 + $0x170] sm:$0xff]
  %v90 = vld [vmem:[%s1 + $0x178] sm:$0xff]
  %v91 = vld [vmem:[%s1 + $0x180] sm:$0xff]
  %v92 = vld [vmem:[%s1 + $0x188] sm:$0xff]
  %v93 = vld [vmem:[%s1 + $0x190] sm:$0xff]
  %v94 = vld [vmem:[%s1 + $0x198] sm:$0xff]
  %v95 = vld [vmem:[%s1 + $0x1a0] sm:$0xff]
  %v96 = vld [vmem:[%s1 + $0x1a8] sm:$0xff]
  %v97 = vld [vmem:[%s1 + $0x1b0] sm:$0xff]
  %v98 = vld [vmem:[%s1 + $0x1b8] sm:$0xff]
  %v99 = vld [vmem:[%s1 + $0x1c0] sm:$0xff]
  %v100 = vld [vmem:[%s1 + $0x1c8] sm:$0xff]
  %v101 = vld [vmem:[%s1 + $0x1d0] sm:$0xff]
  %v102 = vld [vmem:[%s1 + $0x1d8] sm:$0xff]
  %v103 = vld [vmem:[%s1 + $0x1e0] sm:$0xff]
  %v104 = vld [vmem:[%s1 + $0x1e8] sm:$0xff]
  %v105 = vld [vmem:[%s1 + $0x1f0] sm:$0xff]
  %v106 = vld [vmem:[%s1 + $0x1f8] sm:$0xff]
  %v107 = vld [vmem:[%s1 + $0x200] sm:$0xff]
  %v108 = vld [vmem:[%s1 + $0x208] sm:$0xff]
  %v109 = vld [vmem:[%s1 + $0x210] sm:$0xff]
  %v110 = vld [vmem:[%s1 + $0x218] sm:$0xff]
  %v111 = vld [vmem:[%s1 + $0x220] sm:$0xff]
  %v112 = vld [vmem:[%s1 + $0x228] sm:$0xff]
  %v113 = vld [vmem:[%s1 + $0x230] sm:$0xff]
  %v114 = vld [vmem:[%s1 + $0x238] sm:$0xff]
  %vm115 = vcmask 523264
  %v117 = vsel %vm115, %v27, 0
  %v120 = vsel %vm115, %v32, 0
  %v123 = vsel %vm115, %v37, 0
  %v126 = vsel %vm115, %v42, 0
  %128 = vmatprep.subr.mxu0 0.0
  %129 = vmatpush1.msra.mxu0 %v43
  %130 = vmatprep.subr.mxu0 0.0
  %131 = vmatpush1.msra.mxu0 %v44
  %132 = vmatprep.subr.mxu0 0.0
  %133 = vmatpush1.msra.mxu0 %v45
  %134 = vmatprep.subr.mxu0 0.0
  %135 = vmatpush1.msra.mxu0 %v46
  %136 = vmatprep.subr.mxu0 0.0
  %137 = vmatpush1.msra.mxu0 %v47
  %138 = vmatprep.subr.mxu0 0.0
  %139 = vmatpush1.msra.mxu0 %v48
  %140 = vmatprep.subr.mxu0 0.0
  %141 = vmatpush1.msra.mxu0 %v49
  %142 = vmatprep.subr.mxu0 0.0
  %143 = vmatpush1.msra.mxu0 %v50
  %144 = vmatprep.subr.mxu0 0.0
  %145 = vmatpush1.msra.mxu0 %v51
  %146 = vmatprep.subr.mxu0 0.0
  %147 = vmatpush1.msra.mxu0 %v52
  %148 = vmatprep.subr.mxu0 0.0
  %149 = vmatpush1.msra.mxu0 %v53
  %150 = vmatprep.subr.mxu0 0.0
  %151 = vmatpush1.msra.mxu0 %v54
  %152 = vmatprep.subr.mxu0 0.0
  %153 = vmatpush1.msra.mxu0 %v55
  %154 = vmatprep.subr.mxu0 0.0
  %155 = vmatpush1.msra.mxu0 %v56
  %156 = vmatprep.subr.mxu0 0.0
  %157 = vmatpush1.msra.mxu0 %v57
  %158 = vmatprep.subr.mxu0 0.0
  %159 = vmatpush1.msra.mxu0 %v58
  %160 = vmatprep.subr.mxu0 0.0
  %161 = vmatpush1.msra.mxu0 %v59
  %162 = vmatprep.subr.mxu0 0.0
  %163 = vmatpush1.msra.mxu0 %v60
  %164 = vmatprep.subr.mxu0 0.0
  %165 = vmatpush1.msra.mxu0 %v61
  %166 = vmatprep.subr.mxu0 0.0
  %167 = vmatpush1.msra.mxu0 %v62
  %168 = vmatprep.subr.mxu0 0.0
  %169 = vmatpush1.msra.mxu0 %v63
  %170 = vmatprep.subr.mxu0 0.0
  %171 = vmatpush1.msra.mxu0 %v64
  %172 = vmatprep.subr.mxu0 0.0
  %173 = vmatpush1.msra.mxu0 %v65
  %174 = vmatprep.subr.mxu0 0.0
  %175 = vmatpush1.msra.mxu0 %v66
  %176 = vmatprep.subr.mxu0 0.0
  %177 = vmatpush1.msra.mxu0 %v67
  %178 = vmatprep.subr.mxu0 0.0
  %179 = vmatpush1.msra.mxu0 %v68
  %180 = vmatprep.subr.mxu0 0.0
  %181 = vmatpush1.msra.mxu0 %v69
  %182 = vmatprep.subr.mxu0 0.0
  %183 = vmatpush1.msra.mxu0 %v70
  %184 = vmatprep.subr.mxu0 0.0
  %185 = vmatpush1.msra.mxu0 %v71
  %186 = vmatprep.subr.mxu0 0.0
  %187 = vmatpush1.msra.mxu0 %v72
  %188 = vmatprep.subr.mxu0 0.0
  %189 = vmatpush1.msra.mxu0 %v73
  %190 = vmatprep.subr.mxu0 0.0
  %191 = vmatpush1.msra.mxu0 %v74
  %192 = vmatprep.mubr.f32.mxu0 %v24
  %193 = vmatmul.mubr.f32.gmra.mrb[0].mxu0 %v23
  %v194 = vpop.f32.mrb[0].mxu0
  %v195 = vadd.f32 0.0, %v194
  %v196 = vpop.f32.mrb[0].mxu0
  %197 = vmatprep.mubr.f32.mxu0 %v29
  %198 = vmatmul.mubr.f32.gmra.mrb[0].mxu0 %v28
  %v199 = vpop.f32.mrb[0].mxu0
  %v200 = vadd.f32 0.0, %v199
  %v201 = vpop.f32.mrb[0].mxu0
  %202 = vmatprep.mubr.f32.mxu0 %v34
  %203 = vmatmul.mubr.f32.gmra.mrb[0].mxu0 %v33
  %v204 = vpop.f32.mrb[0].mxu0
  %v205 = vadd.f32 0.0, %v204
  %v206 = vpop.f32.mrb[0].mxu0
  %207 = vmatprep.mubr.f32.mxu0 %v39
  %208 = vmatmul.mubr.f32.gmra.mrb[0].mxu0 %v38
  %v209 = vpop.f32.mrb[0].mxu0
  %v210 = vadd.f32 0.0, %v209
  %v211 = vpop.f32.mrb[0].mxu0
  %212 = vdwg.mxu0
  %213 = vmatprep.subr.mxu0 0.0
  %214 = vmatpush1.msra.mxu0 %v75
  %215 = vmatprep.subr.mxu0 0.0
  %216 = vmatpush1.msra.mxu0 %v76
  %217 = vmatprep.subr.mxu0 0.0
  %218 = vmatpush1.msra.mxu0 %v77
  %219 = vmatprep.subr.mxu0 0.0
  %220 = vmatpush1.msra.mxu0 %v78
  %221 = vmatprep.subr.mxu0 0.0
  %222 = vmatpush1.msra.mxu0 %v79
  %223 = vmatprep.subr.mxu0 0.0
  %224 = vmatpush1.msra.mxu0 %v80
  %225 = vmatprep.subr.mxu0 0.0
  %226 = vmatpush1.msra.mxu0 %v81
  %227 = vmatprep.subr.mxu0 0.0
  %228 = vmatpush1.msra.mxu0 %v82
  %229 = vmatprep.subr.mxu0 0.0
  %230 = vmatpush1.msra.mxu0 %v83
  %231 = vmatprep.subr.mxu0 0.0
  %232 = vmatpush1.msra.mxu0 %v84
  %233 = vmatprep.subr.mxu0 0.0
  %234 = vmatpush1.msra.mxu0 %v85
  %235 = vmatprep.subr.mxu0 0.0
  %236 = vmatpush1.msra.mxu0 %v86
  %237 = vmatprep.subr.mxu0 0.0
  %238 = vmatpush1.msra.mxu0 %v87
  %239 = vmatprep.subr.mxu0 0.0
  %240 = vmatpush1.msra.mxu0 %v88
  %241 = vmatprep.subr.mxu0 0.0
  %242 = vmatpush1.msra.mxu0 %v89
  %243 = vmatprep.subr.mxu0 0.0
  %244 = vmatpush1.msra.mxu0 %v90
  %245 = vmatprep.subr.mxu0 0.0
  %246 = vmatpush1.msra.mxu0 %v91
  %247 = vmatprep.subr.mxu0 0.0
  %248 = vmatpush1.msra.mxu0 %v92
  %249 = vmatprep.subr.mxu0 0.0
  %250 = vmatpush1.msra.mxu0 %v93
  %251 = vmatprep.subr.mxu0 0.0
  %252 = vmatpush1.msra.mxu0 %v94
  %253 = vmatprep.subr.mxu0 0.0
  %254 = vmatpush1.msra.mxu0 %v95
  %255 = vmatprep.subr.mxu0 0.0
  %256 = vmatpush1.msra.mxu0 %v96
  %257 = vmatprep.subr.mxu0 0.0
  %258 = vmatpush1.msra.mxu0 %v97
  %259 = vmatprep.subr.mxu0 0.0
  %260 = vmatpush1.msra.mxu0 %v98
  %261 = vmatprep.subr.mxu0 0.0
  %262 = vmatpush1.msra.mxu0 %v99
  %263 = vmatprep.subr.mxu0 0.0
  %264 = vmatpush1.msra.mxu0 %v100
  %265 = vmatprep.subr.mxu0 0.0
  %266 = vmatpush1.msra.mxu0 %v101
  %267 = vmatprep.subr.mxu0 0.0
  %268 = vmatpush1.msra.mxu0 %v102
  %269 = vmatprep.subr.mxu0 0.0
  %270 = vmatpush1.msra.mxu0 %v103
  %271 = vmatprep.subr.mxu0 0.0
  %272 = vmatpush1.msra.mxu0 %v104
  %273 = vmatprep.subr.mxu0 0.0
  %274 = vmatpush1.msra.mxu0 %v105
  %275 = vmatprep.subr.mxu0 0.0
  %276 = vmatpush1.msra.mxu0 %v106
  %277 = vmatprep.mubr.f32.mxu0 %v26
  %278 = vmatmul.mubr.f32.gmra.mrb[0].mxu0 %v25
  %v279 = vpop.f32.mrb[0].mxu0
  %v280 = vadd.f32 %v195, %v279
  %v281 = vpop.f32.mrb[0].mxu0
  %282 = vmatprep.mubr.f32.mxu0 %v31
  %283 = vmatmul.mubr.f32.gmra.mrb[0].mxu0 %v30
  %v284 = vpop.f32.mrb[0].mxu0
  %v285 = vadd.f32 %v200, %v284
  %v286 = vpop.f32.mrb[0].mxu0
  %287 = vmatprep.mubr.f32.mxu0 %v36
  %288 = vmatmul.mubr.f32.gmra.mrb[0].mxu0 %v35
  %v289 = vpop.f32.mrb[0].mxu0
  %v290 = vadd.f32 %v205, %v289
  %v291 = vpop.f32.mrb[0].mxu0
  %292 = vmatprep.mubr.f32.mxu0 %v41
  %293 = vmatmul.mubr.f32.gmra.mrb[0].mxu0 %v40
  %v294 = vpop.f32.mrb[0].mxu0
  %v295 = vadd.f32 %v210, %v294
  %v296 = vpop.f32.mrb[0].mxu0
  %297 = vdwg.mxu0
  %298 = vmatprep.subr.mxu0 0.0
  %299 = vmatpush1.msra.mxu0 %v107
  %300 = vmatprep.subr.mxu0 0.0
  %301 = vmatpush1.msra.mxu0 %v108
  %302 = vmatprep.subr.mxu0 0.0
  %303 = vmatpush1.msra.mxu0 %v109
  %304 = vmatprep.subr.mxu0 0.0
  %305 = vmatpush1.msra.mxu0 %v110
  %306 = vmatprep.subr.mxu0 0.0
  %307 = vmatpush1.msra.mxu0 %v111
  %308 = vmatprep.subr.mxu0 0.0
  %309 = vmatpush1.msra.mxu0 %v112
  %310 = vmatprep.subr.mxu0 0.0
  %311 = vmatpush1.msra.mxu0 %v113
  %312 = vmatprep.subr.mxu0 0.0
  %313 = vmatpush1.msra.mxu0 %v114
  %314 = vmatprep.subr.mxu0 0.0
  %315 = vmatpush1.msra.mxu0 0.0
  %316 = vmatprep.subr.mxu0 0.0
  %317 = vmatpush1.msra.mxu0 0.0
  %318 = vmatprep.subr.mxu0 0.0
  %319 = vmatpush1.msra.mxu0 0.0
  %320 = vmatprep.subr.mxu0 0.0
  %321 = vmatpush1.msra.mxu0 0.0
  %322 = vmatprep.subr.mxu0 0.0
  %323 = vmatpush1.msra.mxu0 0.0
  %324 = vmatprep.subr.mxu0 0.0
  %325 = vmatpush1.msra.mxu0 0.0
  %326 = vmatprep.subr.mxu0 0.0
  %327 = vmatpush1.msra.mxu0 0.0
  %328 = vmatprep.subr.mxu0 0.0
  %329 = vmatpush1.msra.mxu0 0.0
  %330 = vmatprep.subr.mxu0 0.0
  %331 = vmatpush1.msra.mxu0 0.0
  %332 = vmatprep.subr.mxu0 0.0
  %333 = vmatpush1.msra.mxu0 0.0
  %334 = vmatprep.subr.mxu0 0.0
  %335 = vmatpush1.msra.mxu0 0.0
  %336 = vmatprep.subr.mxu0 0.0
  %337 = vmatpush1.msra.mxu0 0.0
  %338 = vmatprep.subr.mxu0 0.0
  %339 = vmatpush1.msra.mxu0 0.0
  %340 = vmatprep.subr.mxu0 0.0
  %341 = vmatpush1.msra.mxu0 0.0
  %342 = vmatprep.subr.mxu0 0.0
  %343 = vmatpush1.msra.mxu0 0.0
  %344 = vmatprep.subr.mxu0 0.0
  %345 = vmatpush1.msra.mxu0 0.0
  %346 = vmatprep.subr.mxu0 0.0
  %347 = vmatpush1.msra.mxu0 0.0
  %348 = vmatprep.subr.mxu0 0.0
  %349 = vmatpush1.msra.mxu0 0.0
  %350 = vmatprep.subr.mxu0 0.0
  %351 = vmatpush1.msra.mxu0 0.0
  %352 = vmatprep.subr.mxu0 0.0
  %353 = vmatpush1.msra.mxu0 0.0
  %354 = vmatprep.subr.mxu0 0.0
  %355 = vmatpush1.msra.mxu0 0.0
  %356 = vmatprep.subr.mxu0 0.0
  %357 = vmatpush1.msra.mxu0 0.0
  %358 = vmatprep.subr.mxu0 0.0
  %359 = vmatpush1.msra.mxu0 0.0
  %360 = vmatprep.subr.mxu0 0.0
  %361 = vmatpush1.msra.mxu0 0.0
  %362 = vmatprep.mubr.f32.mxu0 0.0
  %363 = vmatmul.mubr.f32.gmra.mrb[0].mxu0 %v117
  %v364 = vpop.f32.mrb[0].mxu0
  %v365 = vadd.f32 %v280, %v364
  %v366 = vpop.f32.mrb[0].mxu0
  %367 = vmatprep.mubr.f32.mxu0 0.0
  %368 = vmatmul.mubr.f32.gmra.mrb[0].mxu0 %v120
  %v369 = vpop.f32.mrb[0].mxu0
  %v370 = vadd.f32 %v285, %v369
  %v371 = vpop.f32.mrb[0].mxu0
  %372 = vmatprep.mubr.f32.mxu0 0.0
  %373 = vmatmul.mubr.f32.gmra.mrb[0].mxu0 %v123
  %v374 = vpop.f32.mrb[0].mxu0
  %v375 = vadd.f32 %v290, %v374
  %v376 = vpop.f32.mrb[0].mxu0
  %377 = vmatprep.mubr.f32.mxu0 0.0
  %378 = vmatmul.mubr.f32.gmra.mrb[0].mxu0 %v126
  %v379 = vpop.f32.mrb[0].mxu0
  %v380 = vadd.f32 %v295, %v379
  %v381 = vpop.f32.mrb[0].mxu0
  %382 = vdwg.mxu0
  %p383 = scmp.eq.s32.totalorder 0, 0
  // Predicated region
  $region26: #{inner_unet_forward.14} parent=0 // pred_check
    %p384 = pneg %p383
  $region27: #{inner_unet_forward.14} parent=0 // pred_check_branch
    %386 = sbr.rel (%p384) target = $region29
  $region28: #{inner_unet_forward.14} parent=0 // pred_region
    %vm387 = vcmask 516096
    %388 = vst.msk [vmem:[#allocation3] sm:$0x1] %vm387, 0.0
    %389 = vst.msk [vmem:[#allocation4] sm:$0x1] %vm387, 0.0
  $region29: #{inner_unet_forward.14} parent=0 // pred_fallthru
    _
  %v390 = vld [vmem:[#allocation3] sm:$0x1]
  %v391 = vsel %vm115, %v365, 0.0
  %v392 = vsel %vm115, %v370, 0.0
  %v393 = vadd.f32 %v391, %v392
  %v394 = vsel %vm115, %v375, 0.0
  %v395 = vadd.f32 %v393, %v394
  %v396 = vsel %vm115, %v380, 0.0
  %v397 = vadd.f32 %v395, %v396
  %v398 = vrot.slane %v397, 4
  %v399 = vadd.f32 %v397, %v398
  %v400 = vrot.slane %v399, 2
  %v401 = vadd.f32 %v399, %v400
  %v402 = vrot.slane %v401, 1
  %v403 = vadd.f32 %v401, %v402
  %v404 = vadd.f32 %v390, %v403
  %vm405 = vcmask 516096
  %406 = vst.msk [vmem:[#allocation3] sm:$0x1] %vm405, %v404
  %v407 = vld [vmem:[#allocation4] sm:$0x1]
  %v408 = vmul.f32 %v365, %v365
  %v409 = vmul.f32 %v370, %v370
  %v410 = vmul.f32 %v375, %v375
  %v411 = vmul.f32 %v380, %v380
  %v412 = vsel %vm115, %v408, 0.0
  %v413 = vsel %vm115, %v409, 0.0
  %v414 = vadd.f32 %v412, %v413
  %v415 = vsel %vm115, %v410, 0.0
  %v416 = vadd.f32 %v414, %v415
  %v417 = vsel %vm115, %v411, 0.0
  %v418 = vadd.f32 %v416, %v417
  %v419 = vrot.slane %v418, 4
  %v420 = vadd.f32 %v418, %v419
  %v421 = vrot.slane %v420, 2
  %v422 = vadd.f32 %v420, %v421
  %v423 = vrot.slane %v422, 1
  %v424 = vadd.f32 %v422, %v423
  %v425 = vadd.f32 %v407, %v424
  %426 = vst.msk [vmem:[#allocation4] sm:$0x1] %vm405, %v425
  %427 = vst.msk [vmem:[#allocation2] sm:$0xff] %vm115, %v365
  %428 = vst.msk [vmem:[#allocation2 + $0x8] sm:$0xff] %vm115, %v370
  %429 = vst.msk [vmem:[#allocation2 + $0x10] sm:$0xff] %vm115, %v375
  %430 = vst.msk [vmem:[#allocation2 + $0x18] sm:$0xff] %vm115, %v380
  %v431 = vld [vmem:[#allocation3] sm:$0x1]
  %v432 = vld [vmem:[%s4] sm:$0xff]
  %v433 = vld [vmem:[%s4 + $0x8] sm:$0xff]
  %v434 = vld [vmem:[%s4 + $0x10] sm:$0xff]
  %v435 = vld [vmem:[%s4 + $0x18] sm:$0xff]
  %v436 = vld [vmem:[%s4 + $0x20] sm:$0xff]
  %v437 = vld [vmem:[%s4 + $0x28] sm:$0xff]
  %v438 = vld [vmem:[%s4 + $0x30] sm:$0xff]
  %v439 = vld [vmem:[%s4 + $0x38] sm:$0xff]
  %v441 = vsel %vm115, %v431, 0
  %443 = vmatprep.subr.mxu0 0.0
  %444 = vmatpush1.msra.mxu0 %v432
  %445 = vmatprep.subr.mxu0 0.0
  %446 = vmatpush1.msra.mxu0 %v433
  %447 = vmatprep.subr.mxu0 0.0
  %448 = vmatpush1.msra.mxu0 %v434
  %449 = vmatprep.subr.mxu0 0.0
  %450 = vmatpush1.msra.mxu0 %v435
  %451 = vmatprep.subr.mxu0 0.0
  %452 = vmatpush1.msra.mxu0 %v436
  %453 = vmatprep.subr.mxu0 0.0
  %454 = vmatpush1.msra.mxu0 %v437
  %455 = vmatprep.subr.mxu0 0.0
  %456 = vmatpush1.msra.mxu0 %v438
  %457 = vmatprep.subr.mxu0 0.0
  %458 = vmatpush1.msra.mxu0 %v439
  %459 = vmatprep.subr.mxu0 0.0
  %460 = vmatpush1.msra.mxu0 0.0
  %461 = vmatprep.subr.mxu0 0.0
  %462 = vmatpush1.msra.mxu0 0.0
  %463 = vmatprep.subr.mxu0 0.0
  %464 = vmatpush1.msra.mxu0 0.0
  %465 = vmatprep.subr.mxu0 0.0
  %466 = vmatpush1.msra.mxu0 0.0
  %467 = vmatprep.subr.mxu0 0.0
  %468 = vmatpush1.msra.mxu0 0.0
  %469 = vmatprep.subr.mxu0 0.0
  %470 = vmatpush1.msra.mxu0 0.0
  %471 = vmatprep.subr.mxu0 0.0
  %472 = vmatpush1.msra.mxu0 0.0
  %473 = vmatprep.subr.mxu0 0.0
  %474 = vmatpush1.msra.mxu0 0.0
  %475 = vmatprep.subr.mxu0 0.0
  %476 = vmatpush1.msra.mxu0 0.0
  %477 = vmatprep.subr.mxu0 0.0
  %478 = vmatpush1.msra.mxu0 0.0
  %479 = vmatprep.subr.mxu0 0.0
  %480 = vmatpush1.msra.mxu0 0.0
  %481 = vmatprep.subr.mxu0 0.0
  %482 = vmatpush1.msra.mxu0 0.0
  %483 = vmatprep.subr.mxu0 0.0
  %484 = vmatpush1.msra.mxu0 0.0
  %485 = vmatprep.subr.mxu0 0.0
  %486 = vmatpush1.msra.mxu0 0.0
  %487 = vmatprep.subr.mxu0 0.0
  %488 = vmatpush1.msra.mxu0 0.0
  %489 = vmatprep.subr.mxu0 0.0
  %490 = vmatpush1.msra.mxu0 0.0
  %491 = vmatprep.subr.mxu0 0.0
  %492 = vmatpush1.msra.mxu0 0.0
  %493 = vmatprep.subr.mxu0 0.0
  %494 = vmatpush1.msra.mxu0 0.0
  %495 = vmatprep.subr.mxu0 0.0
  %496 = vmatpush1.msra.mxu0 0.0
  %497 = vmatprep.subr.mxu0 0.0
  %498 = vmatpush1.msra.mxu0 0.0
  %499 = vmatprep.subr.mxu0 0.0
  %500 = vmatpush1.msra.mxu0 0.0
  %501 = vmatprep.subr.mxu0 0.0
  %502 = vmatpush1.msra.mxu0 0.0
  %503 = vmatprep.subr.mxu0 0.0
  %504 = vmatpush1.msra.mxu0 0.0
  %505 = vmatprep.subr.mxu0 0.0
  %506 = vmatpush1.msra.mxu0 0.0
  %507 = vmatprep.mubr.f32.mxu0 0.0
  %508 = vmatmul.mubr.f32.gmra.mrb[0].mxu0 %v441
  %v509 = vpop.f32.mrb[0].mxu0
  %v510 = vadd.f32 0.0, %v509
  %v511 = vpop.f32.mrb[0].mxu0
  %512 = vdwg.mxu0
  %v513 = vld [vmem:[#allocation4] sm:$0x1]
  %v515 = vsel %vm115, %v513, 0
  %517 = vmatprep.subr.mxu0 0.0
  %518 = vmatpush1.msra.mxu0 %v432
  %519 = vmatprep.subr.mxu0 0.0
  %520 = vmatpush1.msra.mxu0 %v433
  %521 = vmatprep.subr.mxu0 0.0
  %522 = vmatpush1.msra.mxu0 %v434
  %523 = vmatprep.subr.mxu0 0.0
  %524 = vmatpush1.msra.mxu0 %v435
  %525 = vmatprep.subr.mxu0 0.0
  %526 = vmatpush1.msra.mxu0 %v436
  %527 = vmatprep.subr.mxu0 0.0
  %528 = vmatpush1.msra.mxu0 %v437
  %529 = vmatprep.subr.mxu0 0.0
  %530 = vmatpush1.msra.mxu0 %v438
  %531 = vmatprep.subr.mxu0 0.0
  %532 = vmatpush1.msra.mxu0 %v439
  %533 = vmatprep.subr.mxu0 0.0
  %534 = vmatpush1.msra.mxu0 0.0
  %535 = vmatprep.subr.mxu0 0.0
  %536 = vmatpush1.msra.mxu0 0.0
  %537 = vmatprep.subr.mxu0 0.0
  %538 = vmatpush1.msra.mxu0 0.0
  %539 = vmatprep.subr.mxu0 0.0
  %540 = vmatpush1.msra.mxu0 0.0
  %541 = vmatprep.subr.mxu0 0.0
  %542 = vmatpush1.msra.mxu0 0.0
  %543 = vmatprep.subr.mxu0 0.0
  %544 = vmatpush1.msra.mxu0 0.0
  %545 = vmatprep.subr.mxu0 0.0
  %546 = vmatpush1.msra.mxu0 0.0
  %547 = vmatprep.subr.mxu0 0.0
  %548 = vmatpush1.msra.mxu0 0.0
  %549 = vmatprep.subr.mxu0 0.0
  %550 = vmatpush1.msra.mxu0 0.0
  %551 = vmatprep.subr.mxu0 0.0
  %552 = vmatpush1.msra.mxu0 0.0
  %553 = vmatprep.subr.mxu0 0.0
  %554 = vmatpush1.msra.mxu0 0.0
  %555 = vmatprep.subr.mxu0 0.0
  %556 = vmatpush1.msra.mxu0 0.0
  %557 = vmatprep.subr.mxu0 0.0
  %558 = vmatpush1.msra.mxu0 0.0
  %559 = vmatprep.subr.mxu0 0.0
  %560 = vmatpush1.msra.mxu0 0.0
  %561 = vmatprep.subr.mxu0 0.0
  %562 = vmatpush1.msra.mxu0 0.0
  %563 = vmatprep.subr.mxu0 0.0
  %564 = vmatpush1.msra.mxu0 0.0
  %565 = vmatprep.subr.mxu0 0.0
  %566 = vmatpush1.msra.mxu0 0.0
  %567 = vmatprep.subr.mxu0 0.0
  %568 = vmatpush1.msra.mxu0 0.0
  %569 = vmatprep.subr.mxu0 0.0
  %570 = vmatpush1.msra.mxu0 0.0
  %571 = vmatprep.subr.mxu0 0.0
  %572 = vmatpush1.msra.mxu0 0.0
  %573 = vmatprep.subr.mxu0 0.0
  %574 = vmatpush1.msra.mxu0 0.0
  %575 = vmatprep.subr.mxu0 0.0
  %576 = vmatpush1.msra.mxu0 0.0
  %577 = vmatprep.subr.mxu0 0.0
  %578 = vmatpush1.msra.mxu0 0.0
  %579 = vmatprep.subr.mxu0 0.0
  %580 = vmatpush1.msra.mxu0 0.0
  %581 = vmatprep.mubr.f32.mxu0 0.0
  %582 = vmatmul.mubr.f32.gmra.mrb[0].mxu0 %v515
  %v583 = vpop.f32.mrb[0].mxu0
  %v584 = vadd.f32 0.0, %v583
  %v585 = vpop.f32.mrb[0].mxu0
  %586 = vdwg.mxu0
  %v587 = vmul.f32 %v510, 0.0078125
  %v588 = vmul.f32 %v584, 0.0078125
  %v589 = vmul.f32 %v587, %v587
  %v590 = vsub.f32 %v588, %v589
  %v591 = vmax.f32 %v590, 0.0
  %v592 = vld [vmem:[%s2] sm:$0x1]
  %v593 = vadd.f32 %v591, 1e-05
  %v594 = vrsqrt.pop %v593
  %v595 = vmul.f32 %v592, %v594
  %v596 = vld [vmem:[%s3] sm:$0x1]
  %v597 = vmul.f32 %v587, %v595
  %v598 = vsub.f32 %v596, %v597
  %v599 = vld [vmem:[%s5] sm:$0xff]
  %v600 = vld [vmem:[%s5 + $0x8] sm:$0xff]
  %vm601 = vcmask 130048
  %v603 = vsel %vm601, %v595, 0
  %605 = vmatprep.subr.mxu0 0.0
  %606 = vmatpush1.msra.mxu0 %v599
  %607 = vmatprep.subr.mxu0 0.0
  %608 = vmatpush1.msra.mxu0 %v600
  %609 = vmatprep.subr.mxu0 0.0
  %610 = vmatpush1.msra.mxu0 0.0
  %611 = vmatprep.subr.mxu0 0.0
  %612 = vmatpush1.msra.mxu0 0.0
  %613 = vmatprep.subr.mxu0 0.0
  %614 = vmatpush1.msra.mxu0 0.0
  %615 = vmatprep.subr.mxu0 0.0
  %616 = vmatpush1.msra.mxu0 0.0
  %617 = vmatprep.subr.mxu0 0.0
  %618 = vmatpush1.msra.mxu0 0.0
  %619 = vmatprep.subr.mxu0 0.0
  %620 = vmatpush1.msra.mxu0 0.0
  %621 = vmatprep.subr.mxu0 0.0
  %622 = vmatpush1.msra.mxu0 0.0
  %623 = vmatprep.subr.mxu0 0.0
  %624 = vmatpush1.msra.mxu0 0.0
  %625 = vmatprep.subr.mxu0 0.0
  %626 = vmatpush1.msra.mxu0 0.0
  %627 = vmatprep.subr.mxu0 0.0
  %628 = vmatpush1.msra.mxu0 0.0
  %629 = vmatprep.subr.mxu0 0.0
  %630 = vmatpush1.msra.mxu0 0.0
  %631 = vmatprep.subr.mxu0 0.0
  %632 = vmatpush1.msra.mxu0 0.0
  %633 = vmatprep.subr.mxu0 0.0
  %634 = vmatpush1.msra.mxu0 0.0
  %635 = vmatprep.subr.mxu0 0.0
  %636 = vmatpush1.msra.mxu0 0.0
  %637 = vmatprep.subr.mxu0 0.0
  %638 = vmatpush1.msra.mxu0 0.0
  %639 = vmatprep.subr.mxu0 0.0
  %640 = vmatpush1.msra.mxu0 0.0
  %641 = vmatprep.subr.mxu0 0.0
  %642 = vmatpush1.msra.mxu0 0.0
  %643 = vmatprep.subr.mxu0 0.0
  %644 = vmatpush1.msra.mxu0 0.0
  %645 = vmatprep.subr.mxu0 0.0
  %646 = vmatpush1.msra.mxu0 0.0
  %647 = vmatprep.subr.mxu0 0.0
  %648 = vmatpush1.msra.mxu0 0.0
  %649 = vmatprep.subr.mxu0 0.0
  %650 = vmatpush1.msra.mxu0 0.0
  %651 = vmatprep.subr.mxu0 0.0
  %652 = vmatpush1.msra.mxu0 0.0
  %653 = vmatprep.subr.mxu0 0.0
  %654 = vmatpush1.msra.mxu0 0.0
  %655 = vmatprep.subr.mxu0 0.0
  %656 = vmatpush1.msra.mxu0 0.0
  %657 = vmatprep.subr.mxu0 0.0
  %658 = vmatpush1.msra.mxu0 0.0
  %659 = vmatprep.subr.mxu0 0.0
  %660 = vmatpush1.msra.mxu0 0.0
  %661 = vmatprep.subr.mxu0 0.0
  %662 = vmatpush1.msra.mxu0 0.0
  %663 = vmatprep.subr.mxu0 0.0
  %664 = vmatpush1.msra.mxu0 0.0
  %665 = vmatprep.subr.mxu0 0.0
  %666 = vmatpush1.msra.mxu0 0.0
  %667 = vmatprep.subr.mxu0 0.0
  %668 = vmatpush1.msra.mxu0 0.0
  %669 = vmatprep.mubr.f32.mxu0 0.0
  %670 = vmatmul.mubr.f32.gmra.mrb[0].mxu0 %v603
  %v671 = vpop.f32.mrb[0].mxu0
  %v672 = vadd.f32 0.0, %v671
  %v673 = vpop.f32.mrb[0].mxu0
  %674 = vdwg.mxu0
  %v676 = vsel %vm601, %v598, 0
  %678 = vmatprep.subr.mxu0 0.0
  %679 = vmatpush1.msra.mxu0 %v599
  %680 = vmatprep.subr.mxu0 0.0
  %681 = vmatpush1.msra.mxu0 %v600
  %682 = vmatprep.subr.mxu0 0.0
  %683 = vmatpush1.msra.mxu0 0.0
  %684 = vmatprep.subr.mxu0 0.0
  %685 = vmatpush1.msra.mxu0 0.0
  %686 = vmatprep.subr.mxu0 0.0
  %687 = vmatpush1.msra.mxu0 0.0
  %688 = vmatprep.subr.mxu0 0.0
  %689 = vmatpush1.msra.mxu0 0.0
  %690 = vmatprep.subr.mxu0 0.0
  %691 = vmatpush1.msra.mxu0 0.0
  %692 = vmatprep.subr.mxu0 0.0
  %693 = vmatpush1.msra.mxu0 0.0
  %694 = vmatprep.subr.mxu0 0.0
  %695 = vmatpush1.msra.mxu0 0.0
  %696 = vmatprep.subr.mxu0 0.0
  %697 = vmatpush1.msra.mxu0 0.0
  %698 = vmatprep.subr.mxu0 0.0
  %699 = vmatpush1.msra.mxu0 0.0
  %700 = vmatprep.subr.mxu0 0.0
  %701 = vmatpush1.msra.mxu0 0.0
  %702 = vmatprep.subr.mxu0 0.0
  %703 = vmatpush1.msra.mxu0 0.0
  %704 = vmatprep.subr.mxu0 0.0
  %705 = vmatpush1.msra.mxu0 0.0
  %706 = vmatprep.subr.mxu0 0.0
  %707 = vmatpush1.msra.mxu0 0.0
  %708 = vmatprep.subr.mxu0 0.0
  %709 = vmatpush1.msra.mxu0 0.0
  %710 = vmatprep.subr.mxu0 0.0
  %711 = vmatpush1.msra.mxu0 0.0
  %712 = vmatprep.subr.mxu0 0.0
  %713 = vmatpush1.msra.mxu0 0.0
  %714 = vmatprep.subr.mxu0 0.0
  %715 = vmatpush1.msra.mxu0 0.0
  %716 = vmatprep.subr.mxu0 0.0
  %717 = vmatpush1.msra.mxu0 0.0
  %718 = vmatprep.subr.mxu0 0.0
  %719 = vmatpush1.msra.mxu0 0.0
  %720 = vmatprep.subr.mxu0 0.0
  %721 = vmatpush1.msra.mxu0 0.0
  %722 = vmatprep.subr.mxu0 0.0
  %723 = vmatpush1.msra.mxu0 0.0
  %724 = vmatprep.subr.mxu0 0.0
  %725 = vmatpush1.msra.mxu0 0.0
  %726 = vmatprep.subr.mxu0 0.0
  %727 = vmatpush1.msra.mxu0 0.0
  %728 = vmatprep.subr.mxu0 0.0
  %729 = vmatpush1.msra.mxu0 0.0
  %730 = vmatprep.subr.mxu0 0.0
  %731 = vmatpush1.msra.mxu0 0.0
  %732 = vmatprep.subr.mxu0 0.0
  %733 = vmatpush1.msra.mxu0 0.0
  %734 = vmatprep.subr.mxu0 0.0
  %735 = vmatpush1.msra.mxu0 0.0
  %736 = vmatprep.subr.mxu0 0.0
  %737 = vmatpush1.msra.mxu0 0.0
  %738 = vmatprep.subr.mxu0 0.0
  %739 = vmatpush1.msra.mxu0 0.0
  %740 = vmatprep.subr.mxu0 0.0
  %741 = vmatpush1.msra.mxu0 0.0
  %742 = vmatprep.mubr.f32.mxu0 0.0
  %743 = vmatmul.mubr.f32.gmra.mrb[0].mxu0 %v676
  %v744 = vpop.f32.mrb[0].mxu0
  %v745 = vadd.f32 0.0, %v744
  %v746 = vpop.f32.mrb[0].mxu0
  %747 = vdwg.mxu0
  // Predicated region
  $region30: #{inner_unet_forward.14} parent=0 // pred_check
    %p748 = pneg %p383
  $region31: #{inner_unet_forward.14} parent=0 // pred_check_branch
    %750 = sbr.rel (%p748) target = $region33
  $region32: #{inner_unet_forward.14} parent=0 // pred_region
    %v751 = vld [vmem:[#allocation2] sm:$0xff]
    %v752 = vld [vmem:[#allocation2 + $0x8] sm:$0xff]
    %v753 = vld [vmem:[#allocation2 + $0x10] sm:$0xff]
    %v754 = vld [vmem:[#allocation2 + $0x18] sm:$0xff]
    %v755 = vlaneseq
    %v756 = vshrl.u32 %v755, 7
    %v757 = vsub.s32 0, %v756
    %v758 = vrot.slane %v672, %v757
    %v759 = vmul.f32 %v751, %v758
    %v760 = vmul.f32 %v752, %v758
    %v761 = vmul.f32 %v753, %v758
    %v762 = vmul.f32 %v754, %v758
    %v763 = vlaneseq
    %v764 = vshrl.u32 %v763, 7
    %v765 = vsub.s32 0, %v764
    %v766 = vrot.slane %v745, %v765
    %v767 = vadd.f32 %v759, %v766
    %v768 = vadd.f32 %v760, %v766
    %v769 = vadd.f32 %v761, %v766
    %v770 = vadd.f32 %v762, %v766
    %vm771 = vcmp.ge.f32.partialorder %v767, 0.0
    %vm772 = vcmp.ge.f32.partialorder %v768, 0.0
    %vm773 = vcmp.ge.f32.partialorder %v769, 0.0
    %vm774 = vcmp.ge.f32.partialorder %v770, 0.0
    %v775 = vmul.f32 %v767, 0.0
    %v776 = vmul.f32 %v768, 0.0
    %v777 = vmul.f32 %v769, 0.0
    %v778 = vmul.f32 %v770, 0.0
    %v779 = vsel %vm771, %v767, %v775
    %v780 = vsel %vm772, %v768, %v776
    %v781 = vsel %vm773, %v769, %v777
    %v782 = vsel %vm774, %v770, %v778
    %783 = vst.msk [vmem:[%s6] sm:$0xff] %vm115, %v779
    %784 = vst.msk [vmem:[%s6 + $0x8] sm:$0xff] %vm115, %v780
    %785 = vst.msk [vmem:[%s6 + $0x10] sm:$0xff] %vm115, %v781
    %786 = vst.msk [vmem:[%s6 + $0x18] sm:$0xff] %vm115, %v782
  $region33: #{inner_unet_forward.14} parent=0 // pred_fallthru
    _
  // Predicated region
  $region34: #{inner_unet_forward.14} parent=0 // pred_check
    _
  $region35: #{inner_unet_forward.14} parent=0 // pred_check_branch
    %788 = sbr.rel (0) target = $region37
  $region36: #{inner_unet_forward.14} parent=0 // pred_region
    _
  $region37: #{inner_unet_forward.14} parent=0 // pred_fallthru
    _
  // Predicated region
  $region38: #{inner_unet_forward.14} parent=0 // pred_check
    _
  $region39: #{inner_unet_forward.14} parent=0 // pred_check_branch
    %790 = sbr.rel (0) target = $region41
  $region40: #{inner_unet_forward.14} parent=0 // pred_region
    _
  $region41: #{inner_unet_forward.14} parent=0 // pred_fallthru
    _

// kernel: tile.59
$region0: #{tile.59}
  %s0 = inlined_call_operand.vmem [shape: f32[8,4,8], index: 0, kind: input, shape index: {}]
  %s1 = inlined_call_operand.vmem [shape: f32[8,32], index: 1, kind: output, shape index: {}]
  $region1: #{tile.59} parent=0
    #allocation0 [shape = 'u8[32768]{0}', space=vmem, size = 0x8000, scoped, tag = 'scoped mem for input reshape']
    %s3 = sshllo.u32 0, 4
    %s4 = smul.addr 4, 7
    %s5 = scalar_lea.vmem %s0, %s4
    %v6 = vld [vmem:[%s5] sm:%s3]
    %s7 = scalar_lea.vmem [#allocation0], 56
    %8 = vst [vmem:[%s7] sm:%s3] %v6
    %s9 = smul.addr 4, 6
    %s10 = scalar_lea.vmem %s0, %s9
    %v11 = vld [vmem:[%s10] sm:%s3]
    %s12 = scalar_lea.vmem [#allocation0], 48
    %13 = vst [vmem:[%s12] sm:%s3] %v11
    %s14 = smul.addr 4, 5
    %s15 = scalar_lea.vmem %s0, %s14
    %v16 = vld [vmem:[%s15] sm:%s3]
    %s17 = scalar_lea.vmem [#allocation0], 40
    %18 = vst [vmem:[%s17] sm:%s3] %v16
    %s19 = smul.addr 4, 4
    %s20 = scalar_lea.vmem %s0, %s19
    %v21 = vld [vmem:[%s20] sm:%s3]
    %s22 = scalar_lea.vmem [#allocation0], 32
    %23 = vst [vmem:[%s22] sm:%s3] %v21
    %s24 = smul.addr 4, 3
    %s25 = scalar_lea.vmem %s0, %s24
    %v26 = vld [vmem:[%s25] sm:%s3]
    %s27 = scalar_lea.vmem [#allocation0], 24
    %28 = vst [vmem:[%s27] sm:%s3] %v26
    %s29 = smul.addr 4, 2
    %s30 = scalar_lea.vmem %s0, %s29
    %v31 = vld [vmem:[%s30] sm:%s3]
    %s32 = scalar_lea.vmem [#allocation0], 16
    %33 = vst [vmem:[%s32] sm:%s3] %v31
    %s34 = scalar_lea.vmem %s0, 4
    %v35 = vld [vmem:[%s34] sm:%s3]
    %s36 = scalar_lea.vmem [#allocation0], 8
    %37 = vst [vmem:[%s36] sm:%s3] %v35
    %v38 = vld [vmem:[%s0] sm:%s3]
    %39 = vst [vmem:[#allocation0] sm:%s3] %v38
    %v40 = vld [vmem:[#allocation0] ss:$8 sm:$0xf]
    %v41 = vld [vmem:[#allocation0] ss:$8 sm:$0xf0]
    %vm42 = vcmask 1047556
    %v43 = vsel %vm42, %v41, %v40
    %vm44 = vcmask 64512
    %45 = vst.msk [vmem:[%s1] sm:$0xff] %vm44, %v43
    %s46 = scalar_lea.vmem [#allocation0], 3
    %v47 = vld [vmem:[%s46] ss:$8 sm:$0xf]
    %s48 = scalar_lea.vmem [#allocation0], 3
    %v49 = vld [vmem:[%s48] ss:$8 sm:$0xf0]
    %vm50 = vcmask 1047556
    %v51 = vsel %vm50, %v49, %v47
    %52 = vrot.lane.b32.xlu0 %v51, 24
    %v53 = vpop.permute.xlu0 %52
    %vm54 = vcmask 261312
    %55 = vst.msk [vmem:[%s1] sm:$0xff] %vm54, %v53
    %s56 = scalar_lea.vmem [#allocation0], 2
    %v57 = vld [vmem:[%s56] ss:$8 sm:$0xf]
    %s58 = scalar_lea.vmem [#allocation0], 2
    %v59 = vld [vmem:[%s58] ss:$8 sm:$0xf0]
    %vm60 = vcmask 1047556
    %v61 = vsel %vm60, %v59, %v57
    %62 = vrot.lane.b32.xlu0 %v61, 16
    %v63 = vpop.permute.xlu0 %62
    %vm64 = vcmask 195712
    %65 = vst.msk [vmem:[%s1] sm:$0xff] %vm64, %v63
    %s66 = scalar_lea.vmem [#allocation0], 1
    %v67 = vld [vmem:[%s66] ss:$8 sm:$0xf]
    %s68 = scalar_lea.vmem [#allocation0], 1
    %v69 = vld [vmem:[%s68] ss:$8 sm:$0xf0]
    %vm70 = vcmask 1047556
    %v71 = vsel %vm70, %v69, %v67
    %72 = vrot.lane.b32.xlu0 %v71, 8
    %v73 = vpop.permute.xlu0 %72
    %vm74 = vcmask 130112
    %75 = vst.msk [vmem:[%s1] sm:$0xff] %vm74, %v73

// kernel: inner_unet_forward.15
$region0: #{inner_unet_forward.15}
  #allocation0 [shape = 'u32[]', space=smem, size = 0x4, offset = 0x4, fixed_abs, tag = 'smem constant byte address 0x4 - core index']
  #allocation1 [shape = 'u32[144,128]{1,0:T(1,128)}', space=vmem, size = 0x12000, scoped, tag = 'internal scratch']
  #allocation2 [shape = 'f32[128,32]{1,0:T(8,128)}', space=vmem, size = 0x10000, scoped, tag = 'scratch operand']
  #allocation3 [shape = 'f32[1,32]{1,0:T(1,128)}', space=vmem, size = 0x200, scoped, tag = 'scratch operand']
  #allocation4 [shape = 'f32[1,32]{1,0:T(1,128)}', space=vmem, size = 0x200, scoped, tag = 'scratch operand']
  %s0 = inlined_call_operand.vmem [shape: f32[128,288], index: 0, kind: input, shape index: {}]
  %s1 = inlined_call_operand.vmem [shape: f32[288,32], index: 1, kind: input, shape index: {}]
  %s2 = inlined_call_operand.vmem [shape: f32[1,8], index: 2, kind: input, shape index: {}]
  %s3 = inlined_call_operand.vmem [shape: f32[1,8], index: 3, kind: input, shape index: {}]
  %s4 = inlined_call_operand.vmem [shape: f32[32,8], index: 4, kind: input, shape index: {}]
  %s5 = inlined_call_operand.vmem [shape: f32[8,32], index: 5, kind: input, shape index: {}]
  %s6 = inlined_call_operand.vmem [shape: f32[128,32], index: 6, kind: output, shape index: {}]
  %s7 = sld [smem:[#allocation0]]
  $region42: #{inner_unet_forward.15} parent=0
    _
  %s9 = ssub.s32 1, %s7
  %s10 = scalar_select 0, %s9, %s7
  // Predicated region
  $region2: #{inner_unet_forward.15} parent=0 // pred_check
    _
  $region3: #{inner_unet_forward.15} parent=0 // pred_check_branch
    %12 = sbr.rel (0) target = $region5
  $region4: #{inner_unet_forward.15} parent=0 // pred_region
    _
  $region5: #{inner_unet_forward.15} parent=0 // pred_fallthru
    _
  // Predicated region
  $region6: #{inner_unet_forward.15} parent=0 // pred_check
    _
  $region7: #{inner_unet_forward.15} parent=0 // pred_check_branch
    %14 = sbr.rel (0) target = $region9
  $region8: #{inner_unet_forward.15} parent=0 // pred_region
    _
  $region9: #{inner_unet_forward.15} parent=0 // pred_fallthru
    _
  // Predicated region
  $region10: #{inner_unet_forward.15} parent=0 // pred_check
    _
  $region11: #{inner_unet_forward.15} parent=0 // pred_check_branch
    %16 = sbr.rel (0) target = $region13
  $region12: #{inner_unet_forward.15} parent=0 // pred_region
    _
  $region13: #{inner_unet_forward.15} parent=0 // pred_fallthru
    _
  // Predicated region
  $region14: #{inner_unet_forward.15} parent=0 // pred_check
    _
  $region15: #{inner_unet_forward.15} parent=0 // pred_check_branch
    %18 = sbr.rel (0) target = $region17
  $region16: #{inner_unet_forward.15} parent=0 // pred_region
    _
  $region17: #{inner_unet_forward.15} parent=0 // pred_fallthru
    _
  // Predicated region
  $region18: #{inner_unet_forward.15} parent=0 // pred_check
    _
  $region19: #{inner_unet_forward.15} parent=0 // pred_check_branch
    %20 = sbr.rel (0) target = $region21
  $region20: #{inner_unet_forward.15} parent=0 // pred_region
    _
  $region21: #{inner_unet_forward.15} parent=0 // pred_fallthru
    _
  // Predicated region
  $region22: #{inner_unet_forward.15} parent=0 // pred_check
    _
  $region23: #{inner_unet_forward.15} parent=0 // pred_check_branch
    %22 = sbr.rel (0) target = $region25
  $region24: #{inner_unet_forward.15} parent=0 // pred_region
    _
  $region25: #{inner_unet_forward.15} parent=0 // pred_fallthru
    _
  %v23 = vld [vmem:[%s0] sm:$0xff]
  %v24 = vld [vmem:[%s0 + $0x8] sm:$0xff]
  %v25 = vld [vmem:[%s0 + $0x10] sm:$0xff]
  %v26 = vld [vmem:[%s0 + $0x18] sm:$0xff]
  %v27 = vld [vmem:[%s0 + $0x20] sm:$0xff]
  %v28 = vld [vmem:[%s0 + $0x28] sm:$0xff]
  %v29 = vld [vmem:[%s0 + $0x30] sm:$0xff]
  %v30 = vld [vmem:[%s0 + $0x38] sm:$0xff]
  %v31 = vld [vmem:[%s0 + $0x40] sm:$0xff]
  %v32 = vld [vmem:[%s0 + $0x48] sm:$0xff]
  %v33 = vld [vmem:[%s0 + $0x50] sm:$0xff]
  %v34 = vld [vmem:[%s0 + $0x58] sm:$0xff]
  %v35 = vld [vmem:[%s0 + $0x60] sm:$0xff]
  %v36 = vld [vmem:[%s0 + $0x68] sm:$0xff]
  %v37 = vld [vmem:[%s0 + $0x70] sm:$0xff]
  %v38 = vld [vmem:[%s0 + $0x78] sm:$0xff]
  %v39 = vld [vmem:[%s0 + $0x80] sm:$0xff]
  %v40 = vld [vmem:[%s0 + $0x88] sm:$0xff]
  %v41 = vld [vmem:[%s0 + $0x90] sm:$0xff]
  %v42 = vld [vmem:[%s0 + $0x98] sm:$0xff]
  %v43 = vld [vmem:[%s0 + $0xa0] sm:$0xff]
  %v44 = vld [vmem:[%s0 + $0xa8] sm:$0xff]
  %v45 = vld [vmem:[%s0 + $0xb0] sm:$0xff]
  %v46 = vld [vmem:[%s0 + $0xb8] sm:$0xff]
  %v47 = vld [vmem:[%s0 + $0xc0] sm:$0xff]
  %v48 = vld [vmem:[%s0 + $0xc8] sm:$0xff]
  %v49 = vld [vmem:[%s0 + $0xd0] sm:$0xff]
  %v50 = vld [vmem:[%s0 + $0xd8] sm:$0xff]
  %v51 = vld [vmem:[%s0 + $0xe0] sm:$0xff]
  %v52 = vld [vmem:[%s0 + $0xe8] sm:$0xff]
  %v53 = vld [vmem:[%s0 + $0xf0] sm:$0xff]
  %v54 = vld [vmem:[%s0 + $0xf8] sm:$0xff]
  %v55 = vld [vmem:[%s0 + $0x100] sm:$0xff]
  %v56 = vld [vmem:[%s0 + $0x108] sm:$0xff]
  %v57 = vld [vmem:[%s0 + $0x110] sm:$0xff]
  %v58 = vld [vmem:[%s0 + $0x118] sm:$0xff]
  %v59 = vld [vmem:[%s0 + $0x120] sm:$0xff]
  %v60 = vld [vmem:[%s0 + $0x128] sm:$0xff]
  %v61 = vld [vmem:[%s0 + $0x130] sm:$0xff]
  %v62 = vld [vmem:[%s0 + $0x138] sm:$0xff]
  %v63 = vld [vmem:[%s0 + $0x140] sm:$0xff]
  %v64 = vld [vmem:[%s0 + $0x148] sm:$0xff]
  %v65 = vld [vmem:[%s0 + $0x150] sm:$0xff]
  %v66 = vld [vmem:[%s0 + $0x158] sm:$0xff]
  %v67 = vld [vmem:[%s0 + $0x160] sm:$0xff]
  %v68 = vld [vmem:[%s0 + $0x168] sm:$0xff]
  %v69 = vld [vmem:[%s0 + $0x170] sm:$0xff]
  %v70 = vld [vmem:[%s0 + $0x178] sm:$0xff]
  %v71 = vld [vmem:[%s1] sm:$0xff]
  %v72 = vld [vmem:[%s1 + $0x8] sm:$0xff]
  %v73 = vld [vmem:[%s1 + $0x10] sm:$0xff]
  %v74 = vld [vmem:[%s1 + $0x18] sm:$0xff]
  %v75 = vld [vmem:[%s1 + $0x20] sm:$0xff]
  %v76 = vld [vmem:[%s1 + $0x28] sm:$0xff]
  %v77 = vld [vmem:[%s1 + $0x30] sm:$0xff]
  %v78 = vld [vmem:[%s1 + $0x38] sm:$0xff]
  %v79 = vld [vmem:[%s1 + $0x40] sm:$0xff]
  %v80 = vld [vmem:[%s1 + $0x48] sm:$0xff]
  %v81 = vld [vmem:[%s1 + $0x50] sm:$0xff]
  %v82 = vld [vmem:[%s1 + $0x58] sm:$0xff]
  %v83 = vld [vmem:[%s1 + $0x60] sm:$0xff]
  %v84 = vld [vmem:[%s1 + $0x68] sm:$0xff]
  %v85 = vld [vmem:[%s1 + $0x70] sm:$0xff]
  %v86 = vld [vmem:[%s1 + $0x78] sm:$0xff]
  %v87 = vld [vmem:[%s1 + $0x80] sm:$0xff]
  %v88 = vld [vmem:[%s1 + $0x88] sm:$0xff]
  %v89 = vld [vmem:[%s1 + $0x90] sm:$0xff]
  %v90 = vld [vmem:[%s1 + $0x98] sm:$0xff]
  %v91 = vld [vmem:[%s1 + $0xa0] sm:$0xff]
  %v92 = vld [vmem:[%s1 + $0xa8] sm:$0xff]
  %v93 = vld [vmem:[%s1 + $0xb0] sm:$0xff]
  %v94 = vld [vmem:[%s1 + $0xb8] sm:$0xff]
  %v95 = vld [vmem:[%s1 + $0xc0] sm:$0xff]
  %v96 = vld [vmem:[%s1 + $0xc8] sm:$0xff]
  %v97 = vld [vmem:[%s1 + $0xd0] sm:$0xff]
  %v98 = vld [vmem:[%s1 + $0xd8] sm:$0xff]
  %v99 = vld [vmem:[%s1 + $0xe0] sm:$0xff]
  %v100 = vld [vmem:[%s1 + $0xe8] sm:$0xff]
  %v101 = vld [vmem:[%s1 + $0xf0] sm:$0xff]
  %v102 = vld [vmem:[%s1 + $0xf8] sm:$0xff]
  %v103 = vld [vmem:[%s1 + $0x100] sm:$0xff]
  %v104 = vld [vmem:[%s1 + $0x108] sm:$0xff]
  %v105 = vld [vmem:[%s1 + $0x110] sm:$0xff]
  %v106 = vld [vmem:[%s1 + $0x118] sm:$0xff]
  %vm107 = vcmask 261120
  %v109 = vsel %vm107, %v25, 0
  %v112 = vsel %vm107, %v28, 0
  %v115 = vsel %vm107, %v31, 0
  %v118 = vsel %vm107, %v34, 0
  %v121 = vsel %vm107, %v37, 0
  %v124 = vsel %vm107, %v40, 0
  %v127 = vsel %vm107, %v43, 0
  %v130 = vsel %vm107, %v46, 0
  %v133 = vsel %vm107, %v49, 0
  %v136 = vsel %vm107, %v52, 0
  %v139 = vsel %vm107, %v55, 0
  %v142 = vsel %vm107, %v58, 0
  %v145 = vsel %vm107, %v61, 0
  %v148 = vsel %vm107, %v64, 0
  %v151 = vsel %vm107, %v67, 0
  %v154 = vsel %vm107, %v70, 0
  %156 = vmatprep.subr.mxu0 0.0
  %157 = vmatpush1.msra.mxu0 %v71
  %158 = vmatprep.subr.mxu0 0.0
  %159 = vmatpush1.msra.mxu0 %v72
  %160 = vmatprep.subr.mxu0 0.0
  %161 = vmatpush1.msra.mxu0 %v73
  %162 = vmatprep.subr.mxu0 0.0
  %163 = vmatpush1.msra.mxu0 %v74
  %164 = vmatprep.subr.mxu0 0.0
  %165 = vmatpush1.msra.mxu0 %v75
  %166 = vmatprep.subr.mxu0 0.0
  %167 = vmatpush1.msra.mxu0 %v76
  %168 = vmatprep.subr.mxu0 0.0
  %169 = vmatpush1.msra.mxu0 %v77
  %170 = vmatprep.subr.mxu0 0.0
  %171 = vmatpush1.msra.mxu0 %v78
  %172 = vmatprep.subr.mxu0 0.0
  %173 = vmatpush1.msra.mxu0 %v79
  %174 = vmatprep.subr.mxu0 0.0
  %175 = vmatpush1.msra.mxu0 %v80
  %176 = vmatprep.subr.mxu0 0.0
  %177 = vmatpush1.msra.mxu0 %v81
  %178 = vmatprep.subr.mxu0 0.0
  %179 = vmatpush1.msra.mxu0 %v82
  %180 = vmatprep.subr.mxu0 0.0
  %181 = vmatpush1.msra.mxu0 %v83
  %182 = vmatprep.subr.mxu0 0.0
  %183 = vmatpush1.msra.mxu0 %v84
  %184 = vmatprep.subr.mxu0 0.0
  %185 = vmatpush1.msra.mxu0 %v85
  %186 = vmatprep.subr.mxu0 0.0
  %187 = vmatpush1.msra.mxu0 %v86
  %188 = vmatprep.subr.mxu0 0.0
  %189 = vmatpush1.msra.mxu0 %v87
  %190 = vmatprep.subr.mxu0 0.0
  %191 = vmatpush1.msra.mxu0 %v88
  %192 = vmatprep.subr.mxu0 0.0
  %193 = vmatpush1.msra.mxu0 %v89
  %194 = vmatprep.subr.mxu0 0.0
  %195 = vmatpush1.msra.mxu0 %v90
  %196 = vmatprep.subr.mxu0 0.0
  %197 = vmatpush1.msra.mxu0 %v91
  %198 = vmatprep.subr.mxu0 0.0
  %199 = vmatpush1.msra.mxu0 %v92
  %200 = vmatprep.subr.mxu0 0.0
  %201 = vmatpush1.msra.mxu0 %v93
  %202 = vmatprep.subr.mxu0 0.0
  %203 = vmatpush1.msra.mxu0 %v94
  %204 = vmatprep.subr.mxu0 0.0
  %205 = vmatpush1.msra.mxu0 %v95
  %206 = vmatprep.subr.mxu0 0.0
  %207 = vmatpush1.msra.mxu0 %v96
  %208 = vmatprep.subr.mxu0 0.0
  %209 = vmatpush1.msra.mxu0 %v97
  %210 = vmatprep.subr.mxu0 0.0
  %211 = vmatpush1.msra.mxu0 %v98
  %212 = vmatprep.subr.mxu0 0.0
  %213 = vmatpush1.msra.mxu0 %v99
  %214 = vmatprep.subr.mxu0 0.0
  %215 = vmatpush1.msra.mxu0 %v100
  %216 = vmatprep.subr.mxu0 0.0
  %217 = vmatpush1.msra.mxu0 %v101
  %218 = vmatprep.subr.mxu0 0.0
  %219 = vmatpush1.msra.mxu0 %v102
  %220 = vmatprep.mubr.f32.mxu0 %v24
  %221 = vmatmul.mubr.f32.gmra.mrb[0].mxu0 %v23
  %v222 = vpop.f32.mrb[0].mxu0
  %v223 = vadd.f32 0.0, %v222
  %v224 = vpop.f32.mrb[0].mxu0
  %225 = vmatprep.mubr.f32.mxu0 %v27
  %226 = vmatmul.mubr.f32.gmra.mrb[0].mxu0 %v26
  %v227 = vpop.f32.mrb[0].mxu0
  %v228 = vadd.f32 0.0, %v227
  %v229 = vpop.f32.mrb[0].mxu0
  %230 = vmatprep.mubr.f32.mxu0 %v30
  %231 = vmatmul.mubr.f32.gmra.mrb[0].mxu0 %v29
  %v232 = vpop.f32.mrb[0].mxu0
  %v233 = vadd.f32 0.0, %v232
  %v234 = vpop.f32.mrb[0].mxu0
  %235 = vmatprep.mubr.f32.mxu0 %v33
  %236 = vmatmul.mubr.f32.gmra.mrb[0].mxu0 %v32
  %v237 = vpop.f32.mrb[0].mxu0
  %v238 = vadd.f32 0.0, %v237
  %v239 = vpop.f32.mrb[0].mxu0
  %240 = vmatprep.mubr.f32.mxu0 %v36
  %241 = vmatmul.mubr.f32.gmra.mrb[0].mxu0 %v35
  %v242 = vpop.f32.mrb[0].mxu0
  %v243 = vadd.f32 0.0, %v242
  %v244 = vpop.f32.mrb[0].mxu0
  %245 = vmatprep.mubr.f32.mxu0 %v39
  %246 = vmatmul.mubr.f32.gmra.mrb[0].mxu0 %v38
  %v247 = vpop.f32.mrb[0].mxu0
  %v248 = vadd.f32 0.0, %v247
  %v249 = vpop.f32.mrb[0].mxu0
  %250 = vmatprep.mubr.f32.mxu0 %v42
  %251 = vmatmul.mubr.f32.gmra.mrb[0].mxu0 %v41
  %v252 = vpop.f32.mrb[0].mxu0
  %v253 = vadd.f32 0.0, %v252
  %v254 = vpop.f32.mrb[0].mxu0
  %255 = vmatprep.mubr.f32.mxu0 %v45
  %256 = vmatmul.mubr.f32.gmra.mrb[0].mxu0 %v44
  %v257 = vpop.f32.mrb[0].mxu0
  %v258 = vadd.f32 0.0, %v257
  %v259 = vpop.f32.mrb[0].mxu0
  %260 = vmatprep.mubr.f32.mxu0 %v48
  %261 = vmatmul.mubr.f32.gmra.mrb[0].mxu0 %v47
  %v262 = vpop.f32.mrb[0].mxu0
  %v263 = vadd.f32 0.0, %v262
  %v264 = vpop.f32.mrb[0].mxu0
  %265 = vmatprep.mubr.f32.mxu0 %v51
  %266 = vmatmul.mubr.f32.gmra.mrb[0].mxu0 %v50
  %v267 = vpop.f32.mrb[0].mxu0
  %v268 = vadd.f32 0.0, %v267
  %v269 = vpop.f32.mrb[0].mxu0
  %270 = vmatprep.mubr.f32.mxu0 %v54
  %271 = vmatmul.mubr.f32.gmra.mrb[0].mxu0 %v53
  %v272 = vpop.f32.mrb[0].mxu0
  %v273 = vadd.f32 0.0, %v272
  %v274 = vpop.f32.mrb[0].mxu0
  %275 = vmatprep.mubr.f32.mxu0 %v57
  %276 = vmatmul.mubr.f32.gmra.mrb[0].mxu0 %v56
  %v277 = vpop.f32.mrb[0].mxu0
  %v278 = vadd.f32 0.0, %v277
  %v279 = vpop.f32.mrb[0].mxu0
  %280 = vmatprep.mubr.f32.mxu0 %v60
  %281 = vmatmul.mubr.f32.gmra.mrb[0].mxu0 %v59
  %v282 = vpop.f32.mrb[0].mxu0
  %v283 = vadd.f32 0.0, %v282
  %v284 = vpop.f32.mrb[0].mxu0
  %285 = vmatprep.mubr.f32.mxu0 %v63
  %286 = vmatmul.mubr.f32.gmra.mrb[0].mxu0 %v62
  %v287 = vpop.f32.mrb[0].mxu0
  %v288 = vadd.f32 0.0, %v287
  %v289 = vpop.f32.mrb[0].mxu0
  %290 = vmatprep.mubr.f32.mxu0 %v66
  %291 = vmatmul.mubr.f32.gmra.mrb[0].mxu0 %v65
  %v292 = vpop.f32.mrb[0].mxu0
  %v293 = vadd.f32 0.0, %v292
  %v294 = vpop.f32.mrb[0].mxu0
  %295 = vmatprep.mubr.f32.mxu0 %v69
  %296 = vmatmul.mubr.f32.gmra.mrb[0].mxu0 %v68
  %v297 = vpop.f32.mrb[0].mxu0
  %v298 = vadd.f32 0.0, %v297
  %v299 = vpop.f32.mrb[0].mxu0
  %300 = vdwg.mxu0
  %301 = vmatprep.subr.mxu0 0.0
  %302 = vmatpush1.msra.mxu0 %v103
  %303 = vmatprep.subr.mxu0 0.0
  %304 = vmatpush1.msra.mxu0 %v104
  %305 = vmatprep.subr.mxu0 0.0
  %306 = vmatpush1.msra.mxu0 %v105
  %307 = vmatprep.subr.mxu0 0.0
  %308 = vmatpush1.msra.mxu0 %v106
  %309 = vmatprep.subr.mxu0 0.0
  %310 = vmatpush1.msra.mxu0 0.0
  %311 = vmatprep.subr.mxu0 0.0
  %312 = vmatpush1.msra.mxu0 0.0
  %313 = vmatprep.subr.mxu0 0.0
  %314 = vmatpush1.msra.mxu0 0.0
  %315 = vmatprep.subr.mxu0 0.0
  %316 = vmatpush1.msra.mxu0 0.0
  %317 = vmatprep.subr.mxu0 0.0
  %318 = vmatpush1.msra.mxu0 0.0
  %319 = vmatprep.subr.mxu0 0.0
  %320 = vmatpush1.msra.mxu0 0.0
  %321 = vmatprep.subr.mxu0 0.0
  %322 = vmatpush1.msra.mxu0 0.0
  %323 = vmatprep.subr.mxu0 0.0
  %324 = vmatpush1.msra.mxu0 0.0
  %325 = vmatprep.subr.mxu0 0.0
  %326 = vmatpush1.msra.mxu0 0.0
  %327 = vmatprep.subr.mxu0 0.0
  %328 = vmatpush1.msra.mxu0 0.0
  %329 = vmatprep.subr.mxu0 0.0
  %330 = vmatpush1.msra.mxu0 0.0
  %331 = vmatprep.subr.mxu0 0.0
  %332 = vmatpush1.msra.mxu0 0.0
  %333 = vmatprep.subr.mxu0 0.0
  %334 = vmatpush1.msra.mxu0 0.0
  %335 = vmatprep.subr.mxu0 0.0
  %336 = vmatpush1.msra.mxu0 0.0
  %337 = vmatprep.subr.mxu0 0.0
  %338 = vmatpush1.msra.mxu0 0.0
  %339 = vmatprep.subr.mxu0 0.0
  %340 = vmatpush1.msra.mxu0 0.0
  %341 = vmatprep.subr.mxu0 0.0
  %342 = vmatpush1.msra.mxu0 0.0
  %343 = vmatprep.subr.mxu0 0.0
  %344 = vmatpush1.msra.mxu0 0.0
  %345 = vmatprep.subr.mxu0 0.0
  %346 = vmatpush1.msra.mxu0 0.0
  %347 = vmatprep.subr.mxu0 0.0
  %348 = vmatpush1.msra.mxu0 0.0
  %349 = vmatprep.subr.mxu0 0.0
  %350 = vmatpush1.msra.mxu0 0.0
  %351 = vmatprep.subr.mxu0 0.0
  %352 = vmatpush1.msra.mxu0 0.0
  %353 = vmatprep.subr.mxu0 0.0
  %354 = vmatpush1.msra.mxu0 0.0
  %355 = vmatprep.subr.mxu0 0.0
  %356 = vmatpush1.msra.mxu0 0.0
  %357 = vmatprep.subr.mxu0 0.0
  %358 = vmatpush1.msra.mxu0 0.0
  %359 = vmatprep.subr.mxu0 0.0
  %360 = vmatpush1.msra.mxu0 0.0
  %361 = vmatprep.subr.mxu0 0.0
  %362 = vmatpush1.msra.mxu0 0.0
  %363 = vmatprep.subr.mxu0 0.0
  %364 = vmatpush1.msra.mxu0 0.0
  %365 = vmatprep.mubr.f32.mxu0 0.0
  %366 = vmatmul.mubr.f32.gmra.mrb[0].mxu0 %v109
  %v367 = vpop.f32.mrb[0].mxu0
  %v368 = vadd.f32 %v223, %v367
  %v369 = vpop.f32.mrb[0].mxu0
  %370 = vmatprep.mubr.f32.mxu0 0.0
  %371 = vmatmul.mubr.f32.gmra.mrb[0].mxu0 %v112
  %v372 = vpop.f32.mrb[0].mxu0
  %v373 = vadd.f32 %v228, %v372
  %v374 = vpop.f32.mrb[0].mxu0
  %375 = vmatprep.mubr.f32.mxu0 0.0
  %376 = vmatmul.mubr.f32.gmra.mrb[0].mxu0 %v115
  %v377 = vpop.f32.mrb[0].mxu0
  %v378 = vadd.f32 %v233, %v377
  %v379 = vpop.f32.mrb[0].mxu0
  %380 = vmatprep.mubr.f32.mxu0 0.0
  %381 = vmatmul.mubr.f32.gmra.mrb[0].mxu0 %v118
  %v382 = vpop.f32.mrb[0].mxu0
  %v383 = vadd.f32 %v238, %v382
  %v384 = vpop.f32.mrb[0].mxu0
  %385 = vmatprep.mubr.f32.mxu0 0.0
  %386 = vmatmul.mubr.f32.gmra.mrb[0].mxu0 %v121
  %v387 = vpop.f32.mrb[0].mxu0
  %v388 = vadd.f32 %v243, %v387
  %v389 = vpop.f32.mrb[0].mxu0
  %390 = vmatprep.mubr.f32.mxu0 0.0
  %391 = vmatmul.mubr.f32.gmra.mrb[0].mxu0 %v124
  %v392 = vpop.f32.mrb[0].mxu0
  %v393 = vadd.f32 %v248, %v392
  %v394 = vpop.f32.mrb[0].mxu0
  %395 = vmatprep.mubr.f32.mxu0 0.0
  %396 = vmatmul.mubr.f32.gmra.mrb[0].mxu0 %v127
  %v397 = vpop.f32.mrb[0].mxu0
  %v398 = vadd.f32 %v253, %v397
  %v399 = vpop.f32.mrb[0].mxu0
  %400 = vmatprep.mubr.f32.mxu0 0.0
  %401 = vmatmul.mubr.f32.gmra.mrb[0].mxu0 %v130
  %v402 = vpop.f32.mrb[0].mxu0
  %v403 = vadd.f32 %v258, %v402
  %v404 = vpop.f32.mrb[0].mxu0
  %405 = vmatprep.mubr.f32.mxu0 0.0
  %406 = vmatmul.mubr.f32.gmra.mrb[0].mxu0 %v133
  %v407 = vpop.f32.mrb[0].mxu0
  %v408 = vadd.f32 %v263, %v407
  %v409 = vpop.f32.mrb[0].mxu0
  %410 = vmatprep.mubr.f32.mxu0 0.0
  %411 = vmatmul.mubr.f32.gmra.mrb[0].mxu0 %v136
  %v412 = vpop.f32.mrb[0].mxu0
  %v413 = vadd.f32 %v268, %v412
  %v414 = vpop.f32.mrb[0].mxu0
  %415 = vmatprep.mubr.f32.mxu0 0.0
  %416 = vmatmul.mubr.f32.gmra.mrb[0].mxu0 %v139
  %v417 = vpop.f32.mrb[0].mxu0
  %v418 = vadd.f32 %v273, %v417
  %v419 = vpop.f32.mrb[0].mxu0
  %420 = vmatprep.mubr.f32.mxu0 0.0
  %421 = vmatmul.mubr.f32.gmra.mrb[0].mxu0 %v142
  %v422 = vpop.f32.mrb[0].mxu0
  %v423 = vadd.f32 %v278, %v422
  %v424 = vpop.f32.mrb[0].mxu0
  %425 = vmatprep.mubr.f32.mxu0 0.0
  %426 = vmatmul.mubr.f32.gmra.mrb[0].mxu0 %v145
  %v427 = vpop.f32.mrb[0].mxu0
  %v428 = vadd.f32 %v283, %v427
  %v429 = vpop.f32.mrb[0].mxu0
  %430 = vmatprep.mubr.f32.mxu0 0.0
  %431 = vmatmul.mubr.f32.gmra.mrb[0].mxu0 %v148
  %v432 = vpop.f32.mrb[0].mxu0
  %v433 = vadd.f32 %v288, %v432
  %v434 = vpop.f32.mrb[0].mxu0
  %435 = vmatprep.mubr.f32.mxu0 0.0
  %436 = vmatmul.mubr.f32.gmra.mrb[0].mxu0 %v151
  %v437 = vpop.f32.mrb[0].mxu0
  %v438 = vadd.f32 %v293, %v437
  %v439 = vpop.f32.mrb[0].mxu0
  %440 = vmatprep.mubr.f32.mxu0 0.0
  %441 = vmatmul.mubr.f32.gmra.mrb[0].mxu0 %v154
  %v442 = vpop.f32.mrb[0].mxu0
  %v443 = vadd.f32 %v298, %v442
  %v444 = vpop.f32.mrb[0].mxu0
  %445 = vdwg.mxu0
  %p446 = scmp.eq.s32.totalorder 0, 0
  // Predicated region
  $region26: #{inner_unet_forward.15} parent=0 // pred_check
    %p447 = pneg %p446
  $region27: #{inner_unet_forward.15} parent=0 // pred_check_branch
    %449 = sbr.rel (%p447) target = $region29
  $region28: #{inner_unet_forward.15} parent=0 // pred_region
    %vm450 = vcmask 253952
    %451 = vst.msk [vmem:[#allocation3] sm:$0x1] %vm450, 0.0
    %452 = vst.msk [vmem:[#allocation4] sm:$0x1] %vm450, 0.0
  $region29: #{inner_unet_forward.15} parent=0 // pred_fallthru
    _
  %v453 = vld [vmem:[#allocation3] sm:$0x1]
  %v454 = vsel %vm107, %v368, 0.0
  %v455 = vsel %vm107, %v373, 0.0
  %v456 = vadd.f32 %v454, %v455
  %v457 = vsel %vm107, %v378, 0.0
  %v458 = vadd.f32 %v456, %v457
  %v459 = vsel %vm107, %v383, 0.0
  %v460 = vadd.f32 %v458, %v459
  %v461 = vsel %vm107, %v388, 0.0
  %v462 = vadd.f32 %v460, %v461
  %v463 = vsel %vm107, %v393, 0.0
  %v464 = vadd.f32 %v462, %v463
  %v465 = vsel %vm107, %v398, 0.0
  %v466 = vadd.f32 %v464, %v465
  %v467 = vsel %vm107, %v403, 0.0
  %v468 = vadd.f32 %v466, %v467
  %v469 = vsel %vm107, %v408, 0.0
  %v470 = vadd.f32 %v468, %v469
  %v471 = vsel %vm107, %v413, 0.0
  %v472 = vadd.f32 %v470, %v471
  %v473 = vsel %vm107, %v418, 0.0
  %v474 = vadd.f32 %v472, %v473
  %v475 = vsel %vm107, %v423, 0.0
  %v476 = vadd.f32 %v474, %v475
  %v477 = vsel %vm107, %v428, 0.0
  %v478 = vadd.f32 %v476, %v477
  %v479 = vsel %vm107, %v433, 0.0
  %v480 = vadd.f32 %v478, %v479
  %v481 = vsel %vm107, %v438, 0.0
  %v482 = vadd.f32 %v480, %v481
  %v483 = vsel %vm107, %v443, 0.0
  %v484 = vadd.f32 %v482, %v483
  %v485 = vrot.slane %v484, 4
  %v486 = vadd.f32 %v484, %v485
  %v487 = vrot.slane %v486, 2
  %v488 = vadd.f32 %v486, %v487
  %v489 = vrot.slane %v488, 1
  %v490 = vadd.f32 %v488, %v489
  %v491 = vadd.f32 %v453, %v490
  %vm492 = vcmask 253952
  %493 = vst.msk [vmem:[#allocation3] sm:$0x1] %vm492, %v491
  %v494 = vld [vmem:[#allocation4] sm:$0x1]
  %v495 = vmul.f32 %v368, %v368
  %v496 = vmul.f32 %v373, %v373
  %v497 = vmul.f32 %v378, %v378
  %v498 = vmul.f32 %v383, %v383
  %v499 = vmul.f32 %v388, %v388
  %v500 = vmul.f32 %v393, %v393
  %v501 = vmul.f32 %v398, %v398
  %v502 = vmul.f32 %v403, %v403
  %v503 = vmul.f32 %v408, %v408
  %v504 = vmul.f32 %v413, %v413
  %v505 = vmul.f32 %v418, %v418
  %v506 = vmul.f32 %v423, %v423
  %v507 = vmul.f32 %v428, %v428
  %v508 = vmul.f32 %v433, %v433
  %v509 = vmul.f32 %v438, %v438
  %v510 = vmul.f32 %v443, %v443
  %v511 = vsel %vm107, %v495, 0.0
  %v512 = vsel %vm107, %v496, 0.0
  %v513 = vadd.f32 %v511, %v512
  %v514 = vsel %vm107, %v497, 0.0
  %v515 = vadd.f32 %v513, %v514
  %v516 = vsel %vm107, %v498, 0.0
  %v517 = vadd.f32 %v515, %v516
  %v518 = vsel %vm107, %v499, 0.0
  %v519 = vadd.f32 %v517, %v518
  %v520 = vsel %vm107, %v500, 0.0
  %v521 = vadd.f32 %v519, %v520
  %v522 = vsel %vm107, %v501, 0.0
  %v523 = vadd.f32 %v521, %v522
  %v524 = vsel %vm107, %v502, 0.0
  %v525 = vadd.f32 %v523, %v524
  %v526 = vsel %vm107, %v503, 0.0
  %v527 = vadd.f32 %v525, %v526
  %v528 = vsel %vm107, %v504, 0.0
  %v529 = vadd.f32 %v527, %v528
  %v530 = vsel %vm107, %v505, 0.0
  %v531 = vadd.f32 %v529, %v530
  %v532 = vsel %vm107, %v506, 0.0
  %v533 = vadd.f32 %v531, %v532
  %v534 = vsel %vm107, %v507, 0.0
  %v535 = vadd.f32 %v533, %v534
  %v536 = vsel %vm107, %v508, 0.0
  %v537 = vadd.f32 %v535, %v536
  %v538 = vsel %vm107, %v509, 0.0
  %v539 = vadd.f32 %v537, %v538
  %v540 = vsel %vm107, %v510, 0.0
  %v541 = vadd.f32 %v539, %v540
  %v542 = vrot.slane %v541, 4
  %v543 = vadd.f32 %v541, %v542
  %v544 = vrot.slane %v543, 2
  %v545 = vadd.f32 %v543, %v544
  %v546 = vrot.slane %v545, 1
  %v547 = vadd.f32 %v545, %v546
  %v548 = vadd.f32 %v494, %v547
  %549 = vst.msk [vmem:[#allocation4] sm:$0x1] %vm492, %v548
  %550 = vst.msk [vmem:[#allocation2] sm:$0xff] %vm107, %v368
  %551 = vst.msk [vmem:[#allocation2 + $0x8] sm:$0xff] %vm107, %v373
  %552 = vst.msk [vmem:[#allocation2 + $0x10] sm:$0xff] %vm107, %v378
  %553 = vst.msk [vmem:[#allocation2 + $0x18] sm:$0xff] %vm107, %v383
  %554 = vst.msk [vmem:[#allocation2 + $0x20] sm:$0xff] %vm107, %v388
  %555 = vst.msk [vmem:[#allocation2 + $0x28] sm:$0xff] %vm107, %v393
  %556 = vst.msk [vmem:[#allocation2 + $0x30] sm:$0xff] %vm107, %v398
  %557 = vst.msk [vmem:[#allocation2 + $0x38] sm:$0xff] %vm107, %v403
  %558 = vst.msk [vmem:[#allocation2 + $0x40] sm:$0xff] %vm107, %v408
  %559 = vst.msk [vmem:[#allocation2 + $0x48] sm:$0xff] %vm107, %v413
  %560 = vst.msk [vmem:[#allocation2 + $0x50] sm:$0xff] %vm107, %v418
  %561 = vst.msk [vmem:[#allocation2 + $0x58] sm:$0xff] %vm107, %v423
  %562 = vst.msk [vmem:[#allocation2 + $0x60] sm:$0xff] %vm107, %v428
  %563 = vst.msk [vmem:[#allocation2 + $0x68] sm:$0xff] %vm107, %v433
  %564 = vst.msk [vmem:[#allocation2 + $0x70] sm:$0xff] %vm107, %v438
  %565 = vst.msk [vmem:[#allocation2 + $0x78] sm:$0xff] %vm107, %v443
  %v566 = vld [vmem:[#allocation3] sm:$0x1]
  %v567 = vld [vmem:[%s4] sm:$0xff]
  %v568 = vld [vmem:[%s4 + $0x8] sm:$0xff]
  %v569 = vld [vmem:[%s4 + $0x10] sm:$0xff]
  %v570 = vld [vmem:[%s4 + $0x18] sm:$0xff]
  %v572 = vsel %vm107, %v566, 0
  %574 = vmatprep.subr.mxu0 0.0
  %575 = vmatpush1.msra.mxu0 %v567
  %576 = vmatprep.subr.mxu0 0.0
  %577 = vmatpush1.msra.mxu0 %v568
  %578 = vmatprep.subr.mxu0 0.0
  %579 = vmatpush1.msra.mxu0 %v569
  %580 = vmatprep.subr.mxu0 0.0
  %581 = vmatpush1.msra.mxu0 %v570
  %582 = vmatprep.subr.mxu0 0.0
  %583 = vmatpush1.msra.mxu0 0.0
  %584 = vmatprep.subr.mxu0 0.0
  %585 = vmatpush1.msra.mxu0 0.0
  %586 = vmatprep.subr.mxu0 0.0
  %587 = vmatpush1.msra.mxu0 0.0
  %588 = vmatprep.subr.mxu0 0.0
  %589 = vmatpush1.msra.mxu0 0.0
  %590 = vmatprep.subr.mxu0 0.0
  %591 = vmatpush1.msra.mxu0 0.0
  %592 = vmatprep.subr.mxu0 0.0
  %593 = vmatpush1.msra.mxu0 0.0
  %594 = vmatprep.subr.mxu0 0.0
  %595 = vmatpush1.msra.mxu0 0.0
  %596 = vmatprep.subr.mxu0 0.0
  %597 = vmatpush1.msra.mxu0 0.0
  %598 = vmatprep.subr.mxu0 0.0
  %599 = vmatpush1.msra.mxu0 0.0
  %600 = vmatprep.subr.mxu0 0.0
  %601 = vmatpush1.msra.mxu0 0.0
  %602 = vmatprep.subr.mxu0 0.0
  %603 = vmatpush1.msra.mxu0 0.0
  %604 = vmatprep.subr.mxu0 0.0
  %605 = vmatpush1.msra.mxu0 0.0
  %606 = vmatprep.subr.mxu0 0.0
  %607 = vmatpush1.msra.mxu0 0.0
  %608 = vmatprep.subr.mxu0 0.0
  %609 = vmatpush1.msra.mxu0 0.0
  %610 = vmatprep.subr.mxu0 0.0
  %611 = vmatpush1.msra.mxu0 0.0
  %612 = vmatprep.subr.mxu0 0.0
  %613 = vmatpush1.msra.mxu0 0.0
  %614 = vmatprep.subr.mxu0 0.0
  %615 = vmatpush1.msra.mxu0 0.0
  %616 = vmatprep.subr.mxu0 0.0
  %617 = vmatpush1.msra.mxu0 0.0
  %618 = vmatprep.subr.mxu0 0.0
  %619 = vmatpush1.msra.mxu0 0.0
  %620 = vmatprep.subr.mxu0 0.0
  %621 = vmatpush1.msra.mxu0 0.0
  %622 = vmatprep.subr.mxu0 0.0
  %623 = vmatpush1.msra.mxu0 0.0
  %624 = vmatprep.subr.mxu0 0.0
  %625 = vmatpush1.msra.mxu0 0.0
  %626 = vmatprep.subr.mxu0 0.0
  %627 = vmatpush1.msra.mxu0 0.0
  %628 = vmatprep.subr.mxu0 0.0
  %629 = vmatpush1.msra.mxu0 0.0
  %630 = vmatprep.subr.mxu0 0.0
  %631 = vmatpush1.msra.mxu0 0.0
  %632 = vmatprep.subr.mxu0 0.0
  %633 = vmatpush1.msra.mxu0 0.0
  %634 = vmatprep.subr.mxu0 0.0
  %635 = vmatpush1.msra.mxu0 0.0
  %636 = vmatprep.subr.mxu0 0.0
  %637 = vmatpush1.msra.mxu0 0.0
  %638 = vmatprep.mubr.f32.mxu0 0.0
  %639 = vmatmul.mubr.f32.gmra.mrb[0].mxu0 %v572
  %v640 = vpop.f32.mrb[0].mxu0
  %v641 = vadd.f32 0.0, %v640
  %v642 = vpop.f32.mrb[0].mxu0
  %643 = vdwg.mxu0
  %v644 = vld [vmem:[#allocation4] sm:$0x1]
  %v646 = vsel %vm107, %v644, 0
  %648 = vmatprep.subr.mxu0 0.0
  %649 = vmatpush1.msra.mxu0 %v567
  %650 = vmatprep.subr.mxu0 0.0
  %651 = vmatpush1.msra.mxu0 %v568
  %652 = vmatprep.subr.mxu0 0.0
  %653 = vmatpush1.msra.mxu0 %v569
  %654 = vmatprep.subr.mxu0 0.0
  %655 = vmatpush1.msra.mxu0 %v570
  %656 = vmatprep.subr.mxu0 0.0
  %657 = vmatpush1.msra.mxu0 0.0
  %658 = vmatprep.subr.mxu0 0.0
  %659 = vmatpush1.msra.mxu0 0.0
  %660 = vmatprep.subr.mxu0 0.0
  %661 = vmatpush1.msra.mxu0 0.0
  %662 = vmatprep.subr.mxu0 0.0
  %663 = vmatpush1.msra.mxu0 0.0
  %664 = vmatprep.subr.mxu0 0.0
  %665 = vmatpush1.msra.mxu0 0.0
  %666 = vmatprep.subr.mxu0 0.0
  %667 = vmatpush1.msra.mxu0 0.0
  %668 = vmatprep.subr.mxu0 0.0
  %669 = vmatpush1.msra.mxu0 0.0
  %670 = vmatprep.subr.mxu0 0.0
  %671 = vmatpush1.msra.mxu0 0.0
  %672 = vmatprep.subr.mxu0 0.0
  %673 = vmatpush1.msra.mxu0 0.0
  %674 = vmatprep.subr.mxu0 0.0
  %675 = vmatpush1.msra.mxu0 0.0
  %676 = vmatprep.subr.mxu0 0.0
  %677 = vmatpush1.msra.mxu0 0.0
  %678 = vmatprep.subr.mxu0 0.0
  %679 = vmatpush1.msra.mxu0 0.0
  %680 = vmatprep.subr.mxu0 0.0
  %681 = vmatpush1.msra.mxu0 0.0
  %682 = vmatprep.subr.mxu0 0.0
  %683 = vmatpush1.msra.mxu0 0.0
  %684 = vmatprep.subr.mxu0 0.0
  %685 = vmatpush1.msra.mxu0 0.0
  %686 = vmatprep.subr.mxu0 0.0
  %687 = vmatpush1.msra.mxu0 0.0
  %688 = vmatprep.subr.mxu0 0.0
  %689 = vmatpush1.msra.mxu0 0.0
  %690 = vmatprep.subr.mxu0 0.0
  %691 = vmatpush1.msra.mxu0 0.0
  %692 = vmatprep.subr.mxu0 0.0
  %693 = vmatpush1.msra.mxu0 0.0
  %694 = vmatprep.subr.mxu0 0.0
  %695 = vmatpush1.msra.mxu0 0.0
  %696 = vmatprep.subr.mxu0 0.0
  %697 = vmatpush1.msra.mxu0 0.0
  %698 = vmatprep.subr.mxu0 0.0
  %699 = vmatpush1.msra.mxu0 0.0
  %700 = vmatprep.subr.mxu0 0.0
  %701 = vmatpush1.msra.mxu0 0.0
  %702 = vmatprep.subr.mxu0 0.0
  %703 = vmatpush1.msra.mxu0 0.0
  %704 = vmatprep.subr.mxu0 0.0
  %705 = vmatpush1.msra.mxu0 0.0
  %706 = vmatprep.subr.mxu0 0.0
  %707 = vmatpush1.msra.mxu0 0.0
  %708 = vmatprep.subr.mxu0 0.0
  %709 = vmatpush1.msra.mxu0 0.0
  %710 = vmatprep.subr.mxu0 0.0
  %711 = vmatpush1.msra.mxu0 0.0
  %712 = vmatprep.mubr.f32.mxu0 0.0
  %713 = vmatmul.mubr.f32.gmra.mrb[0].mxu0 %v646
  %v714 = vpop.f32.mrb[0].mxu0
  %v715 = vadd.f32 0.0, %v714
  %v716 = vpop.f32.mrb[0].mxu0
  %717 = vdwg.mxu0
  %v718 = vmul.f32 %v641, 0.001953125
  %v719 = vmul.f32 %v715, 0.001953125
  %v720 = vmul.f32 %v718, %v718
  %v721 = vsub.f32 %v719, %v720
  %v722 = vmax.f32 %v721, 0.0
  %v723 = vld [vmem:[%s2] sm:$0x1]
  %v724 = vadd.f32 %v722, 1e-05
  %v725 = vrsqrt.pop %v724
  %v726 = vmul.f32 %v723, %v725
  %v727 = vld [vmem:[%s3] sm:$0x1]
  %v728 = vmul.f32 %v718, %v726
  %v729 = vsub.f32 %v727, %v728
  %v730 = vld [vmem:[%s5] sm:$0xff]
  %vm731 = vcmask 64512
  %v733 = vsel %vm731, %v726, 0
  %735 = vmatprep.subr.mxu0 0.0
  %736 = vmatpush1.msra.mxu0 %v730
  %737 = vmatprep.subr.mxu0 0.0
  %738 = vmatpush1.msra.mxu0 0.0
  %739 = vmatprep.subr.mxu0 0.0
  %740 = vmatpush1.msra.mxu0 0.0
  %741 = vmatprep.subr.mxu0 0.0
  %742 = vmatpush1.msra.mxu0 0.0
  %743 = vmatprep.subr.mxu0 0.0
  %744 = vmatpush1.msra.mxu0 0.0
  %745 = vmatprep.subr.mxu0 0.0
  %746 = vmatpush1.msra.mxu0 0.0
  %747 = vmatprep.subr.mxu0 0.0
  %748 = vmatpush1.msra.mxu0 0.0
  %749 = vmatprep.subr.mxu0 0.0
  %750 = vmatpush1.msra.mxu0 0.0
  %751 = vmatprep.subr.mxu0 0.0
  %752 = vmatpush1.msra.mxu0 0.0
  %753 = vmatprep.subr.mxu0 0.0
  %754 = vmatpush1.msra.mxu0 0.0
  %755 = vmatprep.subr.mxu0 0.0
  %756 = vmatpush1.msra.mxu0 0.0
  %757 = vmatprep.subr.mxu0 0.0
  %758 = vmatpush1.msra.mxu0 0.0
  %759 = vmatprep.subr.mxu0 0.0
  %760 = vmatpush1.msra.mxu0 0.0
  %761 = vmatprep.subr.mxu0 0.0
  %762 = vmatpush1.msra.mxu0 0.0
  %763 = vmatprep.subr.mxu0 0.0
  %764 = vmatpush1.msra.mxu0 0.0
  %765 = vmatprep.subr.mxu0 0.0
  %766 = vmatpush1.msra.mxu0 0.0
  %767 = vmatprep.subr.mxu0 0.0
  %768 = vmatpush1.msra.mxu0 0.0
  %769 = vmatprep.subr.mxu0 0.0
  %770 = vmatpush1.msra.mxu0 0.0
  %771 = vmatprep.subr.mxu0 0.0
  %772 = vmatpush1.msra.mxu0 0.0
  %773 = vmatprep.subr.mxu0 0.0
  %774 = vmatpush1.msra.mxu0 0.0
  %775 = vmatprep.subr.mxu0 0.0
  %776 = vmatpush1.msra.mxu0 0.0
  %777 = vmatprep.subr.mxu0 0.0
  %778 = vmatpush1.msra.mxu0 0.0
  %779 = vmatprep.subr.mxu0 0.0
  %780 = vmatpush1.msra.mxu0 0.0
  %781 = vmatprep.subr.mxu0 0.0
  %782 = vmatpush1.msra.mxu0 0.0
  %783 = vmatprep.subr.mxu0 0.0
  %784 = vmatpush1.msra.mxu0 0.0
  %785 = vmatprep.subr.mxu0 0.0
  %786 = vmatpush1.msra.mxu0 0.0
  %787 = vmatprep.subr.mxu0 0.0
  %788 = vmatpush1.msra.mxu0 0.0
  %789 = vmatprep.subr.mxu0 0.0
  %790 = vmatpush1.msra.mxu0 0.0
  %791 = vmatprep.subr.mxu0 0.0
  %792 = vmatpush1.msra.mxu0 0.0
  %793 = vmatprep.subr.mxu0 0.0
  %794 = vmatpush1.msra.mxu0 0.0
  %795 = vmatprep.subr.mxu0 0.0
  %796 = vmatpush1.msra.mxu0 0.0
  %797 = vmatprep.subr.mxu0 0.0
  %798 = vmatpush1.msra.mxu0 0.0
  %799 = vmatprep.mubr.f32.mxu0 0.0
  %800 = vmatmul.mubr.f32.gmra.mrb[0].mxu0 %v733
  %v801 = vpop.f32.mrb[0].mxu0
  %v802 = vadd.f32 0.0, %v801
  %v803 = vpop.f32.mrb[0].mxu0
  %804 = vdwg.mxu0
  %v806 = vsel %vm731, %v729, 0
  %808 = vmatprep.subr.mxu0 0.0
  %809 = vmatpush1.msra.mxu0 %v730
  %810 = vmatprep.subr.mxu0 0.0
  %811 = vmatpush1.msra.mxu0 0.0
  %812 = vmatprep.subr.mxu0 0.0
  %813 = vmatpush1.msra.mxu0 0.0
  %814 = vmatprep.subr.mxu0 0.0
  %815 = vmatpush1.msra.mxu0 0.0
  %816 = vmatprep.subr.mxu0 0.0
  %817 = vmatpush1.msra.mxu0 0.0
  %818 = vmatprep.subr.mxu0 0.0
  %819 = vmatpush1.msra.mxu0 0.0
  %820 = vmatprep.subr.mxu0 0.0
  %821 = vmatpush1.msra.mxu0 0.0
  %822 = vmatprep.subr.mxu0 0.0
  %823 = vmatpush1.msra.mxu0 0.0
  %824 = vmatprep.subr.mxu0 0.0
  %825 = vmatpush1.msra.mxu0 0.0
  %826 = vmatprep.subr.mxu0 0.0
  %827 = vmatpush1.msra.mxu0 0.0
  %828 = vmatprep.subr.mxu0 0.0
  %829 = vmatpush1.msra.mxu0 0.0
  %830 = vmatprep.subr.mxu0 0.0
  %831 = vmatpush1.msra.mxu0 0.0
  %832 = vmatprep.subr.mxu0 0.0
  %833 = vmatpush1.msra.mxu0 0.0
  %834 = vmatprep.subr.mxu0 0.0
  %835 = vmatpush1.msra.mxu0 0.0
  %836 = vmatprep.subr.mxu0 0.0
  %837 = vmatpush1.msra.mxu0 0.0
  %838 = vmatprep.subr.mxu0 0.0
  %839 = vmatpush1.msra.mxu0 0.0
  %840 = vmatprep.subr.mxu0 0.0
  %841 = vmatpush1.msra.mxu0 0.0
  %842 = vmatprep.subr.mxu0 0.0
  %843 = vmatpush1.msra.mxu0 0.0
  %844 = vmatprep.subr.mxu0 0.0
  %845 = vmatpush1.msra.mxu0 0.0
  %846 = vmatprep.subr.mxu0 0.0
  %847 = vmatpush1.msra.mxu0 0.0
  %848 = vmatprep.subr.mxu0 0.0
  %849 = vmatpush1.msra.mxu0 0.0
  %850 = vmatprep.subr.mxu0 0.0
  %851 = vmatpush1.msra.mxu0 0.0
  %852 = vmatprep.subr.mxu0 0.0
  %853 = vmatpush1.msra.mxu0 0.0
  %854 = vmatprep.subr.mxu0 0.0
  %855 = vmatpush1.msra.mxu0 0.0
  %856 = vmatprep.subr.mxu0 0.0
  %857 = vmatpush1.msra.mxu0 0.0
  %858 = vmatprep.subr.mxu0 0.0
  %859 = vmatpush1.msra.mxu0 0.0
  %860 = vmatprep.subr.mxu0 0.0
  %861 = vmatpush1.msra.mxu0 0.0
  %862 = vmatprep.subr.mxu0 0.0
  %863 = vmatpush1.msra.mxu0 0.0
  %864 = vmatprep.subr.mxu0 0.0
  %865 = vmatpush1.msra.mxu0 0.0
  %866 = vmatprep.subr.mxu0 0.0
  %867 = vmatpush1.msra.mxu0 0.0
  %868 = vmatprep.subr.mxu0 0.0
  %869 = vmatpush1.msra.mxu0 0.0
  %870 = vmatprep.subr.mxu0 0.0
  %871 = vmatpush1.msra.mxu0 0.0
  %872 = vmatprep.mubr.f32.mxu0 0.0
  %873 = vmatmul.mubr.f32.gmra.mrb[0].mxu0 %v806
  %v874 = vpop.f32.mrb[0].mxu0
  %v875 = vadd.f32 0.0, %v874
  %v876 = vpop.f32.mrb[0].mxu0
  %877 = vdwg.mxu0
  // Predicated region
  $region30: #{inner_unet_forward.15} parent=0 // pred_check
    %p878 = pneg %p446
  $region31: #{inner_unet_forward.15} parent=0 // pred_check_branch
    %880 = sbr.rel (%p878) target = $region33
  $region32: #{inner_unet_forward.15} parent=0 // pred_region
    %v881 = vld [vmem:[#allocation2] sm:$0xff]
    %v882 = vld [vmem:[#allocation2 + $0x8] sm:$0xff]
    %v883 = vld [vmem:[#allocation2 + $0x10] sm:$0xff]
    %v884 = vld [vmem:[#allocation2 + $0x18] sm:$0xff]
    %v885 = vld [vmem:[#allocation2 + $0x20] sm:$0xff]
    %v886 = vld [vmem:[#allocation2 + $0x28] sm:$0xff]
    %v887 = vld [vmem:[#allocation2 + $0x30] sm:$0xff]
    %v888 = vld [vmem:[#allocation2 + $0x38] sm:$0xff]
    %v889 = vld [vmem:[#allocation2 + $0x40] sm:$0xff]
    %v890 = vld [vmem:[#allocation2 + $0x48] sm:$0xff]
    %v891 = vld [vmem:[#allocation2 + $0x50] sm:$0xff]
    %v892 = vld [vmem:[#allocation2 + $0x58] sm:$0xff]
    %v893 = vld [vmem:[#allocation2 + $0x60] sm:$0xff]
    %v894 = vld [vmem:[#allocation2 + $0x68] sm:$0xff]
    %v895 = vld [vmem:[#allocation2 + $0x70] sm:$0xff]
    %v896 = vld [vmem:[#allocation2 + $0x78] sm:$0xff]
    %v897 = vlaneseq
    %v898 = vshrl.u32 %v897, 7
    %v899 = vsub.s32 0, %v898
    %v900 = vrot.slane %v802, %v899
    %v901 = vmul.f32 %v881, %v900
    %v902 = vmul.f32 %v882, %v900
    %v903 = vmul.f32 %v883, %v900
    %v904 = vmul.f32 %v884, %v900
    %v905 = vmul.f32 %v885, %v900
    %v906 = vmul.f32 %v886, %v900
    %v907 = vmul.f32 %v887, %v900
    %v908 = vmul.f32 %v888, %v900
    %v909 = vmul.f32 %v889, %v900
    %v910 = vmul.f32 %v890, %v900
    %v911 = vmul.f32 %v891, %v900
    %v912 = vmul.f32 %v892, %v900
    %v913 = vmul.f32 %v893, %v900
    %v914 = vmul.f32 %v894, %v900
    %v915 = vmul.f32 %v895, %v900
    %v916 = vmul.f32 %v896, %v900
    %v917 = vlaneseq
    %v918 = vshrl.u32 %v917, 7
    %v919 = vsub.s32 0, %v918
    %v920 = vrot.slane %v875, %v919
    %v921 = vadd.f32 %v901, %v920
    %v922 = vadd.f32 %v902, %v920
    %v923 = vadd.f32 %v903, %v920
    %v924 = vadd.f32 %v904, %v920
    %v925 = vadd.f32 %v905, %v920
    %v926 = vadd.f32 %v906, %v920
    %v927 = vadd.f32 %v907, %v920
    %v928 = vadd.f32 %v908, %v920
    %v929 = vadd.f32 %v909, %v920
    %v930 = vadd.f32 %v910, %v920
    %v931 = vadd.f32 %v911, %v920
    %v932 = vadd.f32 %v912, %v920
    %v933 = vadd.f32 %v913, %v920
    %v934 = vadd.f32 %v914, %v920
    %v935 = vadd.f32 %v915, %v920
    %v936 = vadd.f32 %v916, %v920
    %vm937 = vcmp.ge.f32.partialorder %v921, 0.0
    %vm938 = vcmp.ge.f32.partialorder %v922, 0.0
    %vm939 = vcmp.ge.f32.partialorder %v923, 0.0
    %vm940 = vcmp.ge.f32.partialorder %v924, 0.0
    %vm941 = vcmp.ge.f32.partialorder %v925, 0.0
    %vm942 = vcmp.ge.f32.partialorder %v926, 0.0
    %vm943 = vcmp.ge.f32.partialorder %v927, 0.0
    %vm944 = vcmp.ge.f32.partialorder %v928, 0.0
    %vm945 = vcmp.ge.f32.partialorder %v929, 0.0
    %vm946 = vcmp.ge.f32.partialorder %v930, 0.0
    %vm947 = vcmp.ge.f32.partialorder %v931, 0.0
    %vm948 = vcmp.ge.f32.partialorder %v932, 0.0
    %vm949 = vcmp.ge.f32.partialorder %v933, 0.0
    %vm950 = vcmp.ge.f32.partialorder %v934, 0.0
    %vm951 = vcmp.ge.f32.partialorder %v935, 0.0
    %vm952 = vcmp.ge.f32.partialorder %v936, 0.0
    %v953 = vmul.f32 %v921, 0.0
    %v954 = vmul.f32 %v922, 0.0
    %v955 = vmul.f32 %v923, 0.0
    %v956 = vmul.f32 %v924, 0.0
    %v957 = vmul.f32 %v925, 0.0
    %v958 = vmul.f32 %v926, 0.0
    %v959 = vmul.f32 %v927, 0.0
    %v960 = vmul.f32 %v928, 0.0
    %v961 = vmul.f32 %v929, 0.0
    %v962 = vmul.f32 %v930, 0.0
    %v963 = vmul.f32 %v931, 0.0
    %v964 = vmul.f32 %v932, 0.0
    %v965 = vmul.f32 %v933, 0.0
    %v966 = vmul.f32 %v934, 0.0
    %v967 = vmul.f32 %v935, 0.0
    %v968 = vmul.f32 %v936, 0.0
    %v969 = vsel %vm937, %v921, %v953
    %v970 = vsel %vm938, %v922, %v954
    %v971 = vsel %vm939, %v923, %v955
    %v972 = vsel %vm940, %v924, %v956
    %v973 = vsel %vm941, %v925, %v957
    %v974 = vsel %vm942, %v926, %v958
    %v975 = vsel %vm943, %v927, %v959
    %v976 = vsel %vm944, %v928, %v960
    %v977 = vsel %vm945, %v929, %v961
    %v978 = vsel %vm946, %v930, %v962
    %v979 = vsel %vm947, %v931, %v963
    %v980 = vsel %vm948, %v932, %v964
    %v981 = vsel %vm949, %v933, %v965
    %v982 = vsel %vm950, %v934, %v966
    %v983 = vsel %vm951, %v935, %v967
    %v984 = vsel %vm952, %v936, %v968
    %985 = vst.msk [vmem:[%s6] sm:$0xff] %vm107, %v969
    %986 = vst.msk [vmem:[%s6 + $0x8] sm:$0xff] %vm107, %v970
    %987 = vst.msk [vmem:[%s6 + $0x10] sm:$0xff] %vm107, %v971
    %988 = vst.msk [vmem:[%s6 + $0x18] sm:$0xff] %vm107, %v972
    %989 = vst.msk [vmem:[%s6 + $0x20] sm:$0xff] %vm107, %v973
    %990 = vst.msk [vmem:[%s6 + $0x28] sm:$0xff] %vm107, %v974
    %991 = vst.msk [vmem:[%s6 + $0x30] sm:$0xff] %vm107, %v975
    %992 = vst.msk [vmem:[%s6 + $0x38] sm:$0xff] %vm107, %v976
    %993 = vst.msk [vmem:[%s6 + $0x40] sm:$0xff] %vm107, %v977
    %994 = vst.msk [vmem:[%s6 + $0x48] sm:$0xff] %vm107, %v978
    %995 = vst.msk [vmem:[%s6 + $0x50] sm:$0xff] %vm107, %v979
    %996 = vst.msk [vmem:[%s6 + $0x58] sm:$0xff] %vm107, %v980
    %997 = vst.msk [vmem:[%s6 + $0x60] sm:$0xff] %vm107, %v981
    %998 = vst.msk [vmem:[%s6 + $0x68] sm:$0xff] %vm107, %v982
    %999 = vst.msk [vmem:[%s6 + $0x70] sm:$0xff] %vm107, %v983
    %1000 = vst.msk [vmem:[%s6 + $0x78] sm:$0xff] %vm107, %v984
  $region33: #{inner_unet_forward.15} parent=0 // pred_fallthru
    _
  // Predicated region
  $region34: #{inner_unet_forward.15} parent=0 // pred_check
    _
  $region35: #{inner_unet_forward.15} parent=0 // pred_check_branch
    %1002 = sbr.rel (0) target = $region37
  $region36: #{inner_unet_forward.15} parent=0 // pred_region
    _
  $region37: #{inner_unet_forward.15} parent=0 // pred_fallthru
    _
  // Predicated region
  $region38: #{inner_unet_forward.15} parent=0 // pred_check
    _
  $region39: #{inner_unet_forward.15} parent=0 // pred_check_branch
    %1004 = sbr.rel (0) target = $region41
  $region40: #{inner_unet_forward.15} parent=0 // pred_region
    _
  $region41: #{inner_unet_forward.15} parent=0 // pred_fallthru
    _

// kernel: inner_unet_forward.12
$region0: #{inner_unet_forward.12}
  #allocation0 [shape = 'u32[]', space=smem, size = 0x4, offset = 0x4, fixed_abs, tag = 'smem constant byte address 0x4 - core index']
  #allocation1 [shape = 'u32[144,128]{1,0:T(1,128)}', space=vmem, size = 0x12000, scoped, tag = 'internal scratch']
  %s0 = inlined_call_operand.vmem [shape: f32[2,1024], index: 0, kind: input, shape index: {}]
  %s1 = inlined_call_operand.vmem [shape: f32[1024,64], index: 1, kind: input, shape index: {}]
  %s2 = inlined_call_operand.vmem [shape: f32[1,64], index: 2, kind: input, shape index: {}]
  %s3 = inlined_call_operand.hbm [shape: f32[2,64], index: 3, kind: output, shape index: {}]
  %s4 = sld [smem:[#allocation0]]
  $region22: #{inner_unet_forward.12} parent=0
    _
  %s6 = ssub.s32 1, %s4
  %s7 = scalar_select 0, %s6, %s4
  $region1: #{inner_unet_forward.12} parent=0
    #allocation2 [shape = 'u8[1024]{0}', space=vmem, size = 0x400, scoped, tag = 'output window, operand 0, single buffered']
    #allocation3 [shape = 's32[1]{0}', space=sflag, size = 0x4, scoped, tag = 'scoped memory for inner_unet_forward.12']
    %8 = vsyncpa [#allocation3], 0
    // Predicated region
    $region2: #{inner_unet_forward.12} parent=1 // pred_check
      _
    $region3: #{inner_unet_forward.12} parent=1 // pred_check_branch
      %10 = sbr.rel (0) target = $region5
    $region4: #{inner_unet_forward.12} parent=1 // pred_region
      _
    $region5: #{inner_unet_forward.12} parent=1 // pred_fallthru
      _
    // Predicated region
    $region6: #{inner_unet_forward.12} parent=1 // pred_check
      _
    $region7: #{inner_unet_forward.12} parent=1 // pred_check_branch
      %12 = sbr.rel (0) target = $region9
    $region8: #{inner_unet_forward.12} parent=1 // pred_region
      _
    $region9: #{inner_unet_forward.12} parent=1 // pred_fallthru
      _
    // Predicated region
    $region10: #{inner_unet_forward.12} parent=1 // pred_check
      _
    $region11: #{inner_unet_forward.12} parent=1 // pred_check_branch
      %14 = sbr.rel (0) target = $region13
    $region12: #{inner_unet_forward.12} parent=1 // pred_region
      _
    $region13: #{inner_unet_forward.12} parent=1 // pred_fallthru
      _
    %v15 = vld [vmem:[%s0] sm:$0xff]
    %v16 = vld [vmem:[%s0 + $0x8] sm:$0xff]
    %v17 = vld [vmem:[%s1] sm:$0xff]
    %v18 = vld [vmem:[%s1 + $0x8] sm:$0xff]
    %v19 = vld [vmem:[%s1 + $0x10] sm:$0xff]
    %v20 = vld [vmem:[%s1 + $0x18] sm:$0xff]
    %v21 = vld [vmem:[%s1 + $0x20] sm:$0xff]
    %v22 = vld [vmem:[%s1 + $0x28] sm:$0xff]
    %v23 = vld [vmem:[%s1 + $0x30] sm:$0xff]
    %v24 = vld [vmem:[%s1 + $0x38] sm:$0xff]
    %v25 = vld [vmem:[%s1 + $0x40] sm:$0xff]
    %v26 = vld [vmem:[%s1 + $0x48] sm:$0xff]
    %v27 = vld [vmem:[%s1 + $0x50] sm:$0xff]
    %v28 = vld [vmem:[%s1 + $0x58] sm:$0xff]
    %v29 = vld [vmem:[%s1 + $0x60] sm:$0xff]
    %v30 = vld [vmem:[%s1 + $0x68] sm:$0xff]
    %v31 = vld [vmem:[%s1 + $0x70] sm:$0xff]
    %v32 = vld [vmem:[%s1 + $0x78] sm:$0xff]
    %v33 = vld [vmem:[%s1 + $0x80] sm:$0xff]
    %v34 = vld [vmem:[%s1 + $0x88] sm:$0xff]
    %v35 = vld [vmem:[%s1 + $0x90] sm:$0xff]
    %v36 = vld [vmem:[%s1 + $0x98] sm:$0xff]
    %v37 = vld [vmem:[%s1 + $0xa0] sm:$0xff]
    %v38 = vld [vmem:[%s1 + $0xa8] sm:$0xff]
    %v39 = vld [vmem:[%s1 + $0xb0] sm:$0xff]
    %v40 = vld [vmem:[%s1 + $0xb8] sm:$0xff]
    %v41 = vld [vmem:[%s1 + $0xc0] sm:$0xff]
    %v42 = vld [vmem:[%s1 + $0xc8] sm:$0xff]
    %v43 = vld [vmem:[%s1 + $0xd0] sm:$0xff]
    %v44 = vld [vmem:[%s1 + $0xd8] sm:$0xff]
    %v45 = vld [vmem:[%s1 + $0xe0] sm:$0xff]
    %v46 = vld [vmem:[%s1 + $0xe8] sm:$0xff]
    %v47 = vld [vmem:[%s1 + $0xf0] sm:$0xff]
    %v48 = vld [vmem:[%s1 + $0xf8] sm:$0xff]
    %v49 = vld [vmem:[%s1 + $0x100] sm:$0xff]
    %v50 = vld [vmem:[%s1 + $0x108] sm:$0xff]
    %v51 = vld [vmem:[%s1 + $0x110] sm:$0xff]
    %v52 = vld [vmem:[%s1 + $0x118] sm:$0xff]
    %v53 = vld [vmem:[%s1 + $0x120] sm:$0xff]
    %v54 = vld [vmem:[%s1 + $0x128] sm:$0xff]
    %v55 = vld [vmem:[%s1 + $0x130] sm:$0xff]
    %v56 = vld [vmem:[%s1 + $0x138] sm:$0xff]
    %v57 = vld [vmem:[%s1 + $0x140] sm:$0xff]
    %v58 = vld [vmem:[%s1 + $0x148] sm:$0xff]
    %v59 = vld [vmem:[%s1 + $0x150] sm:$0xff]
    %v60 = vld [vmem:[%s1 + $0x158] sm:$0xff]
    %v61 = vld [vmem:[%s1 + $0x160] sm:$0xff]
    %v62 = vld [vmem:[%s1 + $0x168] sm:$0xff]
    %v63 = vld [vmem:[%s1 + $0x170] sm:$0xff]
    %v64 = vld [vmem:[%s1 + $0x178] sm:$0xff]
    %v65 = vld [vmem:[%s1 + $0x180] sm:$0xff]
    %v66 = vld [vmem:[%s1 + $0x188] sm:$0xff]
    %v67 = vld [vmem:[%s1 + $0x190] sm:$0xff]
    %v68 = vld [vmem:[%s1 + $0x198] sm:$0xff]
    %v69 = vld [vmem:[%s1 + $0x1a0] sm:$0xff]
    %v70 = vld [vmem:[%s1 + $0x1a8] sm:$0xff]
    %v71 = vld [vmem:[%s1 + $0x1b0] sm:$0xff]
    %v72 = vld [vmem:[%s1 + $0x1b8] sm:$0xff]
    %v73 = vld [vmem:[%s1 + $0x1c0] sm:$0xff]
    %v74 = vld [vmem:[%s1 + $0x1c8] sm:$0xff]
    %v75 = vld [vmem:[%s1 + $0x1d0] sm:$0xff]
    %v76 = vld [vmem:[%s1 + $0x1d8] sm:$0xff]
    %v77 = vld [vmem:[%s1 + $0x1e0] sm:$0xff]
    %v78 = vld [vmem:[%s1 + $0x1e8] sm:$0xff]
    %v79 = vld [vmem:[%s1 + $0x1f0] sm:$0xff]
    %v80 = vld [vmem:[%s1 + $0x1f8] sm:$0xff]
    %v81 = vld [vmem:[%s1 + $0x200] sm:$0xff]
    %v82 = vld [vmem:[%s1 + $0x208] sm:$0xff]
    %v83 = vld [vmem:[%s1 + $0x210] sm:$0xff]
    %v84 = vld [vmem:[%s1 + $0x218] sm:$0xff]
    %v85 = vld [vmem:[%s1 + $0x220] sm:$0xff]
    %v86 = vld [vmem:[%s1 + $0x228] sm:$0xff]
    %v87 = vld [vmem:[%s1 + $0x230] sm:$0xff]
    %v88 = vld [vmem:[%s1 + $0x238] sm:$0xff]
    %v89 = vld [vmem:[%s1 + $0x240] sm:$0xff]
    %v90 = vld [vmem:[%s1 + $0x248] sm:$0xff]
    %v91 = vld [vmem:[%s1 + $0x250] sm:$0xff]
    %v92 = vld [vmem:[%s1 + $0x258] sm:$0xff]
    %v93 = vld [vmem:[%s1 + $0x260] sm:$0xff]
    %v94 = vld [vmem:[%s1 + $0x268] sm:$0xff]
    %v95 = vld [vmem:[%s1 + $0x270] sm:$0xff]
    %v96 = vld [vmem:[%s1 + $0x278] sm:$0xff]
    %v97 = vld [vmem:[%s1 + $0x280] sm:$0xff]
    %v98 = vld [vmem:[%s1 + $0x288] sm:$0xff]
    %v99 = vld [vmem:[%s1 + $0x290] sm:$0xff]
    %v100 = vld [vmem:[%s1 + $0x298] sm:$0xff]
    %v101 = vld [vmem:[%s1 + $0x2a0] sm:$0xff]
    %v102 = vld [vmem:[%s1 + $0x2a8] sm:$0xff]
    %v103 = vld [vmem:[%s1 + $0x2b0] sm:$0xff]
    %v104 = vld [vmem:[%s1 + $0x2b8] sm:$0xff]
    %v105 = vld [vmem:[%s1 + $0x2c0] sm:$0xff]
    %v106 = vld [vmem:[%s1 + $0x2c8] sm:$0xff]
    %v107 = vld [vmem:[%s1 + $0x2d0] sm:$0xff]
    %v108 = vld [vmem:[%s1 + $0x2d8] sm:$0xff]
    %v109 = vld [vmem:[%s1 + $0x2e0] sm:$0xff]
    %v110 = vld [vmem:[%s1 + $0x2e8] sm:$0xff]
    %v111 = vld [vmem:[%s1 + $0x2f0] sm:$0xff]
    %v112 = vld [vmem:[%s1 + $0x2f8] sm:$0xff]
    %v113 = vld [vmem:[%s1 + $0x300] sm:$0xff]
    %v114 = vld [vmem:[%s1 + $0x308] sm:$0xff]
    %v115 = vld [vmem:[%s1 + $0x310] sm:$0xff]
    %v116 = vld [vmem:[%s1 + $0x318] sm:$0xff]
    %v117 = vld [vmem:[%s1 + $0x320] sm:$0xff]
    %v118 = vld [vmem:[%s1 + $0x328] sm:$0xff]
    %v119 = vld [vmem:[%s1 + $0x330] sm:$0xff]
    %v120 = vld [vmem:[%s1 + $0x338] sm:$0xff]
    %v121 = vld [vmem:[%s1 + $0x340] sm:$0xff]
    %v122 = vld [vmem:[%s1 + $0x348] sm:$0xff]
    %v123 = vld [vmem:[%s1 + $0x350] sm:$0xff]
    %v124 = vld [vmem:[%s1 + $0x358] sm:$0xff]
    %v125 = vld [vmem:[%s1 + $0x360] sm:$0xff]
    %v126 = vld [vmem:[%s1 + $0x368] sm:$0xff]
    %v127 = vld [vmem:[%s1 + $0x370] sm:$0xff]
    %v128 = vld [vmem:[%s1 + $0x378] sm:$0xff]
    %v129 = vld [vmem:[%s1 + $0x380] sm:$0xff]
    %v130 = vld [vmem:[%s1 + $0x388] sm:$0xff]
    %v131 = vld [vmem:[%s1 + $0x390] sm:$0xff]
    %v132 = vld [vmem:[%s1 + $0x398] sm:$0xff]
    %v133 = vld [vmem:[%s1 + $0x3a0] sm:$0xff]
    %v134 = vld [vmem:[%s1 + $0x3a8] sm:$0xff]
    %v135 = vld [vmem:[%s1 + $0x3b0] sm:$0xff]
    %v136 = vld [vmem:[%s1 + $0x3b8] sm:$0xff]
    %v137 = vld [vmem:[%s1 + $0x3c0] sm:$0xff]
    %v138 = vld [vmem:[%s1 + $0x3c8] sm:$0xff]
    %v139 = vld [vmem:[%s1 + $0x3d0] sm:$0xff]
    %v140 = vld [vmem:[%s1 + $0x3d8] sm:$0xff]
    %v141 = vld [vmem:[%s1 + $0x3e0] sm:$0xff]
    %v142 = vld [vmem:[%s1 + $0x3e8] sm:$0xff]
    %v143 = vld [vmem:[%s1 + $0x3f0] sm:$0xff]
    %v144 = vld [vmem:[%s1 + $0x3f8] sm:$0xff]
    %v145 = vld [vmem:[%s2] sm:$0x1]
    %v147 = vlaneseq
    %v148 = vshrl.u32 %v147, 7
    %v149 = vsub.s32 0, %v148
    %v150 = vrot.slane %v145, %v149
    %v154 = vcombine.high %v15, %v15
    %v156 = vunpack.c.l.s4 1983009808
    %v157 = vunpack.c.0.s8 %v156
    %v158 = vlaneseq
    %v159 = vshrl.u32 %v158, 7
    %v160 = vsub.s32 %v157, %v159
    %v161 = vrot.slane %v15, %v160
    %v163 = vunpack.c.l.s4 1983009808
    %v164 = vunpack.c.0.s8 %v163
    %v165 = vlaneseq
    %v166 = vshrl.u32 %v165, 7
    %v167 = vsub.s32 %v164, %v166
    %v168 = vrot.slane %v154, %v167
    %v169 = vcombine.high %v161, %v161
    %v170 = vcombine.high %v168, %v168
    %v171 = vcombine.high %v16, %v16
    %v173 = vunpack.c.l.s4 1983009808
    %v174 = vunpack.c.0.s8 %v173
    %v175 = vlaneseq
    %v176 = vshrl.u32 %v175, 7
    %v177 = vsub.s32 %v174, %v176
    %v178 = vrot.slane %v16, %v177
    %v180 = vunpack.c.l.s4 1983009808
    %v181 = vunpack.c.0.s8 %v180
    %v182 = vlaneseq
    %v183 = vshrl.u32 %v182, 7
    %v184 = vsub.s32 %v181, %v183
    %v185 = vrot.slane %v171, %v184
    %v186 = vcombine.high %v178, %v178
    %v187 = vcombine.high %v185, %v185
    %196 = vmatprep.subr.mxu0 0.0
    %197 = vmatpush1.msra.mxu0 %v17
    %198 = vmatprep.subr.mxu0 0.0
    %199 = vmatpush1.msra.mxu0 %v18
    %200 = vmatprep.subr.mxu0 0.0
    %201 = vmatpush1.msra.mxu0 %v19
    %202 = vmatprep.subr.mxu0 0.0
    %203 = vmatpush1.msra.mxu0 %v20
    %204 = vmatprep.subr.mxu0 0.0
    %205 = vmatpush1.msra.mxu0 %v21
    %206 = vmatprep.subr.mxu0 0.0
    %207 = vmatpush1.msra.mxu0 %v22
    %208 = vmatprep.subr.mxu0 0.0
    %209 = vmatpush1.msra.mxu0 %v23
    %210 = vmatprep.subr.mxu0 0.0
    %211 = vmatpush1.msra.mxu0 %v24
    %212 = vmatprep.subr.mxu0 0.0
    %213 = vmatpush1.msra.mxu0 %v25
    %214 = vmatprep.subr.mxu0 0.0
    %215 = vmatpush1.msra.mxu0 %v26
    %216 = vmatprep.subr.mxu0 0.0
    %217 = vmatpush1.msra.mxu0 %v27
    %218 = vmatprep.subr.mxu0 0.0
    %219 = vmatpush1.msra.mxu0 %v28
    %220 = vmatprep.subr.mxu0 0.0
    %221 = vmatpush1.msra.mxu0 %v29
    %222 = vmatprep.subr.mxu0 0.0
    %223 = vmatpush1.msra.mxu0 %v30
    %224 = vmatprep.subr.mxu0 0.0
    %225 = vmatpush1.msra.mxu0 %v31
    %226 = vmatprep.subr.mxu0 0.0
    %227 = vmatpush1.msra.mxu0 %v32
    %228 = vmatprep.subr.mxu0 0.0
    %229 = vmatpush1.msra.mxu0 %v33
    %230 = vmatprep.subr.mxu0 0.0
    %231 = vmatpush1.msra.mxu0 %v34
    %232 = vmatprep.subr.mxu0 0.0
    %233 = vmatpush1.msra.mxu0 %v35
    %234 = vmatprep.subr.mxu0 0.0
    %235 = vmatpush1.msra.mxu0 %v36
    %236 = vmatprep.subr.mxu0 0.0
    %237 = vmatpush1.msra.mxu0 %v37
    %238 = vmatprep.subr.mxu0 0.0
    %239 = vmatpush1.msra.mxu0 %v38
    %240 = vmatprep.subr.mxu0 0.0
    %241 = vmatpush1.msra.mxu0 %v39
    %242 = vmatprep.subr.mxu0 0.0
    %243 = vmatpush1.msra.mxu0 %v40
    %244 = vmatprep.subr.mxu0 0.0
    %245 = vmatpush1.msra.mxu0 %v41
    %246 = vmatprep.subr.mxu0 0.0
    %247 = vmatpush1.msra.mxu0 %v42
    %248 = vmatprep.subr.mxu0 0.0
    %249 = vmatpush1.msra.mxu0 %v43
    %250 = vmatprep.subr.mxu0 0.0
    %251 = vmatpush1.msra.mxu0 %v44
    %252 = vmatprep.subr.mxu0 0.0
    %253 = vmatpush1.msra.mxu0 %v45
    %254 = vmatprep.subr.mxu0 0.0
    %255 = vmatpush1.msra.mxu0 %v46
    %256 = vmatprep.subr.mxu0 0.0
    %257 = vmatpush1.msra.mxu0 %v47
    %258 = vmatprep.subr.mxu0 0.0
    %259 = vmatpush1.msra.mxu0 %v48
    %260 = vmatprep.mubr.f32.mxu0 %v169
    %261 = vmatmul.mubr.f32.gmra.mrb[0].mxu0 %v161
    %v262 = vpop.f32.mrb[0].mxu0
    %v263 = vadd.f32 %v150, %v262
    %v264 = vpop.f32.mrb[0].mxu0
    %265 = vdwg.mxu0
    %266 = vmatprep.subr.mxu0 0.0
    %267 = vmatpush1.msra.mxu0 %v49
    %268 = vmatprep.subr.mxu0 0.0
    %269 = vmatpush1.msra.mxu0 %v50
    %270 = vmatprep.subr.mxu0 0.0
    %271 = vmatpush1.msra.mxu0 %v51
    %272 = vmatprep.subr.mxu0 0.0
    %273 = vmatpush1.msra.mxu0 %v52
    %274 = vmatprep.subr.mxu0 0.0
    %275 = vmatpush1.msra.mxu0 %v53
    %276 = vmatprep.subr.mxu0 0.0
    %277 = vmatpush1.msra.mxu0 %v54
    %278 = vmatprep.subr.mxu0 0.0
    %279 = vmatpush1.msra.mxu0 %v55
    %280 = vmatprep.subr.mxu0 0.0
    %281 = vmatpush1.msra.mxu0 %v56
    %282 = vmatprep.subr.mxu0 0.0
    %283 = vmatpush1.msra.mxu0 %v57
    %284 = vmatprep.subr.mxu0 0.0
    %285 = vmatpush1.msra.mxu0 %v58
    %286 = vmatprep.subr.mxu0 0.0
    %287 = vmatpush1.msra.mxu0 %v59
    %288 = vmatprep.subr.mxu0 0.0
    %289 = vmatpush1.msra.mxu0 %v60
    %290 = vmatprep.subr.mxu0 0.0
    %291 = vmatpush1.msra.mxu0 %v61
    %292 = vmatprep.subr.mxu0 0.0
    %293 = vmatpush1.msra.mxu0 %v62
    %294 = vmatprep.subr.mxu0 0.0
    %295 = vmatpush1.msra.mxu0 %v63
    %296 = vmatprep.subr.mxu0 0.0
    %297 = vmatpush1.msra.mxu0 %v64
    %298 = vmatprep.subr.mxu0 0.0
    %299 = vmatpush1.msra.mxu0 %v65
    %300 = vmatprep.subr.mxu0 0.0
    %301 = vmatpush1.msra.mxu0 %v66
    %302 = vmatprep.subr.mxu0 0.0
    %303 = vmatpush1.msra.mxu0 %v67
    %304 = vmatprep.subr.mxu0 0.0
    %305 = vmatpush1.msra.mxu0 %v68
    %306 = vmatprep.subr.mxu0 0.0
    %307 = vmatpush1.msra.mxu0 %v69
    %308 = vmatprep.subr.mxu0 0.0
    %309 = vmatpush1.msra.mxu0 %v70
    %310 = vmatprep.subr.mxu0 0.0
    %311 = vmatpush1.msra.mxu0 %v71
    %312 = vmatprep.subr.mxu0 0.0
    %313 = vmatpush1.msra.mxu0 %v72
    %314 = vmatprep.subr.mxu0 0.0
    %315 = vmatpush1.msra.mxu0 %v73
    %316 = vmatprep.subr.mxu0 0.0
    %317 = vmatpush1.msra.mxu0 %v74
    %318 = vmatprep.subr.mxu0 0.0
    %319 = vmatpush1.msra.mxu0 %v75
    %320 = vmatprep.subr.mxu0 0.0
    %321 = vmatpush1.msra.mxu0 %v76
    %322 = vmatprep.subr.mxu0 0.0
    %323 = vmatpush1.msra.mxu0 %v77
    %324 = vmatprep.subr.mxu0 0.0
    %325 = vmatpush1.msra.mxu0 %v78
    %326 = vmatprep.subr.mxu0 0.0
    %327 = vmatpush1.msra.mxu0 %v79
    %328 = vmatprep.subr.mxu0 0.0
    %329 = vmatpush1.msra.mxu0 %v80
    %330 = vmatprep.mubr.f32.mxu0 %v170
    %331 = vmatmul.mubr.f32.gmra.mrb[0].mxu0 %v168
    %v332 = vpop.f32.mrb[0].mxu0
    %v333 = vadd.f32 %v263, %v332
    %v334 = vpop.f32.mrb[0].mxu0
    %335 = vdwg.mxu0
    %336 = vmatprep.subr.mxu0 0.0
    %337 = vmatpush1.msra.mxu0 %v81
    %338 = vmatprep.subr.mxu0 0.0
    %339 = vmatpush1.msra.mxu0 %v82
    %340 = vmatprep.subr.mxu0 0.0
    %341 = vmatpush1.msra.mxu0 %v83
    %342 = vmatprep.subr.mxu0 0.0
    %343 = vmatpush1.msra.mxu0 %v84
    %344 = vmatprep.subr.mxu0 0.0
    %345 = vmatpush1.msra.mxu0 %v85
    %346 = vmatprep.subr.mxu0 0.0
    %347 = vmatpush1.msra.mxu0 %v86
    %348 = vmatprep.subr.mxu0 0.0
    %349 = vmatpush1.msra.mxu0 %v87
    %350 = vmatprep.subr.mxu0 0.0
    %351 = vmatpush1.msra.mxu0 %v88
    %352 = vmatprep.subr.mxu0 0.0
    %353 = vmatpush1.msra.mxu0 %v89
    %354 = vmatprep.subr.mxu0 0.0
    %355 = vmatpush1.msra.mxu0 %v90
    %356 = vmatprep.subr.mxu0 0.0
    %357 = vmatpush1.msra.mxu0 %v91
    %358 = vmatprep.subr.mxu0 0.0
    %359 = vmatpush1.msra.mxu0 %v92
    %360 = vmatprep.subr.mxu0 0.0
    %361 = vmatpush1.msra.mxu0 %v93
    %362 = vmatprep.subr.mxu0 0.0
    %363 = vmatpush1.msra.mxu0 %v94
    %364 = vmatprep.subr.mxu0 0.0
    %365 = vmatpush1.msra.mxu0 %v95
    %366 = vmatprep.subr.mxu0 0.0
    %367 = vmatpush1.msra.mxu0 %v96
    %368 = vmatprep.subr.mxu0 0.0
    %369 = vmatpush1.msra.mxu0 %v97
    %370 = vmatprep.subr.mxu0 0.0
    %371 = vmatpush1.msra.mxu0 %v98
    %372 = vmatprep.subr.mxu0 0.0
    %373 = vmatpush1.msra.mxu0 %v99
    %374 = vmatprep.subr.mxu0 0.0
    %375 = vmatpush1.msra.mxu0 %v100
    %376 = vmatprep.subr.mxu0 0.0
    %377 = vmatpush1.msra.mxu0 %v101
    %378 = vmatprep.subr.mxu0 0.0
    %379 = vmatpush1.msra.mxu0 %v102
    %380 = vmatprep.subr.mxu0 0.0
    %381 = vmatpush1.msra.mxu0 %v103
    %382 = vmatprep.subr.mxu0 0.0
    %383 = vmatpush1.msra.mxu0 %v104
    %384 = vmatprep.subr.mxu0 0.0
    %385 = vmatpush1.msra.mxu0 %v105
    %386 = vmatprep.subr.mxu0 0.0
    %387 = vmatpush1.msra.mxu0 %v106
    %388 = vmatprep.subr.mxu0 0.0
    %389 = vmatpush1.msra.mxu0 %v107
    %390 = vmatprep.subr.mxu0 0.0
    %391 = vmatpush1.msra.mxu0 %v108
    %392 = vmatprep.subr.mxu0 0.0
    %393 = vmatpush1.msra.mxu0 %v109
    %394 = vmatprep.subr.mxu0 0.0
    %395 = vmatpush1.msra.mxu0 %v110
    %396 = vmatprep.subr.mxu0 0.0
    %397 = vmatpush1.msra.mxu0 %v111
    %398 = vmatprep.subr.mxu0 0.0
    %399 = vmatpush1.msra.mxu0 %v112
    %400 = vmatprep.mubr.f32.mxu0 %v186
    %401 = vmatmul.mubr.f32.gmra.mrb[0].mxu0 %v178
    %v402 = vpop.f32.mrb[0].mxu0
    %v403 = vadd.f32 %v333, %v402
    %v404 = vpop.f32.mrb[0].mxu0
    %405 = vdwg.mxu0
    %406 = vmatprep.subr.mxu0 0.0
    %407 = vmatpush1.msra.mxu0 %v113
    %408 = vmatprep.subr.mxu0 0.0
    %409 = vmatpush1.msra.mxu0 %v114
    %410 = vmatprep.subr.mxu0 0.0
    %411 = vmatpush1.msra.mxu0 %v115
    %412 = vmatprep.subr.mxu0 0.0
    %413 = vmatpush1.msra.mxu0 %v116
    %414 = vmatprep.subr.mxu0 0.0
    %415 = vmatpush1.msra.mxu0 %v117
    %416 = vmatprep.subr.mxu0 0.0
    %417 = vmatpush1.msra.mxu0 %v118
    %418 = vmatprep.subr.mxu0 0.0
    %419 = vmatpush1.msra.mxu0 %v119
    %420 = vmatprep.subr.mxu0 0.0
    %421 = vmatpush1.msra.mxu0 %v120
    %422 = vmatprep.subr.mxu0 0.0
    %423 = vmatpush1.msra.mxu0 %v121
    %424 = vmatprep.subr.mxu0 0.0
    %425 = vmatpush1.msra.mxu0 %v122
    %426 = vmatprep.subr.mxu0 0.0
    %427 = vmatpush1.msra.mxu0 %v123
    %428 = vmatprep.subr.mxu0 0.0
    %429 = vmatpush1.msra.mxu0 %v124
    %430 = vmatprep.subr.mxu0 0.0
    %431 = vmatpush1.msra.mxu0 %v125
    %432 = vmatprep.subr.mxu0 0.0
    %433 = vmatpush1.msra.mxu0 %v126
    %434 = vmatprep.subr.mxu0 0.0
    %435 = vmatpush1.msra.mxu0 %v127
    %436 = vmatprep.subr.mxu0 0.0
    %437 = vmatpush1.msra.mxu0 %v128
    %438 = vmatprep.subr.mxu0 0.0
    %439 = vmatpush1.msra.mxu0 %v129
    %440 = vmatprep.subr.mxu0 0.0
    %441 = vmatpush1.msra.mxu0 %v130
    %442 = vmatprep.subr.mxu0 0.0
    %443 = vmatpush1.msra.mxu0 %v131
    %444 = vmatprep.subr.mxu0 0.0
    %445 = vmatpush1.msra.mxu0 %v132
    %446 = vmatprep.subr.mxu0 0.0
    %447 = vmatpush1.msra.mxu0 %v133
    %448 = vmatprep.subr.mxu0 0.0
    %449 = vmatpush1.msra.mxu0 %v134
    %450 = vmatprep.subr.mxu0 0.0
    %451 = vmatpush1.msra.mxu0 %v135
    %452 = vmatprep.subr.mxu0 0.0
    %453 = vmatpush1.msra.mxu0 %v136
    %454 = vmatprep.subr.mxu0 0.0
    %455 = vmatpush1.msra.mxu0 %v137
    %456 = vmatprep.subr.mxu0 0.0
    %457 = vmatpush1.msra.mxu0 %v138
    %458 = vmatprep.subr.mxu0 0.0
    %459 = vmatpush1.msra.mxu0 %v139
    %460 = vmatprep.subr.mxu0 0.0
    %461 = vmatpush1.msra.mxu0 %v140
    %462 = vmatprep.subr.mxu0 0.0
    %463 = vmatpush1.msra.mxu0 %v141
    %464 = vmatprep.subr.mxu0 0.0
    %465 = vmatpush1.msra.mxu0 %v142
    %466 = vmatprep.subr.mxu0 0.0
    %467 = vmatpush1.msra.mxu0 %v143
    %468 = vmatprep.subr.mxu0 0.0
    %469 = vmatpush1.msra.mxu0 %v144
    %470 = vmatprep.mubr.f32.mxu0 %v187
    %471 = vmatmul.mubr.f32.gmra.mrb[0].mxu0 %v185
    %v472 = vpop.f32.mrb[0].mxu0
    %v473 = vadd.f32 %v403, %v472
    %v474 = vpop.f32.mrb[0].mxu0
    %475 = vdwg.mxu0
    %vm476 = vcmp.ge.f32.partialorder %v473, 0.0
    %v477 = vmul.f32 %v473, 0.0
    %v478 = vsel %vm476, %v473, %v477
    %vm479 = vcmask 517120
    %480 = vst.msk [vmem:[#allocation2] sm:$0x3] %vm479, %v478
    // Predicated region
    $region14: #{inner_unet_forward.12} parent=1 // pred_check
      _
    $region15: #{inner_unet_forward.12} parent=1 // pred_check_branch
      %482 = sbr.rel (0) target = $region17
    $region16: #{inner_unet_forward.12} parent=1 // pred_region
      %s484 = ssub.s32 32, 32
      %485 = vsyncadd [#allocation3], %s484
      %s487 = sshll.u32 [#allocation2], 4
      %s488 = int_to_ptr.vmem [resolvable:$true] %s487
      %490 = dma.vmem_to_hbm [thread:$0]  %s488, 32, %s3, [#allocation3]
    $region17: #{inner_unet_forward.12} parent=1 // pred_fallthru
      _
    // Predicated region
    $region18: #{inner_unet_forward.12} parent=1 // pred_check
      _
    $region19: #{inner_unet_forward.12} parent=1 // pred_check_branch
      %492 = sbr.rel (0) target = $region21
    $region20: #{inner_unet_forward.12} parent=1 // pred_region
      %493 = dma.done [#allocation3], 32
    $region21: #{inner_unet_forward.12} parent=1 // pred_fallthru
      _
    %494 = vsyncpa [#allocation3], 1

</llo_original>
